<compile_context>
chip_gen: v7x
topology: tpu7x:2x2x1
jax: 0.10.0
libtpu: 0.0.40
codegen_flags: <defaults>
</compile_context>

<pallas_src>
import functools

import jax
import jax.numpy as jnp
from jax import lax
from jax.experimental import pallas as pl
from jax.experimental.pallas import tpu as pltpu


def _round_up(x, m):
    return ((x + m - 1) // m) * m


def _cdiv(a, b):
    return -(-a // b)


def _device_kind():
    try:
        return jax.devices()[0].device_kind.lower()
    except Exception:
        return ""


def _pick_batch_tiling(B, *, is_v7x):
    """Returns (batch_tile, n_tiles) with batch_tile a multiple of 8.

    v7x: 2 TensorCores + 64 MiB VMEM -> cap the tile at 128 and prefer >=2
    tiles so both cores get work and per-core footprint is halved.
    v5e/v6e: 1 TC + 128 MiB VMEM -> large tiles amortize MXU fill/drain and the
    ~0.35 us per-grid-step overhead.
    The tile is sized ~cdiv(B, n_tiles) so the padded tail stays small.
    """
    cap = 128 if is_v7x else 256
    n_tiles = max(1, _cdiv(B, cap))
    if is_v7x and B > 8 and n_tiles < 2:
        n_tiles = 2
    tile = _round_up(max(1, _cdiv(B, n_tiles)), 8)
    return tile, n_tiles


# -----------------------------------------------------------------------------
# Fused Pallas kernel: N-layer LSTM + flatten + 3-layer MLP head.
# -----------------------------------------------------------------------------
def _fused_lstm_mlp_kernel(n_layers, seq_len, hidden, gate_dtype, *refs):
    """All shapes padded: hidden -> H (mult. of 128), batch tile Bt (mult. of 8).

    refs layout (in order):
      x_ref                  (T, Bt, D)   bf16  time-major padded input
      per layer l:
        w_ih_l               (D_l, 4H)    bf16  (per-gate zero padding)
        w_hh_l               (H, 4H)      bf16
        b_l                  (1, 4H)      f32   (b_ih + b_hh)
      fc1_w                  (T, H, F1)   bf16  (fc_1 weight, split per timestep)
      fc1_b                  (1, F1)      f32
      fcm_w                  (F1, FM)     bf16
      fcm_b                  (1, FM)      f32
      fc2_w                  (FM, O)      bf16
      fc2_b                  (1, O)       f32
      out_ref                (Bt, O)      f32
      gx_sc   (scratch)      (T, Bt, 4H)  bf16  hoisted input projection
      seq_sc  (scratch)      (T, Bt, H)   bf16  inter-layer hidden sequence
    """
    T, H = seq_len, hidden
    p = 0
    x_ref = refs[p]; p += 1
    lstm_refs = []
    for _ in range(n_layers):
        lstm_refs.append((refs[p], refs[p + 1], refs[p + 2]))
        p += 3
    fc1w_ref, fc1b_ref, fcmw_ref, fcmb_ref, fc2w_ref, fc2b_ref = refs[p:p + 6]
    p += 6
    out_ref = refs[p]; p += 1
    gx_sc = refs[p]; p += 1
    seq_sc = refs[p]

    Bt = x_ref.shape[1]
    F1 = fc1w_ref.shape[2]

    def cell(g, c):
        # g: (Bt, 4H) f32 preactivation; c: (Bt, H) f32 state.
        # Gate order matches PyTorch: i, f, g, o; slices are lane-tile aligned
        # (H is a multiple of 128).  Nonlinearities run in `gate_dtype`
        # (bf16 on v6e/v7x -> bf16 EUP path; f32 on v5e); c stays f32.
        gq = g.astype(gate_dtype)
        i_g = jax.nn.sigmoid(gq[:, 0 * H:1 * H])
        f_g = jax.nn.sigmoid(gq[:, 1 * H:2 * H])
        g_g = jnp.tanh(gq[:, 2 * H:3 * H])
        o_g = jax.nn.sigmoid(gq[:, 3 * H:4 * H])
        c_new = (f_g * c + i_g * g_g).astype(jnp.float32)
        h_new = (o_g * jnp.tanh(c_new.astype(gate_dtype))).astype(jnp.bfloat16)
        return h_new, c_new

    # Accumulator for the fused flatten + fc_1 (last layer only).
    acc1 = jnp.zeros((Bt, F1), jnp.float32)

    for layer in range(n_layers):
        w_ih_ref, w_hh_ref, b_ref = lstm_refs[layer]
        xin_ref = x_ref if layer == 0 else seq_sc          # bf16, no cast needed
        d_in = xin_ref.shape[-1]

        # Hoisted input projection: one (T*Bt, D_l) @ (D_l, 4H) MXU matmul for
        # the whole sequence (+ bias).  Stored into a bf16 VMEM scratch so no
        # (T, Bt, 4H) f32 value stays live across the whole time loop.
        gx = jnp.dot(xin_ref[...].reshape(T * Bt, d_in), w_ih_ref[...],
                     preferred_element_type=jnp.float32) + b_ref[...]
        gx_sc[...] = gx.reshape(T, Bt, 4 * H).astype(jnp.bfloat16)

        w_hh = w_hh_ref[...]                                # (H, 4H) bf16
        h0 = jnp.zeros((Bt, H), jnp.bfloat16)
        c0 = jnp.zeros((Bt, H), jnp.float32)
        last_layer = layer == n_layers - 1

        if last_layer:
            def step(t, carry):
                h, c, acc = carry
                g = jnp.dot(h, w_hh, preferred_element_type=jnp.float32) + gx_sc[t]
                h, c = cell(g, c)
                # Fused flatten + fc_1 (dropout is identity at inference):
                #   relu(flat) @ W1 == sum_t relu(h_t) @ W1[t*H:(t+1)*H, :]
                acc = acc + jnp.dot(jnp.maximum(h, 0.0), fc1w_ref[t],
                                    preferred_element_type=jnp.float32)
                return h, c, acc
            carry = (h0, c0, acc1)
        else:
            def step(t, carry):
                h, c = carry
                g = jnp.dot(h, w_hh, preferred_element_type=jnp.float32) + gx_sc[t]
                h, c = cell(g, c)
                seq_sc[t] = h
                return h, c
            carry = (h0, c0)

        # Short lookbacks: static unroll (LLO scheduler visibility).
        # Long lookbacks: rolled loop bounds live ranges and compile time.
        if T < 16:
            for t in range(T):
                carry = step(t, carry)
        else:
            carry = lax.fori_loop(0, T, step, carry)

        if last_layer:
            acc1 = carry[2]

    # MLP head: relu -> fc_m -> relu -> fc_2 (fc_1 already accumulated above).
    h1 = jnp.maximum(acc1 + fc1b_ref[...], 0.0)
    hm = jnp.maximum(
        jnp.dot(h1.astype(jnp.bfloat16), fcmw_ref[...],
                preferred_element_type=jnp.float32) + fcmb_ref[...], 0.0)
    out_ref[...] = (
        jnp.dot(hm.astype(jnp.bfloat16), fc2w_ref[...],
                preferred_element_type=jnp.float32) + fc2b_ref[...])


# -----------------------------------------------------------------------------
# Wrapper
# -----------------------------------------------------------------------------
def fused_lstm_mlp(x_tbd, lstm_params, fc1_w, fc1_b, fcm_w, fcm_b, fc2_w, fc2_b,
                   *, hidden_pad, batch_tile, gate_dtype=jnp.bfloat16,
                   vmem_cap_bytes=100 * (1 << 20)):
    """x_tbd: (T, B_pad, D_pad) bf16 (padded); weights already padded."""
    T, b_pad, d_pad = x_tbd.shape
    out_pad = fc2_w.shape[1]
    n_layers = len(lstm_params)
    n_batch_tiles = b_pad // batch_tile
    H = hidden_pad

    weight_args = []
    for (w_ih, w_hh, b) in lstm_params:
        weight_args += [w_ih, w_hh, b]
    weight_args += [fc1_w, fc1_b, fcm_w, fcm_b, fc2_w, fc2_b]
    args = [x_tbd] + weight_args

    # --- VMEM budget: per-tile footprint + headroom, capped per generation.
    weight_bytes = sum(a.size * a.dtype.itemsize for a in weight_args)
    x_tile_bytes = T * batch_tile * d_pad * x_tbd.dtype.itemsize
    out_tile_bytes = batch_tile * out_pad * 4
    scratch_bytes = T * batch_tile * (4 * H + H) * 2          # bf16 scratches
    footprint = (2 * x_tile_bytes + 2 * out_tile_bytes + 2 * weight_bytes
                 + scratch_bytes)
    vmem_limit = int(min(vmem_cap_bytes,
                         max(32 * (1 << 20), footprint + 8 * (1 << 20))))

    # --- Advisory cost model so XLA schedules the embedding glue sanely.
    flops = 0
    d_in = d_pad
    for _ in range(n_layers):
        flops += 2 * T * b_pad * d_in * 4 * H                 # input projection
        flops += 2 * T * b_pad * H * 4 * H                    # recurrence
        d_in = H
    f1, fm = fc1_w.shape[2], fcm_w.shape[1]
    flops += (2 * T * b_pad * H * f1
              + 2 * b_pad * f1 * fm + 2 * b_pad * fm * out_pad)
    transcendentals = n_layers * 5 * T * b_pad * H
    bytes_accessed = int(sum(a.size * a.dtype.itemsize for a in args)
                         + b_pad * out_pad * 4)

    kernel = functools.partial(_fused_lstm_mlp_kernel, n_layers, T, H, gate_dtype)

    def make_in_specs(single_buffer_weights):
        pm = pl.Buffered(1) if single_buffer_weights else None
        specs = [pl.BlockSpec((T, batch_tile, d_pad), lambda i: (0, i, 0))]
        for w in weight_args:
            nd = len(w.shape)
            specs.append(pl.BlockSpec(tuple(w.shape),
                                      (lambda i, _nd=nd: (0,) * _nd),
                                      pipeline_mode=pm))
        return specs

    def build(single_buffer_weights):
        return pl.pallas_call(
            kernel,
            out_shape=jax.ShapeDtypeStruct((b_pad, out_pad), jnp.float32),
            grid_spec=pltpu.PrefetchScalarGridSpec(
                num_scalar_prefetch=0,
                grid=(n_batch_tiles,),
                in_specs=make_in_specs(single_buffer_weights),
                out_specs=pl.BlockSpec((batch_tile, out_pad), lambda i: (i, 0)),
                scratch_shapes=[
                    pltpu.VMEM((T, batch_tile, 4 * H), jnp.bfloat16),  # gx
                    pltpu.VMEM((T, batch_tile, H), jnp.bfloat16),      # h seq
                ]),
            compiler_params=pltpu.CompilerParams(
                dimension_semantics=("parallel",),
                vmem_limit_bytes=vmem_limit),
            cost_estimate=pl.CostEstimate(
                flops=int(flops), transcendentals=int(transcendentals),
                bytes_accessed=bytes_accessed),
        )

    # Constant-index weight blocks do not need double buffering; request a
    # single buffer, falling back if this jax build rejects Buffered(1).
    try:
        return build(True)(*args)
    except Exception:
        return build(False)(*args)


# -----------------------------------------------------------------------------
# Model: parameters + forward (mirrors LSTM_Embedding.forward, branch where
# both static and dynamic categorical features are present)
# -----------------------------------------------------------------------------
class LSTMEmbeddingPallas:
    def __init__(self, key, emb_dims_dynamic, emb_dims_static,
                 no_of_cat_static, no_of_continous_static,
                 no_of_cat_dyn, no_of_continous_dyn,
                 lookback_length, hidden_size, lstm_layers,
                 prediction_horizon, fc1_size, fcm_size, dropout):
        self.seq_len = lookback_length
        self.n_hidden = hidden_size
        self.n_layers = lstm_layers
        self.output_size = prediction_horizon

        self.no_of_embs = (sum(y for _, y in emb_dims_dynamic)
                           + sum(y for _, y in emb_dims_static))
        lstm_in = self.no_of_embs + no_of_continous_static + no_of_continous_dyn
        self.lstm_in = lstm_in

        # Lane-dense padded sizes.
        self.h_pad = _round_up(hidden_size, 128)
        self.d_pad = _round_up(lstm_in, 128)
        self.f1_pad = _round_up(fc1_size, 128)
        self.fm_pad = _round_up(fcm_size, 128)
        self.o_pad = _round_up(prediction_horizon, 128)

        ks = iter(jax.random.split(key, 1024))

        def init(shape, scale=0.1):
            return (scale * jax.random.normal(next(ks), shape)).astype(jnp.float32)

        # One embedding table per (timestep, dynamic cat feature), like
        # nn.ModuleList([...] for emb_dims_dynamic * lookback_length).
        self.emb_dyn = [init((n, d)) for _ in range(lookback_length)
                        for (n, d) in emb_dims_dynamic]
        self.emb_static = [init((n, d)) for (n, d) in emb_dims_static]

        # ---- unpadded f32 params (reference path) ----------------------------
        self.lstm_params_f32 = []
        d_in = lstm_in
        for _ in range(lstm_layers):
            w_ih = init((d_in, 4 * hidden_size))   # stored transposed vs (4H,in)
            w_hh = init((hidden_size, 4 * hidden_size))
            b = init((1, 4 * hidden_size))         # b_ih + b_hh combined
            self.lstm_params_f32.append((w_ih, w_hh, b))
            d_in = hidden_size
        self.fc1_w = init((hidden_size * lookback_length, fc1_size))
        self.fc1_b = init((1, fc1_size))
        self.fcm_w = init((fc1_size, fcm_size))
        self.fcm_b = init((1, fcm_size))
        self.fc2_w = init((fcm_size, prediction_horizon))
        self.fc2_b = init((1, prediction_horizon))

        # ---- padded / bf16 params for the Pallas kernel -----------------------
        # NOTE: the padded-lane invariant (padded hidden lanes stay exactly 0
        # through the recurrence) relies on per-gate zero padding of W and b
        # plus zero initial h/c.  Do not add nonzero bias padding or in-kernel
        # dropout without revisiting it.
        H, Hp = hidden_size, self.h_pad

        def pad_gates_mat(w, in_pad):
            w4 = w.reshape(w.shape[0], 4, H)
            w4 = jnp.pad(w4, ((0, in_pad - w.shape[0]), (0, 0), (0, Hp - H)))
            return w4.reshape(in_pad, 4 * Hp).astype(jnp.bfloat16)

        def pad_gates_bias(b):
            b4 = b.reshape(1, 4, H)
            b4 = jnp.pad(b4, ((0, 0), (0, 0), (0, Hp - H)))
            return b4.reshape(1, 4 * Hp).astype(jnp.float32)

        self.lstm_params_pad = []
        in_pad = self.d_pad
        for (w_ih, w_hh, b) in self.lstm_params_f32:
            self.lstm_params_pad.append((pad_gates_mat(w_ih, in_pad),
                                         pad_gates_mat(w_hh, Hp),
                                         pad_gates_bias(b)))
            in_pad = Hp

        def pad2(w, r, c, dtype):
            return jnp.pad(w, ((0, r - w.shape[0]),
                               (0, c - w.shape[1]))).astype(dtype)

        T = lookback_length
        fc1_w_t = self.fc1_w.reshape(T, H, fc1_size)       # time-split fc_1
        fc1_w_t = jnp.pad(fc1_w_t,
                          ((0, 0), (0, Hp - H), (0, self.f1_pad - fc1_size)))
        self.fc1_w_pad = fc1_w_t.astype(jnp.bfloat16)
        self.fc1_b_pad = pad2(self.fc1_b, 1, self.f1_pad, jnp.float32)
        self.fcm_w_pad = pad2(self.fcm_w, self.f1_pad, self.fm_pad, jnp.bfloat16)
        self.fcm_b_pad = pad2(self.fcm_b, 1, self.fm_pad, jnp.float32)
        self.fc2_w_pad = pad2(self.fc2_w, self.fm_pad, self.o_pad, jnp.bfloat16)
        self.fc2_b_pad = pad2(self.fc2_b, 1, self.o_pad, jnp.float32)

    # --- embedding lookups + concat (plain-JAX glue) --------------------------
    def _embed(self, x_cat_static, x_cont_static, x_cat_dynamic, x_cont_dynamic):
        B = x_cat_static.shape[0]
        T = self.seq_len
        x_cat_dyn_flat = x_cat_dynamic.reshape(B, -1)          # (B, T*n_cat_dyn)
        x_d = jnp.concatenate(
            [jnp.take(tbl, x_cat_dyn_flat[:, i].astype(jnp.int32), axis=0)
             for i, tbl in enumerate(self.emb_dyn)], axis=1)
        x_d = x_d.reshape(B, T, -1)
        x_cat_stat_flat = x_cat_static.reshape(B, -1)
        x_s = jnp.concatenate(
            [jnp.take(tbl, x_cat_stat_flat[:, i].astype(jnp.int32), axis=0)
             for i, tbl in enumerate(self.emb_static)], axis=1)
        x_s = jnp.broadcast_to(x_s[:, None, :], (B, T, x_s.shape[1]))
        x_cs = jnp.broadcast_to(x_cont_static[:, None, :],
                                (B, T, x_cont_static.shape[1]))
        return jnp.concatenate([x_s, x_d, x_cs, x_cont_dynamic],
                               axis=2).astype(jnp.float32)

    # --- Pallas forward -------------------------------------------------------
    def forward(self, x_cat_static, x_cont_static, x_cat_dynamic, x_cont_dynamic):
        x = self._embed(x_cat_static, x_cont_static,
                        x_cat_dynamic, x_cont_dynamic)          # (B, T, D)
        B, T, D = x.shape

        kind = _device_kind()
        is_v7x = "v7" in kind
        is_v5 = "v5" in kind

        batch_tile, n_tiles = _pick_batch_tiling(B, is_v7x=is_v7x)
        b_pad = batch_tile * n_tiles

        # Cast to bf16 once in XLA (it only feeds bf16 MXU matmuls in-kernel):
        # halves the streaming DMA and removes per-tile VALU cast passes.
        x_tbd = jnp.transpose(x, (1, 0, 2))                     # time-major
        x_tbd = jnp.pad(x_tbd, ((0, 0), (0, b_pad - B),
                                (0, self.d_pad - D))).astype(jnp.bfloat16)

        out = fused_lstm_mlp(
            x_tbd, self.lstm_params_pad,
            self.fc1_w_pad, self.fc1_b_pad,
            self.fcm_w_pad, self.fcm_b_pad,
            self.fc2_w_pad, self.fc2_b_pad,
            hidden_pad=self.h_pad, batch_tile=batch_tile,
            gate_dtype=jnp.float32 if is_v5 else jnp.bfloat16,  # no bf16 EUP on v5e
            vmem_cap_bytes=(56 if is_v7x else 100) * (1 << 20))
        return out[:B, :self.output_size]

    # --- pure-JAX f32 reference (for correctness checking) --------------------
    def forward_reference(self, x_cat_static, x_cont_static,
                          x_cat_dynamic, x_cont_dynamic):
        x = self._embed(x_cat_static, x_cont_static,
                        x_cat_dynamic, x_cont_dynamic)
        H = self.n_hidden
        h_seq = x
        for (w_ih, w_hh, b) in self.lstm_params_f32:
            Bsz = h_seq.shape[0]
            h = jnp.zeros((Bsz, H), jnp.float32)
            c = jnp.zeros((Bsz, H), jnp.float32)
            outs = []
            for t in range(self.seq_len):
                g = h_seq[:, t, :] @ w_ih + h @ w_hh + b
                i_g = jax.nn.sigmoid(g[:, 0 * H:1 * H])
                f_g = jax.nn.sigmoid(g[:, 1 * H:2 * H])
                g_g = jnp.tanh(g[:, 2 * H:3 * H])
                o_g = jax.nn.sigmoid(g[:, 3 * H:4 * H])
                c = f_g * c + i_g * g_g
                h = o_g * jnp.tanh(c)
                outs.append(h)
            h_seq = jnp.stack(outs, axis=1)
        flat = h_seq.reshape(h_seq.shape[0], -1)
        z = jnp.maximum(flat, 0.0)                               # dropout=identity
        z = jnp.maximum(z @ self.fc1_w + self.fc1_b, 0.0)
        z = jnp.maximum(z @ self.fcm_w + self.fcm_b, 0.0)
        return z @ self.fc2_w + self.fc2_b


# -----------------------------------------------------------------------------
# Demo
# -----------------------------------------------------------------------------
if __name__ == "__main__":
    key = jax.random.PRNGKey(0)
    k_model, k_cs, k_cd, k_fs, k_fd = jax.random.split(key, 5)

    B = 2
    seq_len = 8
    hidden = 32
    lstm_layers = 2
    emb_dims_static = [(5, 4), (7, 3)]     # 2 static categorical features
    emb_dims_dynamic = [(6, 4), (9, 5)]    # 2 dynamic categorical features
    n_cat_static, n_cont_static = 2, 3
    n_cat_dyn, n_cont_dyn = 2, 3
    fc1_size, fcm_size = 64, 32
    prediction_horizon = 4

    model = LSTMEmbeddingPallas(
        k_model, emb_dims_dynamic, emb_dims_static,
        n_cat_static, n_cont_static, n_cat_dyn, n_cont_dyn,
        seq_len, hidden, lstm_layers, prediction_horizon,
        fc1_size, fcm_size, dropout=0.1)

    x_cat_static = jax.random.randint(k_cs, (B, n_cat_static), 0, 5)
    x_cat_dynamic = jax.random.randint(k_cd, (B, seq_len, n_cat_dyn), 0, 6)
    x_cont_static = jax.random.normal(k_fs, (B, n_cont_static), dtype=jnp.float32)
    x_cont_dynamic = jax.random.normal(k_fd, (B, seq_len, n_cont_dyn),
                                       dtype=jnp.float32)

    out = model.forward(x_cat_static, x_cont_static, x_cat_dynamic, x_cont_dynamic)
    out = jax.block_until_ready(out)
    assert out.shape == (B, prediction_horizon), out.shape

    # Correctness vs pure-JAX f32 reference (kernel uses bf16 weights /
    # activations -> loose tolerance).
    ref = model.forward_reference(x_cat_static, x_cont_static,
                                  x_cat_dynamic, x_cont_dynamic)
    max_err = float(jnp.max(jnp.abs(out - ref)))
    assert max_err < 5e-2, f"max abs error vs reference = {max_err}"

    print("KERNEL_OK")
</pallas_src>

<mosaic_0001>
module attributes {stable_mosaic.version = 11 : i64} {
  func.func @_fused_lstm_mlp_kernel(%arg0: i32, %arg1: memref<8x8x128xbf16, #tpu.memory_space<vmem>>, %arg2: memref<128x512xbf16, #tpu.memory_space<vmem>>, %arg3: memref<128x512xbf16, #tpu.memory_space<vmem>>, %arg4: memref<1x512xf32, #tpu.memory_space<vmem>>, %arg5: memref<128x512xbf16, #tpu.memory_space<vmem>>, %arg6: memref<128x512xbf16, #tpu.memory_space<vmem>>, %arg7: memref<1x512xf32, #tpu.memory_space<vmem>>, %arg8: memref<8x128x128xbf16, #tpu.memory_space<vmem>>, %arg9: memref<1x128xf32, #tpu.memory_space<vmem>>, %arg10: memref<128x128xbf16, #tpu.memory_space<vmem>>, %arg11: memref<1x128xf32, #tpu.memory_space<vmem>>, %arg12: memref<128x128xbf16, #tpu.memory_space<vmem>>, %arg13: memref<1x128xf32, #tpu.memory_space<vmem>>, %arg14: memref<8x128xf32, #tpu.memory_space<vmem>>, %arg15: memref<8x8x512xbf16, #tpu.memory_space<vmem>>, %arg16: memref<8x8x128xbf16, #tpu.memory_space<vmem>>) attributes {dimension_semantics = [#tpu.dimension_semantics<parallel>], iteration_bounds = array<i64: 1>, scalar_prefetch = 0 : i64, scratch_operands = 2 : i64, tpu.core_type = #tpu.core_type<tc>, window_params = [{transform_indices = @transform_0, window_bounds = array<i64: 8, 8, 128>}, {pipeline_mode = #tpu.pipeline_mode<synchronous>, transform_indices = @transform_1, window_bounds = array<i64: 128, 512>}, {pipeline_mode = #tpu.pipeline_mode<synchronous>, transform_indices = @transform_2, window_bounds = array<i64: 128, 512>}, {pipeline_mode = #tpu.pipeline_mode<synchronous>, transform_indices = @transform_3, window_bounds = array<i64: 1, 512>}, {pipeline_mode = #tpu.pipeline_mode<synchronous>, transform_indices = @transform_4, window_bounds = array<i64: 128, 512>}, {pipeline_mode = #tpu.pipeline_mode<synchronous>, transform_indices = @transform_5, window_bounds = array<i64: 128, 512>}, {pipeline_mode = #tpu.pipeline_mode<synchronous>, transform_indices = @transform_6, window_bounds = array<i64: 1, 512>}, {pipeline_mode = #tpu.pipeline_mode<synchronous>, transform_indices = @transform_7, window_bounds = array<i64: 8, 128, 128>}, {pipeline_mode = #tpu.pipeline_mode<synchronous>, transform_indices = @transform_8, window_bounds = array<i64: 1, 128>}, {pipeline_mode = #tpu.pipeline_mode<synchronous>, transform_indices = @transform_9, window_bounds = array<i64: 128, 128>}, {pipeline_mode = #tpu.pipeline_mode<synchronous>, transform_indices = @transform_10, window_bounds = array<i64: 1, 128>}, {pipeline_mode = #tpu.pipeline_mode<synchronous>, transform_indices = @transform_11, window_bounds = array<i64: 128, 128>}, {pipeline_mode = #tpu.pipeline_mode<synchronous>, transform_indices = @transform_12, window_bounds = array<i64: 1, 128>}, {transform_indices = @transform_13, window_bounds = array<i64: 8, 128>}]} {
    %cst = arith.constant 0.000000e+00 : f32
    %0 = vector.broadcast %cst : f32 to vector<8x128xf32>
    %c0 = arith.constant 0 : index
    %c0_0 = arith.constant 0 : index
    %c0_1 = arith.constant 0 : index
    %1 = vector.load %arg1[%c0, %c0_0, %c0_1] : memref<8x8x128xbf16, #tpu.memory_space<vmem>>, vector<8x8x128xbf16>
    %2 = vector.shape_cast %1 : vector<8x8x128xbf16> to vector<64x128xbf16>
    %c0_2 = arith.constant 0 : index
    %c0_3 = arith.constant 0 : index
    %3 = vector.load %arg2[%c0_2, %c0_3] : memref<128x512xbf16, #tpu.memory_space<vmem>>, vector<128x512xbf16>
    %cst_4 = arith.constant dense<0.000000e+00> : vector<64x512xf32>
    %4 = tpu.matmul %2, %3, %cst_4 {dimension_numbers = #tpu.dot_dimension_numbers<[1], [0], [0], [1], [0, 0, 1, 1], [], []>} : vector<64x128xbf16>, vector<128x512xbf16>, vector<64x512xf32> -> vector<64x512xf32>
    %c0_5 = arith.constant 0 : index
    %c0_6 = arith.constant 0 : index
    %5 = vector.load %arg4[%c0_5, %c0_6] : memref<1x512xf32, #tpu.memory_space<vmem>>, vector<1x512xf32>
    %6 = vector.broadcast %5 : vector<1x512xf32> to vector<64x512xf32>
    %7 = arith.addf %4, %6 : vector<64x512xf32>
    %8 = vector.shape_cast %7 : vector<64x512xf32> to vector<8x8x512xf32>
    %9 = arith.truncf %8 : vector<8x8x512xf32> to vector<8x8x512xbf16>
    %c0_7 = arith.constant 0 : index
    %c0_8 = arith.constant 0 : index
    %c0_9 = arith.constant 0 : index
    %10 = vector.load %arg15[%c0_7, %c0_8, %c0_9] : memref<8x8x512xbf16, #tpu.memory_space<vmem>>, vector<8x8x512xbf16>
    tpu.vector_store %arg15[%c0_7, %c0_8, %c0_9], %9 {strides = array<i32>} : memref<8x8x512xbf16, #tpu.memory_space<vmem>>, vector<8x8x512xbf16>,
    %c0_10 = arith.constant 0 : index
    %c0_11 = arith.constant 0 : index
    %11 = vector.load %arg3[%c0_10, %c0_11] : memref<128x512xbf16, #tpu.memory_space<vmem>>, vector<128x512xbf16>
    %cst_12 = arith.constant 0.000000e+00 : bf16
    %12 = vector.broadcast %cst_12 : bf16 to vector<8x128xbf16>
    %cst_13 = arith.constant 0.000000e+00 : f32
    %13 = vector.broadcast %cst_13 : f32 to vector<8x128xf32>
    %cst_14 = arith.constant dense<0.000000e+00> : vector<8x512xf32>
    %14 = tpu.matmul %12, %11, %cst_14 {dimension_numbers = #tpu.dot_dimension_numbers<[1], [0], [0], [1], [0, 0, 1, 1], [], []>} : vector<8x128xbf16>, vector<128x512xbf16>, vector<8x512xf32> -> vector<8x512xf32>
    %c0_15 = arith.constant 0 : index
    %c0_16 = arith.constant 0 : index
    %c0_17 = arith.constant 0 : index
    %15 = vector.load %arg15[%c0_15, %c0_16, %c0_17] : memref<8x8x512xbf16, #tpu.memory_space<vmem>>, vector<1x8x512xbf16>
    %16 = vector.shape_cast %15 : vector<1x8x512xbf16> to vector<8x512xbf16>
    %17 = arith.extf %16 : vector<8x512xbf16> to vector<8x512xf32>
    %18 = arith.addf %14, %17 : vector<8x512xf32>
    %19 = arith.truncf %18 : vector<8x512xf32> to vector<8x512xbf16>
    %20 = vector.extract_strided_slice %19 {offsets = [0, 0], sizes = [8, 128], strides = [1, 1]} : vector<8x512xbf16> to vector<8x128xbf16>
    %21 = arith.negf %20 : vector<8x128xbf16>
    %22 = math.exp %21 : vector<8x128xbf16>
    %cst_18 = arith.constant 1.000000e+00 : bf16
    %23 = vector.broadcast %cst_18 : bf16 to vector<8x128xbf16>
    %24 = arith.addf %23, %22 : vector<8x128xbf16>
    %25 = arith.divf %23, %24 : vector<8x128xbf16>
    %26 = vector.extract_strided_slice %19 {offsets = [0, 128], sizes = [8, 128], strides = [1, 1]} : vector<8x512xbf16> to vector<8x128xbf16>
    %27 = arith.negf %26 : vector<8x128xbf16>
    %28 = math.exp %27 : vector<8x128xbf16>
    %cst_19 = arith.constant 1.000000e+00 : bf16
    %29 = vector.broadcast %cst_19 : bf16 to vector<8x128xbf16>
    %30 = arith.addf %29, %28 : vector<8x128xbf16>
    %31 = arith.divf %29, %30 : vector<8x128xbf16>
    %32 = vector.extract_strided_slice %19 {offsets = [0, 256], sizes = [8, 128], strides = [1, 1]} : vector<8x512xbf16> to vector<8x128xbf16>
    %33 = math.tanh %32 : vector<8x128xbf16>
    %34 = vector.extract_strided_slice %19 {offsets = [0, 384], sizes = [8, 128], strides = [1, 1]} : vector<8x512xbf16> to vector<8x128xbf16>
    %35 = arith.negf %34 : vector<8x128xbf16>
    %36 = math.exp %35 : vector<8x128xbf16>
    %cst_20 = arith.constant 1.000000e+00 : bf16
    %37 = vector.broadcast %cst_20 : bf16 to vector<8x128xbf16>
    %38 = arith.addf %37, %36 : vector<8x128xbf16>
    %39 = arith.divf %37, %38 : vector<8x128xbf16>
    %40 = arith.extf %31 : vector<8x128xbf16> to vector<8x128xf32>
    %41 = arith.mulf %40, %13 : vector<8x128xf32>
    %42 = arith.mulf %25, %33 : vector<8x128xbf16>
    %43 = arith.extf %42 : vector<8x128xbf16> to vector<8x128xf32>
    %44 = arith.addf %41, %43 : vector<8x128xf32>
    %45 = arith.truncf %44 : vector<8x128xf32> to vector<8x128xbf16>
    %46 = math.tanh %45 : vector<8x128xbf16>
    %47 = arith.mulf %39, %46 : vector<8x128xbf16>
    %c0_21 = arith.constant 0 : index
    %c0_22 = arith.constant 0 : index
    %c0_23 = arith.constant 0 : index
    %48 = vector.load %arg16[%c0_21, %c0_22, %c0_23] : memref<8x8x128xbf16, #tpu.memory_space<vmem>>, vector<1x8x128xbf16>
    %49 = vector.shape_cast %48 : vector<1x8x128xbf16> to vector<8x128xbf16>
    %50 = vector.shape_cast %47 : vector<8x128xbf16> to vector<1x8x128xbf16>
    tpu.vector_store %arg16[%c0_21, %c0_22, %c0_23], %50 {strides = array<i32>} : memref<8x8x128xbf16, #tpu.memory_space<vmem>>, vector<1x8x128xbf16>,
    %cst_24 = arith.constant dense<0.000000e+00> : vector<8x512xf32>
    %51 = tpu.matmul %47, %11, %cst_24 {dimension_numbers = #tpu.dot_dimension_numbers<[1], [0], [0], [1], [0, 0, 1, 1], [], []>} : vector<8x128xbf16>, vector<128x512xbf16>, vector<8x512xf32> -> vector<8x512xf32>
    %c1 = arith.constant 1 : index
    %c0_25 = arith.constant 0 : index
    %c0_26 = arith.constant 0 : index
    %52 = vector.load %arg15[%c1, %c0_25, %c0_26] : memref<8x8x512xbf16, #tpu.memory_space<vmem>>, vector<1x8x512xbf16>
    %53 = vector.shape_cast %52 : vector<1x8x512xbf16> to vector<8x512xbf16>
    %54 = arith.extf %53 : vector<8x512xbf16> to vector<8x512xf32>
    %55 = arith.addf %51, %54 : vector<8x512xf32>
    %56 = arith.truncf %55 : vector<8x512xf32> to vector<8x512xbf16>
    %57 = vector.extract_strided_slice %56 {offsets = [0, 0], sizes = [8, 128], strides = [1, 1]} : vector<8x512xbf16> to vector<8x128xbf16>
    %58 = arith.negf %57 : vector<8x128xbf16>
    %59 = math.exp %58 : vector<8x128xbf16>
    %cst_27 = arith.constant 1.000000e+00 : bf16
    %60 = vector.broadcast %cst_27 : bf16 to vector<8x128xbf16>
    %61 = arith.addf %60, %59 : vector<8x128xbf16>
    %62 = arith.divf %60, %61 : vector<8x128xbf16>
    %63 = vector.extract_strided_slice %56 {offsets = [0, 128], sizes = [8, 128], strides = [1, 1]} : vector<8x512xbf16> to vector<8x128xbf16>
    %64 = arith.negf %63 : vector<8x128xbf16>
    %65 = math.exp %64 : vector<8x128xbf16>
    %cst_28 = arith.constant 1.000000e+00 : bf16
    %66 = vector.broadcast %cst_28 : bf16 to vector<8x128xbf16>
    %67 = arith.addf %66, %65 : vector<8x128xbf16>
    %68 = arith.divf %66, %67 : vector<8x128xbf16>
    %69 = vector.extract_strided_slice %56 {offsets = [0, 256], sizes = [8, 128], strides = [1, 1]} : vector<8x512xbf16> to vector<8x128xbf16>
    %70 = math.tanh %69 : vector<8x128xbf16>
    %71 = vector.extract_strided_slice %56 {offsets = [0, 384], sizes = [8, 128], strides = [1, 1]} : vector<8x512xbf16> to vector<8x128xbf16>
    %72 = arith.negf %71 : vector<8x128xbf16>
    %73 = math.exp %72 : vector<8x128xbf16>
    %cst_29 = arith.constant 1.000000e+00 : bf16
    %74 = vector.broadcast %cst_29 : bf16 to vector<8x128xbf16>
    %75 = arith.addf %74, %73 : vector<8x128xbf16>
    %76 = arith.divf %74, %75 : vector<8x128xbf16>
    %77 = arith.extf %68 : vector<8x128xbf16> to vector<8x128xf32>
    %78 = arith.mulf %77, %44 : vector<8x128xf32>
    %79 = arith.mulf %62, %70 : vector<8x128xbf16>
    %80 = arith.extf %79 : vector<8x128xbf16> to vector<8x128xf32>
    %81 = arith.addf %78, %80 : vector<8x128xf32>
    %82 = arith.truncf %81 : vector<8x128xf32> to vector<8x128xbf16>
    %83 = math.tanh %82 : vector<8x128xbf16>
    %84 = arith.mulf %76, %83 : vector<8x128xbf16>
    %c1_30 = arith.constant 1 : index
    %c0_31 = arith.constant 0 : index
    %c0_32 = arith.constant 0 : index
    %85 = vector.load %arg16[%c1_30, %c0_31, %c0_32] : memref<8x8x128xbf16, #tpu.memory_space<vmem>>, vector<1x8x128xbf16>
    %86 = vector.shape_cast %85 : vector<1x8x128xbf16> to vector<8x128xbf16>
    %87 = vector.shape_cast %84 : vector<8x128xbf16> to vector<1x8x128xbf16>
    tpu.vector_store %arg16[%c1_30, %c0_31, %c0_32], %87 {strides = array<i32>} : memref<8x8x128xbf16, #tpu.memory_space<vmem>>, vector<1x8x128xbf16>,
    %cst_33 = arith.constant dense<0.000000e+00> : vector<8x512xf32>
    %88 = tpu.matmul %84, %11, %cst_33 {dimension_numbers = #tpu.dot_dimension_numbers<[1], [0], [0], [1], [0, 0, 1, 1], [], []>} : vector<8x128xbf16>, vector<128x512xbf16>, vector<8x512xf32> -> vector<8x512xf32>
    %c2 = arith.constant 2 : index
    %c0_34 = arith.constant 0 : index
    %c0_35 = arith.constant 0 : index
    %89 = vector.load %arg15[%c2, %c0_34, %c0_35] : memref<8x8x512xbf16, #tpu.memory_space<vmem>>, vector<1x8x512xbf16>
    %90 = vector.shape_cast %89 : vector<1x8x512xbf16> to vector<8x512xbf16>
    %91 = arith.extf %90 : vector<8x512xbf16> to vector<8x512xf32>
    %92 = arith.addf %88, %91 : vector<8x512xf32>
    %93 = arith.truncf %92 : vector<8x512xf32> to vector<8x512xbf16>
    %94 = vector.extract_strided_slice %93 {offsets = [0, 0], sizes = [8, 128], strides = [1, 1]} : vector<8x512xbf16> to vector<8x128xbf16>
    %95 = arith.negf %94 : vector<8x128xbf16>
    %96 = math.exp %95 : vector<8x128xbf16>
    %cst_36 = arith.constant 1.000000e+00 : bf16
    %97 = vector.broadcast %cst_36 : bf16 to vector<8x128xbf16>
    %98 = arith.addf %97, %96 : vector<8x128xbf16>
    %99 = arith.divf %97, %98 : vector<8x128xbf16>
    %100 = vector.extract_strided_slice %93 {offsets = [0, 128], sizes = [8, 128], strides = [1, 1]} : vector<8x512xbf16> to vector<8x128xbf16>
    %101 = arith.negf %100 : vector<8x128xbf16>
    %102 = math.exp %101 : vector<8x128xbf16>
    %cst_37 = arith.constant 1.000000e+00 : bf16
    %103 = vector.broadcast %cst_37 : bf16 to vector<8x128xbf16>
    %104 = arith.addf %103, %102 : vector<8x128xbf16>
    %105 = arith.divf %103, %104 : vector<8x128xbf16>
    %106 = vector.extract_strided_slice %93 {offsets = [0, 256], sizes = [8, 128], strides = [1, 1]} : vector<8x512xbf16> to vector<8x128xbf16>
    %107 = math.tanh %106 : vector<8x128xbf16>
    %108 = vector.extract_strided_slice %93 {offsets = [0, 384], sizes = [8, 128], strides = [1, 1]} : vector<8x512xbf16> to vector<8x128xbf16>
    %109 = arith.negf %108 : vector<8x128xbf16>
    %110 = math.exp %109 : vector<8x128xbf16>
    %cst_38 = arith.constant 1.000000e+00 : bf16
    %111 = vector.broadcast %cst_38 : bf16 to vector<8x128xbf16>
    %112 = arith.addf %111, %110 : vector<8x128xbf16>
    %113 = arith.divf %111, %112 : vector<8x128xbf16>
    %114 = arith.extf %105 : vector<8x128xbf16> to vector<8x128xf32>
    %115 = arith.mulf %114, %81 : vector<8x128xf32>
    %116 = arith.mulf %99, %107 : vector<8x128xbf16>
    %117 = arith.extf %116 : vector<8x128xbf16> to vector<8x128xf32>
    %118 = arith.addf %115, %117 : vector<8x128xf32>
    %119 = arith.truncf %118 : vector<8x128xf32> to vector<8x128xbf16>
    %120 = math.tanh %119 : vector<8x128xbf16>
    %121 = arith.mulf %113, %120 : vector<8x128xbf16>
    %c2_39 = arith.constant 2 : index
    %c0_40 = arith.constant 0 : index
    %c0_41 = arith.constant 0 : index
    %122 = vector.load %arg16[%c2_39, %c0_40, %c0_41] : memref<8x8x128xbf16, #tpu.memory_space<vmem>>, vector<1x8x128xbf16>
    %123 = vector.shape_cast %122 : vector<1x8x128xbf16> to vector<8x128xbf16>
    %124 = vector.shape_cast %121 : vector<8x128xbf16> to vector<1x8x128xbf16>
    tpu.vector_store %arg16[%c2_39, %c0_40, %c0_41], %124 {strides = array<i32>} : memref<8x8x128xbf16, #tpu.memory_space<vmem>>, vector<1x8x128xbf16>,
    %cst_42 = arith.constant dense<0.000000e+00> : vector<8x512xf32>
    %125 = tpu.matmul %121, %11, %cst_42 {dimension_numbers = #tpu.dot_dimension_numbers<[1], [0], [0], [1], [0, 0, 1, 1], [], []>} : vector<8x128xbf16>, vector<128x512xbf16>, vector<8x512xf32> -> vector<8x512xf32>
    %c3 = arith.constant 3 : index
    %c0_43 = arith.constant 0 : index
    %c0_44 = arith.constant 0 : index
    %126 = vector.load %arg15[%c3, %c0_43, %c0_44] : memref<8x8x512xbf16, #tpu.memory_space<vmem>>, vector<1x8x512xbf16>
    %127 = vector.shape_cast %126 : vector<1x8x512xbf16> to vector<8x512xbf16>
    %128 = arith.extf %127 : vector<8x512xbf16> to vector<8x512xf32>
    %129 = arith.addf %125, %128 : vector<8x512xf32>
    %130 = arith.truncf %129 : vector<8x512xf32> to vector<8x512xbf16>
    %131 = vector.extract_strided_slice %130 {offsets = [0, 0], sizes = [8, 128], strides = [1, 1]} : vector<8x512xbf16> to vector<8x128xbf16>
    %132 = arith.negf %131 : vector<8x128xbf16>
    %133 = math.exp %132 : vector<8x128xbf16>
    %cst_45 = arith.constant 1.000000e+00 : bf16
    %134 = vector.broadcast %cst_45 : bf16 to vector<8x128xbf16>
    %135 = arith.addf %134, %133 : vector<8x128xbf16>
    %136 = arith.divf %134, %135 : vector<8x128xbf16>
    %137 = vector.extract_strided_slice %130 {offsets = [0, 128], sizes = [8, 128], strides = [1, 1]} : vector<8x512xbf16> to vector<8x128xbf16>
    %138 = arith.negf %137 : vector<8x128xbf16>
    %139 = math.exp %138 : vector<8x128xbf16>
    %cst_46 = arith.constant 1.000000e+00 : bf16
    %140 = vector.broadcast %cst_46 : bf16 to vector<8x128xbf16>
    %141 = arith.addf %140, %139 : vector<8x128xbf16>
    %142 = arith.divf %140, %141 : vector<8x128xbf16>
    %143 = vector.extract_strided_slice %130 {offsets = [0, 256], sizes = [8, 128], strides = [1, 1]} : vector<8x512xbf16> to vector<8x128xbf16>
    %144 = math.tanh %143 : vector<8x128xbf16>
    %145 = vector.extract_strided_slice %130 {offsets = [0, 384], sizes = [8, 128], strides = [1, 1]} : vector<8x512xbf16> to vector<8x128xbf16>
    %146 = arith.negf %145 : vector<8x128xbf16>
    %147 = math.exp %146 : vector<8x128xbf16>
    %cst_47 = arith.constant 1.000000e+00 : bf16
    %148 = vector.broadcast %cst_47 : bf16 to vector<8x128xbf16>
    %149 = arith.addf %148, %147 : vector<8x128xbf16>
    %150 = arith.divf %148, %149 : vector<8x128xbf16>
    %151 = arith.extf %142 : vector<8x128xbf16> to vector<8x128xf32>
    %152 = arith.mulf %151, %118 : vector<8x128xf32>
    %153 = arith.mulf %136, %144 : vector<8x128xbf16>
    %154 = arith.extf %153 : vector<8x128xbf16> to vector<8x128xf32>
    %155 = arith.addf %152, %154 : vector<8x128xf32>
    %156 = arith.truncf %155 : vector<8x128xf32> to vector<8x128xbf16>
    %157 = math.tanh %156 : vector<8x128xbf16>
    %158 = arith.mulf %150, %157 : vector<8x128xbf16>
    %c3_48 = arith.constant 3 : index
    %c0_49 = arith.constant 0 : index
    %c0_50 = arith.constant 0 : index
    %159 = vector.load %arg16[%c3_48, %c0_49, %c0_50] : memref<8x8x128xbf16, #tpu.memory_space<vmem>>, vector<1x8x128xbf16>
    %160 = vector.shape_cast %159 : vector<1x8x128xbf16> to vector<8x128xbf16>
    %161 = vector.shape_cast %158 : vector<8x128xbf16> to vector<1x8x128xbf16>
    tpu.vector_store %arg16[%c3_48, %c0_49, %c0_50], %161 {strides = array<i32>} : memref<8x8x128xbf16, #tpu.memory_space<vmem>>, vector<1x8x128xbf16>,
    %cst_51 = arith.constant dense<0.000000e+00> : vector<8x512xf32>
    %162 = tpu.matmul %158, %11, %cst_51 {dimension_numbers = #tpu.dot_dimension_numbers<[1], [0], [0], [1], [0, 0, 1, 1], [], []>} : vector<8x128xbf16>, vector<128x512xbf16>, vector<8x512xf32> -> vector<8x512xf32>
    %c4 = arith.constant 4 : index
    %c0_52 = arith.constant 0 : index
    %c0_53 = arith.constant 0 : index
    %163 = vector.load %arg15[%c4, %c0_52, %c0_53] : memref<8x8x512xbf16, #tpu.memory_space<vmem>>, vector<1x8x512xbf16>
    %164 = vector.shape_cast %163 : vector<1x8x512xbf16> to vector<8x512xbf16>
    %165 = arith.extf %164 : vector<8x512xbf16> to vector<8x512xf32>
    %166 = arith.addf %162, %165 : vector<8x512xf32>
    %167 = arith.truncf %166 : vector<8x512xf32> to vector<8x512xbf16>
    %168 = vector.extract_strided_slice %167 {offsets = [0, 0], sizes = [8, 128], strides = [1, 1]} : vector<8x512xbf16> to vector<8x128xbf16>
    %169 = arith.negf %168 : vector<8x128xbf16>
    %170 = math.exp %169 : vector<8x128xbf16>
    %cst_54 = arith.constant 1.000000e+00 : bf16
    %171 = vector.broadcast %cst_54 : bf16 to vector<8x128xbf16>
    %172 = arith.addf %171, %170 : vector<8x128xbf16>
    %173 = arith.divf %171, %172 : vector<8x128xbf16>
    %174 = vector.extract_strided_slice %167 {offsets = [0, 128], sizes = [8, 128], strides = [1, 1]} : vector<8x512xbf16> to vector<8x128xbf16>
    %175 = arith.negf %174 : vector<8x128xbf16>
    %176 = math.exp %175 : vector<8x128xbf16>
    %cst_55 = arith.constant 1.000000e+00 : bf16
    %177 = vector.broadcast %cst_55 : bf16 to vector<8x128xbf16>
    %178 = arith.addf %177, %176 : vector<8x128xbf16>
    %179 = arith.divf %177, %178 : vector<8x128xbf16>
    %180 = vector.extract_strided_slice %167 {offsets = [0, 256], sizes = [8, 128], strides = [1, 1]} : vector<8x512xbf16> to vector<8x128xbf16>
    %181 = math.tanh %180 : vector<8x128xbf16>
    %182 = vector.extract_strided_slice %167 {offsets = [0, 384], sizes = [8, 128], strides = [1, 1]} : vector<8x512xbf16> to vector<8x128xbf16>
    %183 = arith.negf %182 : vector<8x128xbf16>
    %184 = math.exp %183 : vector<8x128xbf16>
    %cst_56 = arith.constant 1.000000e+00 : bf16
    %185 = vector.broadcast %cst_56 : bf16 to vector<8x128xbf16>
    %186 = arith.addf %185, %184 : vector<8x128xbf16>
    %187 = arith.divf %185, %186 : vector<8x128xbf16>
    %188 = arith.extf %179 : vector<8x128xbf16> to vector<8x128xf32>
    %189 = arith.mulf %188, %155 : vector<8x128xf32>
    %190 = arith.mulf %173, %181 : vector<8x128xbf16>
    %191 = arith.extf %190 : vector<8x128xbf16> to vector<8x128xf32>
    %192 = arith.addf %189, %191 : vector<8x128xf32>
    %193 = arith.truncf %192 : vector<8x128xf32> to vector<8x128xbf16>
    %194 = math.tanh %193 : vector<8x128xbf16>
    %195 = arith.mulf %187, %194 : vector<8x128xbf16>
    %c4_57 = arith.constant 4 : index
    %c0_58 = arith.constant 0 : index
    %c0_59 = arith.constant 0 : index
    %196 = vector.load %arg16[%c4_57, %c0_58, %c0_59] : memref<8x8x128xbf16, #tpu.memory_space<vmem>>, vector<1x8x128xbf16>
    %197 = vector.shape_cast %196 : vector<1x8x128xbf16> to vector<8x128xbf16>
    %198 = vector.shape_cast %195 : vector<8x128xbf16> to vector<1x8x128xbf16>
    tpu.vector_store %arg16[%c4_57, %c0_58, %c0_59], %198 {strides = array<i32>} : memref<8x8x128xbf16, #tpu.memory_space<vmem>>, vector<1x8x128xbf16>,
    %cst_60 = arith.constant dense<0.000000e+00> : vector<8x512xf32>
    %199 = tpu.matmul %195, %11, %cst_60 {dimension_numbers = #tpu.dot_dimension_numbers<[1], [0], [0], [1], [0, 0, 1, 1], [], []>} : vector<8x128xbf16>, vector<128x512xbf16>, vector<8x512xf32> -> vector<8x512xf32>
    %c5 = arith.constant 5 : index
    %c0_61 = arith.constant 0 : index
    %c0_62 = arith.constant 0 : index
    %200 = vector.load %arg15[%c5, %c0_61, %c0_62] : memref<8x8x512xbf16, #tpu.memory_space<vmem>>, vector<1x8x512xbf16>
    %201 = vector.shape_cast %200 : vector<1x8x512xbf16> to vector<8x512xbf16>
    %202 = arith.extf %201 : vector<8x512xbf16> to vector<8x512xf32>
    %203 = arith.addf %199, %202 : vector<8x512xf32>
    %204 = arith.truncf %203 : vector<8x512xf32> to vector<8x512xbf16>
    %205 = vector.extract_strided_slice %204 {offsets = [0, 0], sizes = [8, 128], strides = [1, 1]} : vector<8x512xbf16> to vector<8x128xbf16>
    %206 = arith.negf %205 : vector<8x128xbf16>
    %207 = math.exp %206 : vector<8x128xbf16>
    %cst_63 = arith.constant 1.000000e+00 : bf16
    %208 = vector.broadcast %cst_63 : bf16 to vector<8x128xbf16>
    %209 = arith.addf %208, %207 : vector<8x128xbf16>
    %210 = arith.divf %208, %209 : vector<8x128xbf16>
    %211 = vector.extract_strided_slice %204 {offsets = [0, 128], sizes = [8, 128], strides = [1, 1]} : vector<8x512xbf16> to vector<8x128xbf16>
    %212 = arith.negf %211 : vector<8x128xbf16>
    %213 = math.exp %212 : vector<8x128xbf16>
    %cst_64 = arith.constant 1.000000e+00 : bf16
    %214 = vector.broadcast %cst_64 : bf16 to vector<8x128xbf16>
    %215 = arith.addf %214, %213 : vector<8x128xbf16>
    %216 = arith.divf %214, %215 : vector<8x128xbf16>
    %217 = vector.extract_strided_slice %204 {offsets = [0, 256], sizes = [8, 128], strides = [1, 1]} : vector<8x512xbf16> to vector<8x128xbf16>
    %218 = math.tanh %217 : vector<8x128xbf16>
    %219 = vector.extract_strided_slice %204 {offsets = [0, 384], sizes = [8, 128], strides = [1, 1]} : vector<8x512xbf16> to vector<8x128xbf16>
    %220 = arith.negf %219 : vector<8x128xbf16>
    %221 = math.exp %220 : vector<8x128xbf16>
    %cst_65 = arith.constant 1.000000e+00 : bf16
    %222 = vector.broadcast %cst_65 : bf16 to vector<8x128xbf16>
    %223 = arith.addf %222, %221 : vector<8x128xbf16>
    %224 = arith.divf %222, %223 : vector<8x128xbf16>
    %225 = arith.extf %216 : vector<8x128xbf16> to vector<8x128xf32>
    %226 = arith.mulf %225, %192 : vector<8x128xf32>
    %227 = arith.mulf %210, %218 : vector<8x128xbf16>
    %228 = arith.extf %227 : vector<8x128xbf16> to vector<8x128xf32>
    %229 = arith.addf %226, %228 : vector<8x128xf32>
    %230 = arith.truncf %229 : vector<8x128xf32> to vector<8x128xbf16>
    %231 = math.tanh %230 : vector<8x128xbf16>
    %232 = arith.mulf %224, %231 : vector<8x128xbf16>
    %c5_66 = arith.constant 5 : index
    %c0_67 = arith.constant 0 : index
    %c0_68 = arith.constant 0 : index
    %233 = vector.load %arg16[%c5_66, %c0_67, %c0_68] : memref<8x8x128xbf16, #tpu.memory_space<vmem>>, vector<1x8x128xbf16>
    %234 = vector.shape_cast %233 : vector<1x8x128xbf16> to vector<8x128xbf16>
    %235 = vector.shape_cast %232 : vector<8x128xbf16> to vector<1x8x128xbf16>
    tpu.vector_store %arg16[%c5_66, %c0_67, %c0_68], %235 {strides = array<i32>} : memref<8x8x128xbf16, #tpu.memory_space<vmem>>, vector<1x8x128xbf16>,
    %cst_69 = arith.constant dense<0.000000e+00> : vector<8x512xf32>
    %236 = tpu.matmul %232, %11, %cst_69 {dimension_numbers = #tpu.dot_dimension_numbers<[1], [0], [0], [1], [0, 0, 1, 1], [], []>} : vector<8x128xbf16>, vector<128x512xbf16>, vector<8x512xf32> -> vector<8x512xf32>
    %c6 = arith.constant 6 : index
    %c0_70 = arith.constant 0 : index
    %c0_71 = arith.constant 0 : index
    %237 = vector.load %arg15[%c6, %c0_70, %c0_71] : memref<8x8x512xbf16, #tpu.memory_space<vmem>>, vector<1x8x512xbf16>
    %238 = vector.shape_cast %237 : vector<1x8x512xbf16> to vector<8x512xbf16>
    %239 = arith.extf %238 : vector<8x512xbf16> to vector<8x512xf32>
    %240 = arith.addf %236, %239 : vector<8x512xf32>
    %241 = arith.truncf %240 : vector<8x512xf32> to vector<8x512xbf16>
    %242 = vector.extract_strided_slice %241 {offsets = [0, 0], sizes = [8, 128], strides = [1, 1]} : vector<8x512xbf16> to vector<8x128xbf16>
    %243 = arith.negf %242 : vector<8x128xbf16>
    %244 = math.exp %243 : vector<8x128xbf16>
    %cst_72 = arith.constant 1.000000e+00 : bf16
    %245 = vector.broadcast %cst_72 : bf16 to vector<8x128xbf16>
    %246 = arith.addf %245, %244 : vector<8x128xbf16>
    %247 = arith.divf %245, %246 : vector<8x128xbf16>
    %248 = vector.extract_strided_slice %241 {offsets = [0, 128], sizes = [8, 128], strides = [1, 1]} : vector<8x512xbf16> to vector<8x128xbf16>
    %249 = arith.negf %248 : vector<8x128xbf16>
    %250 = math.exp %249 : vector<8x128xbf16>
    %cst_73 = arith.constant 1.000000e+00 : bf16
    %251 = vector.broadcast %cst_73 : bf16 to vector<8x128xbf16>
    %252 = arith.addf %251, %250 : vector<8x128xbf16>
    %253 = arith.divf %251, %252 : vector<8x128xbf16>
    %254 = vector.extract_strided_slice %241 {offsets = [0, 256], sizes = [8, 128], strides = [1, 1]} : vector<8x512xbf16> to vector<8x128xbf16>
    %255 = math.tanh %254 : vector<8x128xbf16>
    %256 = vector.extract_strided_slice %241 {offsets = [0, 384], sizes = [8, 128], strides = [1, 1]} : vector<8x512xbf16> to vector<8x128xbf16>
    %257 = arith.negf %256 : vector<8x128xbf16>
    %258 = math.exp %257 : vector<8x128xbf16>
    %cst_74 = arith.constant 1.000000e+00 : bf16
    %259 = vector.broadcast %cst_74 : bf16 to vector<8x128xbf16>
    %260 = arith.addf %259, %258 : vector<8x128xbf16>
    %261 = arith.divf %259, %260 : vector<8x128xbf16>
    %262 = arith.extf %253 : vector<8x128xbf16> to vector<8x128xf32>
    %263 = arith.mulf %262, %229 : vector<8x128xf32>
    %264 = arith.mulf %247, %255 : vector<8x128xbf16>
    %265 = arith.extf %264 : vector<8x128xbf16> to vector<8x128xf32>
    %266 = arith.addf %263, %265 : vector<8x128xf32>
    %267 = arith.truncf %266 : vector<8x128xf32> to vector<8x128xbf16>
    %268 = math.tanh %267 : vector<8x128xbf16>
    %269 = arith.mulf %261, %268 : vector<8x128xbf16>
    %c6_75 = arith.constant 6 : index
    %c0_76 = arith.constant 0 : index
    %c0_77 = arith.constant 0 : index
    %270 = vector.load %arg16[%c6_75, %c0_76, %c0_77] : memref<8x8x128xbf16, #tpu.memory_space<vmem>>, vector<1x8x128xbf16>
    %271 = vector.shape_cast %270 : vector<1x8x128xbf16> to vector<8x128xbf16>
    %272 = vector.shape_cast %269 : vector<8x128xbf16> to vector<1x8x128xbf16>
    tpu.vector_store %arg16[%c6_75, %c0_76, %c0_77], %272 {strides = array<i32>} : memref<8x8x128xbf16, #tpu.memory_space<vmem>>, vector<1x8x128xbf16>,
    %cst_78 = arith.constant dense<0.000000e+00> : vector<8x512xf32>
    %273 = tpu.matmul %269, %11, %cst_78 {dimension_numbers = #tpu.dot_dimension_numbers<[1], [0], [0], [1], [0, 0, 1, 1], [], []>} : vector<8x128xbf16>, vector<128x512xbf16>, vector<8x512xf32> -> vector<8x512xf32>
    %c7 = arith.constant 7 : index
    %c0_79 = arith.constant 0 : index
    %c0_80 = arith.constant 0 : index
    %274 = vector.load %arg15[%c7, %c0_79, %c0_80] : memref<8x8x512xbf16, #tpu.memory_space<vmem>>, vector<1x8x512xbf16>
    %275 = vector.shape_cast %274 : vector<1x8x512xbf16> to vector<8x512xbf16>
    %276 = arith.extf %275 : vector<8x512xbf16> to vector<8x512xf32>
    %277 = arith.addf %273, %276 : vector<8x512xf32>
    %278 = arith.truncf %277 : vector<8x512xf32> to vector<8x512xbf16>
    %279 = vector.extract_strided_slice %278 {offsets = [0, 0], sizes = [8, 128], strides = [1, 1]} : vector<8x512xbf16> to vector<8x128xbf16>
    %280 = arith.negf %279 : vector<8x128xbf16>
    %281 = math.exp %280 : vector<8x128xbf16>
    %cst_81 = arith.constant 1.000000e+00 : bf16
    %282 = vector.broadcast %cst_81 : bf16 to vector<8x128xbf16>
    %283 = arith.addf %282, %281 : vector<8x128xbf16>
    %284 = arith.divf %282, %283 : vector<8x128xbf16>
    %285 = vector.extract_strided_slice %278 {offsets = [0, 128], sizes = [8, 128], strides = [1, 1]} : vector<8x512xbf16> to vector<8x128xbf16>
    %286 = arith.negf %285 : vector<8x128xbf16>
    %287 = math.exp %286 : vector<8x128xbf16>
    %cst_82 = arith.constant 1.000000e+00 : bf16
    %288 = vector.broadcast %cst_82 : bf16 to vector<8x128xbf16>
    %289 = arith.addf %288, %287 : vector<8x128xbf16>
    %290 = arith.divf %288, %289 : vector<8x128xbf16>
    %291 = vector.extract_strided_slice %278 {offsets = [0, 256], sizes = [8, 128], strides = [1, 1]} : vector<8x512xbf16> to vector<8x128xbf16>
    %292 = math.tanh %291 : vector<8x128xbf16>
    %293 = vector.extract_strided_slice %278 {offsets = [0, 384], sizes = [8, 128], strides = [1, 1]} : vector<8x512xbf16> to vector<8x128xbf16>
    %294 = arith.negf %293 : vector<8x128xbf16>
    %295 = math.exp %294 : vector<8x128xbf16>
    %cst_83 = arith.constant 1.000000e+00 : bf16
    %296 = vector.broadcast %cst_83 : bf16 to vector<8x128xbf16>
    %297 = arith.addf %296, %295 : vector<8x128xbf16>
    %298 = arith.divf %296, %297 : vector<8x128xbf16>
    %299 = arith.extf %290 : vector<8x128xbf16> to vector<8x128xf32>
    %300 = arith.mulf %299, %266 : vector<8x128xf32>
    %301 = arith.mulf %284, %292 : vector<8x128xbf16>
    %302 = arith.extf %301 : vector<8x128xbf16> to vector<8x128xf32>
    %303 = arith.addf %300, %302 : vector<8x128xf32>
    %304 = arith.truncf %303 : vector<8x128xf32> to vector<8x128xbf16>
    %305 = math.tanh %304 : vector<8x128xbf16>
    %306 = arith.mulf %298, %305 : vector<8x128xbf16>
    %c7_84 = arith.constant 7 : index
    %c0_85 = arith.constant 0 : index
    %c0_86 = arith.constant 0 : index
    %307 = vector.load %arg16[%c7_84, %c0_85, %c0_86] : memref<8x8x128xbf16, #tpu.memory_space<vmem>>, vector<1x8x128xbf16>
    %308 = vector.shape_cast %307 : vector<1x8x128xbf16> to vector<8x128xbf16>
    %309 = vector.shape_cast %306 : vector<8x128xbf16> to vector<1x8x128xbf16>
    tpu.vector_store %arg16[%c7_84, %c0_85, %c0_86], %309 {strides = array<i32>} : memref<8x8x128xbf16, #tpu.memory_space<vmem>>, vector<1x8x128xbf16>,
    %c0_87 = arith.constant 0 : index
    %c0_88 = arith.constant 0 : index
    %c0_89 = arith.constant 0 : index
    %310 = vector.load %arg16[%c0_87, %c0_88, %c0_89] : memref<8x8x128xbf16, #tpu.memory_space<vmem>>, vector<8x8x128xbf16>
    %311 = vector.shape_cast %310 : vector<8x8x128xbf16> to vector<64x128xbf16>
    %c0_90 = arith.constant 0 : index
    %c0_91 = arith.constant 0 : index
    %312 = vector.load %arg5[%c0_90, %c0_91] : memref<128x512xbf16, #tpu.memory_space<vmem>>, vector<128x512xbf16>
    %cst_92 = arith.constant dense<0.000000e+00> : vector<64x512xf32>
    %313 = tpu.matmul %311, %312, %cst_92 {dimension_numbers = #tpu.dot_dimension_numbers<[1], [0], [0], [1], [0, 0, 1, 1], [], []>} : vector<64x128xbf16>, vector<128x512xbf16>, vector<64x512xf32> -> vector<64x512xf32>
    %c0_93 = arith.constant 0 : index
    %c0_94 = arith.constant 0 : index
    %314 = vector.load %arg7[%c0_93, %c0_94] : memref<1x512xf32, #tpu.memory_space<vmem>>, vector<1x512xf32>
    %315 = vector.broadcast %314 : vector<1x512xf32> to vector<64x512xf32>
    %316 = arith.addf %313, %315 : vector<64x512xf32>
    %317 = vector.shape_cast %316 : vector<64x512xf32> to vector<8x8x512xf32>
    %318 = arith.truncf %317 : vector<8x8x512xf32> to vector<8x8x512xbf16>
    %c0_95 = arith.constant 0 : index
    %c0_96 = arith.constant 0 : index
    %c0_97 = arith.constant 0 : index
    %319 = vector.load %arg15[%c0_95, %c0_96, %c0_97] : memref<8x8x512xbf16, #tpu.memory_space<vmem>>, vector<8x8x512xbf16>
    tpu.vector_store %arg15[%c0_95, %c0_96, %c0_97], %318 {strides = array<i32>} : memref<8x8x512xbf16, #tpu.memory_space<vmem>>, vector<8x8x512xbf16>,
    %c0_98 = arith.constant 0 : index
    %c0_99 = arith.constant 0 : index
    %320 = vector.load %arg6[%c0_98, %c0_99] : memref<128x512xbf16, #tpu.memory_space<vmem>>, vector<128x512xbf16>
    %cst_100 = arith.constant 0.000000e+00 : bf16
    %321 = vector.broadcast %cst_100 : bf16 to vector<8x128xbf16>
    %cst_101 = arith.constant 0.000000e+00 : f32
    %322 = vector.broadcast %cst_101 : f32 to vector<8x128xf32>
    %cst_102 = arith.constant dense<0.000000e+00> : vector<8x512xf32>
    %323 = tpu.matmul %321, %320, %cst_102 {dimension_numbers = #tpu.dot_dimension_numbers<[1], [0], [0], [1], [0, 0, 1, 1], [], []>} : vector<8x128xbf16>, vector<128x512xbf16>, vector<8x512xf32> -> vector<8x512xf32>
    %c0_103 = arith.constant 0 : index
    %c0_104 = arith.constant 0 : index
    %c0_105 = arith.constant 0 : index
    %324 = vector.load %arg15[%c0_103, %c0_104, %c0_105] : memref<8x8x512xbf16, #tpu.memory_space<vmem>>, vector<1x8x512xbf16>
    %325 = vector.shape_cast %324 : vector<1x8x512xbf16> to vector<8x512xbf16>
    %326 = arith.extf %325 : vector<8x512xbf16> to vector<8x512xf32>
    %327 = arith.addf %323, %326 : vector<8x512xf32>
    %328 = arith.truncf %327 : vector<8x512xf32> to vector<8x512xbf16>
    %329 = vector.extract_strided_slice %328 {offsets = [0, 0], sizes = [8, 128], strides = [1, 1]} : vector<8x512xbf16> to vector<8x128xbf16>
    %330 = arith.negf %329 : vector<8x128xbf16>
    %331 = math.exp %330 : vector<8x128xbf16>
    %cst_106 = arith.constant 1.000000e+00 : bf16
    %332 = vector.broadcast %cst_106 : bf16 to vector<8x128xbf16>
    %333 = arith.addf %332, %331 : vector<8x128xbf16>
    %334 = arith.divf %332, %333 : vector<8x128xbf16>
    %335 = vector.extract_strided_slice %328 {offsets = [0, 128], sizes = [8, 128], strides = [1, 1]} : vector<8x512xbf16> to vector<8x128xbf16>
    %336 = arith.negf %335 : vector<8x128xbf16>
    %337 = math.exp %336 : vector<8x128xbf16>
    %cst_107 = arith.constant 1.000000e+00 : bf16
    %338 = vector.broadcast %cst_107 : bf16 to vector<8x128xbf16>
    %339 = arith.addf %338, %337 : vector<8x128xbf16>
    %340 = arith.divf %338, %339 : vector<8x128xbf16>
    %341 = vector.extract_strided_slice %328 {offsets = [0, 256], sizes = [8, 128], strides = [1, 1]} : vector<8x512xbf16> to vector<8x128xbf16>
    %342 = math.tanh %341 : vector<8x128xbf16>
    %343 = vector.extract_strided_slice %328 {offsets = [0, 384], sizes = [8, 128], strides = [1, 1]} : vector<8x512xbf16> to vector<8x128xbf16>
    %344 = arith.negf %343 : vector<8x128xbf16>
    %345 = math.exp %344 : vector<8x128xbf16>
    %cst_108 = arith.constant 1.000000e+00 : bf16
    %346 = vector.broadcast %cst_108 : bf16 to vector<8x128xbf16>
    %347 = arith.addf %346, %345 : vector<8x128xbf16>
    %348 = arith.divf %346, %347 : vector<8x128xbf16>
    %349 = arith.extf %340 : vector<8x128xbf16> to vector<8x128xf32>
    %350 = arith.mulf %349, %322 : vector<8x128xf32>
    %351 = arith.mulf %334, %342 : vector<8x128xbf16>
    %352 = arith.extf %351 : vector<8x128xbf16> to vector<8x128xf32>
    %353 = arith.addf %350, %352 : vector<8x128xf32>
    %354 = arith.truncf %353 : vector<8x128xf32> to vector<8x128xbf16>
    %355 = math.tanh %354 : vector<8x128xbf16>
    %356 = arith.mulf %348, %355 : vector<8x128xbf16>
    %cst_109 = arith.constant 0.000000e+00 : bf16
    %357 = vector.broadcast %cst_109 : bf16 to vector<8x128xbf16>
    %358 = arith.maximumf %356, %357 : vector<8x128xbf16>
    %c0_110 = arith.constant 0 : index
    %c0_111 = arith.constant 0 : index
    %c0_112 = arith.constant 0 : index
    %359 = vector.load %arg8[%c0_110, %c0_111, %c0_112] : memref<8x128x128xbf16, #tpu.memory_space<vmem>>, vector<1x128x128xbf16>
    %360 = vector.shape_cast %359 : vector<1x128x128xbf16> to vector<128x128xbf16>
    %cst_113 = arith.constant dense<0.000000e+00> : vector<8x128xf32>
    %361 = tpu.matmul %358, %360, %cst_113 {dimension_numbers = #tpu.dot_dimension_numbers<[1], [0], [0], [1], [0, 0, 1, 1], [], []>} : vector<8x128xbf16>, vector<128x128xbf16>, vector<8x128xf32> -> vector<8x128xf32>
    %362 = arith.addf %0, %361 : vector<8x128xf32>
    %cst_114 = arith.constant dense<0.000000e+00> : vector<8x512xf32>
    %363 = tpu.matmul %356, %320, %cst_114 {dimension_numbers = #tpu.dot_dimension_numbers<[1], [0], [0], [1], [0, 0, 1, 1], [], []>} : vector<8x128xbf16>, vector<128x512xbf16>, vector<8x512xf32> -> vector<8x512xf32>
    %c1_115 = arith.constant 1 : index
    %c0_116 = arith.constant 0 : index
    %c0_117 = arith.constant 0 : index
    %364 = vector.load %arg15[%c1_115, %c0_116, %c0_117] : memref<8x8x512xbf16, #tpu.memory_space<vmem>>, vector<1x8x512xbf16>
    %365 = vector.shape_cast %364 : vector<1x8x512xbf16> to vector<8x512xbf16>
    %366 = arith.extf %365 : vector<8x512xbf16> to vector<8x512xf32>
    %367 = arith.addf %363, %366 : vector<8x512xf32>
    %368 = arith.truncf %367 : vector<8x512xf32> to vector<8x512xbf16>
    %369 = vector.extract_strided_slice %368 {offsets = [0, 0], sizes = [8, 128], strides = [1, 1]} : vector<8x512xbf16> to vector<8x128xbf16>
    %370 = arith.negf %369 : vector<8x128xbf16>
    %371 = math.exp %370 : vector<8x128xbf16>
    %cst_118 = arith.constant 1.000000e+00 : bf16
    %372 = vector.broadcast %cst_118 : bf16 to vector<8x128xbf16>
    %373 = arith.addf %372, %371 : vector<8x128xbf16>
    %374 = arith.divf %372, %373 : vector<8x128xbf16>
    %375 = vector.extract_strided_slice %368 {offsets = [0, 128], sizes = [8, 128], strides = [1, 1]} : vector<8x512xbf16> to vector<8x128xbf16>
    %376 = arith.negf %375 : vector<8x128xbf16>
    %377 = math.exp %376 : vector<8x128xbf16>
    %cst_119 = arith.constant 1.000000e+00 : bf16
    %378 = vector.broadcast %cst_119 : bf16 to vector<8x128xbf16>
    %379 = arith.addf %378, %377 : vector<8x128xbf16>
    %380 = arith.divf %378, %379 : vector<8x128xbf16>
    %381 = vector.extract_strided_slice %368 {offsets = [0, 256], sizes = [8, 128], strides = [1, 1]} : vector<8x512xbf16> to vector<8x128xbf16>
    %382 = math.tanh %381 : vector<8x128xbf16>
    %383 = vector.extract_strided_slice %368 {offsets = [0, 384], sizes = [8, 128], strides = [1, 1]} : vector<8x512xbf16> to vector<8x128xbf16>
    %384 = arith.negf %383 : vector<8x128xbf16>
    %385 = math.exp %384 : vector<8x128xbf16>
    %cst_120 = arith.constant 1.000000e+00 : bf16
    %386 = vector.broadcast %cst_120 : bf16 to vector<8x128xbf16>
    %387 = arith.addf %386, %385 : vector<8x128xbf16>
    %388 = arith.divf %386, %387 : vector<8x128xbf16>
    %389 = arith.extf %380 : vector<8x128xbf16> to vector<8x128xf32>
    %390 = arith.mulf %389, %353 : vector<8x128xf32>
    %391 = arith.mulf %374, %382 : vector<8x128xbf16>
    %392 = arith.extf %391 : vector<8x128xbf16> to vector<8x128xf32>
    %393 = arith.addf %390, %392 : vector<8x128xf32>
    %394 = arith.truncf %393 : vector<8x128xf32> to vector<8x128xbf16>
    %395 = math.tanh %394 : vector<8x128xbf16>
    %396 = arith.mulf %388, %395 : vector<8x128xbf16>
    %cst_121 = arith.constant 0.000000e+00 : bf16
    %397 = vector.broadcast %cst_121 : bf16 to vector<8x128xbf16>
    %398 = arith.maximumf %396, %397 : vector<8x128xbf16>
    %c1_122 = arith.constant 1 : index
    %c0_123 = arith.constant 0 : index
    %c0_124 = arith.constant 0 : index
    %399 = vector.load %arg8[%c1_122, %c0_123, %c0_124] : memref<8x128x128xbf16, #tpu.memory_space<vmem>>, vector<1x128x128xbf16>
    %400 = vector.shape_cast %399 : vector<1x128x128xbf16> to vector<128x128xbf16>
    %cst_125 = arith.constant dense<0.000000e+00> : vector<8x128xf32>
    %401 = tpu.matmul %398, %400, %cst_125 {dimension_numbers = #tpu.dot_dimension_numbers<[1], [0], [0], [1], [0, 0, 1, 1], [], []>} : vector<8x128xbf16>, vector<128x128xbf16>, vector<8x128xf32> -> vector<8x128xf32>
    %402 = arith.addf %362, %401 : vector<8x128xf32>
    %cst_126 = arith.constant dense<0.000000e+00> : vector<8x512xf32>
    %403 = tpu.matmul %396, %320, %cst_126 {dimension_numbers = #tpu.dot_dimension_numbers<[1], [0], [0], [1], [0, 0, 1, 1], [], []>} : vector<8x128xbf16>, vector<128x512xbf16>, vector<8x512xf32> -> vector<8x512xf32>
    %c2_127 = arith.constant 2 : index
    %c0_128 = arith.constant 0 : index
    %c0_129 = arith.constant 0 : index
    %404 = vector.load %arg15[%c2_127, %c0_128, %c0_129] : memref<8x8x512xbf16, #tpu.memory_space<vmem>>, vector<1x8x512xbf16>
    %405 = vector.shape_cast %404 : vector<1x8x512xbf16> to vector<8x512xbf16>
    %406 = arith.extf %405 : vector<8x512xbf16> to vector<8x512xf32>
    %407 = arith.addf %403, %406 : vector<8x512xf32>
    %408 = arith.truncf %407 : vector<8x512xf32> to vector<8x512xbf16>
    %409 = vector.extract_strided_slice %408 {offsets = [0, 0], sizes = [8, 128], strides = [1, 1]} : vector<8x512xbf16> to vector<8x128xbf16>
    %410 = arith.negf %409 : vector<8x128xbf16>
    %411 = math.exp %410 : vector<8x128xbf16>
    %cst_130 = arith.constant 1.000000e+00 : bf16
    %412 = vector.broadcast %cst_130 : bf16 to vector<8x128xbf16>
    %413 = arith.addf %412, %411 : vector<8x128xbf16>
    %414 = arith.divf %412, %413 : vector<8x128xbf16>
    %415 = vector.extract_strided_slice %408 {offsets = [0, 128], sizes = [8, 128], strides = [1, 1]} : vector<8x512xbf16> to vector<8x128xbf16>
    %416 = arith.negf %415 : vector<8x128xbf16>
    %417 = math.exp %416 : vector<8x128xbf16>
    %cst_131 = arith.constant 1.000000e+00 : bf16
    %418 = vector.broadcast %cst_131 : bf16 to vector<8x128xbf16>
    %419 = arith.addf %418, %417 : vector<8x128xbf16>
    %420 = arith.divf %418, %419 : vector<8x128xbf16>
    %421 = vector.extract_strided_slice %408 {offsets = [0, 256], sizes = [8, 128], strides = [1, 1]} : vector<8x512xbf16> to vector<8x128xbf16>
    %422 = math.tanh %421 : vector<8x128xbf16>
    %423 = vector.extract_strided_slice %408 {offsets = [0, 384], sizes = [8, 128], strides = [1, 1]} : vector<8x512xbf16> to vector<8x128xbf16>
    %424 = arith.negf %423 : vector<8x128xbf16>
    %425 = math.exp %424 : vector<8x128xbf16>
    %cst_132 = arith.constant 1.000000e+00 : bf16
    %426 = vector.broadcast %cst_132 : bf16 to vector<8x128xbf16>
    %427 = arith.addf %426, %425 : vector<8x128xbf16>
    %428 = arith.divf %426, %427 : vector<8x128xbf16>
    %429 = arith.extf %420 : vector<8x128xbf16> to vector<8x128xf32>
    %430 = arith.mulf %429, %393 : vector<8x128xf32>
    %431 = arith.mulf %414, %422 : vector<8x128xbf16>
    %432 = arith.extf %431 : vector<8x128xbf16> to vector<8x128xf32>
    %433 = arith.addf %430, %432 : vector<8x128xf32>
    %434 = arith.truncf %433 : vector<8x128xf32> to vector<8x128xbf16>
    %435 = math.tanh %434 : vector<8x128xbf16>
    %436 = arith.mulf %428, %435 : vector<8x128xbf16>
    %cst_133 = arith.constant 0.000000e+00 : bf16
    %437 = vector.broadcast %cst_133 : bf16 to vector<8x128xbf16>
    %438 = arith.maximumf %436, %437 : vector<8x128xbf16>
    %c2_134 = arith.constant 2 : index
    %c0_135 = arith.constant 0 : index
    %c0_136 = arith.constant 0 : index
    %439 = vector.load %arg8[%c2_134, %c0_135, %c0_136] : memref<8x128x128xbf16, #tpu.memory_space<vmem>>, vector<1x128x128xbf16>
    %440 = vector.shape_cast %439 : vector<1x128x128xbf16> to vector<128x128xbf16>
    %cst_137 = arith.constant dense<0.000000e+00> : vector<8x128xf32>
    %441 = tpu.matmul %438, %440, %cst_137 {dimension_numbers = #tpu.dot_dimension_numbers<[1], [0], [0], [1], [0, 0, 1, 1], [], []>} : vector<8x128xbf16>, vector<128x128xbf16>, vector<8x128xf32> -> vector<8x128xf32>
    %442 = arith.addf %402, %441 : vector<8x128xf32>
    %cst_138 = arith.constant dense<0.000000e+00> : vector<8x512xf32>
    %443 = tpu.matmul %436, %320, %cst_138 {dimension_numbers = #tpu.dot_dimension_numbers<[1], [0], [0], [1], [0, 0, 1, 1], [], []>} : vector<8x128xbf16>, vector<128x512xbf16>, vector<8x512xf32> -> vector<8x512xf32>
    %c3_139 = arith.constant 3 : index
    %c0_140 = arith.constant 0 : index
    %c0_141 = arith.constant 0 : index
    %444 = vector.load %arg15[%c3_139, %c0_140, %c0_141] : memref<8x8x512xbf16, #tpu.memory_space<vmem>>, vector<1x8x512xbf16>
    %445 = vector.shape_cast %444 : vector<1x8x512xbf16> to vector<8x512xbf16>
    %446 = arith.extf %445 : vector<8x512xbf16> to vector<8x512xf32>
    %447 = arith.addf %443, %446 : vector<8x512xf32>
    %448 = arith.truncf %447 : vector<8x512xf32> to vector<8x512xbf16>
    %449 = vector.extract_strided_slice %448 {offsets = [0, 0], sizes = [8, 128], strides = [1, 1]} : vector<8x512xbf16> to vector<8x128xbf16>
    %450 = arith.negf %449 : vector<8x128xbf16>
    %451 = math.exp %450 : vector<8x128xbf16>
    %cst_142 = arith.constant 1.000000e+00 : bf16
    %452 = vector.broadcast %cst_142 : bf16 to vector<8x128xbf16>
    %453 = arith.addf %452, %451 : vector<8x128xbf16>
    %454 = arith.divf %452, %453 : vector<8x128xbf16>
    %455 = vector.extract_strided_slice %448 {offsets = [0, 128], sizes = [8, 128], strides = [1, 1]} : vector<8x512xbf16> to vector<8x128xbf16>
    %456 = arith.negf %455 : vector<8x128xbf16>
    %457 = math.exp %456 : vector<8x128xbf16>
    %cst_143 = arith.constant 1.000000e+00 : bf16
    %458 = vector.broadcast %cst_143 : bf16 to vector<8x128xbf16>
    %459 = arith.addf %458, %457 : vector<8x128xbf16>
    %460 = arith.divf %458, %459 : vector<8x128xbf16>
    %461 = vector.extract_strided_slice %448 {offsets = [0, 256], sizes = [8, 128], strides = [1, 1]} : vector<8x512xbf16> to vector<8x128xbf16>
    %462 = math.tanh %461 : vector<8x128xbf16>
    %463 = vector.extract_strided_slice %448 {offsets = [0, 384], sizes = [8, 128], strides = [1, 1]} : vector<8x512xbf16> to vector<8x128xbf16>
    %464 = arith.negf %463 : vector<8x128xbf16>
    %465 = math.exp %464 : vector<8x128xbf16>
    %cst_144 = arith.constant 1.000000e+00 : bf16
    %466 = vector.broadcast %cst_144 : bf16 to vector<8x128xbf16>
    %467 = arith.addf %466, %465 : vector<8x128xbf16>
    %468 = arith.divf %466, %467 : vector<8x128xbf16>
    %469 = arith.extf %460 : vector<8x128xbf16> to vector<8x128xf32>
    %470 = arith.mulf %469, %433 : vector<8x128xf32>
    %471 = arith.mulf %454, %462 : vector<8x128xbf16>
    %472 = arith.extf %471 : vector<8x128xbf16> to vector<8x128xf32>
    %473 = arith.addf %470, %472 : vector<8x128xf32>
    %474 = arith.truncf %473 : vector<8x128xf32> to vector<8x128xbf16>
    %475 = math.tanh %474 : vector<8x128xbf16>
    %476 = arith.mulf %468, %475 : vector<8x128xbf16>
    %cst_145 = arith.constant 0.000000e+00 : bf16
    %477 = vector.broadcast %cst_145 : bf16 to vector<8x128xbf16>
    %478 = arith.maximumf %476, %477 : vector<8x128xbf16>
    %c3_146 = arith.constant 3 : index
    %c0_147 = arith.constant 0 : index
    %c0_148 = arith.constant 0 : index
    %479 = vector.load %arg8[%c3_146, %c0_147, %c0_148] : memref<8x128x128xbf16, #tpu.memory_space<vmem>>, vector<1x128x128xbf16>
    %480 = vector.shape_cast %479 : vector<1x128x128xbf16> to vector<128x128xbf16>
    %cst_149 = arith.constant dense<0.000000e+00> : vector<8x128xf32>
    %481 = tpu.matmul %478, %480, %cst_149 {dimension_numbers = #tpu.dot_dimension_numbers<[1], [0], [0], [1], [0, 0, 1, 1], [], []>} : vector<8x128xbf16>, vector<128x128xbf16>, vector<8x128xf32> -> vector<8x128xf32>
    %482 = arith.addf %442, %481 : vector<8x128xf32>
    %cst_150 = arith.constant dense<0.000000e+00> : vector<8x512xf32>
    %483 = tpu.matmul %476, %320, %cst_150 {dimension_numbers = #tpu.dot_dimension_numbers<[1], [0], [0], [1], [0, 0, 1, 1], [], []>} : vector<8x128xbf16>, vector<128x512xbf16>, vector<8x512xf32> -> vector<8x512xf32>
    %c4_151 = arith.constant 4 : index
    %c0_152 = arith.constant 0 : index
    %c0_153 = arith.constant 0 : index
    %484 = vector.load %arg15[%c4_151, %c0_152, %c0_153] : memref<8x8x512xbf16, #tpu.memory_space<vmem>>, vector<1x8x512xbf16>
    %485 = vector.shape_cast %484 : vector<1x8x512xbf16> to vector<8x512xbf16>
    %486 = arith.extf %485 : vector<8x512xbf16> to vector<8x512xf32>
    %487 = arith.addf %483, %486 : vector<8x512xf32>
    %488 = arith.truncf %487 : vector<8x512xf32> to vector<8x512xbf16>
    %489 = vector.extract_strided_slice %488 {offsets = [0, 0], sizes = [8, 128], strides = [1, 1]} : vector<8x512xbf16> to vector<8x128xbf16>
    %490 = arith.negf %489 : vector<8x128xbf16>
    %491 = math.exp %490 : vector<8x128xbf16>
    %cst_154 = arith.constant 1.000000e+00 : bf16
    %492 = vector.broadcast %cst_154 : bf16 to vector<8x128xbf16>
    %493 = arith.addf %492, %491 : vector<8x128xbf16>
    %494 = arith.divf %492, %493 : vector<8x128xbf16>
    %495 = vector.extract_strided_slice %488 {offsets = [0, 128], sizes = [8, 128], strides = [1, 1]} : vector<8x512xbf16> to vector<8x128xbf16>
    %496 = arith.negf %495 : vector<8x128xbf16>
    %497 = math.exp %496 : vector<8x128xbf16>
    %cst_155 = arith.constant 1.000000e+00 : bf16
    %498 = vector.broadcast %cst_155 : bf16 to vector<8x128xbf16>
    %499 = arith.addf %498, %497 : vector<8x128xbf16>
    %500 = arith.divf %498, %499 : vector<8x128xbf16>
    %501 = vector.extract_strided_slice %488 {offsets = [0, 256], sizes = [8, 128], strides = [1, 1]} : vector<8x512xbf16> to vector<8x128xbf16>
    %502 = math.tanh %501 : vector<8x128xbf16>
    %503 = vector.extract_strided_slice %488 {offsets = [0, 384], sizes = [8, 128], strides = [1, 1]} : vector<8x512xbf16> to vector<8x128xbf16>
    %504 = arith.negf %503 : vector<8x128xbf16>
    %505 = math.exp %504 : vector<8x128xbf16>
    %cst_156 = arith.constant 1.000000e+00 : bf16
    %506 = vector.broadcast %cst_156 : bf16 to vector<8x128xbf16>
    %507 = arith.addf %506, %505 : vector<8x128xbf16>
    %508 = arith.divf %506, %507 : vector<8x128xbf16>
    %509 = arith.extf %500 : vector<8x128xbf16> to vector<8x128xf32>
    %510 = arith.mulf %509, %473 : vector<8x128xf32>
    %511 = arith.mulf %494, %502 : vector<8x128xbf16>
    %512 = arith.extf %511 : vector<8x128xbf16> to vector<8x128xf32>
    %513 = arith.addf %510, %512 : vector<8x128xf32>
    %514 = arith.truncf %513 : vector<8x128xf32> to vector<8x128xbf16>
    %515 = math.tanh %514 : vector<8x128xbf16>
    %516 = arith.mulf %508, %515 : vector<8x128xbf16>
    %cst_157 = arith.constant 0.000000e+00 : bf16
    %517 = vector.broadcast %cst_157 : bf16 to vector<8x128xbf16>
    %518 = arith.maximumf %516, %517 : vector<8x128xbf16>
    %c4_158 = arith.constant 4 : index
    %c0_159 = arith.constant 0 : index
    %c0_160 = arith.constant 0 : index
    %519 = vector.load %arg8[%c4_158, %c0_159, %c0_160] : memref<8x128x128xbf16, #tpu.memory_space<vmem>>, vector<1x128x128xbf16>
    %520 = vector.shape_cast %519 : vector<1x128x128xbf16> to vector<128x128xbf16>
    %cst_161 = arith.constant dense<0.000000e+00> : vector<8x128xf32>
    %521 = tpu.matmul %518, %520, %cst_161 {dimension_numbers = #tpu.dot_dimension_numbers<[1], [0], [0], [1], [0, 0, 1, 1], [], []>} : vector<8x128xbf16>, vector<128x128xbf16>, vector<8x128xf32> -> vector<8x128xf32>
    %522 = arith.addf %482, %521 : vector<8x128xf32>
    %cst_162 = arith.constant dense<0.000000e+00> : vector<8x512xf32>
    %523 = tpu.matmul %516, %320, %cst_162 {dimension_numbers = #tpu.dot_dimension_numbers<[1], [0], [0], [1], [0, 0, 1, 1], [], []>} : vector<8x128xbf16>, vector<128x512xbf16>, vector<8x512xf32> -> vector<8x512xf32>
    %c5_163 = arith.constant 5 : index
    %c0_164 = arith.constant 0 : index
    %c0_165 = arith.constant 0 : index
    %524 = vector.load %arg15[%c5_163, %c0_164, %c0_165] : memref<8x8x512xbf16, #tpu.memory_space<vmem>>, vector<1x8x512xbf16>
    %525 = vector.shape_cast %524 : vector<1x8x512xbf16> to vector<8x512xbf16>
    %526 = arith.extf %525 : vector<8x512xbf16> to vector<8x512xf32>
    %527 = arith.addf %523, %526 : vector<8x512xf32>
    %528 = arith.truncf %527 : vector<8x512xf32> to vector<8x512xbf16>
    %529 = vector.extract_strided_slice %528 {offsets = [0, 0], sizes = [8, 128], strides = [1, 1]} : vector<8x512xbf16> to vector<8x128xbf16>
    %530 = arith.negf %529 : vector<8x128xbf16>
    %531 = math.exp %530 : vector<8x128xbf16>
    %cst_166 = arith.constant 1.000000e+00 : bf16
    %532 = vector.broadcast %cst_166 : bf16 to vector<8x128xbf16>
    %533 = arith.addf %532, %531 : vector<8x128xbf16>
    %534 = arith.divf %532, %533 : vector<8x128xbf16>
    %535 = vector.extract_strided_slice %528 {offsets = [0, 128], sizes = [8, 128], strides = [1, 1]} : vector<8x512xbf16> to vector<8x128xbf16>
    %536 = arith.negf %535 : vector<8x128xbf16>
    %537 = math.exp %536 : vector<8x128xbf16>
    %cst_167 = arith.constant 1.000000e+00 : bf16
    %538 = vector.broadcast %cst_167 : bf16 to vector<8x128xbf16>
    %539 = arith.addf %538, %537 : vector<8x128xbf16>
    %540 = arith.divf %538, %539 : vector<8x128xbf16>
    %541 = vector.extract_strided_slice %528 {offsets = [0, 256], sizes = [8, 128], strides = [1, 1]} : vector<8x512xbf16> to vector<8x128xbf16>
    %542 = math.tanh %541 : vector<8x128xbf16>
    %543 = vector.extract_strided_slice %528 {offsets = [0, 384], sizes = [8, 128], strides = [1, 1]} : vector<8x512xbf16> to vector<8x128xbf16>
    %544 = arith.negf %543 : vector<8x128xbf16>
    %545 = math.exp %544 : vector<8x128xbf16>
    %cst_168 = arith.constant 1.000000e+00 : bf16
    %546 = vector.broadcast %cst_168 : bf16 to vector<8x128xbf16>
    %547 = arith.addf %546, %545 : vector<8x128xbf16>
    %548 = arith.divf %546, %547 : vector<8x128xbf16>
    %549 = arith.extf %540 : vector<8x128xbf16> to vector<8x128xf32>
    %550 = arith.mulf %549, %513 : vector<8x128xf32>
    %551 = arith.mulf %534, %542 : vector<8x128xbf16>
    %552 = arith.extf %551 : vector<8x128xbf16> to vector<8x128xf32>
    %553 = arith.addf %550, %552 : vector<8x128xf32>
    %554 = arith.truncf %553 : vector<8x128xf32> to vector<8x128xbf16>
    %555 = math.tanh %554 : vector<8x128xbf16>
    %556 = arith.mulf %548, %555 : vector<8x128xbf16>
    %cst_169 = arith.constant 0.000000e+00 : bf16
    %557 = vector.broadcast %cst_169 : bf16 to vector<8x128xbf16>
    %558 = arith.maximumf %556, %557 : vector<8x128xbf16>
    %c5_170 = arith.constant 5 : index
    %c0_171 = arith.constant 0 : index
    %c0_172 = arith.constant 0 : index
    %559 = vector.load %arg8[%c5_170, %c0_171, %c0_172] : memref<8x128x128xbf16, #tpu.memory_space<vmem>>, vector<1x128x128xbf16>
    %560 = vector.shape_cast %559 : vector<1x128x128xbf16> to vector<128x128xbf16>
    %cst_173 = arith.constant dense<0.000000e+00> : vector<8x128xf32>
    %561 = tpu.matmul %558, %560, %cst_173 {dimension_numbers = #tpu.dot_dimension_numbers<[1], [0], [0], [1], [0, 0, 1, 1], [], []>} : vector<8x128xbf16>, vector<128x128xbf16>, vector<8x128xf32> -> vector<8x128xf32>
    %562 = arith.addf %522, %561 : vector<8x128xf32>
    %cst_174 = arith.constant dense<0.000000e+00> : vector<8x512xf32>
    %563 = tpu.matmul %556, %320, %cst_174 {dimension_numbers = #tpu.dot_dimension_numbers<[1], [0], [0], [1], [0, 0, 1, 1], [], []>} : vector<8x128xbf16>, vector<128x512xbf16>, vector<8x512xf32> -> vector<8x512xf32>
    %c6_175 = arith.constant 6 : index
    %c0_176 = arith.constant 0 : index
    %c0_177 = arith.constant 0 : index
    %564 = vector.load %arg15[%c6_175, %c0_176, %c0_177] : memref<8x8x512xbf16, #tpu.memory_space<vmem>>, vector<1x8x512xbf16>
    %565 = vector.shape_cast %564 : vector<1x8x512xbf16> to vector<8x512xbf16>
    %566 = arith.extf %565 : vector<8x512xbf16> to vector<8x512xf32>
    %567 = arith.addf %563, %566 : vector<8x512xf32>
    %568 = arith.truncf %567 : vector<8x512xf32> to vector<8x512xbf16>
    %569 = vector.extract_strided_slice %568 {offsets = [0, 0], sizes = [8, 128], strides = [1, 1]} : vector<8x512xbf16> to vector<8x128xbf16>
    %570 = arith.negf %569 : vector<8x128xbf16>
    %571 = math.exp %570 : vector<8x128xbf16>
    %cst_178 = arith.constant 1.000000e+00 : bf16
    %572 = vector.broadcast %cst_178 : bf16 to vector<8x128xbf16>
    %573 = arith.addf %572, %571 : vector<8x128xbf16>
    %574 = arith.divf %572, %573 : vector<8x128xbf16>
    %575 = vector.extract_strided_slice %568 {offsets = [0, 128], sizes = [8, 128], strides = [1, 1]} : vector<8x512xbf16> to vector<8x128xbf16>
    %576 = arith.negf %575 : vector<8x128xbf16>
    %577 = math.exp %576 : vector<8x128xbf16>
    %cst_179 = arith.constant 1.000000e+00 : bf16
    %578 = vector.broadcast %cst_179 : bf16 to vector<8x128xbf16>
    %579 = arith.addf %578, %577 : vector<8x128xbf16>
    %580 = arith.divf %578, %579 : vector<8x128xbf16>
    %581 = vector.extract_strided_slice %568 {offsets = [0, 256], sizes = [8, 128], strides = [1, 1]} : vector<8x512xbf16> to vector<8x128xbf16>
    %582 = math.tanh %581 : vector<8x128xbf16>
    %583 = vector.extract_strided_slice %568 {offsets = [0, 384], sizes = [8, 128], strides = [1, 1]} : vector<8x512xbf16> to vector<8x128xbf16>
    %584 = arith.negf %583 : vector<8x128xbf16>
    %585 = math.exp %584 : vector<8x128xbf16>
    %cst_180 = arith.constant 1.000000e+00 : bf16
    %586 = vector.broadcast %cst_180 : bf16 to vector<8x128xbf16>
    %587 = arith.addf %586, %585 : vector<8x128xbf16>
    %588 = arith.divf %586, %587 : vector<8x128xbf16>
    %589 = arith.extf %580 : vector<8x128xbf16> to vector<8x128xf32>
    %590 = arith.mulf %589, %553 : vector<8x128xf32>
    %591 = arith.mulf %574, %582 : vector<8x128xbf16>
    %592 = arith.extf %591 : vector<8x128xbf16> to vector<8x128xf32>
    %593 = arith.addf %590, %592 : vector<8x128xf32>
    %594 = arith.truncf %593 : vector<8x128xf32> to vector<8x128xbf16>
    %595 = math.tanh %594 : vector<8x128xbf16>
    %596 = arith.mulf %588, %595 : vector<8x128xbf16>
    %cst_181 = arith.constant 0.000000e+00 : bf16
    %597 = vector.broadcast %cst_181 : bf16 to vector<8x128xbf16>
    %598 = arith.maximumf %596, %597 : vector<8x128xbf16>
    %c6_182 = arith.constant 6 : index
    %c0_183 = arith.constant 0 : index
    %c0_184 = arith.constant 0 : index
    %599 = vector.load %arg8[%c6_182, %c0_183, %c0_184] : memref<8x128x128xbf16, #tpu.memory_space<vmem>>, vector<1x128x128xbf16>
    %600 = vector.shape_cast %599 : vector<1x128x128xbf16> to vector<128x128xbf16>
    %cst_185 = arith.constant dense<0.000000e+00> : vector<8x128xf32>
    %601 = tpu.matmul %598, %600, %cst_185 {dimension_numbers = #tpu.dot_dimension_numbers<[1], [0], [0], [1], [0, 0, 1, 1], [], []>} : vector<8x128xbf16>, vector<128x128xbf16>, vector<8x128xf32> -> vector<8x128xf32>
    %602 = arith.addf %562, %601 : vector<8x128xf32>
    %cst_186 = arith.constant dense<0.000000e+00> : vector<8x512xf32>
    %603 = tpu.matmul %596, %320, %cst_186 {dimension_numbers = #tpu.dot_dimension_numbers<[1], [0], [0], [1], [0, 0, 1, 1], [], []>} : vector<8x128xbf16>, vector<128x512xbf16>, vector<8x512xf32> -> vector<8x512xf32>
    %c7_187 = arith.constant 7 : index
    %c0_188 = arith.constant 0 : index
    %c0_189 = arith.constant 0 : index
    %604 = vector.load %arg15[%c7_187, %c0_188, %c0_189] : memref<8x8x512xbf16, #tpu.memory_space<vmem>>, vector<1x8x512xbf16>
    %605 = vector.shape_cast %604 : vector<1x8x512xbf16> to vector<8x512xbf16>
    %606 = arith.extf %605 : vector<8x512xbf16> to vector<8x512xf32>
    %607 = arith.addf %603, %606 : vector<8x512xf32>
    %608 = arith.truncf %607 : vector<8x512xf32> to vector<8x512xbf16>
    %609 = vector.extract_strided_slice %608 {offsets = [0, 0], sizes = [8, 128], strides = [1, 1]} : vector<8x512xbf16> to vector<8x128xbf16>
    %610 = arith.negf %609 : vector<8x128xbf16>
    %611 = math.exp %610 : vector<8x128xbf16>
    %cst_190 = arith.constant 1.000000e+00 : bf16
    %612 = vector.broadcast %cst_190 : bf16 to vector<8x128xbf16>
    %613 = arith.addf %612, %611 : vector<8x128xbf16>
    %614 = arith.divf %612, %613 : vector<8x128xbf16>
    %615 = vector.extract_strided_slice %608 {offsets = [0, 128], sizes = [8, 128], strides = [1, 1]} : vector<8x512xbf16> to vector<8x128xbf16>
    %616 = arith.negf %615 : vector<8x128xbf16>
    %617 = math.exp %616 : vector<8x128xbf16>
    %cst_191 = arith.constant 1.000000e+00 : bf16
    %618 = vector.broadcast %cst_191 : bf16 to vector<8x128xbf16>
    %619 = arith.addf %618, %617 : vector<8x128xbf16>
    %620 = arith.divf %618, %619 : vector<8x128xbf16>
    %621 = vector.extract_strided_slice %608 {offsets = [0, 256], sizes = [8, 128], strides = [1, 1]} : vector<8x512xbf16> to vector<8x128xbf16>
    %622 = math.tanh %621 : vector<8x128xbf16>
    %623 = vector.extract_strided_slice %608 {offsets = [0, 384], sizes = [8, 128], strides = [1, 1]} : vector<8x512xbf16> to vector<8x128xbf16>
    %624 = arith.negf %623 : vector<8x128xbf16>
    %625 = math.exp %624 : vector<8x128xbf16>
    %cst_192 = arith.constant 1.000000e+00 : bf16
    %626 = vector.broadcast %cst_192 : bf16 to vector<8x128xbf16>
    %627 = arith.addf %626, %625 : vector<8x128xbf16>
    %628 = arith.divf %626, %627 : vector<8x128xbf16>
    %629 = arith.extf %620 : vector<8x128xbf16> to vector<8x128xf32>
    %630 = arith.mulf %629, %593 : vector<8x128xf32>
    %631 = arith.mulf %614, %622 : vector<8x128xbf16>
    %632 = arith.extf %631 : vector<8x128xbf16> to vector<8x128xf32>
    %633 = arith.addf %630, %632 : vector<8x128xf32>
    %634 = arith.truncf %633 : vector<8x128xf32> to vector<8x128xbf16>
    %635 = math.tanh %634 : vector<8x128xbf16>
    %636 = arith.mulf %628, %635 : vector<8x128xbf16>
    %cst_193 = arith.constant 0.000000e+00 : bf16
    %637 = vector.broadcast %cst_193 : bf16 to vector<8x128xbf16>
    %638 = arith.maximumf %636, %637 : vector<8x128xbf16>
    %c7_194 = arith.constant 7 : index
    %c0_195 = arith.constant 0 : index
    %c0_196 = arith.constant 0 : index
    %639 = vector.load %arg8[%c7_194, %c0_195, %c0_196] : memref<8x128x128xbf16, #tpu.memory_space<vmem>>, vector<1x128x128xbf16>
    %640 = vector.shape_cast %639 : vector<1x128x128xbf16> to vector<128x128xbf16>
    %cst_197 = arith.constant dense<0.000000e+00> : vector<8x128xf32>
    %641 = tpu.matmul %638, %640, %cst_197 {dimension_numbers = #tpu.dot_dimension_numbers<[1], [0], [0], [1], [0, 0, 1, 1], [], []>} : vector<8x128xbf16>, vector<128x128xbf16>, vector<8x128xf32> -> vector<8x128xf32>
    %642 = arith.addf %602, %641 : vector<8x128xf32>
    %c0_198 = arith.constant 0 : index
    %c0_199 = arith.constant 0 : index
    %643 = vector.load %arg9[%c0_198, %c0_199] : memref<1x128xf32, #tpu.memory_space<vmem>>, vector<1x128xf32>
    %644 = vector.broadcast %643 : vector<1x128xf32> to vector<8x128xf32>
    %645 = arith.addf %642, %644 : vector<8x128xf32>
    %cst_200 = arith.constant 0.000000e+00 : f32
    %646 = vector.broadcast %cst_200 : f32 to vector<8x128xf32>
    %647 = arith.maximumf %645, %646 : vector<8x128xf32>
    %648 = arith.truncf %647 : vector<8x128xf32> to vector<8x128xbf16>
    %c0_201 = arith.constant 0 : index
    %c0_202 = arith.constant 0 : index
    %649 = vector.load %arg10[%c0_201, %c0_202] : memref<128x128xbf16, #tpu.memory_space<vmem>>, vector<128x128xbf16>
    %cst_203 = arith.constant dense<0.000000e+00> : vector<8x128xf32>
    %650 = tpu.matmul %648, %649, %cst_203 {dimension_numbers = #tpu.dot_dimension_numbers<[1], [0], [0], [1], [0, 0, 1, 1], [], []>} : vector<8x128xbf16>, vector<128x128xbf16>, vector<8x128xf32> -> vector<8x128xf32>
    %c0_204 = arith.constant 0 : index
    %c0_205 = arith.constant 0 : index
    %651 = vector.load %arg11[%c0_204, %c0_205] : memref<1x128xf32, #tpu.memory_space<vmem>>, vector<1x128xf32>
    %652 = vector.broadcast %651 : vector<1x128xf32> to vector<8x128xf32>
    %653 = arith.addf %650, %652 : vector<8x128xf32>
    %cst_206 = arith.constant 0.000000e+00 : f32
    %654 = vector.broadcast %cst_206 : f32 to vector<8x128xf32>
    %655 = arith.maximumf %653, %654 : vector<8x128xf32>
    %656 = arith.truncf %655 : vector<8x128xf32> to vector<8x128xbf16>
    %c0_207 = arith.constant 0 : index
    %c0_208 = arith.constant 0 : index
    %657 = vector.load %arg12[%c0_207, %c0_208] : memref<128x128xbf16, #tpu.memory_space<vmem>>, vector<128x128xbf16>
    %cst_209 = arith.constant dense<0.000000e+00> : vector<8x128xf32>
    %658 = tpu.matmul %656, %657, %cst_209 {dimension_numbers = #tpu.dot_dimension_numbers<[1], [0], [0], [1], [0, 0, 1, 1], [], []>} : vector<8x128xbf16>, vector<128x128xbf16>, vector<8x128xf32> -> vector<8x128xf32>
    %c0_210 = arith.constant 0 : index
    %c0_211 = arith.constant 0 : index
    %659 = vector.load %arg13[%c0_210, %c0_211] : memref<1x128xf32, #tpu.memory_space<vmem>>, vector<1x128xf32>
    %660 = vector.broadcast %659 : vector<1x128xf32> to vector<8x128xf32>
    %661 = arith.addf %658, %660 : vector<8x128xf32>
    %c0_212 = arith.constant 0 : index
    %c0_213 = arith.constant 0 : index
    %662 = vector.load %arg14[%c0_212, %c0_213] : memref<8x128xf32, #tpu.memory_space<vmem>>, vector<8x128xf32>
    tpu.vector_store %arg14[%c0_212, %c0_213], %661 {strides = array<i32>} : memref<8x128xf32, #tpu.memory_space<vmem>>, vector<8x128xf32>,
    return
  }
  func.func @transform_0(%arg0: i32) -> (i32, i32, i32) {
    %c0_i32 = arith.constant 0 : i32
    %c0_i32_0 = arith.constant 0 : i32
    %c0_i32_1 = arith.constant 0 : i32
    return %c0_i32, %arg0, %c0_i32_0 : i32, i32, i32
  }
  func.func @transform_1(%arg0: i32) -> (i32, i32) {
    %c0_i32 = arith.constant 0 : i32
    %c0_i32_0 = arith.constant 0 : i32
    %c0_i32_1 = arith.constant 0 : i32
    return %c0_i32, %c0_i32_0 : i32, i32
  }
  func.func @transform_2(%arg0: i32) -> (i32, i32) {
    %c0_i32 = arith.constant 0 : i32
    %c0_i32_0 = arith.constant 0 : i32
    %c0_i32_1 = arith.constant 0 : i32
    return %c0_i32, %c0_i32_0 : i32, i32
  }
  func.func @transform_3(%arg0: i32) -> (i32, i32) {
    %c0_i32 = arith.constant 0 : i32
    %c0_i32_0 = arith.constant 0 : i32
    %c0_i32_1 = arith.constant 0 : i32
    return %c0_i32, %c0_i32_0 : i32, i32
  }
  func.func @transform_4(%arg0: i32) -> (i32, i32) {
    %c0_i32 = arith.constant 0 : i32
    %c0_i32_0 = arith.constant 0 : i32
    %c0_i32_1 = arith.constant 0 : i32
    return %c0_i32, %c0_i32_0 : i32, i32
  }
  func.func @transform_5(%arg0: i32) -> (i32, i32) {
    %c0_i32 = arith.constant 0 : i32
    %c0_i32_0 = arith.constant 0 : i32
    %c0_i32_1 = arith.constant 0 : i32
    return %c0_i32, %c0_i32_0 : i32, i32
  }
  func.func @transform_6(%arg0: i32) -> (i32, i32) {
    %c0_i32 = arith.constant 0 : i32
    %c0_i32_0 = arith.constant 0 : i32
    %c0_i32_1 = arith.constant 0 : i32
    return %c0_i32, %c0_i32_0 : i32, i32
  }
  func.func @transform_7(%arg0: i32) -> (i32, i32, i32) {
    %c0_i32 = arith.constant 0 : i32
    %c0_i32_0 = arith.constant 0 : i32
    %c0_i32_1 = arith.constant 0 : i32
    %c0_i32_2 = arith.constant 0 : i32
    return %c0_i32, %c0_i32_0, %c0_i32_1 : i32, i32, i32
  }
  func.func @transform_8(%arg0: i32) -> (i32, i32) {
    %c0_i32 = arith.constant 0 : i32
    %c0_i32_0 = arith.constant 0 : i32
    %c0_i32_1 = arith.constant 0 : i32
    return %c0_i32, %c0_i32_0 : i32, i32
  }
  func.func @transform_9(%arg0: i32) -> (i32, i32) {
    %c0_i32 = arith.constant 0 : i32
    %c0_i32_0 = arith.constant 0 : i32
    %c0_i32_1 = arith.constant 0 : i32
    return %c0_i32, %c0_i32_0 : i32, i32
  }
  func.func @transform_10(%arg0: i32) -> (i32, i32) {
    %c0_i32 = arith.constant 0 : i32
    %c0_i32_0 = arith.constant 0 : i32
    %c0_i32_1 = arith.constant 0 : i32
    return %c0_i32, %c0_i32_0 : i32, i32
  }
  func.func @transform_11(%arg0: i32) -> (i32, i32) {
    %c0_i32 = arith.constant 0 : i32
    %c0_i32_0 = arith.constant 0 : i32
    %c0_i32_1 = arith.constant 0 : i32
    return %c0_i32, %c0_i32_0 : i32, i32
  }
  func.func @transform_12(%arg0: i32) -> (i32, i32) {
    %c0_i32 = arith.constant 0 : i32
    %c0_i32_0 = arith.constant 0 : i32
    %c0_i32_1 = arith.constant 0 : i32
    return %c0_i32, %c0_i32_0 : i32, i32
  }
  func.func @transform_13(%arg0: i32) -> (i32, i32) {
    %c0_i32 = arith.constant 0 : i32
    %c0_i32_0 = arith.constant 0 : i32
    return %arg0, %c0_i32 : i32, i32
  }
}

module attributes {stable_mosaic.version = 11 : i64} {
  func.func @_fused_lstm_mlp_kernel(%arg0: i32, %arg1: memref<8x8x128xbf16, #tpu.memory_space<vmem>>, %arg2: memref<128x512xbf16, #tpu.memory_space<vmem>>, %arg3: memref<128x512xbf16, #tpu.memory_space<vmem>>, %arg4: memref<1x512xf32, #tpu.memory_space<vmem>>, %arg5: memref<128x512xbf16, #tpu.memory_space<vmem>>, %arg6: memref<128x512xbf16, #tpu.memory_space<vmem>>, %arg7: memref<1x512xf32, #tpu.memory_space<vmem>>, %arg8: memref<8x128x128xbf16, #tpu.memory_space<vmem>>, %arg9: memref<1x128xf32, #tpu.memory_space<vmem>>, %arg10: memref<128x128xbf16, #tpu.memory_space<vmem>>, %arg11: memref<1x128xf32, #tpu.memory_space<vmem>>, %arg12: memref<128x128xbf16, #tpu.memory_space<vmem>>, %arg13: memref<1x128xf32, #tpu.memory_space<vmem>>, %arg14: memref<8x128xf32, #tpu.memory_space<vmem>>, %arg15: memref<8x8x512xbf16, #tpu.memory_space<vmem>>, %arg16: memref<8x8x128xbf16, #tpu.memory_space<vmem>>) attributes {dimension_semantics = [#tpu.dimension_semantics<parallel>], iteration_bounds = array<i64: 1>, scalar_prefetch = 0 : i64, scratch_operands = 2 : i64, tpu.core_type = #tpu.core_type<tc>, window_params = [{transform_indices = @transform_0, window_bounds = array<i64: 8, 8, 128>}, {pipeline_mode = #tpu.pipeline_mode<synchronous>, transform_indices = @transform_1, window_bounds = array<i64: 128, 512>}, {pipeline_mode = #tpu.pipeline_mode<synchronous>, transform_indices = @transform_2, window_bounds = array<i64: 128, 512>}, {pipeline_mode = #tpu.pipeline_mode<synchronous>, transform_indices = @transform_3, window_bounds = array<i64: 1, 512>}, {pipeline_mode = #tpu.pipeline_mode<synchronous>, transform_indices = @transform_4, window_bounds = array<i64: 128, 512>}, {pipeline_mode = #tpu.pipeline_mode<synchronous>, transform_indices = @transform_5, window_bounds = array<i64: 128, 512>}, {pipeline_mode = #tpu.pipeline_mode<synchronous>, transform_indices = @transform_6, window_bounds = array<i64: 1, 512>}, {pipeline_mode = #tpu.pipeline_mode<synchronous>, transform_indices = @transform_7, window_bounds = array<i64: 8, 128, 128>}, {pipeline_mode = #tpu.pipeline_mode<synchronous>, transform_indices = @transform_8, window_bounds = array<i64: 1, 128>}, {pipeline_mode = #tpu.pipeline_mode<synchronous>, transform_indices = @transform_9, window_bounds = array<i64: 128, 128>}, {pipeline_mode = #tpu.pipeline_mode<synchronous>, transform_indices = @transform_10, window_bounds = array<i64: 1, 128>}, {pipeline_mode = #tpu.pipeline_mode<synchronous>, transform_indices = @transform_11, window_bounds = array<i64: 128, 128>}, {pipeline_mode = #tpu.pipeline_mode<synchronous>, transform_indices = @transform_12, window_bounds = array<i64: 1, 128>}, {transform_indices = @transform_13, window_bounds = array<i64: 8, 128>}]} {
    %cst = arith.constant 0.000000e+00 : f32
    %0 = vector.broadcast %cst : f32 to vector<8x128xf32>
    %c0 = arith.constant 0 : index
    %c0_0 = arith.constant 0 : index
    %c0_1 = arith.constant 0 : index
    %1 = vector.load %arg1[%c0, %c0_0, %c0_1] : memref<8x8x128xbf16, #tpu.memory_space<vmem>>, vector<8x8x128xbf16>
    %2 = vector.shape_cast %1 : vector<8x8x128xbf16> to vector<64x128xbf16>
    %c0_2 = arith.constant 0 : index
    %c0_3 = arith.constant 0 : index
    %3 = vector.load %arg2[%c0_2, %c0_3] : memref<128x512xbf16, #tpu.memory_space<vmem>>, vector<128x512xbf16>
    %cst_4 = arith.constant dense<0.000000e+00> : vector<64x512xf32>
    %4 = tpu.matmul %2, %3, %cst_4 {dimension_numbers = #tpu.dot_dimension_numbers<[1], [0], [0], [1], [0, 0, 1, 1], [], []>} : vector<64x128xbf16>, vector<128x512xbf16>, vector<64x512xf32> -> vector<64x512xf32>
    %c0_5 = arith.constant 0 : index
    %c0_6 = arith.constant 0 : index
    %5 = vector.load %arg4[%c0_5, %c0_6] : memref<1x512xf32, #tpu.memory_space<vmem>>, vector<1x512xf32>
    %6 = vector.broadcast %5 : vector<1x512xf32> to vector<64x512xf32>
    %7 = arith.addf %4, %6 : vector<64x512xf32>
    %8 = vector.shape_cast %7 : vector<64x512xf32> to vector<8x8x512xf32>
    %9 = arith.truncf %8 : vector<8x8x512xf32> to vector<8x8x512xbf16>
    %c0_7 = arith.constant 0 : index
    %c0_8 = arith.constant 0 : index
    %c0_9 = arith.constant 0 : index
    %10 = vector.load %arg15[%c0_7, %c0_8, %c0_9] : memref<8x8x512xbf16, #tpu.memory_space<vmem>>, vector<8x8x512xbf16>
    tpu.vector_store %arg15[%c0_7, %c0_8, %c0_9], %9 {strides = array<i32>} : memref<8x8x512xbf16, #tpu.memory_space<vmem>>, vector<8x8x512xbf16>,
    %c0_10 = arith.constant 0 : index
    %c0_11 = arith.constant 0 : index
    %11 = vector.load %arg3[%c0_10, %c0_11] : memref<128x512xbf16, #tpu.memory_space<vmem>>, vector<128x512xbf16>
    %cst_12 = arith.constant 0.000000e+00 : bf16
    %12 = vector.broadcast %cst_12 : bf16 to vector<8x128xbf16>
    %cst_13 = arith.constant 0.000000e+00 : f32
    %13 = vector.broadcast %cst_13 : f32 to vector<8x128xf32>
    %cst_14 = arith.constant dense<0.000000e+00> : vector<8x512xf32>
    %14 = tpu.matmul %12, %11, %cst_14 {dimension_numbers = #tpu.dot_dimension_numbers<[1], [0], [0], [1], [0, 0, 1, 1], [], []>} : vector<8x128xbf16>, vector<128x512xbf16>, vector<8x512xf32> -> vector<8x512xf32>
    %c0_15 = arith.constant 0 : index
    %c0_16 = arith.constant 0 : index
    %c0_17 = arith.constant 0 : index
    %15 = vector.load %arg15[%c0_15, %c0_16, %c0_17] : memref<8x8x512xbf16, #tpu.memory_space<vmem>>, vector<1x8x512xbf16>
    %16 = vector.shape_cast %15 : vector<1x8x512xbf16> to vector<8x512xbf16>
    %17 = arith.extf %16 : vector<8x512xbf16> to vector<8x512xf32>
    %18 = arith.addf %14, %17 : vector<8x512xf32>
    %19 = arith.truncf %18 : vector<8x512xf32> to vector<8x512xbf16>
    %20 = vector.extract_strided_slice %19 {offsets = [0, 0], sizes = [8, 128], strides = [1, 1]} : vector<8x512xbf16> to vector<8x128xbf16>
    %21 = arith.negf %20 : vector<8x128xbf16>
    %22 = math.exp %21 : vector<8x128xbf16>
    %cst_18 = arith.constant 1.000000e+00 : bf16
    %23 = vector.broadcast %cst_18 : bf16 to vector<8x128xbf16>
    %24 = arith.addf %23, %22 : vector<8x128xbf16>
    %25 = arith.divf %23, %24 : vector<8x128xbf16>
    %26 = vector.extract_strided_slice %19 {offsets = [0, 128], sizes = [8, 128], strides = [1, 1]} : vector<8x512xbf16> to vector<8x128xbf16>
    %27 = arith.negf %26 : vector<8x128xbf16>
    %28 = math.exp %27 : vector<8x128xbf16>
    %cst_19 = arith.constant 1.000000e+00 : bf16
    %29 = vector.broadcast %cst_19 : bf16 to vector<8x128xbf16>
    %30 = arith.addf %29, %28 : vector<8x128xbf16>
    %31 = arith.divf %29, %30 : vector<8x128xbf16>
    %32 = vector.extract_strided_slice %19 {offsets = [0, 256], sizes = [8, 128], strides = [1, 1]} : vector<8x512xbf16> to vector<8x128xbf16>
    %33 = math.tanh %32 : vector<8x128xbf16>
    %34 = vector.extract_strided_slice %19 {offsets = [0, 384], sizes = [8, 128], strides = [1, 1]} : vector<8x512xbf16> to vector<8x128xbf16>
    %35 = arith.negf %34 : vector<8x128xbf16>
    %36 = math.exp %35 : vector<8x128xbf16>
    %cst_20 = arith.constant 1.000000e+00 : bf16
    %37 = vector.broadcast %cst_20 : bf16 to vector<8x128xbf16>
    %38 = arith.addf %37, %36 : vector<8x128xbf16>
    %39 = arith.divf %37, %38 : vector<8x128xbf16>
    %40 = arith.extf %31 : vector<8x128xbf16> to vector<8x128xf32>
    %41 = arith.mulf %40, %13 : vector<8x128xf32>
    %42 = arith.mulf %25, %33 : vector<8x128xbf16>
    %43 = arith.extf %42 : vector<8x128xbf16> to vector<8x128xf32>
    %44 = arith.addf %41, %43 : vector<8x128xf32>
    %45 = arith.truncf %44 : vector<8x128xf32> to vector<8x128xbf16>
    %46 = math.tanh %45 : vector<8x128xbf16>
    %47 = arith.mulf %39, %46 : vector<8x128xbf16>
    %c0_21 = arith.constant 0 : index
    %c0_22 = arith.constant 0 : index
    %c0_23 = arith.constant 0 : index
    %48 = vector.load %arg16[%c0_21, %c0_22, %c0_23] : memref<8x8x128xbf16, #tpu.memory_space<vmem>>, vector<1x8x128xbf16>
    %49 = vector.shape_cast %48 : vector<1x8x128xbf16> to vector<8x128xbf16>
    %50 = vector.shape_cast %47 : vector<8x128xbf16> to vector<1x8x128xbf16>
    tpu.vector_store %arg16[%c0_21, %c0_22, %c0_23], %50 {strides = array<i32>} : memref<8x8x128xbf16, #tpu.memory_space<vmem>>, vector<1x8x128xbf16>,
    %cst_24 = arith.constant dense<0.000000e+00> : vector<8x512xf32>
    %51 = tpu.matmul %47, %11, %cst_24 {dimension_numbers = #tpu.dot_dimension_numbers<[1], [0], [0], [1], [0, 0, 1, 1], [], []>} : vector<8x128xbf16>, vector<128x512xbf16>, vector<8x512xf32> -> vector<8x512xf32>
    %c1 = arith.constant 1 : index
    %c0_25 = arith.constant 0 : index
    %c0_26 = arith.constant 0 : index
    %52 = vector.load %arg15[%c1, %c0_25, %c0_26] : memref<8x8x512xbf16, #tpu.memory_space<vmem>>, vector<1x8x512xbf16>
    %53 = vector.shape_cast %52 : vector<1x8x512xbf16> to vector<8x512xbf16>
    %54 = arith.extf %53 : vector<8x512xbf16> to vector<8x512xf32>
    %55 = arith.addf %51, %54 : vector<8x512xf32>
    %56 = arith.truncf %55 : vector<8x512xf32> to vector<8x512xbf16>
    %57 = vector.extract_strided_slice %56 {offsets = [0, 0], sizes = [8, 128], strides = [1, 1]} : vector<8x512xbf16> to vector<8x128xbf16>
    %58 = arith.negf %57 : vector<8x128xbf16>
    %59 = math.exp %58 : vector<8x128xbf16>
    %cst_27 = arith.constant 1.000000e+00 : bf16
    %60 = vector.broadcast %cst_27 : bf16 to vector<8x128xbf16>
    %61 = arith.addf %60, %59 : vector<8x128xbf16>
    %62 = arith.divf %60, %61 : vector<8x128xbf16>
    %63 = vector.extract_strided_slice %56 {offsets = [0, 128], sizes = [8, 128], strides = [1, 1]} : vector<8x512xbf16> to vector<8x128xbf16>
    %64 = arith.negf %63 : vector<8x128xbf16>
    %65 = math.exp %64 : vector<8x128xbf16>
    %cst_28 = arith.constant 1.000000e+00 : bf16
    %66 = vector.broadcast %cst_28 : bf16 to vector<8x128xbf16>
    %67 = arith.addf %66, %65 : vector<8x128xbf16>
    %68 = arith.divf %66, %67 : vector<8x128xbf16>
    %69 = vector.extract_strided_slice %56 {offsets = [0, 256], sizes = [8, 128], strides = [1, 1]} : vector<8x512xbf16> to vector<8x128xbf16>
    %70 = math.tanh %69 : vector<8x128xbf16>
    %71 = vector.extract_strided_slice %56 {offsets = [0, 384], sizes = [8, 128], strides = [1, 1]} : vector<8x512xbf16> to vector<8x128xbf16>
    %72 = arith.negf %71 : vector<8x128xbf16>
    %73 = math.exp %72 : vector<8x128xbf16>
    %cst_29 = arith.constant 1.000000e+00 : bf16
    %74 = vector.broadcast %cst_29 : bf16 to vector<8x128xbf16>
    %75 = arith.addf %74, %73 : vector<8x128xbf16>
    %76 = arith.divf %74, %75 : vector<8x128xbf16>
    %77 = arith.extf %68 : vector<8x128xbf16> to vector<8x128xf32>
    %78 = arith.mulf %77, %44 : vector<8x128xf32>
    %79 = arith.mulf %62, %70 : vector<8x128xbf16>
    %80 = arith.extf %79 : vector<8x128xbf16> to vector<8x128xf32>
    %81 = arith.addf %78, %80 : vector<8x128xf32>
    %82 = arith.truncf %81 : vector<8x128xf32> to vector<8x128xbf16>
    %83 = math.tanh %82 : vector<8x128xbf16>
    %84 = arith.mulf %76, %83 : vector<8x128xbf16>
    %c1_30 = arith.constant 1 : index
    %c0_31 = arith.constant 0 : index
    %c0_32 = arith.constant 0 : index
    %85 = vector.load %arg16[%c1_30, %c0_31, %c0_32] : memref<8x8x128xbf16, #tpu.memory_space<vmem>>, vector<1x8x128xbf16>
    %86 = vector.shape_cast %85 : vector<1x8x128xbf16> to vector<8x128xbf16>
    %87 = vector.shape_cast %84 : vector<8x128xbf16> to vector<1x8x128xbf16>
    tpu.vector_store %arg16[%c1_30, %c0_31, %c0_32], %87 {strides = array<i32>} : memref<8x8x128xbf16, #tpu.memory_space<vmem>>, vector<1x8x128xbf16>,
    %cst_33 = arith.constant dense<0.000000e+00> : vector<8x512xf32>
    %88 = tpu.matmul %84, %11, %cst_33 {dimension_numbers = #tpu.dot_dimension_numbers<[1], [0], [0], [1], [0, 0, 1, 1], [], []>} : vector<8x128xbf16>, vector<128x512xbf16>, vector<8x512xf32> -> vector<8x512xf32>
    %c2 = arith.constant 2 : index
    %c0_34 = arith.constant 0 : index
    %c0_35 = arith.constant 0 : index
    %89 = vector.load %arg15[%c2, %c0_34, %c0_35] : memref<8x8x512xbf16, #tpu.memory_space<vmem>>, vector<1x8x512xbf16>
    %90 = vector.shape_cast %89 : vector<1x8x512xbf16> to vector<8x512xbf16>
    %91 = arith.extf %90 : vector<8x512xbf16> to vector<8x512xf32>
    %92 = arith.addf %88, %91 : vector<8x512xf32>
    %93 = arith.truncf %92 : vector<8x512xf32> to vector<8x512xbf16>
    %94 = vector.extract_strided_slice %93 {offsets = [0, 0], sizes = [8, 128], strides = [1, 1]} : vector<8x512xbf16> to vector<8x128xbf16>
    %95 = arith.negf %94 : vector<8x128xbf16>
    %96 = math.exp %95 : vector<8x128xbf16>
    %cst_36 = arith.constant 1.000000e+00 : bf16
    %97 = vector.broadcast %cst_36 : bf16 to vector<8x128xbf16>
    %98 = arith.addf %97, %96 : vector<8x128xbf16>
    %99 = arith.divf %97, %98 : vector<8x128xbf16>
    %100 = vector.extract_strided_slice %93 {offsets = [0, 128], sizes = [8, 128], strides = [1, 1]} : vector<8x512xbf16> to vector<8x128xbf16>
    %101 = arith.negf %100 : vector<8x128xbf16>
    %102 = math.exp %101 : vector<8x128xbf16>
    %cst_37 = arith.constant 1.000000e+00 : bf16
    %103 = vector.broadcast %cst_37 : bf16 to vector<8x128xbf16>
    %104 = arith.addf %103, %102 : vector<8x128xbf16>
    %105 = arith.divf %103, %104 : vector<8x128xbf16>
    %106 = vector.extract_strided_slice %93 {offsets = [0, 256], sizes = [8, 128], strides = [1, 1]} : vector<8x512xbf16> to vector<8x128xbf16>
    %107 = math.tanh %106 : vector<8x128xbf16>
    %108 = vector.extract_strided_slice %93 {offsets = [0, 384], sizes = [8, 128], strides = [1, 1]} : vector<8x512xbf16> to vector<8x128xbf16>
    %109 = arith.negf %108 : vector<8x128xbf16>
    %110 = math.exp %109 : vector<8x128xbf16>
    %cst_38 = arith.constant 1.000000e+00 : bf16
    %111 = vector.broadcast %cst_38 : bf16 to vector<8x128xbf16>
    %112 = arith.addf %111, %110 : vector<8x128xbf16>
    %113 = arith.divf %111, %112 : vector<8x128xbf16>
    %114 = arith.extf %105 : vector<8x128xbf16> to vector<8x128xf32>
    %115 = arith.mulf %114, %81 : vector<8x128xf32>
    %116 = arith.mulf %99, %107 : vector<8x128xbf16>
    %117 = arith.extf %116 : vector<8x128xbf16> to vector<8x128xf32>
    %118 = arith.addf %115, %117 : vector<8x128xf32>
    %119 = arith.truncf %118 : vector<8x128xf32> to vector<8x128xbf16>
    %120 = math.tanh %119 : vector<8x128xbf16>
    %121 = arith.mulf %113, %120 : vector<8x128xbf16>
    %c2_39 = arith.constant 2 : index
    %c0_40 = arith.constant 0 : index
    %c0_41 = arith.constant 0 : index
    %122 = vector.load %arg16[%c2_39, %c0_40, %c0_41] : memref<8x8x128xbf16, #tpu.memory_space<vmem>>, vector<1x8x128xbf16>
    %123 = vector.shape_cast %122 : vector<1x8x128xbf16> to vector<8x128xbf16>
    %124 = vector.shape_cast %121 : vector<8x128xbf16> to vector<1x8x128xbf16>
    tpu.vector_store %arg16[%c2_39, %c0_40, %c0_41], %124 {strides = array<i32>} : memref<8x8x128xbf16, #tpu.memory_space<vmem>>, vector<1x8x128xbf16>,
    %cst_42 = arith.constant dense<0.000000e+00> : vector<8x512xf32>
    %125 = tpu.matmul %121, %11, %cst_42 {dimension_numbers = #tpu.dot_dimension_numbers<[1], [0], [0], [1], [0, 0, 1, 1], [], []>} : vector<8x128xbf16>, vector<128x512xbf16>, vector<8x512xf32> -> vector<8x512xf32>
    %c3 = arith.constant 3 : index
    %c0_43 = arith.constant 0 : index
    %c0_44 = arith.constant 0 : index
    %126 = vector.load %arg15[%c3, %c0_43, %c0_44] : memref<8x8x512xbf16, #tpu.memory_space<vmem>>, vector<1x8x512xbf16>
    %127 = vector.shape_cast %126 : vector<1x8x512xbf16> to vector<8x512xbf16>
    %128 = arith.extf %127 : vector<8x512xbf16> to vector<8x512xf32>
    %129 = arith.addf %125, %128 : vector<8x512xf32>
    %130 = arith.truncf %129 : vector<8x512xf32> to vector<8x512xbf16>
    %131 = vector.extract_strided_slice %130 {offsets = [0, 0], sizes = [8, 128], strides = [1, 1]} : vector<8x512xbf16> to vector<8x128xbf16>
    %132 = arith.negf %131 : vector<8x128xbf16>
    %133 = math.exp %132 : vector<8x128xbf16>
    %cst_45 = arith.constant 1.000000e+00 : bf16
    %134 = vector.broadcast %cst_45 : bf16 to vector<8x128xbf16>
    %135 = arith.addf %134, %133 : vector<8x128xbf16>
    %136 = arith.divf %134, %135 : vector<8x128xbf16>
    %137 = vector.extract_strided_slice %130 {offsets = [0, 128], sizes = [8, 128], strides = [1, 1]} : vector<8x512xbf16> to vector<8x128xbf16>
    %138 = arith.negf %137 : vector<8x128xbf16>
    %139 = math.exp %138 : vector<8x128xbf16>
    %cst_46 = arith.constant 1.000000e+00 : bf16
    %140 = vector.broadcast %cst_46 : bf16 to vector<8x128xbf16>
    %141 = arith.addf %140, %139 : vector<8x128xbf16>
    %142 = arith.divf %140, %141 : vector<8x128xbf16>
    %143 = vector.extract_strided_slice %130 {offsets = [0, 256], sizes = [8, 128], strides = [1, 1]} : vector<8x512xbf16> to vector<8x128xbf16>
    %144 = math.tanh %143 : vector<8x128xbf16>
    %145 = vector.extract_strided_slice %130 {offsets = [0, 384], sizes = [8, 128], strides = [1, 1]} : vector<8x512xbf16> to vector<8x128xbf16>
    %146 = arith.negf %145 : vector<8x128xbf16>
    %147 = math.exp %146 : vector<8x128xbf16>
    %cst_47 = arith.constant 1.000000e+00 : bf16
    %148 = vector.broadcast %cst_47 : bf16 to vector<8x128xbf16>
    %149 = arith.addf %148, %147 : vector<8x128xbf16>
    %150 = arith.divf %148, %149 : vector<8x128xbf16>
    %151 = arith.extf %142 : vector<8x128xbf16> to vector<8x128xf32>
    %152 = arith.mulf %151, %118 : vector<8x128xf32>
    %153 = arith.mulf %136, %144 : vector<8x128xbf16>
    %154 = arith.extf %153 : vector<8x128xbf16> to vector<8x128xf32>
    %155 = arith.addf %152, %154 : vector<8x128xf32>
    %156 = arith.truncf %155 : vector<8x128xf32> to vector<8x128xbf16>
    %157 = math.tanh %156 : vector<8x128xbf16>
    %158 = arith.mulf %150, %157 : vector<8x128xbf16>
    %c3_48 = arith.constant 3 : index
    %c0_49 = arith.constant 0 : index
    %c0_50 = arith.constant 0 : index
    %159 = vector.load %arg16[%c3_48, %c0_49, %c0_50] : memref<8x8x128xbf16, #tpu.memory_space<vmem>>, vector<1x8x128xbf16>
    %160 = vector.shape_cast %159 : vector<1x8x128xbf16> to vector<8x128xbf16>
    %161 = vector.shape_cast %158 : vector<8x128xbf16> to vector<1x8x128xbf16>
    tpu.vector_store %arg16[%c3_48, %c0_49, %c0_50], %161 {strides = array<i32>} : memref<8x8x128xbf16, #tpu.memory_space<vmem>>, vector<1x8x128xbf16>,
    %cst_51 = arith.constant dense<0.000000e+00> : vector<8x512xf32>
    %162 = tpu.matmul %158, %11, %cst_51 {dimension_numbers = #tpu.dot_dimension_numbers<[1], [0], [0], [1], [0, 0, 1, 1], [], []>} : vector<8x128xbf16>, vector<128x512xbf16>, vector<8x512xf32> -> vector<8x512xf32>
    %c4 = arith.constant 4 : index
    %c0_52 = arith.constant 0 : index
    %c0_53 = arith.constant 0 : index
    %163 = vector.load %arg15[%c4, %c0_52, %c0_53] : memref<8x8x512xbf16, #tpu.memory_space<vmem>>, vector<1x8x512xbf16>
    %164 = vector.shape_cast %163 : vector<1x8x512xbf16> to vector<8x512xbf16>
    %165 = arith.extf %164 : vector<8x512xbf16> to vector<8x512xf32>
    %166 = arith.addf %162, %165 : vector<8x512xf32>
    %167 = arith.truncf %166 : vector<8x512xf32> to vector<8x512xbf16>
    %168 = vector.extract_strided_slice %167 {offsets = [0, 0], sizes = [8, 128], strides = [1, 1]} : vector<8x512xbf16> to vector<8x128xbf16>
    %169 = arith.negf %168 : vector<8x128xbf16>
    %170 = math.exp %169 : vector<8x128xbf16>
    %cst_54 = arith.constant 1.000000e+00 : bf16
    %171 = vector.broadcast %cst_54 : bf16 to vector<8x128xbf16>
    %172 = arith.addf %171, %170 : vector<8x128xbf16>
    %173 = arith.divf %171, %172 : vector<8x128xbf16>
    %174 = vector.extract_strided_slice %167 {offsets = [0, 128], sizes = [8, 128], strides = [1, 1]} : vector<8x512xbf16> to vector<8x128xbf16>
    %175 = arith.negf %174 : vector<8x128xbf16>
    %176 = math.exp %175 : vector<8x128xbf16>
    %cst_55 = arith.constant 1.000000e+00 : bf16
    %177 = vector.broadcast %cst_55 : bf16 to vector<8x128xbf16>
    %178 = arith.addf %177, %176 : vector<8x128xbf16>
    %179 = arith.divf %177, %178 : vector<8x128xbf16>
    %180 = vector.extract_strided_slice %167 {offsets = [0, 256], sizes = [8, 128], strides = [1, 1]} : vector<8x512xbf16> to vector<8x128xbf16>
    %181 = math.tanh %180 : vector<8x128xbf16>
    %182 = vector.extract_strided_slice %167 {offsets = [0, 384], sizes = [8, 128], strides = [1, 1]} : vector<8x512xbf16> to vector<8x128xbf16>
    %183 = arith.negf %182 : vector<8x128xbf16>
    %184 = math.exp %183 : vector<8x128xbf16>
    %cst_56 = arith.constant 1.000000e+00 : bf16
    %185 = vector.broadcast %cst_56 : bf16 to vector<8x128xbf16>
    %186 = arith.addf %185, %184 : vector<8x128xbf16>
    %187 = arith.divf %185, %186 : vector<8x128xbf16>
    %188 = arith.extf %179 : vector<8x128xbf16> to vector<8x128xf32>
    %189 = arith.mulf %188, %155 : vector<8x128xf32>
    %190 = arith.mulf %173, %181 : vector<8x128xbf16>
    %191 = arith.extf %190 : vector<8x128xbf16> to vector<8x128xf32>
    %192 = arith.addf %189, %191 : vector<8x128xf32>
    %193 = arith.truncf %192 : vector<8x128xf32> to vector<8x128xbf16>
    %194 = math.tanh %193 : vector<8x128xbf16>
    %195 = arith.mulf %187, %194 : vector<8x128xbf16>
    %c4_57 = arith.constant 4 : index
    %c0_58 = arith.constant 0 : index
    %c0_59 = arith.constant 0 : index
    %196 = vector.load %arg16[%c4_57, %c0_58, %c0_59] : memref<8x8x128xbf16, #tpu.memory_space<vmem>>, vector<1x8x128xbf16>
    %197 = vector.shape_cast %196 : vector<1x8x128xbf16> to vector<8x128xbf16>
    %198 = vector.shape_cast %195 : vector<8x128xbf16> to vector<1x8x128xbf16>
    tpu.vector_store %arg16[%c4_57, %c0_58, %c0_59], %198 {strides = array<i32>} : memref<8x8x128xbf16, #tpu.memory_space<vmem>>, vector<1x8x128xbf16>,
    %cst_60 = arith.constant dense<0.000000e+00> : vector<8x512xf32>
    %199 = tpu.matmul %195, %11, %cst_60 {dimension_numbers = #tpu.dot_dimension_numbers<[1], [0], [0], [1], [0, 0, 1, 1], [], []>} : vector<8x128xbf16>, vector<128x512xbf16>, vector<8x512xf32> -> vector<8x512xf32>
    %c5 = arith.constant 5 : index
    %c0_61 = arith.constant 0 : index
    %c0_62 = arith.constant 0 : index
    %200 = vector.load %arg15[%c5, %c0_61, %c0_62] : memref<8x8x512xbf16, #tpu.memory_space<vmem>>, vector<1x8x512xbf16>
    %201 = vector.shape_cast %200 : vector<1x8x512xbf16> to vector<8x512xbf16>
    %202 = arith.extf %201 : vector<8x512xbf16> to vector<8x512xf32>
    %203 = arith.addf %199, %202 : vector<8x512xf32>
    %204 = arith.truncf %203 : vector<8x512xf32> to vector<8x512xbf16>
    %205 = vector.extract_strided_slice %204 {offsets = [0, 0], sizes = [8, 128], strides = [1, 1]} : vector<8x512xbf16> to vector<8x128xbf16>
    %206 = arith.negf %205 : vector<8x128xbf16>
    %207 = math.exp %206 : vector<8x128xbf16>
    %cst_63 = arith.constant 1.000000e+00 : bf16
    %208 = vector.broadcast %cst_63 : bf16 to vector<8x128xbf16>
    %209 = arith.addf %208, %207 : vector<8x128xbf16>
    %210 = arith.divf %208, %209 : vector<8x128xbf16>
    %211 = vector.extract_strided_slice %204 {offsets = [0, 128], sizes = [8, 128], strides = [1, 1]} : vector<8x512xbf16> to vector<8x128xbf16>
    %212 = arith.negf %211 : vector<8x128xbf16>
    %213 = math.exp %212 : vector<8x128xbf16>
    %cst_64 = arith.constant 1.000000e+00 : bf16
    %214 = vector.broadcast %cst_64 : bf16 to vector<8x128xbf16>
    %215 = arith.addf %214, %213 : vector<8x128xbf16>
    %216 = arith.divf %214, %215 : vector<8x128xbf16>
    %217 = vector.extract_strided_slice %204 {offsets = [0, 256], sizes = [8, 128], strides = [1, 1]} : vector<8x512xbf16> to vector<8x128xbf16>
    %218 = math.tanh %217 : vector<8x128xbf16>
    %219 = vector.extract_strided_slice %204 {offsets = [0, 384], sizes = [8, 128], strides = [1, 1]} : vector<8x512xbf16> to vector<8x128xbf16>
    %220 = arith.negf %219 : vector<8x128xbf16>
    %221 = math.exp %220 : vector<8x128xbf16>
    %cst_65 = arith.constant 1.000000e+00 : bf16
    %222 = vector.broadcast %cst_65 : bf16 to vector<8x128xbf16>
    %223 = arith.addf %222, %221 : vector<8x128xbf16>
    %224 = arith.divf %222, %223 : vector<8x128xbf16>
    %225 = arith.extf %216 : vector<8x128xbf16> to vector<8x128xf32>
    %226 = arith.mulf %225, %192 : vector<8x128xf32>
    %227 = arith.mulf %210, %218 : vector<8x128xbf16>
    %228 = arith.extf %227 : vector<8x128xbf16> to vector<8x128xf32>
    %229 = arith.addf %226, %228 : vector<8x128xf32>
    %230 = arith.truncf %229 : vector<8x128xf32> to vector<8x128xbf16>
    %231 = math.tanh %230 : vector<8x128xbf16>
    %232 = arith.mulf %224, %231 : vector<8x128xbf16>
    %c5_66 = arith.constant 5 : index
    %c0_67 = arith.constant 0 : index
    %c0_68 = arith.constant 0 : index
    %233 = vector.load %arg16[%c5_66, %c0_67, %c0_68] : memref<8x8x128xbf16, #tpu.memory_space<vmem>>, vector<1x8x128xbf16>
    %234 = vector.shape_cast %233 : vector<1x8x128xbf16> to vector<8x128xbf16>
    %235 = vector.shape_cast %232 : vector<8x128xbf16> to vector<1x8x128xbf16>
    tpu.vector_store %arg16[%c5_66, %c0_67, %c0_68], %235 {strides = array<i32>} : memref<8x8x128xbf16, #tpu.memory_space<vmem>>, vector<1x8x128xbf16>,
    %cst_69 = arith.constant dense<0.000000e+00> : vector<8x512xf32>
    %236 = tpu.matmul %232, %11, %cst_69 {dimension_numbers = #tpu.dot_dimension_numbers<[1], [0], [0], [1], [0, 0, 1, 1], [], []>} : vector<8x128xbf16>, vector<128x512xbf16>, vector<8x512xf32> -> vector<8x512xf32>
    %c6 = arith.constant 6 : index
    %c0_70 = arith.constant 0 : index
    %c0_71 = arith.constant 0 : index
    %237 = vector.load %arg15[%c6, %c0_70, %c0_71] : memref<8x8x512xbf16, #tpu.memory_space<vmem>>, vector<1x8x512xbf16>
    %238 = vector.shape_cast %237 : vector<1x8x512xbf16> to vector<8x512xbf16>
    %239 = arith.extf %238 : vector<8x512xbf16> to vector<8x512xf32>
    %240 = arith.addf %236, %239 : vector<8x512xf32>
    %241 = arith.truncf %240 : vector<8x512xf32> to vector<8x512xbf16>
    %242 = vector.extract_strided_slice %241 {offsets = [0, 0], sizes = [8, 128], strides = [1, 1]} : vector<8x512xbf16> to vector<8x128xbf16>
    %243 = arith.negf %242 : vector<8x128xbf16>
    %244 = math.exp %243 : vector<8x128xbf16>
    %cst_72 = arith.constant 1.000000e+00 : bf16
    %245 = vector.broadcast %cst_72 : bf16 to vector<8x128xbf16>
    %246 = arith.addf %245, %244 : vector<8x128xbf16>
    %247 = arith.divf %245, %246 : vector<8x128xbf16>
    %248 = vector.extract_strided_slice %241 {offsets = [0, 128], sizes = [8, 128], strides = [1, 1]} : vector<8x512xbf16> to vector<8x128xbf16>
    %249 = arith.negf %248 : vector<8x128xbf16>
    %250 = math.exp %249 : vector<8x128xbf16>
    %cst_73 = arith.constant 1.000000e+00 : bf16
    %251 = vector.broadcast %cst_73 : bf16 to vector<8x128xbf16>
    %252 = arith.addf %251, %250 : vector<8x128xbf16>
    %253 = arith.divf %251, %252 : vector<8x128xbf16>
    %254 = vector.extract_strided_slice %241 {offsets = [0, 256], sizes = [8, 128], strides = [1, 1]} : vector<8x512xbf16> to vector<8x128xbf16>
    %255 = math.tanh %254 : vector<8x128xbf16>
    %256 = vector.extract_strided_slice %241 {offsets = [0, 384], sizes = [8, 128], strides = [1, 1]} : vector<8x512xbf16> to vector<8x128xbf16>
    %257 = arith.negf %256 : vector<8x128xbf16>
    %258 = math.exp %257 : vector<8x128xbf16>
    %cst_74 = arith.constant 1.000000e+00 : bf16
    %259 = vector.broadcast %cst_74 : bf16 to vector<8x128xbf16>
    %260 = arith.addf %259, %258 : vector<8x128xbf16>
    %261 = arith.divf %259, %260 : vector<8x128xbf16>
    %262 = arith.extf %253 : vector<8x128xbf16> to vector<8x128xf32>
    %263 = arith.mulf %262, %229 : vector<8x128xf32>
    %264 = arith.mulf %247, %255 : vector<8x128xbf16>
    %265 = arith.extf %264 : vector<8x128xbf16> to vector<8x128xf32>
    %266 = arith.addf %263, %265 : vector<8x128xf32>
    %267 = arith.truncf %266 : vector<8x128xf32> to vector<8x128xbf16>
    %268 = math.tanh %267 : vector<8x128xbf16>
    %269 = arith.mulf %261, %268 : vector<8x128xbf16>
    %c6_75 = arith.constant 6 : index
    %c0_76 = arith.constant 0 : index
    %c0_77 = arith.constant 0 : index
    %270 = vector.load %arg16[%c6_75, %c0_76, %c0_77] : memref<8x8x128xbf16, #tpu.memory_space<vmem>>, vector<1x8x128xbf16>
    %271 = vector.shape_cast %270 : vector<1x8x128xbf16> to vector<8x128xbf16>
    %272 = vector.shape_cast %269 : vector<8x128xbf16> to vector<1x8x128xbf16>
    tpu.vector_store %arg16[%c6_75, %c0_76, %c0_77], %272 {strides = array<i32>} : memref<8x8x128xbf16, #tpu.memory_space<vmem>>, vector<1x8x128xbf16>,
    %cst_78 = arith.constant dense<0.000000e+00> : vector<8x512xf32>
    %273 = tpu.matmul %269, %11, %cst_78 {dimension_numbers = #tpu.dot_dimension_numbers<[1], [0], [0], [1], [0, 0, 1, 1], [], []>} : vector<8x128xbf16>, vector<128x512xbf16>, vector<8x512xf32> -> vector<8x512xf32>
    %c7 = arith.constant 7 : index
    %c0_79 = arith.constant 0 : index
    %c0_80 = arith.constant 0 : index
    %274 = vector.load %arg15[%c7, %c0_79, %c0_80] : memref<8x8x512xbf16, #tpu.memory_space<vmem>>, vector<1x8x512xbf16>
    %275 = vector.shape_cast %274 : vector<1x8x512xbf16> to vector<8x512xbf16>
    %276 = arith.extf %275 : vector<8x512xbf16> to vector<8x512xf32>
    %277 = arith.addf %273, %276 : vector<8x512xf32>
    %278 = arith.truncf %277 : vector<8x512xf32> to vector<8x512xbf16>
    %279 = vector.extract_strided_slice %278 {offsets = [0, 0], sizes = [8, 128], strides = [1, 1]} : vector<8x512xbf16> to vector<8x128xbf16>
    %280 = arith.negf %279 : vector<8x128xbf16>
    %281 = math.exp %280 : vector<8x128xbf16>
    %cst_81 = arith.constant 1.000000e+00 : bf16
    %282 = vector.broadcast %cst_81 : bf16 to vector<8x128xbf16>
    %283 = arith.addf %282, %281 : vector<8x128xbf16>
    %284 = arith.divf %282, %283 : vector<8x128xbf16>
    %285 = vector.extract_strided_slice %278 {offsets = [0, 128], sizes = [8, 128], strides = [1, 1]} : vector<8x512xbf16> to vector<8x128xbf16>
    %286 = arith.negf %285 : vector<8x128xbf16>
    %287 = math.exp %286 : vector<8x128xbf16>
    %cst_82 = arith.constant 1.000000e+00 : bf16
    %288 = vector.broadcast %cst_82 : bf16 to vector<8x128xbf16>
    %289 = arith.addf %288, %287 : vector<8x128xbf16>
    %290 = arith.divf %288, %289 : vector<8x128xbf16>
    %291 = vector.extract_strided_slice %278 {offsets = [0, 256], sizes = [8, 128], strides = [1, 1]} : vector<8x512xbf16> to vector<8x128xbf16>
    %292 = math.tanh %291 : vector<8x128xbf16>
    %293 = vector.extract_strided_slice %278 {offsets = [0, 384], sizes = [8, 128], strides = [1, 1]} : vector<8x512xbf16> to vector<8x128xbf16>
    %294 = arith.negf %293 : vector<8x128xbf16>
    %295 = math.exp %294 : vector<8x128xbf16>
    %cst_83 = arith.constant 1.000000e+00 : bf16
    %296 = vector.broadcast %cst_83 : bf16 to vector<8x128xbf16>
    %297 = arith.addf %296, %295 : vector<8x128xbf16>
    %298 = arith.divf %296, %297 : vector<8x128xbf16>
    %299 = arith.extf %290 : vector<8x128xbf16> to vector<8x128xf32>
    %300 = arith.mulf %299, %266 : vector<8x128xf32>
    %301 = arith.mulf %284, %292 : vector<8x128xbf16>
    %302 = arith.extf %301 : vector<8x128xbf16> to vector<8x128xf32>
    %303 = arith.addf %300, %302 : vector<8x128xf32>
    %304 = arith.truncf %303 : vector<8x128xf32> to vector<8x128xbf16>
    %305 = math.tanh %304 : vector<8x128xbf16>
    %306 = arith.mulf %298, %305 : vector<8x128xbf16>
    %c7_84 = arith.constant 7 : index
    %c0_85 = arith.constant 0 : index
    %c0_86 = arith.constant 0 : index
    %307 = vector.load %arg16[%c7_84, %c0_85, %c0_86] : memref<8x8x128xbf16, #tpu.memory_space<vmem>>, vector<1x8x128xbf16>
    %308 = vector.shape_cast %307 : vector<1x8x128xbf16> to vector<8x128xbf16>
    %309 = vector.shape_cast %306 : vector<8x128xbf16> to vector<1x8x128xbf16>
    tpu.vector_store %arg16[%c7_84, %c0_85, %c0_86], %309 {strides = array<i32>} : memref<8x8x128xbf16, #tpu.memory_space<vmem>>, vector<1x8x128xbf16>,
    %c0_87 = arith.constant 0 : index
    %c0_88 = arith.constant 0 : index
    %c0_89 = arith.constant 0 : index
    %310 = vector.load %arg16[%c0_87, %c0_88, %c0_89] : memref<8x8x128xbf16, #tpu.memory_space<vmem>>, vector<8x8x128xbf16>
    %311 = vector.shape_cast %310 : vector<8x8x128xbf16> to vector<64x128xbf16>
    %c0_90 = arith.constant 0 : index
    %c0_91 = arith.constant 0 : index
    %312 = vector.load %arg5[%c0_90, %c0_91] : memref<128x512xbf16, #tpu.memory_space<vmem>>, vector<128x512xbf16>
    %cst_92 = arith.constant dense<0.000000e+00> : vector<64x512xf32>
    %313 = tpu.matmul %311, %312, %cst_92 {dimension_numbers = #tpu.dot_dimension_numbers<[1], [0], [0], [1], [0, 0, 1, 1], [], []>} : vector<64x128xbf16>, vector<128x512xbf16>, vector<64x512xf32> -> vector<64x512xf32>
    %c0_93 = arith.constant 0 : index
    %c0_94 = arith.constant 0 : index
    %314 = vector.load %arg7[%c0_93, %c0_94] : memref<1x512xf32, #tpu.memory_space<vmem>>, vector<1x512xf32>
    %315 = vector.broadcast %314 : vector<1x512xf32> to vector<64x512xf32>
    %316 = arith.addf %313, %315 : vector<64x512xf32>
    %317 = vector.shape_cast %316 : vector<64x512xf32> to vector<8x8x512xf32>
    %318 = arith.truncf %317 : vector<8x8x512xf32> to vector<8x8x512xbf16>
    %c0_95 = arith.constant 0 : index
    %c0_96 = arith.constant 0 : index
    %c0_97 = arith.constant 0 : index
    %319 = vector.load %arg15[%c0_95, %c0_96, %c0_97] : memref<8x8x512xbf16, #tpu.memory_space<vmem>>, vector<8x8x512xbf16>
    tpu.vector_store %arg15[%c0_95, %c0_96, %c0_97], %318 {strides = array<i32>} : memref<8x8x512xbf16, #tpu.memory_space<vmem>>, vector<8x8x512xbf16>,
    %c0_98 = arith.constant 0 : index
    %c0_99 = arith.constant 0 : index
    %320 = vector.load %arg6[%c0_98, %c0_99] : memref<128x512xbf16, #tpu.memory_space<vmem>>, vector<128x512xbf16>
    %cst_100 = arith.constant 0.000000e+00 : bf16
    %321 = vector.broadcast %cst_100 : bf16 to vector<8x128xbf16>
    %cst_101 = arith.constant 0.000000e+00 : f32
    %322 = vector.broadcast %cst_101 : f32 to vector<8x128xf32>
    %cst_102 = arith.constant dense<0.000000e+00> : vector<8x512xf32>
    %323 = tpu.matmul %321, %320, %cst_102 {dimension_numbers = #tpu.dot_dimension_numbers<[1], [0], [0], [1], [0, 0, 1, 1], [], []>} : vector<8x128xbf16>, vector<128x512xbf16>, vector<8x512xf32> -> vector<8x512xf32>
    %c0_103 = arith.constant 0 : index
    %c0_104 = arith.constant 0 : index
    %c0_105 = arith.constant 0 : index
    %324 = vector.load %arg15[%c0_103, %c0_104, %c0_105] : memref<8x8x512xbf16, #tpu.memory_space<vmem>>, vector<1x8x512xbf16>
    %325 = vector.shape_cast %324 : vector<1x8x512xbf16> to vector<8x512xbf16>
    %326 = arith.extf %325 : vector<8x512xbf16> to vector<8x512xf32>
    %327 = arith.addf %323, %326 : vector<8x512xf32>
    %328 = arith.truncf %327 : vector<8x512xf32> to vector<8x512xbf16>
    %329 = vector.extract_strided_slice %328 {offsets = [0, 0], sizes = [8, 128], strides = [1, 1]} : vector<8x512xbf16> to vector<8x128xbf16>
    %330 = arith.negf %329 : vector<8x128xbf16>
    %331 = math.exp %330 : vector<8x128xbf16>
    %cst_106 = arith.constant 1.000000e+00 : bf16
    %332 = vector.broadcast %cst_106 : bf16 to vector<8x128xbf16>
    %333 = arith.addf %332, %331 : vector<8x128xbf16>
    %334 = arith.divf %332, %333 : vector<8x128xbf16>
    %335 = vector.extract_strided_slice %328 {offsets = [0, 128], sizes = [8, 128], strides = [1, 1]} : vector<8x512xbf16> to vector<8x128xbf16>
    %336 = arith.negf %335 : vector<8x128xbf16>
    %337 = math.exp %336 : vector<8x128xbf16>
    %cst_107 = arith.constant 1.000000e+00 : bf16
    %338 = vector.broadcast %cst_107 : bf16 to vector<8x128xbf16>
    %339 = arith.addf %338, %337 : vector<8x128xbf16>
    %340 = arith.divf %338, %339 : vector<8x128xbf16>
    %341 = vector.extract_strided_slice %328 {offsets = [0, 256], sizes = [8, 128], strides = [1, 1]} : vector<8x512xbf16> to vector<8x128xbf16>
    %342 = math.tanh %341 : vector<8x128xbf16>
    %343 = vector.extract_strided_slice %328 {offsets = [0, 384], sizes = [8, 128], strides = [1, 1]} : vector<8x512xbf16> to vector<8x128xbf16>
    %344 = arith.negf %343 : vector<8x128xbf16>
    %345 = math.exp %344 : vector<8x128xbf16>
    %cst_108 = arith.constant 1.000000e+00 : bf16
    %346 = vector.broadcast %cst_108 : bf16 to vector<8x128xbf16>
    %347 = arith.addf %346, %345 : vector<8x128xbf16>
    %348 = arith.divf %346, %347 : vector<8x128xbf16>
    %349 = arith.extf %340 : vector<8x128xbf16> to vector<8x128xf32>
    %350 = arith.mulf %349, %322 : vector<8x128xf32>
    %351 = arith.mulf %334, %342 : vector<8x128xbf16>
    %352 = arith.extf %351 : vector<8x128xbf16> to vector<8x128xf32>
    %353 = arith.addf %350, %352 : vector<8x128xf32>
    %354 = arith.truncf %353 : vector<8x128xf32> to vector<8x128xbf16>
    %355 = math.tanh %354 : vector<8x128xbf16>
    %356 = arith.mulf %348, %355 : vector<8x128xbf16>
    %cst_109 = arith.constant 0.000000e+00 : bf16
    %357 = vector.broadcast %cst_109 : bf16 to vector<8x128xbf16>
    %358 = arith.maximumf %356, %357 : vector<8x128xbf16>
    %c0_110 = arith.constant 0 : index
    %c0_111 = arith.constant 0 : index
    %c0_112 = arith.constant 0 : index
    %359 = vector.load %arg8[%c0_110, %c0_111, %c0_112] : memref<8x128x128xbf16, #tpu.memory_space<vmem>>, vector<1x128x128xbf16>
    %360 = vector.shape_cast %359 : vector<1x128x128xbf16> to vector<128x128xbf16>
    %cst_113 = arith.constant dense<0.000000e+00> : vector<8x128xf32>
    %361 = tpu.matmul %358, %360, %cst_113 {dimension_numbers = #tpu.dot_dimension_numbers<[1], [0], [0], [1], [0, 0, 1, 1], [], []>} : vector<8x128xbf16>, vector<128x128xbf16>, vector<8x128xf32> -> vector<8x128xf32>
    %362 = arith.addf %0, %361 : vector<8x128xf32>
    %cst_114 = arith.constant dense<0.000000e+00> : vector<8x512xf32>
    %363 = tpu.matmul %356, %320, %cst_114 {dimension_numbers = #tpu.dot_dimension_numbers<[1], [0], [0], [1], [0, 0, 1, 1], [], []>} : vector<8x128xbf16>, vector<128x512xbf16>, vector<8x512xf32> -> vector<8x512xf32>
    %c1_115 = arith.constant 1 : index
    %c0_116 = arith.constant 0 : index
    %c0_117 = arith.constant 0 : index
    %364 = vector.load %arg15[%c1_115, %c0_116, %c0_117] : memref<8x8x512xbf16, #tpu.memory_space<vmem>>, vector<1x8x512xbf16>
    %365 = vector.shape_cast %364 : vector<1x8x512xbf16> to vector<8x512xbf16>
    %366 = arith.extf %365 : vector<8x512xbf16> to vector<8x512xf32>
    %367 = arith.addf %363, %366 : vector<8x512xf32>
    %368 = arith.truncf %367 : vector<8x512xf32> to vector<8x512xbf16>
    %369 = vector.extract_strided_slice %368 {offsets = [0, 0], sizes = [8, 128], strides = [1, 1]} : vector<8x512xbf16> to vector<8x128xbf16>
    %370 = arith.negf %369 : vector<8x128xbf16>
    %371 = math.exp %370 : vector<8x128xbf16>
    %cst_118 = arith.constant 1.000000e+00 : bf16
    %372 = vector.broadcast %cst_118 : bf16 to vector<8x128xbf16>
    %373 = arith.addf %372, %371 : vector<8x128xbf16>
    %374 = arith.divf %372, %373 : vector<8x128xbf16>
    %375 = vector.extract_strided_slice %368 {offsets = [0, 128], sizes = [8, 128], strides = [1, 1]} : vector<8x512xbf16> to vector<8x128xbf16>
    %376 = arith.negf %375 : vector<8x128xbf16>
    %377 = math.exp %376 : vector<8x128xbf16>
    %cst_119 = arith.constant 1.000000e+00 : bf16
    %378 = vector.broadcast %cst_119 : bf16 to vector<8x128xbf16>
    %379 = arith.addf %378, %377 : vector<8x128xbf16>
    %380 = arith.divf %378, %379 : vector<8x128xbf16>
    %381 = vector.extract_strided_slice %368 {offsets = [0, 256], sizes = [8, 128], strides = [1, 1]} : vector<8x512xbf16> to vector<8x128xbf16>
    %382 = math.tanh %381 : vector<8x128xbf16>
    %383 = vector.extract_strided_slice %368 {offsets = [0, 384], sizes = [8, 128], strides = [1, 1]} : vector<8x512xbf16> to vector<8x128xbf16>
    %384 = arith.negf %383 : vector<8x128xbf16>
    %385 = math.exp %384 : vector<8x128xbf16>
    %cst_120 = arith.constant 1.000000e+00 : bf16
    %386 = vector.broadcast %cst_120 : bf16 to vector<8x128xbf16>
    %387 = arith.addf %386, %385 : vector<8x128xbf16>
    %388 = arith.divf %386, %387 : vector<8x128xbf16>
    %389 = arith.extf %380 : vector<8x128xbf16> to vector<8x128xf32>
    %390 = arith.mulf %389, %353 : vector<8x128xf32>
    %391 = arith.mulf %374, %382 : vector<8x128xbf16>
    %392 = arith.extf %391 : vector<8x128xbf16> to vector<8x128xf32>
    %393 = arith.addf %390, %392 : vector<8x128xf32>
    %394 = arith.truncf %393 : vector<8x128xf32> to vector<8x128xbf16>
    %395 = math.tanh %394 : vector<8x128xbf16>
    %396 = arith.mulf %388, %395 : vector<8x128xbf16>
    %cst_121 = arith.constant 0.000000e+00 : bf16
    %397 = vector.broadcast %cst_121 : bf16 to vector<8x128xbf16>
    %398 = arith.maximumf %396, %397 : vector<8x128xbf16>
    %c1_122 = arith.constant 1 : index
    %c0_123 = arith.constant 0 : index
    %c0_124 = arith.constant 0 : index
    %399 = vector.load %arg8[%c1_122, %c0_123, %c0_124] : memref<8x128x128xbf16, #tpu.memory_space<vmem>>, vector<1x128x128xbf16>
    %400 = vector.shape_cast %399 : vector<1x128x128xbf16> to vector<128x128xbf16>
    %cst_125 = arith.constant dense<0.000000e+00> : vector<8x128xf32>
    %401 = tpu.matmul %398, %400, %cst_125 {dimension_numbers = #tpu.dot_dimension_numbers<[1], [0], [0], [1], [0, 0, 1, 1], [], []>} : vector<8x128xbf16>, vector<128x128xbf16>, vector<8x128xf32> -> vector<8x128xf32>
    %402 = arith.addf %362, %401 : vector<8x128xf32>
    %cst_126 = arith.constant dense<0.000000e+00> : vector<8x512xf32>
    %403 = tpu.matmul %396, %320, %cst_126 {dimension_numbers = #tpu.dot_dimension_numbers<[1], [0], [0], [1], [0, 0, 1, 1], [], []>} : vector<8x128xbf16>, vector<128x512xbf16>, vector<8x512xf32> -> vector<8x512xf32>
    %c2_127 = arith.constant 2 : index
    %c0_128 = arith.constant 0 : index
    %c0_129 = arith.constant 0 : index
    %404 = vector.load %arg15[%c2_127, %c0_128, %c0_129] : memref<8x8x512xbf16, #tpu.memory_space<vmem>>, vector<1x8x512xbf16>
    %405 = vector.shape_cast %404 : vector<1x8x512xbf16> to vector<8x512xbf16>
    %406 = arith.extf %405 : vector<8x512xbf16> to vector<8x512xf32>
    %407 = arith.addf %403, %406 : vector<8x512xf32>
    %408 = arith.truncf %407 : vector<8x512xf32> to vector<8x512xbf16>
    %409 = vector.extract_strided_slice %408 {offsets = [0, 0], sizes = [8, 128], strides = [1, 1]} : vector<8x512xbf16> to vector<8x128xbf16>
    %410 = arith.negf %409 : vector<8x128xbf16>
    %411 = math.exp %410 : vector<8x128xbf16>
    %cst_130 = arith.constant 1.000000e+00 : bf16
    %412 = vector.broadcast %cst_130 : bf16 to vector<8x128xbf16>
    %413 = arith.addf %412, %411 : vector<8x128xbf16>
    %414 = arith.divf %412, %413 : vector<8x128xbf16>
    %415 = vector.extract_strided_slice %408 {offsets = [0, 128], sizes = [8, 128], strides = [1, 1]} : vector<8x512xbf16> to vector<8x128xbf16>
    %416 = arith.negf %415 : vector<8x128xbf16>
    %417 = math.exp %416 : vector<8x128xbf16>
    %cst_131 = arith.constant 1.000000e+00 : bf16
    %418 = vector.broadcast %cst_131 : bf16 to vector<8x128xbf16>
    %419 = arith.addf %418, %417 : vector<8x128xbf16>
    %420 = arith.divf %418, %419 : vector<8x128xbf16>
    %421 = vector.extract_strided_slice %408 {offsets = [0, 256], sizes = [8, 128], strides = [1, 1]} : vector<8x512xbf16> to vector<8x128xbf16>
    %422 = math.tanh %421 : vector<8x128xbf16>
    %423 = vector.extract_strided_slice %408 {offsets = [0, 384], sizes = [8, 128], strides = [1, 1]} : vector<8x512xbf16> to vector<8x128xbf16>
    %424 = arith.negf %423 : vector<8x128xbf16>
    %425 = math.exp %424 : vector<8x128xbf16>
    %cst_132 = arith.constant 1.000000e+00 : bf16
    %426 = vector.broadcast %cst_132 : bf16 to vector<8x128xbf16>
    %427 = arith.addf %426, %425 : vector<8x128xbf16>
    %428 = arith.divf %426, %427 : vector<8x128xbf16>
    %429 = arith.extf %420 : vector<8x128xbf16> to vector<8x128xf32>
    %430 = arith.mulf %429, %393 : vector<8x128xf32>
    %431 = arith.mulf %414, %422 : vector<8x128xbf16>
    %432 = arith.extf %431 : vector<8x128xbf16> to vector<8x128xf32>
    %433 = arith.addf %430, %432 : vector<8x128xf32>
    %434 = arith.truncf %433 : vector<8x128xf32> to vector<8x128xbf16>
    %435 = math.tanh %434 : vector<8x128xbf16>
    %436 = arith.mulf %428, %435 : vector<8x128xbf16>
    %cst_133 = arith.constant 0.000000e+00 : bf16
    %437 = vector.broadcast %cst_133 : bf16 to vector<8x128xbf16>
    %438 = arith.maximumf %436, %437 : vector<8x128xbf16>
    %c2_134 = arith.constant 2 : index
    %c0_135 = arith.constant 0 : index
    %c0_136 = arith.constant 0 : index
    %439 = vector.load %arg8[%c2_134, %c0_135, %c0_136] : memref<8x128x128xbf16, #tpu.memory_space<vmem>>, vector<1x128x128xbf16>
    %440 = vector.shape_cast %439 : vector<1x128x128xbf16> to vector<128x128xbf16>
    %cst_137 = arith.constant dense<0.000000e+00> : vector<8x128xf32>
    %441 = tpu.matmul %438, %440, %cst_137 {dimension_numbers = #tpu.dot_dimension_numbers<[1], [0], [0], [1], [0, 0, 1, 1], [], []>} : vector<8x128xbf16>, vector<128x128xbf16>, vector<8x128xf32> -> vector<8x128xf32>
    %442 = arith.addf %402, %441 : vector<8x128xf32>
    %cst_138 = arith.constant dense<0.000000e+00> : vector<8x512xf32>
    %443 = tpu.matmul %436, %320, %cst_138 {dimension_numbers = #tpu.dot_dimension_numbers<[1], [0], [0], [1], [0, 0, 1, 1], [], []>} : vector<8x128xbf16>, vector<128x512xbf16>, vector<8x512xf32> -> vector<8x512xf32>
    %c3_139 = arith.constant 3 : index
    %c0_140 = arith.constant 0 : index
    %c0_141 = arith.constant 0 : index
    %444 = vector.load %arg15[%c3_139, %c0_140, %c0_141] : memref<8x8x512xbf16, #tpu.memory_space<vmem>>, vector<1x8x512xbf16>
    %445 = vector.shape_cast %444 : vector<1x8x512xbf16> to vector<8x512xbf16>
    %446 = arith.extf %445 : vector<8x512xbf16> to vector<8x512xf32>
    %447 = arith.addf %443, %446 : vector<8x512xf32>
    %448 = arith.truncf %447 : vector<8x512xf32> to vector<8x512xbf16>
    %449 = vector.extract_strided_slice %448 {offsets = [0, 0], sizes = [8, 128], strides = [1, 1]} : vector<8x512xbf16> to vector<8x128xbf16>
    %450 = arith.negf %449 : vector<8x128xbf16>
    %451 = math.exp %450 : vector<8x128xbf16>
    %cst_142 = arith.constant 1.000000e+00 : bf16
    %452 = vector.broadcast %cst_142 : bf16 to vector<8x128xbf16>
    %453 = arith.addf %452, %451 : vector<8x128xbf16>
    %454 = arith.divf %452, %453 : vector<8x128xbf16>
    %455 = vector.extract_strided_slice %448 {offsets = [0, 128], sizes = [8, 128], strides = [1, 1]} : vector<8x512xbf16> to vector<8x128xbf16>
    %456 = arith.negf %455 : vector<8x128xbf16>
    %457 = math.exp %456 : vector<8x128xbf16>
    %cst_143 = arith.constant 1.000000e+00 : bf16
    %458 = vector.broadcast %cst_143 : bf16 to vector<8x128xbf16>
    %459 = arith.addf %458, %457 : vector<8x128xbf16>
    %460 = arith.divf %458, %459 : vector<8x128xbf16>
    %461 = vector.extract_strided_slice %448 {offsets = [0, 256], sizes = [8, 128], strides = [1, 1]} : vector<8x512xbf16> to vector<8x128xbf16>
    %462 = math.tanh %461 : vector<8x128xbf16>
    %463 = vector.extract_strided_slice %448 {offsets = [0, 384], sizes = [8, 128], strides = [1, 1]} : vector<8x512xbf16> to vector<8x128xbf16>
    %464 = arith.negf %463 : vector<8x128xbf16>
    %465 = math.exp %464 : vector<8x128xbf16>
    %cst_144 = arith.constant 1.000000e+00 : bf16
    %466 = vector.broadcast %cst_144 : bf16 to vector<8x128xbf16>
    %467 = arith.addf %466, %465 : vector<8x128xbf16>
    %468 = arith.divf %466, %467 : vector<8x128xbf16>
    %469 = arith.extf %460 : vector<8x128xbf16> to vector<8x128xf32>
    %470 = arith.mulf %469, %433 : vector<8x128xf32>
    %471 = arith.mulf %454, %462 : vector<8x128xbf16>
    %472 = arith.extf %471 : vector<8x128xbf16> to vector<8x128xf32>
    %473 = arith.addf %470, %472 : vector<8x128xf32>
    %474 = arith.truncf %473 : vector<8x128xf32> to vector<8x128xbf16>
    %475 = math.tanh %474 : vector<8x128xbf16>
    %476 = arith.mulf %468, %475 : vector<8x128xbf16>
    %cst_145 = arith.constant 0.000000e+00 : bf16
    %477 = vector.broadcast %cst_145 : bf16 to vector<8x128xbf16>
    %478 = arith.maximumf %476, %477 : vector<8x128xbf16>
    %c3_146 = arith.constant 3 : index
    %c0_147 = arith.constant 0 : index
    %c0_148 = arith.constant 0 : index
    %479 = vector.load %arg8[%c3_146, %c0_147, %c0_148] : memref<8x128x128xbf16, #tpu.memory_space<vmem>>, vector<1x128x128xbf16>
    %480 = vector.shape_cast %479 : vector<1x128x128xbf16> to vector<128x128xbf16>
    %cst_149 = arith.constant dense<0.000000e+00> : vector<8x128xf32>
    %481 = tpu.matmul %478, %480, %cst_149 {dimension_numbers = #tpu.dot_dimension_numbers<[1], [0], [0], [1], [0, 0, 1, 1], [], []>} : vector<8x128xbf16>, vector<128x128xbf16>, vector<8x128xf32> -> vector<8x128xf32>
    %482 = arith.addf %442, %481 : vector<8x128xf32>
    %cst_150 = arith.constant dense<0.000000e+00> : vector<8x512xf32>
    %483 = tpu.matmul %476, %320, %cst_150 {dimension_numbers = #tpu.dot_dimension_numbers<[1], [0], [0], [1], [0, 0, 1, 1], [], []>} : vector<8x128xbf16>, vector<128x512xbf16>, vector<8x512xf32> -> vector<8x512xf32>
    %c4_151 = arith.constant 4 : index
    %c0_152 = arith.constant 0 : index
    %c0_153 = arith.constant 0 : index
    %484 = vector.load %arg15[%c4_151, %c0_152, %c0_153] : memref<8x8x512xbf16, #tpu.memory_space<vmem>>, vector<1x8x512xbf16>
    %485 = vector.shape_cast %484 : vector<1x8x512xbf16> to vector<8x512xbf16>
    %486 = arith.extf %485 : vector<8x512xbf16> to vector<8x512xf32>
    %487 = arith.addf %483, %486 : vector<8x512xf32>
    %488 = arith.truncf %487 : vector<8x512xf32> to vector<8x512xbf16>
    %489 = vector.extract_strided_slice %488 {offsets = [0, 0], sizes = [8, 128], strides = [1, 1]} : vector<8x512xbf16> to vector<8x128xbf16>
    %490 = arith.negf %489 : vector<8x128xbf16>
    %491 = math.exp %490 : vector<8x128xbf16>
    %cst_154 = arith.constant 1.000000e+00 : bf16
    %492 = vector.broadcast %cst_154 : bf16 to vector<8x128xbf16>
    %493 = arith.addf %492, %491 : vector<8x128xbf16>
    %494 = arith.divf %492, %493 : vector<8x128xbf16>
    %495 = vector.extract_strided_slice %488 {offsets = [0, 128], sizes = [8, 128], strides = [1, 1]} : vector<8x512xbf16> to vector<8x128xbf16>
    %496 = arith.negf %495 : vector<8x128xbf16>
    %497 = math.exp %496 : vector<8x128xbf16>
    %cst_155 = arith.constant 1.000000e+00 : bf16
    %498 = vector.broadcast %cst_155 : bf16 to vector<8x128xbf16>
    %499 = arith.addf %498, %497 : vector<8x128xbf16>
    %500 = arith.divf %498, %499 : vector<8x128xbf16>
    %501 = vector.extract_strided_slice %488 {offsets = [0, 256], sizes = [8, 128], strides = [1, 1]} : vector<8x512xbf16> to vector<8x128xbf16>
    %502 = math.tanh %501 : vector<8x128xbf16>
    %503 = vector.extract_strided_slice %488 {offsets = [0, 384], sizes = [8, 128], strides = [1, 1]} : vector<8x512xbf16> to vector<8x128xbf16>
    %504 = arith.negf %503 : vector<8x128xbf16>
    %505 = math.exp %504 : vector<8x128xbf16>
    %cst_156 = arith.constant 1.000000e+00 : bf16
    %506 = vector.broadcast %cst_156 : bf16 to vector<8x128xbf16>
    %507 = arith.addf %506, %505 : vector<8x128xbf16>
    %508 = arith.divf %506, %507 : vector<8x128xbf16>
    %509 = arith.extf %500 : vector<8x128xbf16> to vector<8x128xf32>
    %510 = arith.mulf %509, %473 : vector<8x128xf32>
    %511 = arith.mulf %494, %502 : vector<8x128xbf16>
    %512 = arith.extf %511 : vector<8x128xbf16> to vector<8x128xf32>
    %513 = arith.addf %510, %512 : vector<8x128xf32>
    %514 = arith.truncf %513 : vector<8x128xf32> to vector<8x128xbf16>
    %515 = math.tanh %514 : vector<8x128xbf16>
    %516 = arith.mulf %508, %515 : vector<8x128xbf16>
    %cst_157 = arith.constant 0.000000e+00 : bf16
    %517 = vector.broadcast %cst_157 : bf16 to vector<8x128xbf16>
    %518 = arith.maximumf %516, %517 : vector<8x128xbf16>
    %c4_158 = arith.constant 4 : index
    %c0_159 = arith.constant 0 : index
    %c0_160 = arith.constant 0 : index
    %519 = vector.load %arg8[%c4_158, %c0_159, %c0_160] : memref<8x128x128xbf16, #tpu.memory_space<vmem>>, vector<1x128x128xbf16>
    %520 = vector.shape_cast %519 : vector<1x128x128xbf16> to vector<128x128xbf16>
    %cst_161 = arith.constant dense<0.000000e+00> : vector<8x128xf32>
    %521 = tpu.matmul %518, %520, %cst_161 {dimension_numbers = #tpu.dot_dimension_numbers<[1], [0], [0], [1], [0, 0, 1, 1], [], []>} : vector<8x128xbf16>, vector<128x128xbf16>, vector<8x128xf32> -> vector<8x128xf32>
    %522 = arith.addf %482, %521 : vector<8x128xf32>
    %cst_162 = arith.constant dense<0.000000e+00> : vector<8x512xf32>
    %523 = tpu.matmul %516, %320, %cst_162 {dimension_numbers = #tpu.dot_dimension_numbers<[1], [0], [0], [1], [0, 0, 1, 1], [], []>} : vector<8x128xbf16>, vector<128x512xbf16>, vector<8x512xf32> -> vector<8x512xf32>
    %c5_163 = arith.constant 5 : index
    %c0_164 = arith.constant 0 : index
    %c0_165 = arith.constant 0 : index
    %524 = vector.load %arg15[%c5_163, %c0_164, %c0_165] : memref<8x8x512xbf16, #tpu.memory_space<vmem>>, vector<1x8x512xbf16>
    %525 = vector.shape_cast %524 : vector<1x8x512xbf16> to vector<8x512xbf16>
    %526 = arith.extf %525 : vector<8x512xbf16> to vector<8x512xf32>
    %527 = arith.addf %523, %526 : vector<8x512xf32>
    %528 = arith.truncf %527 : vector<8x512xf32> to vector<8x512xbf16>
    %529 = vector.extract_strided_slice %528 {offsets = [0, 0], sizes = [8, 128], strides = [1, 1]} : vector<8x512xbf16> to vector<8x128xbf16>
    %530 = arith.negf %529 : vector<8x128xbf16>
    %531 = math.exp %530 : vector<8x128xbf16>
    %cst_166 = arith.constant 1.000000e+00 : bf16
    %532 = vector.broadcast %cst_166 : bf16 to vector<8x128xbf16>
    %533 = arith.addf %532, %531 : vector<8x128xbf16>
    %534 = arith.divf %532, %533 : vector<8x128xbf16>
    %535 = vector.extract_strided_slice %528 {offsets = [0, 128], sizes = [8, 128], strides = [1, 1]} : vector<8x512xbf16> to vector<8x128xbf16>
    %536 = arith.negf %535 : vector<8x128xbf16>
    %537 = math.exp %536 : vector<8x128xbf16>
    %cst_167 = arith.constant 1.000000e+00 : bf16
    %538 = vector.broadcast %cst_167 : bf16 to vector<8x128xbf16>
    %539 = arith.addf %538, %537 : vector<8x128xbf16>
    %540 = arith.divf %538, %539 : vector<8x128xbf16>
    %541 = vector.extract_strided_slice %528 {offsets = [0, 256], sizes = [8, 128], strides = [1, 1]} : vector<8x512xbf16> to vector<8x128xbf16>
    %542 = math.tanh %541 : vector<8x128xbf16>
    %543 = vector.extract_strided_slice %528 {offsets = [0, 384], sizes = [8, 128], strides = [1, 1]} : vector<8x512xbf16> to vector<8x128xbf16>
    %544 = arith.negf %543 : vector<8x128xbf16>
    %545 = math.exp %544 : vector<8x128xbf16>
    %cst_168 = arith.constant 1.000000e+00 : bf16
    %546 = vector.broadcast %cst_168 : bf16 to vector<8x128xbf16>
    %547 = arith.addf %546, %545 : vector<8x128xbf16>
    %548 = arith.divf %546, %547 : vector<8x128xbf16>
    %549 = arith.extf %540 : vector<8x128xbf16> to vector<8x128xf32>
    %550 = arith.mulf %549, %513 : vector<8x128xf32>
    %551 = arith.mulf %534, %542 : vector<8x128xbf16>
    %552 = arith.extf %551 : vector<8x128xbf16> to vector<8x128xf32>
    %553 = arith.addf %550, %552 : vector<8x128xf32>
    %554 = arith.truncf %553 : vector<8x128xf32> to vector<8x128xbf16>
    %555 = math.tanh %554 : vector<8x128xbf16>
    %556 = arith.mulf %548, %555 : vector<8x128xbf16>
    %cst_169 = arith.constant 0.000000e+00 : bf16
    %557 = vector.broadcast %cst_169 : bf16 to vector<8x128xbf16>
    %558 = arith.maximumf %556, %557 : vector<8x128xbf16>
    %c5_170 = arith.constant 5 : index
    %c0_171 = arith.constant 0 : index
    %c0_172 = arith.constant 0 : index
    %559 = vector.load %arg8[%c5_170, %c0_171, %c0_172] : memref<8x128x128xbf16, #tpu.memory_space<vmem>>, vector<1x128x128xbf16>
    %560 = vector.shape_cast %559 : vector<1x128x128xbf16> to vector<128x128xbf16>
    %cst_173 = arith.constant dense<0.000000e+00> : vector<8x128xf32>
    %561 = tpu.matmul %558, %560, %cst_173 {dimension_numbers = #tpu.dot_dimension_numbers<[1], [0], [0], [1], [0, 0, 1, 1], [], []>} : vector<8x128xbf16>, vector<128x128xbf16>, vector<8x128xf32> -> vector<8x128xf32>
    %562 = arith.addf %522, %561 : vector<8x128xf32>
    %cst_174 = arith.constant dense<0.000000e+00> : vector<8x512xf32>
    %563 = tpu.matmul %556, %320, %cst_174 {dimension_numbers = #tpu.dot_dimension_numbers<[1], [0], [0], [1], [0, 0, 1, 1], [], []>} : vector<8x128xbf16>, vector<128x512xbf16>, vector<8x512xf32> -> vector<8x512xf32>
    %c6_175 = arith.constant 6 : index
    %c0_176 = arith.constant 0 : index
    %c0_177 = arith.constant 0 : index
    %564 = vector.load %arg15[%c6_175, %c0_176, %c0_177] : memref<8x8x512xbf16, #tpu.memory_space<vmem>>, vector<1x8x512xbf16>
    %565 = vector.shape_cast %564 : vector<1x8x512xbf16> to vector<8x512xbf16>
    %566 = arith.extf %565 : vector<8x512xbf16> to vector<8x512xf32>
    %567 = arith.addf %563, %566 : vector<8x512xf32>
    %568 = arith.truncf %567 : vector<8x512xf32> to vector<8x512xbf16>
    %569 = vector.extract_strided_slice %568 {offsets = [0, 0], sizes = [8, 128], strides = [1, 1]} : vector<8x512xbf16> to vector<8x128xbf16>
    %570 = arith.negf %569 : vector<8x128xbf16>
    %571 = math.exp %570 : vector<8x128xbf16>
    %cst_178 = arith.constant 1.000000e+00 : bf16
    %572 = vector.broadcast %cst_178 : bf16 to vector<8x128xbf16>
    %573 = arith.addf %572, %571 : vector<8x128xbf16>
    %574 = arith.divf %572, %573 : vector<8x128xbf16>
    %575 = vector.extract_strided_slice %568 {offsets = [0, 128], sizes = [8, 128], strides = [1, 1]} : vector<8x512xbf16> to vector<8x128xbf16>
    %576 = arith.negf %575 : vector<8x128xbf16>
    %577 = math.exp %576 : vector<8x128xbf16>
    %cst_179 = arith.constant 1.000000e+00 : bf16
    %578 = vector.broadcast %cst_179 : bf16 to vector<8x128xbf16>
    %579 = arith.addf %578, %577 : vector<8x128xbf16>
    %580 = arith.divf %578, %579 : vector<8x128xbf16>
    %581 = vector.extract_strided_slice %568 {offsets = [0, 256], sizes = [8, 128], strides = [1, 1]} : vector<8x512xbf16> to vector<8x128xbf16>
    %582 = math.tanh %581 : vector<8x128xbf16>
    %583 = vector.extract_strided_slice %568 {offsets = [0, 384], sizes = [8, 128], strides = [1, 1]} : vector<8x512xbf16> to vector<8x128xbf16>
    %584 = arith.negf %583 : vector<8x128xbf16>
    %585 = math.exp %584 : vector<8x128xbf16>
    %cst_180 = arith.constant 1.000000e+00 : bf16
    %586 = vector.broadcast %cst_180 : bf16 to vector<8x128xbf16>
    %587 = arith.addf %586, %585 : vector<8x128xbf16>
    %588 = arith.divf %586, %587 : vector<8x128xbf16>
    %589 = arith.extf %580 : vector<8x128xbf16> to vector<8x128xf32>
    %590 = arith.mulf %589, %553 : vector<8x128xf32>
    %591 = arith.mulf %574, %582 : vector<8x128xbf16>
    %592 = arith.extf %591 : vector<8x128xbf16> to vector<8x128xf32>
    %593 = arith.addf %590, %592 : vector<8x128xf32>
    %594 = arith.truncf %593 : vector<8x128xf32> to vector<8x128xbf16>
    %595 = math.tanh %594 : vector<8x128xbf16>
    %596 = arith.mulf %588, %595 : vector<8x128xbf16>
    %cst_181 = arith.constant 0.000000e+00 : bf16
    %597 = vector.broadcast %cst_181 : bf16 to vector<8x128xbf16>
    %598 = arith.maximumf %596, %597 : vector<8x128xbf16>
    %c6_182 = arith.constant 6 : index
    %c0_183 = arith.constant 0 : index
    %c0_184 = arith.constant 0 : index
    %599 = vector.load %arg8[%c6_182, %c0_183, %c0_184] : memref<8x128x128xbf16, #tpu.memory_space<vmem>>, vector<1x128x128xbf16>
    %600 = vector.shape_cast %599 : vector<1x128x128xbf16> to vector<128x128xbf16>
    %cst_185 = arith.constant dense<0.000000e+00> : vector<8x128xf32>
    %601 = tpu.matmul %598, %600, %cst_185 {dimension_numbers = #tpu.dot_dimension_numbers<[1], [0], [0], [1], [0, 0, 1, 1], [], []>} : vector<8x128xbf16>, vector<128x128xbf16>, vector<8x128xf32> -> vector<8x128xf32>
    %602 = arith.addf %562, %601 : vector<8x128xf32>
    %cst_186 = arith.constant dense<0.000000e+00> : vector<8x512xf32>
    %603 = tpu.matmul %596, %320, %cst_186 {dimension_numbers = #tpu.dot_dimension_numbers<[1], [0], [0], [1], [0, 0, 1, 1], [], []>} : vector<8x128xbf16>, vector<128x512xbf16>, vector<8x512xf32> -> vector<8x512xf32>
    %c7_187 = arith.constant 7 : index
    %c0_188 = arith.constant 0 : index
    %c0_189 = arith.constant 0 : index
    %604 = vector.load %arg15[%c7_187, %c0_188, %c0_189] : memref<8x8x512xbf16, #tpu.memory_space<vmem>>, vector<1x8x512xbf16>
    %605 = vector.shape_cast %604 : vector<1x8x512xbf16> to vector<8x512xbf16>
    %606 = arith.extf %605 : vector<8x512xbf16> to vector<8x512xf32>
    %607 = arith.addf %603, %606 : vector<8x512xf32>
    %608 = arith.truncf %607 : vector<8x512xf32> to vector<8x512xbf16>
    %609 = vector.extract_strided_slice %608 {offsets = [0, 0], sizes = [8, 128], strides = [1, 1]} : vector<8x512xbf16> to vector<8x128xbf16>
    %610 = arith.negf %609 : vector<8x128xbf16>
    %611 = math.exp %610 : vector<8x128xbf16>
    %cst_190 = arith.constant 1.000000e+00 : bf16
    %612 = vector.broadcast %cst_190 : bf16 to vector<8x128xbf16>
    %613 = arith.addf %612, %611 : vector<8x128xbf16>
    %614 = arith.divf %612, %613 : vector<8x128xbf16>
    %615 = vector.extract_strided_slice %608 {offsets = [0, 128], sizes = [8, 128], strides = [1, 1]} : vector<8x512xbf16> to vector<8x128xbf16>
    %616 = arith.negf %615 : vector<8x128xbf16>
    %617 = math.exp %616 : vector<8x128xbf16>
    %cst_191 = arith.constant 1.000000e+00 : bf16
    %618 = vector.broadcast %cst_191 : bf16 to vector<8x128xbf16>
    %619 = arith.addf %618, %617 : vector<8x128xbf16>
    %620 = arith.divf %618, %619 : vector<8x128xbf16>
    %621 = vector.extract_strided_slice %608 {offsets = [0, 256], sizes = [8, 128], strides = [1, 1]} : vector<8x512xbf16> to vector<8x128xbf16>
    %622 = math.tanh %621 : vector<8x128xbf16>
    %623 = vector.extract_strided_slice %608 {offsets = [0, 384], sizes = [8, 128], strides = [1, 1]} : vector<8x512xbf16> to vector<8x128xbf16>
    %624 = arith.negf %623 : vector<8x128xbf16>
    %625 = math.exp %624 : vector<8x128xbf16>
    %cst_192 = arith.constant 1.000000e+00 : bf16
    %626 = vector.broadcast %cst_192 : bf16 to vector<8x128xbf16>
    %627 = arith.addf %626, %625 : vector<8x128xbf16>
    %628 = arith.divf %626, %627 : vector<8x128xbf16>
    %629 = arith.extf %620 : vector<8x128xbf16> to vector<8x128xf32>
    %630 = arith.mulf %629, %593 : vector<8x128xf32>
    %631 = arith.mulf %614, %622 : vector<8x128xbf16>
    %632 = arith.extf %631 : vector<8x128xbf16> to vector<8x128xf32>
    %633 = arith.addf %630, %632 : vector<8x128xf32>
    %634 = arith.truncf %633 : vector<8x128xf32> to vector<8x128xbf16>
    %635 = math.tanh %634 : vector<8x128xbf16>
    %636 = arith.mulf %628, %635 : vector<8x128xbf16>
    %cst_193 = arith.constant 0.000000e+00 : bf16
    %637 = vector.broadcast %cst_193 : bf16 to vector<8x128xbf16>
    %638 = arith.maximumf %636, %637 : vector<8x128xbf16>
    %c7_194 = arith.constant 7 : index
    %c0_195 = arith.constant 0 : index
    %c0_196 = arith.constant 0 : index
    %639 = vector.load %arg8[%c7_194, %c0_195, %c0_196] : memref<8x128x128xbf16, #tpu.memory_space<vmem>>, vector<1x128x128xbf16>
    %640 = vector.shape_cast %639 : vector<1x128x128xbf16> to vector<128x128xbf16>
    %cst_197 = arith.constant dense<0.000000e+00> : vector<8x128xf32>
    %641 = tpu.matmul %638, %640, %cst_197 {dimension_numbers = #tpu.dot_dimension_numbers<[1], [0], [0], [1], [0, 0, 1, 1], [], []>} : vector<8x128xbf16>, vector<128x128xbf16>, vector<8x128xf32> -> vector<8x128xf32>
    %642 = arith.addf %602, %641 : vector<8x128xf32>
    %c0_198 = arith.constant 0 : index
    %c0_199 = arith.constant 0 : index
    %643 = vector.load %arg9[%c0_198, %c0_199] : memref<1x128xf32, #tpu.memory_space<vmem>>, vector<1x128xf32>
    %644 = vector.broadcast %643 : vector<1x128xf32> to vector<8x128xf32>
    %645 = arith.addf %642, %644 : vector<8x128xf32>
    %cst_200 = arith.constant 0.000000e+00 : f32
    %646 = vector.broadcast %cst_200 : f32 to vector<8x128xf32>
    %647 = arith.maximumf %645, %646 : vector<8x128xf32>
    %648 = arith.truncf %647 : vector<8x128xf32> to vector<8x128xbf16>
    %c0_201 = arith.constant 0 : index
    %c0_202 = arith.constant 0 : index
    %649 = vector.load %arg10[%c0_201, %c0_202] : memref<128x128xbf16, #tpu.memory_space<vmem>>, vector<128x128xbf16>
    %cst_203 = arith.constant dense<0.000000e+00> : vector<8x128xf32>
    %650 = tpu.matmul %648, %649, %cst_203 {dimension_numbers = #tpu.dot_dimension_numbers<[1], [0], [0], [1], [0, 0, 1, 1], [], []>} : vector<8x128xbf16>, vector<128x128xbf16>, vector<8x128xf32> -> vector<8x128xf32>
    %c0_204 = arith.constant 0 : index
    %c0_205 = arith.constant 0 : index
    %651 = vector.load %arg11[%c0_204, %c0_205] : memref<1x128xf32, #tpu.memory_space<vmem>>, vector<1x128xf32>
    %652 = vector.broadcast %651 : vector<1x128xf32> to vector<8x128xf32>
    %653 = arith.addf %650, %652 : vector<8x128xf32>
    %cst_206 = arith.constant 0.000000e+00 : f32
    %654 = vector.broadcast %cst_206 : f32 to vector<8x128xf32>
    %655 = arith.maximumf %653, %654 : vector<8x128xf32>
    %656 = arith.truncf %655 : vector<8x128xf32> to vector<8x128xbf16>
    %c0_207 = arith.constant 0 : index
    %c0_208 = arith.constant 0 : index
    %657 = vector.load %arg12[%c0_207, %c0_208] : memref<128x128xbf16, #tpu.memory_space<vmem>>, vector<128x128xbf16>
    %cst_209 = arith.constant dense<0.000000e+00> : vector<8x128xf32>
    %658 = tpu.matmul %656, %657, %cst_209 {dimension_numbers = #tpu.dot_dimension_numbers<[1], [0], [0], [1], [0, 0, 1, 1], [], []>} : vector<8x128xbf16>, vector<128x128xbf16>, vector<8x128xf32> -> vector<8x128xf32>
    %c0_210 = arith.constant 0 : index
    %c0_211 = arith.constant 0 : index
    %659 = vector.load %arg13[%c0_210, %c0_211] : memref<1x128xf32, #tpu.memory_space<vmem>>, vector<1x128xf32>
    %660 = vector.broadcast %659 : vector<1x128xf32> to vector<8x128xf32>
    %661 = arith.addf %658, %660 : vector<8x128xf32>
    %c0_212 = arith.constant 0 : index
    %c0_213 = arith.constant 0 : index
    %662 = vector.load %arg14[%c0_212, %c0_213] : memref<8x128xf32, #tpu.memory_space<vmem>>, vector<8x128xf32>
    tpu.vector_store %arg14[%c0_212, %c0_213], %661 {strides = array<i32>} : memref<8x128xf32, #tpu.memory_space<vmem>>, vector<8x128xf32>,
    return
  }
  func.func @transform_0(%arg0: i32) -> (i32, i32, i32) {
    %c0_i32 = arith.constant 0 : i32
    %c0_i32_0 = arith.constant 0 : i32
    %c0_i32_1 = arith.constant 0 : i32
    return %c0_i32, %arg0, %c0_i32_0 : i32, i32, i32
  }
  func.func @transform_1(%arg0: i32) -> (i32, i32) {
    %c0_i32 = arith.constant 0 : i32
    %c0_i32_0 = arith.constant 0 : i32
    %c0_i32_1 = arith.constant 0 : i32
    return %c0_i32, %c0_i32_0 : i32, i32
  }
  func.func @transform_2(%arg0: i32) -> (i32, i32) {
    %c0_i32 = arith.constant 0 : i32
    %c0_i32_0 = arith.constant 0 : i32
    %c0_i32_1 = arith.constant 0 : i32
    return %c0_i32, %c0_i32_0 : i32, i32
  }
  func.func @transform_3(%arg0: i32) -> (i32, i32) {
    %c0_i32 = arith.constant 0 : i32
    %c0_i32_0 = arith.constant 0 : i32
    %c0_i32_1 = arith.constant 0 : i32
    return %c0_i32, %c0_i32_0 : i32, i32
  }
  func.func @transform_4(%arg0: i32) -> (i32, i32) {
    %c0_i32 = arith.constant 0 : i32
    %c0_i32_0 = arith.constant 0 : i32
    %c0_i32_1 = arith.constant 0 : i32
    return %c0_i32, %c0_i32_0 : i32, i32
  }
  func.func @transform_5(%arg0: i32) -> (i32, i32) {
    %c0_i32 = arith.constant 0 : i32
    %c0_i32_0 = arith.constant 0 : i32
    %c0_i32_1 = arith.constant 0 : i32
    return %c0_i32, %c0_i32_0 : i32, i32
  }
  func.func @transform_6(%arg0: i32) -> (i32, i32) {
    %c0_i32 = arith.constant 0 : i32
    %c0_i32_0 = arith.constant 0 : i32
    %c0_i32_1 = arith.constant 0 : i32
    return %c0_i32, %c0_i32_0 : i32, i32
  }
  func.func @transform_7(%arg0: i32) -> (i32, i32, i32) {
    %c0_i32 = arith.constant 0 : i32
    %c0_i32_0 = arith.constant 0 : i32
    %c0_i32_1 = arith.constant 0 : i32
    %c0_i32_2 = arith.constant 0 : i32
    return %c0_i32, %c0_i32_0, %c0_i32_1 : i32, i32, i32
  }
  func.func @transform_8(%arg0: i32) -> (i32, i32) {
    %c0_i32 = arith.constant 0 : i32
    %c0_i32_0 = arith.constant 0 : i32
    %c0_i32_1 = arith.constant 0 : i32
    return %c0_i32, %c0_i32_0 : i32, i32
  }
  func.func @transform_9(%arg0: i32) -> (i32, i32) {
    %c0_i32 = arith.constant 0 : i32
    %c0_i32_0 = arith.constant 0 : i32
    %c0_i32_1 = arith.constant 0 : i32
    return %c0_i32, %c0_i32_0 : i32, i32
  }
  func.func @transform_10(%arg0: i32) -> (i32, i32) {
    %c0_i32 = arith.constant 0 : i32
    %c0_i32_0 = arith.constant 0 : i32
    %c0_i32_1 = arith.constant 0 : i32
    return %c0_i32, %c0_i32_0 : i32, i32
  }
  func.func @transform_11(%arg0: i32) -> (i32, i32) {
    %c0_i32 = arith.constant 0 : i32
    %c0_i32_0 = arith.constant 0 : i32
    %c0_i32_1 = arith.constant 0 : i32
    return %c0_i32, %c0_i32_0 : i32, i32
  }
  func.func @transform_12(%arg0: i32) -> (i32, i32) {
    %c0_i32 = arith.constant 0 : i32
    %c0_i32_0 = arith.constant 0 : i32
    %c0_i32_1 = arith.constant 0 : i32
    return %c0_i32, %c0_i32_0 : i32, i32
  }
  func.func @transform_13(%arg0: i32) -> (i32, i32) {
    %c0_i32 = arith.constant 0 : i32
    %c0_i32_0 = arith.constant 0 : i32
    return %arg0, %c0_i32 : i32, i32
  }
}

</mosaic_0001>

<llo_original>
// kernel: tpu_custom_call.1
$region0: #{tpu_custom_call.1}
  #allocation0 [shape = 'u32[]', space=smem, size = 0x4, offset = 0x4, fixed_abs, tag = 'smem constant byte address 0x4 - core index']
  #allocation1 [shape = 'u32[144,128]{1,0:T(1,128)}', space=vmem, size = 0x12000, scoped, tag = 'internal scratch']
  #allocation2 [shape = 'bf16[8,8,512]{2,1,0:T(8,128)(2,1)}', space=vmem, size = 0x10000, scoped, tag = 'scratch operand']
  #allocation3 [shape = 'bf16[8,8,128]{2,1,0:T(8,128)(2,1)}', space=vmem, size = 0x4000, scoped, tag = 'scratch operand']
  %s0 = inlined_call_operand.hbm [shape: bf16[8,8,128], index: 0, kind: input, shape index: {}]
  %s1 = inlined_call_operand.hbm [shape: bf16[128,512], index: 1, kind: input, shape index: {}]
  %s2 = inlined_call_operand.hbm [shape: bf16[128,512], index: 2, kind: input, shape index: {}]
  %s3 = inlined_call_operand.vmem [shape: f32[1,512], index: 3, kind: input, shape index: {}]
  %s4 = inlined_call_operand.hbm [shape: bf16[128,512], index: 4, kind: input, shape index: {}]
  %s5 = inlined_call_operand.hbm [shape: bf16[128,512], index: 5, kind: input, shape index: {}]
  %s6 = inlined_call_operand.vmem [shape: f32[1,512], index: 6, kind: input, shape index: {}]
  %s7 = inlined_call_operand.hbm [shape: bf16[8,128,128], index: 7, kind: input, shape index: {}]
  %s8 = inlined_call_operand.vmem [shape: f32[1,128], index: 8, kind: input, shape index: {}]
  %s9 = inlined_call_operand.hbm [shape: bf16[128,128], index: 9, kind: input, shape index: {}]
  %s10 = inlined_call_operand.vmem [shape: f32[1,128], index: 10, kind: input, shape index: {}]
  %s11 = inlined_call_operand.hbm [shape: bf16[128,128], index: 11, kind: input, shape index: {}]
  %s12 = inlined_call_operand.vmem [shape: f32[1,128], index: 12, kind: input, shape index: {}]
  %s13 = inlined_call_operand.hbm [shape: f32[8,128], index: 13, kind: output, shape index: {}]
  %s14 = sld [smem:[#allocation0]]
  $region94: #{tpu_custom_call.1} parent=0
    _
  %s16 = ssub.s32 1, %s14
  %s17 = scalar_select 0, %s16, %s14
  $region1: #{tpu_custom_call.1} parent=0
    #allocation4 [shape = 'u8[16384]{0}', space=vmem, size = 0x4000, scoped, tag = 'input window, operand 0, single buffered']
    #allocation5 [shape = 's32[1]{0}', space=sflag, size = 0x4, scoped, tag = 'scoped memory for tpu_custom_call.1']
    #allocation6 [shape = 's32[1]{0}', space=sflag, size = 0x4, scoped, tag = 'scoped memory for tpu_custom_call.1']
    #allocation7 [shape = 'u8[131072]{0}', space=vmem, size = 0x20000, scoped, tag = 'input window, operand 1, single buffered']
    #allocation8 [shape = 's32[1]{0}', space=sflag, size = 0x4, scoped, tag = 'scoped memory for tpu_custom_call.1']
    #allocation9 [shape = 'u8[131072]{0}', space=vmem, size = 0x20000, scoped, tag = 'input window, operand 2, single buffered']
    #allocation10 [shape = 'u8[131072]{0}', space=vmem, size = 0x20000, scoped, tag = 'input window, operand 4, single buffered']
    #allocation11 [shape = 's32[1]{0}', space=sflag, size = 0x4, scoped, tag = 'scoped memory for tpu_custom_call.1']
    #allocation12 [shape = 'u8[131072]{0}', space=vmem, size = 0x20000, scoped, tag = 'input window, operand 5, single buffered']
    #allocation13 [shape = 'u8[262144]{0}', space=vmem, size = 0x40000, scoped, tag = 'input window, operand 7, single buffered']
    #allocation14 [shape = 's32[1]{0}', space=sflag, size = 0x4, scoped, tag = 'scoped memory for tpu_custom_call.1']
    #allocation15 [shape = 'u8[32768]{0}', space=vmem, size = 0x8000, scoped, tag = 'input window, operand 9, single buffered']
    #allocation16 [shape = 'u8[32768]{0}', space=vmem, size = 0x8000, scoped, tag = 'input window, operand 11, single buffered']
    #allocation17 [shape = 's32[1]{0}', space=sflag, size = 0x4, scoped, tag = 'scoped memory for tpu_custom_call.1']
    #allocation18 [shape = 'u8[4096]{0}', space=vmem, size = 0x1000, scoped, tag = 'output window, operand 0, single buffered']
    %18 = vsyncpa [#allocation5], 0
    %19 = vsyncpa [#allocation8], 0
    %20 = vsyncpa [#allocation11], 0
    %21 = vsyncpa [#allocation14], 0
    %22 = vsyncpa [#allocation17], 0
    %23 = vsyncpa [#allocation6], 0
    // Predicated region
    $region2: #{tpu_custom_call.1} parent=1 // pred_check
      _
    $region3: #{tpu_custom_call.1} parent=1 // pred_check_branch
      %25 = sbr.rel (0) target = $region5
    $region4: #{tpu_custom_call.1} parent=1 // pred_region
      %s27 = ssub.s32 512, 512
      %28 = vsyncadd [#allocation5], %s27
      %s29 = sshll.u32 [#allocation4], 4
      %s30 = int_to_ptr.vmem [resolvable:$true] %s29
      %35 = dma.hbm_to_vmem [thread:$0]  %s0, 512, %s30, [#allocation5], 64, 64, 4
    $region5: #{tpu_custom_call.1} parent=1 // pred_fallthru
      _
    // Predicated region
    $region6: #{tpu_custom_call.1} parent=1 // pred_check
      _
    $region7: #{tpu_custom_call.1} parent=1 // pred_check_branch
      %37 = sbr.rel (0) target = $region9
    $region8: #{tpu_custom_call.1} parent=1 // pred_region
      %s39 = ssub.s32 4096, 4096
      %40 = vsyncadd [#allocation8], %s39
      %s41 = sshll.u32 [#allocation7], 4
      %s42 = int_to_ptr.vmem [resolvable:$true] %s41
      %47 = dma.hbm_to_vmem [thread:$0]  %s1, 4096, %s42, [#allocation8], 256, 256, 16
    $region9: #{tpu_custom_call.1} parent=1 // pred_fallthru
      _
    // Predicated region
    $region10: #{tpu_custom_call.1} parent=1 // pred_check
      _
    $region11: #{tpu_custom_call.1} parent=1 // pred_check_branch
      %49 = sbr.rel (0) target = $region13
    $region12: #{tpu_custom_call.1} parent=1 // pred_region
      %s51 = ssub.s32 4096, 4096
      %52 = vsyncadd [#allocation8], %s51
      %s53 = sshll.u32 [#allocation9], 4
      %s54 = int_to_ptr.vmem [resolvable:$true] %s53
      %59 = dma.hbm_to_vmem [thread:$0]  %s2, 4096, %s54, [#allocation8], 256, 256, 16
    $region13: #{tpu_custom_call.1} parent=1 // pred_fallthru
      _
    // Predicated region
    $region14: #{tpu_custom_call.1} parent=1 // pred_check
      _
    $region15: #{tpu_custom_call.1} parent=1 // pred_check_branch
      %61 = sbr.rel (0) target = $region17
    $region16: #{tpu_custom_call.1} parent=1 // pred_region
      _
    $region17: #{tpu_custom_call.1} parent=1 // pred_fallthru
      _
    // Predicated region
    $region18: #{tpu_custom_call.1} parent=1 // pred_check
      _
    $region19: #{tpu_custom_call.1} parent=1 // pred_check_branch
      %63 = sbr.rel (0) target = $region21
    $region20: #{tpu_custom_call.1} parent=1 // pred_region
      %s65 = ssub.s32 4096, 4096
      %66 = vsyncadd [#allocation11], %s65
      %s67 = sshll.u32 [#allocation10], 4
      %s68 = int_to_ptr.vmem [resolvable:$true] %s67
      %73 = dma.hbm_to_vmem [thread:$0]  %s4, 4096, %s68, [#allocation11], 256, 256, 16
    $region21: #{tpu_custom_call.1} parent=1 // pred_fallthru
      _
    // Predicated region
    $region22: #{tpu_custom_call.1} parent=1 // pred_check
      _
    $region23: #{tpu_custom_call.1} parent=1 // pred_check_branch
      %75 = sbr.rel (0) target = $region25
    $region24: #{tpu_custom_call.1} parent=1 // pred_region
      %s77 = ssub.s32 4096, 4096
      %78 = vsyncadd [#allocation11], %s77
      %s79 = sshll.u32 [#allocation12], 4
      %s80 = int_to_ptr.vmem [resolvable:$true] %s79
      %85 = dma.hbm_to_vmem [thread:$0]  %s5, 4096, %s80, [#allocation11], 256, 256, 16
    $region25: #{tpu_custom_call.1} parent=1 // pred_fallthru
      _
    // Predicated region
    $region26: #{tpu_custom_call.1} parent=1 // pred_check
      _
    $region27: #{tpu_custom_call.1} parent=1 // pred_check_branch
      %87 = sbr.rel (0) target = $region29
    $region28: #{tpu_custom_call.1} parent=1 // pred_region
      _
    $region29: #{tpu_custom_call.1} parent=1 // pred_fallthru
      _
    // Predicated region
    $region30: #{tpu_custom_call.1} parent=1 // pred_check
      _
    $region31: #{tpu_custom_call.1} parent=1 // pred_check_branch
      %89 = sbr.rel (0) target = $region33
    $region32: #{tpu_custom_call.1} parent=1 // pred_region
      %s91 = ssub.s32 8192, 8192
      %92 = vsyncadd [#allocation14], %s91
      %s93 = sshll.u32 [#allocation13], 4
      %s94 = int_to_ptr.vmem [resolvable:$true] %s93
      %99 = dma.hbm_to_vmem [thread:$0]  %s7, 8192, %s94, [#allocation14], 64, 64, 4
    $region33: #{tpu_custom_call.1} parent=1 // pred_fallthru
      _
    // Predicated region
    $region34: #{tpu_custom_call.1} parent=1 // pred_check
      _
    $region35: #{tpu_custom_call.1} parent=1 // pred_check_branch
      %101 = sbr.rel (0) target = $region37
    $region36: #{tpu_custom_call.1} parent=1 // pred_region
      _
    $region37: #{tpu_custom_call.1} parent=1 // pred_fallthru
      _
    // Predicated region
    $region38: #{tpu_custom_call.1} parent=1 // pred_check
      _
    $region39: #{tpu_custom_call.1} parent=1 // pred_check_branch
      %103 = sbr.rel (0) target = $region41
    $region40: #{tpu_custom_call.1} parent=1 // pred_region
      %s105 = ssub.s32 1024, 1024
      %106 = vsyncadd [#allocation14], %s105
      %s107 = sshll.u32 [#allocation15], 4
      %s108 = int_to_ptr.vmem [resolvable:$true] %s107
      %113 = dma.hbm_to_vmem [thread:$0]  %s9, 1024, %s108, [#allocation14], 64, 64, 4
    $region41: #{tpu_custom_call.1} parent=1 // pred_fallthru
      _
    // Predicated region
    $region42: #{tpu_custom_call.1} parent=1 // pred_check
      _
    $region43: #{tpu_custom_call.1} parent=1 // pred_check_branch
      %115 = sbr.rel (0) target = $region45
    $region44: #{tpu_custom_call.1} parent=1 // pred_region
      _
    $region45: #{tpu_custom_call.1} parent=1 // pred_fallthru
      _
    // Predicated region
    $region46: #{tpu_custom_call.1} parent=1 // pred_check
      _
    $region47: #{tpu_custom_call.1} parent=1 // pred_check_branch
      %117 = sbr.rel (0) target = $region49
    $region48: #{tpu_custom_call.1} parent=1 // pred_region
      %s119 = ssub.s32 1024, 1024
      %120 = vsyncadd [#allocation17], %s119
      %s121 = sshll.u32 [#allocation16], 4
      %s122 = int_to_ptr.vmem [resolvable:$true] %s121
      %127 = dma.hbm_to_vmem [thread:$0]  %s11, 1024, %s122, [#allocation17], 64, 64, 4
    $region49: #{tpu_custom_call.1} parent=1 // pred_fallthru
      _
    // Predicated region
    $region50: #{tpu_custom_call.1} parent=1 // pred_check
      _
    $region51: #{tpu_custom_call.1} parent=1 // pred_check_branch
      %129 = sbr.rel (0) target = $region53
    $region52: #{tpu_custom_call.1} parent=1 // pred_region
      _
    $region53: #{tpu_custom_call.1} parent=1 // pred_fallthru
      _
    // Predicated region
    $region54: #{tpu_custom_call.1} parent=1 // pred_check
      _
    $region55: #{tpu_custom_call.1} parent=1 // pred_check_branch
      %131 = sbr.rel (0) target = $region57
    $region56: #{tpu_custom_call.1} parent=1 // pred_region
      %132 = dma.done [#allocation5], 512
    $region57: #{tpu_custom_call.1} parent=1 // pred_fallthru
      _
    // Predicated region
    $region58: #{tpu_custom_call.1} parent=1 // pred_check
      _
    $region59: #{tpu_custom_call.1} parent=1 // pred_check_branch
      %134 = sbr.rel (0) target = $region61
    $region60: #{tpu_custom_call.1} parent=1 // pred_region
      %135 = dma.done [#allocation8], 4096
    $region61: #{tpu_custom_call.1} parent=1 // pred_fallthru
      _
    // Predicated region
    $region62: #{tpu_custom_call.1} parent=1 // pred_check
      _
    $region63: #{tpu_custom_call.1} parent=1 // pred_check_branch
      %137 = sbr.rel (0) target = $region65
    $region64: #{tpu_custom_call.1} parent=1 // pred_region
      %138 = dma.done [#allocation8], 4096
    $region65: #{tpu_custom_call.1} parent=1 // pred_fallthru
      _
    // Predicated region
    $region66: #{tpu_custom_call.1} parent=1 // pred_check
      _
    $region67: #{tpu_custom_call.1} parent=1 // pred_check_branch
      %140 = sbr.rel (0) target = $region69
    $region68: #{tpu_custom_call.1} parent=1 // pred_region
      %141 = dma.done [#allocation11], 4096
    $region69: #{tpu_custom_call.1} parent=1 // pred_fallthru
      _
    // Predicated region
    $region70: #{tpu_custom_call.1} parent=1 // pred_check
      _
    $region71: #{tpu_custom_call.1} parent=1 // pred_check_branch
      %143 = sbr.rel (0) target = $region73
    $region72: #{tpu_custom_call.1} parent=1 // pred_region
      %144 = dma.done [#allocation11], 4096
    $region73: #{tpu_custom_call.1} parent=1 // pred_fallthru
      _
    // Predicated region
    $region74: #{tpu_custom_call.1} parent=1 // pred_check
      _
    $region75: #{tpu_custom_call.1} parent=1 // pred_check_branch
      %146 = sbr.rel (0) target = $region77
    $region76: #{tpu_custom_call.1} parent=1 // pred_region
      %147 = dma.done [#allocation14], 8192
    $region77: #{tpu_custom_call.1} parent=1 // pred_fallthru
      _
    // Predicated region
    $region78: #{tpu_custom_call.1} parent=1 // pred_check
      _
    $region79: #{tpu_custom_call.1} parent=1 // pred_check_branch
      %149 = sbr.rel (0) target = $region81
    $region80: #{tpu_custom_call.1} parent=1 // pred_region
      %150 = dma.done [#allocation14], 1024
    $region81: #{tpu_custom_call.1} parent=1 // pred_fallthru
      _
    // Predicated region
    $region82: #{tpu_custom_call.1} parent=1 // pred_check
      _
    $region83: #{tpu_custom_call.1} parent=1 // pred_check_branch
      %152 = sbr.rel (0) target = $region85
    $region84: #{tpu_custom_call.1} parent=1 // pred_region
      %153 = dma.done [#allocation17], 1024
    $region85: #{tpu_custom_call.1} parent=1 // pred_fallthru
      _
    %v156 = vld [vmem:[#allocation4] sm:$0xf]
    %v157 = vld [vmem:[#allocation4 + $0x4] sm:$0xf]
    %v158 = vld [vmem:[#allocation4 + $0x8] sm:$0xf]
    %v159 = vld [vmem:[#allocation4 + $0xc] sm:$0xf]
    %v160 = vld [vmem:[#allocation4 + $0x10] sm:$0xf]
    %v161 = vld [vmem:[#allocation4 + $0x14] sm:$0xf]
    %v162 = vld [vmem:[#allocation4 + $0x18] sm:$0xf]
    %v163 = vld [vmem:[#allocation4 + $0x1c] sm:$0xf]
    %v164 = vld [vmem:[#allocation7] sm:$0xff]
    %v165 = vld [vmem:[#allocation7 + $0x8] sm:$0xff]
    %v166 = vld [vmem:[#allocation7 + $0x10] sm:$0xff]
    %v167 = vld [vmem:[#allocation7 + $0x18] sm:$0xff]
    %v168 = vld [vmem:[#allocation7 + $0x20] sm:$0xff]
    %v169 = vld [vmem:[#allocation7 + $0x28] sm:$0xff]
    %v170 = vld [vmem:[#allocation7 + $0x30] sm:$0xff]
    %v171 = vld [vmem:[#allocation7 + $0x38] sm:$0xff]
    %v172 = vld [vmem:[#allocation7 + $0x40] sm:$0xff]
    %v173 = vld [vmem:[#allocation7 + $0x48] sm:$0xff]
    %v174 = vld [vmem:[#allocation7 + $0x50] sm:$0xff]
    %v175 = vld [vmem:[#allocation7 + $0x58] sm:$0xff]
    %v176 = vld [vmem:[#allocation7 + $0x60] sm:$0xff]
    %v177 = vld [vmem:[#allocation7 + $0x68] sm:$0xff]
    %v178 = vld [vmem:[#allocation7 + $0x70] sm:$0xff]
    %v179 = vld [vmem:[#allocation7 + $0x78] sm:$0xff]
    %v180 = vld [vmem:[#allocation7 + $0x80] sm:$0xff]
    %v181 = vld [vmem:[#allocation7 + $0x88] sm:$0xff]
    %v182 = vld [vmem:[#allocation7 + $0x90] sm:$0xff]
    %v183 = vld [vmem:[#allocation7 + $0x98] sm:$0xff]
    %v184 = vld [vmem:[#allocation7 + $0xa0] sm:$0xff]
    %v185 = vld [vmem:[#allocation7 + $0xa8] sm:$0xff]
    %v186 = vld [vmem:[#allocation7 + $0xb0] sm:$0xff]
    %v187 = vld [vmem:[#allocation7 + $0xb8] sm:$0xff]
    %v188 = vld [vmem:[#allocation7 + $0xc0] sm:$0xff]
    %v189 = vld [vmem:[#allocation7 + $0xc8] sm:$0xff]
    %v190 = vld [vmem:[#allocation7 + $0xd0] sm:$0xff]
    %v191 = vld [vmem:[#allocation7 + $0xd8] sm:$0xff]
    %v192 = vld [vmem:[#allocation7 + $0xe0] sm:$0xff]
    %v193 = vld [vmem:[#allocation7 + $0xe8] sm:$0xff]
    %v194 = vld [vmem:[#allocation7 + $0xf0] sm:$0xff]
    %v195 = vld [vmem:[#allocation7 + $0xf8] sm:$0xff]
    %v196 = vld [vmem:[%s3] sm:$0xf]
    %v198 = vlaneseq
    %v199 = vshrl.u32 %v198, 7
    %v200 = vsub.s32 0, %v199
    %v201 = vrot.slane %v196, %v200
    %v202 = vlaneseq
    %v203 = vshrl.u32 %v202, 7
    %v204 = vsub.s32 1, %v203
    %v205 = vrot.slane %v196, %v204
    %v206 = vlaneseq
    %v207 = vshrl.u32 %v206, 7
    %v208 = vsub.s32 2, %v207
    %v209 = vrot.slane %v196, %v208
    %v210 = vlaneseq
    %v211 = vshrl.u32 %v210, 7
    %v212 = vsub.s32 3, %v211
    %v213 = vrot.slane %v196, %v212
    %v226 = vunpack.c.l.b16 %v156
    %v227 = vunpack.c.l.b16 %v157
    %v228 = vunpack.c.l.b16 %v158
    %v229 = vunpack.c.l.b16 %v159
    %v230 = vunpack.c.l.b16 %v160
    %v231 = vunpack.c.l.b16 %v161
    %v232 = vunpack.c.l.b16 %v162
    %v233 = vunpack.c.l.b16 %v163
    %v234 = vpack.c.b16 %v227, %v226
    %v235 = vpack.c.b16 %v229, %v228
    %v236 = vpack.c.b16 %v231, %v230
    %v237 = vpack.c.b16 %v233, %v232
    %v274 = vunpack.c.l.b16 %v164
    %v275 = vunpack.c.h.b16 %v164
    %v276 = vunpack.c.l.b16 %v165
    %v277 = vunpack.c.h.b16 %v165
    %v278 = vunpack.c.l.b16 %v166
    %v279 = vunpack.c.h.b16 %v166
    %v280 = vunpack.c.l.b16 %v167
    %v281 = vunpack.c.h.b16 %v167
    %v282 = vunpack.c.l.b16 %v168
    %v283 = vunpack.c.h.b16 %v168
    %v284 = vunpack.c.l.b16 %v169
    %v285 = vunpack.c.h.b16 %v169
    %v286 = vunpack.c.l.b16 %v170
    %v287 = vunpack.c.h.b16 %v170
    %v288 = vunpack.c.l.b16 %v171
    %v289 = vunpack.c.h.b16 %v171
    %v290 = vunpack.c.l.b16 %v172
    %v291 = vunpack.c.h.b16 %v172
    %v292 = vunpack.c.l.b16 %v173
    %v293 = vunpack.c.h.b16 %v173
    %v294 = vunpack.c.l.b16 %v174
    %v295 = vunpack.c.h.b16 %v174
    %v296 = vunpack.c.l.b16 %v175
    %v297 = vunpack.c.h.b16 %v175
    %v298 = vunpack.c.l.b16 %v176
    %v299 = vunpack.c.h.b16 %v176
    %v300 = vunpack.c.l.b16 %v177
    %v301 = vunpack.c.h.b16 %v177
    %v302 = vunpack.c.l.b16 %v178
    %v303 = vunpack.c.h.b16 %v178
    %v304 = vunpack.c.l.b16 %v179
    %v305 = vunpack.c.h.b16 %v179
    %v306 = vunpack.c.l.b16 %v180
    %v307 = vunpack.c.h.b16 %v180
    %v308 = vunpack.c.l.b16 %v181
    %v309 = vunpack.c.h.b16 %v181
    %v310 = vunpack.c.l.b16 %v182
    %v311 = vunpack.c.h.b16 %v182
    %v312 = vunpack.c.l.b16 %v183
    %v313 = vunpack.c.h.b16 %v183
    %v314 = vunpack.c.l.b16 %v184
    %v315 = vunpack.c.h.b16 %v184
    %v316 = vunpack.c.l.b16 %v185
    %v317 = vunpack.c.h.b16 %v185
    %v318 = vunpack.c.l.b16 %v186
    %v319 = vunpack.c.h.b16 %v186
    %v320 = vunpack.c.l.b16 %v187
    %v321 = vunpack.c.h.b16 %v187
    %v322 = vunpack.c.l.b16 %v188
    %v323 = vunpack.c.h.b16 %v188
    %v324 = vunpack.c.l.b16 %v189
    %v325 = vunpack.c.h.b16 %v189
    %v326 = vunpack.c.l.b16 %v190
    %v327 = vunpack.c.h.b16 %v190
    %v328 = vunpack.c.l.b16 %v191
    %v329 = vunpack.c.h.b16 %v191
    %v330 = vunpack.c.l.b16 %v192
    %v331 = vunpack.c.h.b16 %v192
    %v332 = vunpack.c.l.b16 %v193
    %v333 = vunpack.c.h.b16 %v193
    %v334 = vunpack.c.l.b16 %v194
    %v335 = vunpack.c.h.b16 %v194
    %v336 = vunpack.c.l.b16 %v195
    %v337 = vunpack.c.h.b16 %v195
    %v338 = vpack.c.b16 %v278, %v274
    %v339 = vpack.c.b16 %v279, %v275
    %v340 = vpack.c.b16 %v280, %v276
    %v341 = vpack.c.b16 %v281, %v277
    %v342 = vpack.c.b16 %v286, %v282
    %v343 = vpack.c.b16 %v287, %v283
    %v344 = vpack.c.b16 %v288, %v284
    %v345 = vpack.c.b16 %v289, %v285
    %v346 = vpack.c.b16 %v294, %v290
    %v347 = vpack.c.b16 %v295, %v291
    %v348 = vpack.c.b16 %v296, %v292
    %v349 = vpack.c.b16 %v297, %v293
    %v350 = vpack.c.b16 %v302, %v298
    %v351 = vpack.c.b16 %v303, %v299
    %v352 = vpack.c.b16 %v304, %v300
    %v353 = vpack.c.b16 %v305, %v301
    %v354 = vpack.c.b16 %v310, %v306
    %v355 = vpack.c.b16 %v311, %v307
    %v356 = vpack.c.b16 %v312, %v308
    %v357 = vpack.c.b16 %v313, %v309
    %v358 = vpack.c.b16 %v318, %v314
    %v359 = vpack.c.b16 %v319, %v315
    %v360 = vpack.c.b16 %v320, %v316
    %v361 = vpack.c.b16 %v321, %v317
    %v362 = vpack.c.b16 %v326, %v322
    %v363 = vpack.c.b16 %v327, %v323
    %v364 = vpack.c.b16 %v328, %v324
    %v365 = vpack.c.b16 %v329, %v325
    %v366 = vpack.c.b16 %v334, %v330
    %v367 = vpack.c.b16 %v335, %v331
    %v368 = vpack.c.b16 %v336, %v332
    %v369 = vpack.c.b16 %v337, %v333
    %402 = vmatprep.subr.bf16.mxu0 %v339
    %403 = vmatpush1.bf16.msra.mxu0 %v338
    %404 = vmatprep.subr.bf16.mxu0 %v343
    %405 = vmatpush1.bf16.msra.mxu0 %v342
    %406 = vmatprep.subr.bf16.mxu0 %v347
    %407 = vmatpush1.bf16.msra.mxu0 %v346
    %408 = vmatprep.subr.bf16.mxu0 %v351
    %409 = vmatpush1.bf16.msra.mxu0 %v350
    %410 = vmatprep.subr.bf16.mxu0 %v355
    %411 = vmatpush1.bf16.msra.mxu0 %v354
    %412 = vmatprep.subr.bf16.mxu0 %v359
    %413 = vmatpush1.bf16.msra.mxu0 %v358
    %414 = vmatprep.subr.bf16.mxu0 %v363
    %415 = vmatpush1.bf16.msra.mxu0 %v362
    %416 = vmatprep.subr.bf16.mxu0 %v367
    %417 = vmatpush1.bf16.msra.mxu0 %v366
    %418 = vmatprep.subr.bf16.mxu0 0
    %419 = vmatpush1.bf16.msra.mxu0 0
    %420 = vmatprep.subr.bf16.mxu0 0
    %421 = vmatpush1.bf16.msra.mxu0 0
    %422 = vmatprep.subr.bf16.mxu0 0
    %423 = vmatpush1.bf16.msra.mxu0 0
    %424 = vmatprep.subr.bf16.mxu0 0
    %425 = vmatpush1.bf16.msra.mxu0 0
    %426 = vmatprep.subr.bf16.mxu0 0
    %427 = vmatpush1.bf16.msra.mxu0 0
    %428 = vmatprep.subr.bf16.mxu0 0
    %429 = vmatpush1.bf16.msra.mxu0 0
    %430 = vmatprep.subr.bf16.mxu0 0
    %431 = vmatpush1.bf16.msra.mxu0 0
    %432 = vmatprep.subr.bf16.mxu0 0
    %433 = vmatpush1.bf16.msra.mxu0 0
    %434 = vmatprep.mubr.bf16.mxu0 0
    %435 = vmatmul.mubr.bf16.gmra.mrb[0].mxu0 %v234
    %v436 = vpop.f32.mrb[0].mxu0
    %v437 = vadd.f32 %v201, %v436
    %v438 = vpop.f32.mrb[0].mxu0
    %v439 = vadd.f32 %v205, %v438
    %v440 = vpop.f32.mrb[0].mxu0
    %v441 = vadd.f32 %v201, %v440
    %v442 = vpop.f32.mrb[0].mxu0
    %v443 = vadd.f32 %v205, %v442
    %444 = vmatprep.mubr.bf16.mxu0 0
    %445 = vmatmul.mubr.bf16.gmra.mrb[0].mxu0 %v235
    %v446 = vpop.f32.mrb[0].mxu0
    %v447 = vadd.f32 %v201, %v446
    %v448 = vpop.f32.mrb[0].mxu0
    %v449 = vadd.f32 %v205, %v448
    %v450 = vpop.f32.mrb[0].mxu0
    %v451 = vadd.f32 %v201, %v450
    %v452 = vpop.f32.mrb[0].mxu0
    %v453 = vadd.f32 %v205, %v452
    %454 = vmatprep.mubr.bf16.mxu0 0
    %455 = vmatmul.mubr.bf16.gmra.mrb[0].mxu0 %v236
    %v456 = vpop.f32.mrb[0].mxu0
    %v457 = vadd.f32 %v201, %v456
    %v458 = vpop.f32.mrb[0].mxu0
    %v459 = vadd.f32 %v205, %v458
    %v460 = vpop.f32.mrb[0].mxu0
    %v461 = vadd.f32 %v201, %v460
    %v462 = vpop.f32.mrb[0].mxu0
    %v463 = vadd.f32 %v205, %v462
    %464 = vmatprep.mubr.bf16.mxu0 0
    %465 = vmatmul.mubr.bf16.gmra.mrb[0].mxu0 %v237
    %v466 = vpop.f32.mrb[0].mxu0
    %v467 = vadd.f32 %v201, %v466
    %v468 = vpop.f32.mrb[0].mxu0
    %v469 = vadd.f32 %v205, %v468
    %v470 = vpop.f32.mrb[0].mxu0
    %v471 = vadd.f32 %v201, %v470
    %v472 = vpop.f32.mrb[0].mxu0
    %v473 = vadd.f32 %v205, %v472
    %474 = vdwg.mxu0
    %475 = vmatprep.subr.bf16.mxu0 %v341
    %476 = vmatpush1.bf16.msra.mxu0 %v340
    %477 = vmatprep.subr.bf16.mxu0 %v345
    %478 = vmatpush1.bf16.msra.mxu0 %v344
    %479 = vmatprep.subr.bf16.mxu0 %v349
    %480 = vmatpush1.bf16.msra.mxu0 %v348
    %481 = vmatprep.subr.bf16.mxu0 %v353
    %482 = vmatpush1.bf16.msra.mxu0 %v352
    %483 = vmatprep.subr.bf16.mxu0 %v357
    %484 = vmatpush1.bf16.msra.mxu0 %v356
    %485 = vmatprep.subr.bf16.mxu0 %v361
    %486 = vmatpush1.bf16.msra.mxu0 %v360
    %487 = vmatprep.subr.bf16.mxu0 %v365
    %488 = vmatpush1.bf16.msra.mxu0 %v364
    %489 = vmatprep.subr.bf16.mxu0 %v369
    %490 = vmatpush1.bf16.msra.mxu0 %v368
    %491 = vmatprep.subr.bf16.mxu0 0
    %492 = vmatpush1.bf16.msra.mxu0 0
    %493 = vmatprep.subr.bf16.mxu0 0
    %494 = vmatpush1.bf16.msra.mxu0 0
    %495 = vmatprep.subr.bf16.mxu0 0
    %496 = vmatpush1.bf16.msra.mxu0 0
    %497 = vmatprep.subr.bf16.mxu0 0
    %498 = vmatpush1.bf16.msra.mxu0 0
    %499 = vmatprep.subr.bf16.mxu0 0
    %500 = vmatpush1.bf16.msra.mxu0 0
    %501 = vmatprep.subr.bf16.mxu0 0
    %502 = vmatpush1.bf16.msra.mxu0 0
    %503 = vmatprep.subr.bf16.mxu0 0
    %504 = vmatpush1.bf16.msra.mxu0 0
    %505 = vmatprep.subr.bf16.mxu0 0
    %506 = vmatpush1.bf16.msra.mxu0 0
    %507 = vmatprep.mubr.bf16.mxu0 0
    %508 = vmatmul.mubr.bf16.gmra.mrb[0].mxu0 %v234
    %v509 = vpop.f32.mrb[0].mxu0
    %v510 = vadd.f32 %v209, %v509
    %v511 = vpop.f32.mrb[0].mxu0
    %v512 = vadd.f32 %v213, %v511
    %v513 = vpop.f32.mrb[0].mxu0
    %v514 = vadd.f32 %v209, %v513
    %v515 = vpop.f32.mrb[0].mxu0
    %v516 = vadd.f32 %v213, %v515
    %517 = vmatprep.mubr.bf16.mxu0 0
    %518 = vmatmul.mubr.bf16.gmra.mrb[0].mxu0 %v235
    %v519 = vpop.f32.mrb[0].mxu0
    %v520 = vadd.f32 %v209, %v519
    %v521 = vpop.f32.mrb[0].mxu0
    %v522 = vadd.f32 %v213, %v521
    %v523 = vpop.f32.mrb[0].mxu0
    %v524 = vadd.f32 %v209, %v523
    %v525 = vpop.f32.mrb[0].mxu0
    %v526 = vadd.f32 %v213, %v525
    %527 = vmatprep.mubr.bf16.mxu0 0
    %528 = vmatmul.mubr.bf16.gmra.mrb[0].mxu0 %v236
    %v529 = vpop.f32.mrb[0].mxu0
    %v530 = vadd.f32 %v209, %v529
    %v531 = vpop.f32.mrb[0].mxu0
    %v532 = vadd.f32 %v213, %v531
    %v533 = vpop.f32.mrb[0].mxu0
    %v534 = vadd.f32 %v209, %v533
    %v535 = vpop.f32.mrb[0].mxu0
    %v536 = vadd.f32 %v213, %v535
    %537 = vmatprep.mubr.bf16.mxu0 0
    %538 = vmatmul.mubr.bf16.gmra.mrb[0].mxu0 %v237
    %v539 = vpop.f32.mrb[0].mxu0
    %v540 = vadd.f32 %v209, %v539
    %v541 = vpop.f32.mrb[0].mxu0
    %v542 = vadd.f32 %v213, %v541
    %v543 = vpop.f32.mrb[0].mxu0
    %v544 = vadd.f32 %v209, %v543
    %v545 = vpop.f32.mrb[0].mxu0
    %v546 = vadd.f32 %v213, %v545
    %547 = vdwg.mxu0
    %v548 = vpack.c.bf16 %v437, %v437
    %v549 = vpack.c.bf16 %v439, %v439
    %v550 = vpack.c.bf16 %v510, %v510
    %v551 = vpack.c.bf16 %v512, %v512
    %v552 = vpack.c.bf16 %v441, %v441
    %v553 = vpack.c.bf16 %v443, %v443
    %v554 = vpack.c.bf16 %v514, %v514
    %v555 = vpack.c.bf16 %v516, %v516
    %v556 = vpack.c.bf16 %v447, %v447
    %v557 = vpack.c.bf16 %v449, %v449
    %v558 = vpack.c.bf16 %v520, %v520
    %v559 = vpack.c.bf16 %v522, %v522
    %v560 = vpack.c.bf16 %v451, %v451
    %v561 = vpack.c.bf16 %v453, %v453
    %v562 = vpack.c.bf16 %v524, %v524
    %v563 = vpack.c.bf16 %v526, %v526
    %v564 = vpack.c.bf16 %v457, %v457
    %v565 = vpack.c.bf16 %v459, %v459
    %v566 = vpack.c.bf16 %v530, %v530
    %v567 = vpack.c.bf16 %v532, %v532
    %v568 = vpack.c.bf16 %v461, %v461
    %v569 = vpack.c.bf16 %v463, %v463
    %v570 = vpack.c.bf16 %v534, %v534
    %v571 = vpack.c.bf16 %v536, %v536
    %v572 = vpack.c.bf16 %v467, %v467
    %v573 = vpack.c.bf16 %v469, %v469
    %v574 = vpack.c.bf16 %v540, %v540
    %v575 = vpack.c.bf16 %v542, %v542
    %v576 = vpack.c.bf16 %v471, %v471
    %v577 = vpack.c.bf16 %v473, %v473
    %v578 = vpack.c.bf16 %v544, %v544
    %v579 = vpack.c.bf16 %v546, %v546
    %v612 = vunpack.c.l.b16 %v548
    %v613 = vunpack.c.l.b16 %v549
    %v614 = vunpack.c.l.b16 %v550
    %v615 = vunpack.c.l.b16 %v551
    %v616 = vunpack.c.l.b16 %v552
    %v617 = vunpack.c.l.b16 %v553
    %v618 = vunpack.c.l.b16 %v554
    %v619 = vunpack.c.l.b16 %v555
    %v620 = vunpack.c.l.b16 %v556
    %v621 = vunpack.c.l.b16 %v557
    %v622 = vunpack.c.l.b16 %v558
    %v623 = vunpack.c.l.b16 %v559
    %v624 = vunpack.c.l.b16 %v560
    %v625 = vunpack.c.l.b16 %v561
    %v626 = vunpack.c.l.b16 %v562
    %v627 = vunpack.c.l.b16 %v563
    %v628 = vunpack.c.l.b16 %v564
    %v629 = vunpack.c.l.b16 %v565
    %v630 = vunpack.c.l.b16 %v566
    %v631 = vunpack.c.l.b16 %v567
    %v632 = vunpack.c.l.b16 %v568
    %v633 = vunpack.c.l.b16 %v569
    %v634 = vunpack.c.l.b16 %v570
    %v635 = vunpack.c.l.b16 %v571
    %v636 = vunpack.c.l.b16 %v572
    %v637 = vunpack.c.l.b16 %v573
    %v638 = vunpack.c.l.b16 %v574
    %v639 = vunpack.c.l.b16 %v575
    %v640 = vunpack.c.l.b16 %v576
    %v641 = vunpack.c.l.b16 %v577
    %v642 = vunpack.c.l.b16 %v578
    %v643 = vunpack.c.l.b16 %v579
    %v644 = vpack.c.b16 %v613, %v612
    %v645 = vpack.c.b16 %v615, %v614
    %v646 = vpack.c.b16 %v617, %v616
    %v647 = vpack.c.b16 %v619, %v618
    %v648 = vpack.c.b16 %v621, %v620
    %v649 = vpack.c.b16 %v623, %v622
    %v650 = vpack.c.b16 %v625, %v624
    %v651 = vpack.c.b16 %v627, %v626
    %v652 = vpack.c.b16 %v629, %v628
    %v653 = vpack.c.b16 %v631, %v630
    %v654 = vpack.c.b16 %v633, %v632
    %v655 = vpack.c.b16 %v635, %v634
    %v656 = vpack.c.b16 %v637, %v636
    %v657 = vpack.c.b16 %v639, %v638
    %v658 = vpack.c.b16 %v641, %v640
    %v659 = vpack.c.b16 %v643, %v642
    %676 = vst [vmem:[#allocation2] sm:$0xff] %v644
    %677 = vst [vmem:[#allocation2 + $0x8] sm:$0xff] %v645
    %678 = vst [vmem:[#allocation2 + $0x10] sm:$0xff] %v646
    %679 = vst [vmem:[#allocation2 + $0x18] sm:$0xff] %v647
    %680 = vst [vmem:[#allocation2 + $0x20] sm:$0xff] %v648
    %681 = vst [vmem:[#allocation2 + $0x28] sm:$0xff] %v649
    %682 = vst [vmem:[#allocation2 + $0x30] sm:$0xff] %v650
    %683 = vst [vmem:[#allocation2 + $0x38] sm:$0xff] %v651
    %684 = vst [vmem:[#allocation2 + $0x40] sm:$0xff] %v652
    %685 = vst [vmem:[#allocation2 + $0x48] sm:$0xff] %v653
    %686 = vst [vmem:[#allocation2 + $0x50] sm:$0xff] %v654
    %687 = vst [vmem:[#allocation2 + $0x58] sm:$0xff] %v655
    %688 = vst [vmem:[#allocation2 + $0x60] sm:$0xff] %v656
    %689 = vst [vmem:[#allocation2 + $0x68] sm:$0xff] %v657
    %690 = vst [vmem:[#allocation2 + $0x70] sm:$0xff] %v658
    %691 = vst [vmem:[#allocation2 + $0x78] sm:$0xff] %v659
    %v692 = vld [vmem:[#allocation9] sm:$0xff]
    %v693 = vld [vmem:[#allocation9 + $0x8] sm:$0xff]
    %v694 = vld [vmem:[#allocation9 + $0x10] sm:$0xff]
    %v695 = vld [vmem:[#allocation9 + $0x18] sm:$0xff]
    %v696 = vld [vmem:[#allocation9 + $0x20] sm:$0xff]
    %v697 = vld [vmem:[#allocation9 + $0x28] sm:$0xff]
    %v698 = vld [vmem:[#allocation9 + $0x30] sm:$0xff]
    %v699 = vld [vmem:[#allocation9 + $0x38] sm:$0xff]
    %v700 = vld [vmem:[#allocation9 + $0x40] sm:$0xff]
    %v701 = vld [vmem:[#allocation9 + $0x48] sm:$0xff]
    %v702 = vld [vmem:[#allocation9 + $0x50] sm:$0xff]
    %v703 = vld [vmem:[#allocation9 + $0x58] sm:$0xff]
    %v704 = vld [vmem:[#allocation9 + $0x60] sm:$0xff]
    %v705 = vld [vmem:[#allocation9 + $0x68] sm:$0xff]
    %v706 = vld [vmem:[#allocation9 + $0x70] sm:$0xff]
    %v707 = vld [vmem:[#allocation9 + $0x78] sm:$0xff]
    %v708 = vld [vmem:[#allocation9 + $0x80] sm:$0xff]
    %v709 = vld [vmem:[#allocation9 + $0x88] sm:$0xff]
    %v710 = vld [vmem:[#allocation9 + $0x90] sm:$0xff]
    %v711 = vld [vmem:[#allocation9 + $0x98] sm:$0xff]
    %v712 = vld [vmem:[#allocation9 + $0xa0] sm:$0xff]
    %v713 = vld [vmem:[#allocation9 + $0xa8] sm:$0xff]
    %v714 = vld [vmem:[#allocation9 + $0xb0] sm:$0xff]
    %v715 = vld [vmem:[#allocation9 + $0xb8] sm:$0xff]
    %v716 = vld [vmem:[#allocation9 + $0xc0] sm:$0xff]
    %v717 = vld [vmem:[#allocation9 + $0xc8] sm:$0xff]
    %v718 = vld [vmem:[#allocation9 + $0xd0] sm:$0xff]
    %v719 = vld [vmem:[#allocation9 + $0xd8] sm:$0xff]
    %v720 = vld [vmem:[#allocation9 + $0xe0] sm:$0xff]
    %v721 = vld [vmem:[#allocation9 + $0xe8] sm:$0xff]
    %v722 = vld [vmem:[#allocation9 + $0xf0] sm:$0xff]
    %v723 = vld [vmem:[#allocation9 + $0xf8] sm:$0xff]
    %v724 = vld [vmem:[#allocation2] sm:$0xff]
    %v725 = vld [vmem:[#allocation2 + $0x8] sm:$0xff]
    %v726 = vunpack.c.l.bf16 %v724
    %v727 = vunpack.c.h.bf16 %v724
    %v728 = vunpack.c.l.bf16 %v725
    %v729 = vunpack.c.h.bf16 %v725
    %v762 = vunpack.c.l.b16 %v692
    %v763 = vunpack.c.h.b16 %v692
    %v764 = vunpack.c.l.b16 %v693
    %v765 = vunpack.c.h.b16 %v693
    %v766 = vunpack.c.l.b16 %v694
    %v767 = vunpack.c.h.b16 %v694
    %v768 = vunpack.c.l.b16 %v695
    %v769 = vunpack.c.h.b16 %v695
    %v770 = vunpack.c.l.b16 %v696
    %v771 = vunpack.c.h.b16 %v696
    %v772 = vunpack.c.l.b16 %v697
    %v773 = vunpack.c.h.b16 %v697
    %v774 = vunpack.c.l.b16 %v698
    %v775 = vunpack.c.h.b16 %v698
    %v776 = vunpack.c.l.b16 %v699
    %v777 = vunpack.c.h.b16 %v699
    %v778 = vunpack.c.l.b16 %v700
    %v779 = vunpack.c.h.b16 %v700
    %v780 = vunpack.c.l.b16 %v701
    %v781 = vunpack.c.h.b16 %v701
    %v782 = vunpack.c.l.b16 %v702
    %v783 = vunpack.c.h.b16 %v702
    %v784 = vunpack.c.l.b16 %v703
    %v785 = vunpack.c.h.b16 %v703
    %v786 = vunpack.c.l.b16 %v704
    %v787 = vunpack.c.h.b16 %v704
    %v788 = vunpack.c.l.b16 %v705
    %v789 = vunpack.c.h.b16 %v705
    %v790 = vunpack.c.l.b16 %v706
    %v791 = vunpack.c.h.b16 %v706
    %v792 = vunpack.c.l.b16 %v707
    %v793 = vunpack.c.h.b16 %v707
    %v794 = vunpack.c.l.b16 %v708
    %v795 = vunpack.c.h.b16 %v708
    %v796 = vunpack.c.l.b16 %v709
    %v797 = vunpack.c.h.b16 %v709
    %v798 = vunpack.c.l.b16 %v710
    %v799 = vunpack.c.h.b16 %v710
    %v800 = vunpack.c.l.b16 %v711
    %v801 = vunpack.c.h.b16 %v711
    %v802 = vunpack.c.l.b16 %v712
    %v803 = vunpack.c.h.b16 %v712
    %v804 = vunpack.c.l.b16 %v713
    %v805 = vunpack.c.h.b16 %v713
    %v806 = vunpack.c.l.b16 %v714
    %v807 = vunpack.c.h.b16 %v714
    %v808 = vunpack.c.l.b16 %v715
    %v809 = vunpack.c.h.b16 %v715
    %v810 = vunpack.c.l.b16 %v716
    %v811 = vunpack.c.h.b16 %v716
    %v812 = vunpack.c.l.b16 %v717
    %v813 = vunpack.c.h.b16 %v717
    %v814 = vunpack.c.l.b16 %v718
    %v815 = vunpack.c.h.b16 %v718
    %v816 = vunpack.c.l.b16 %v719
    %v817 = vunpack.c.h.b16 %v719
    %v818 = vunpack.c.l.b16 %v720
    %v819 = vunpack.c.h.b16 %v720
    %v820 = vunpack.c.l.b16 %v721
    %v821 = vunpack.c.h.b16 %v721
    %v822 = vunpack.c.l.b16 %v722
    %v823 = vunpack.c.h.b16 %v722
    %v824 = vunpack.c.l.b16 %v723
    %v825 = vunpack.c.h.b16 %v723
    %v826 = vpack.c.b16 %v766, %v762
    %v827 = vpack.c.b16 %v767, %v763
    %v828 = vpack.c.b16 %v768, %v764
    %v829 = vpack.c.b16 %v769, %v765
    %v830 = vpack.c.b16 %v774, %v770
    %v831 = vpack.c.b16 %v775, %v771
    %v832 = vpack.c.b16 %v776, %v772
    %v833 = vpack.c.b16 %v777, %v773
    %v834 = vpack.c.b16 %v782, %v778
    %v835 = vpack.c.b16 %v783, %v779
    %v836 = vpack.c.b16 %v784, %v780
    %v837 = vpack.c.b16 %v785, %v781
    %v838 = vpack.c.b16 %v790, %v786
    %v839 = vpack.c.b16 %v791, %v787
    %v840 = vpack.c.b16 %v792, %v788
    %v841 = vpack.c.b16 %v793, %v789
    %v842 = vpack.c.b16 %v798, %v794
    %v843 = vpack.c.b16 %v799, %v795
    %v844 = vpack.c.b16 %v800, %v796
    %v845 = vpack.c.b16 %v801, %v797
    %v846 = vpack.c.b16 %v806, %v802
    %v847 = vpack.c.b16 %v807, %v803
    %v848 = vpack.c.b16 %v808, %v804
    %v849 = vpack.c.b16 %v809, %v805
    %v850 = vpack.c.b16 %v814, %v810
    %v851 = vpack.c.b16 %v815, %v811
    %v852 = vpack.c.b16 %v816, %v812
    %v853 = vpack.c.b16 %v817, %v813
    %v854 = vpack.c.b16 %v822, %v818
    %v855 = vpack.c.b16 %v823, %v819
    %v856 = vpack.c.b16 %v824, %v820
    %v857 = vpack.c.b16 %v825, %v821
    %890 = vmatprep.subr.bf16.mxu0 %v827
    %891 = vmatpush1.bf16.msra.mxu0 %v826
    %892 = vmatprep.subr.bf16.mxu0 %v831
    %893 = vmatpush1.bf16.msra.mxu0 %v830
    %894 = vmatprep.subr.bf16.mxu0 %v835
    %895 = vmatpush1.bf16.msra.mxu0 %v834
    %896 = vmatprep.subr.bf16.mxu0 %v839
    %897 = vmatpush1.bf16.msra.mxu0 %v838
    %898 = vmatprep.subr.bf16.mxu0 %v843
    %899 = vmatpush1.bf16.msra.mxu0 %v842
    %900 = vmatprep.subr.bf16.mxu0 %v847
    %901 = vmatpush1.bf16.msra.mxu0 %v846
    %902 = vmatprep.subr.bf16.mxu0 %v851
    %903 = vmatpush1.bf16.msra.mxu0 %v850
    %904 = vmatprep.subr.bf16.mxu0 %v855
    %905 = vmatpush1.bf16.msra.mxu0 %v854
    %906 = vmatprep.subr.bf16.mxu0 0
    %907 = vmatpush1.bf16.msra.mxu0 0
    %908 = vmatprep.subr.bf16.mxu0 0
    %909 = vmatpush1.bf16.msra.mxu0 0
    %910 = vmatprep.subr.bf16.mxu0 0
    %911 = vmatpush1.bf16.msra.mxu0 0
    %912 = vmatprep.subr.bf16.mxu0 0
    %913 = vmatpush1.bf16.msra.mxu0 0
    %914 = vmatprep.subr.bf16.mxu0 0
    %915 = vmatpush1.bf16.msra.mxu0 0
    %916 = vmatprep.subr.bf16.mxu0 0
    %917 = vmatpush1.bf16.msra.mxu0 0
    %918 = vmatprep.subr.bf16.mxu0 0
    %919 = vmatpush1.bf16.msra.mxu0 0
    %920 = vmatprep.subr.bf16.mxu0 0
    %921 = vmatpush1.bf16.msra.mxu0 0
    %922 = vmatprep.mubr.bf16.mxu0 0
    %923 = vmatmul.mubr.bf16.gmra.mrb[0].mxu0 0
    %v924 = vpop.f32.mrb[0].mxu0
    %v925 = vadd.f32 %v726, %v924
    %v926 = vpop.f32.mrb[0].mxu0
    %v927 = vadd.f32 %v727, %v926
    %v928 = vpop.f32.mrb[0].mxu0
    %v929 = vpop.f32.mrb[0].mxu0
    %930 = vdwg.mxu0
    %931 = vmatprep.subr.bf16.mxu0 %v829
    %932 = vmatpush1.bf16.msra.mxu0 %v828
    %933 = vmatprep.subr.bf16.mxu0 %v833
    %934 = vmatpush1.bf16.msra.mxu0 %v832
    %935 = vmatprep.subr.bf16.mxu0 %v837
    %936 = vmatpush1.bf16.msra.mxu0 %v836
    %937 = vmatprep.subr.bf16.mxu0 %v841
    %938 = vmatpush1.bf16.msra.mxu0 %v840
    %939 = vmatprep.subr.bf16.mxu0 %v845
    %940 = vmatpush1.bf16.msra.mxu0 %v844
    %941 = vmatprep.subr.bf16.mxu0 %v849
    %942 = vmatpush1.bf16.msra.mxu0 %v848
    %943 = vmatprep.subr.bf16.mxu0 %v853
    %944 = vmatpush1.bf16.msra.mxu0 %v852
    %945 = vmatprep.subr.bf16.mxu0 %v857
    %946 = vmatpush1.bf16.msra.mxu0 %v856
    %947 = vmatprep.subr.bf16.mxu0 0
    %948 = vmatpush1.bf16.msra.mxu0 0
    %949 = vmatprep.subr.bf16.mxu0 0
    %950 = vmatpush1.bf16.msra.mxu0 0
    %951 = vmatprep.subr.bf16.mxu0 0
    %952 = vmatpush1.bf16.msra.mxu0 0
    %953 = vmatprep.subr.bf16.mxu0 0
    %954 = vmatpush1.bf16.msra.mxu0 0
    %955 = vmatprep.subr.bf16.mxu0 0
    %956 = vmatpush1.bf16.msra.mxu0 0
    %957 = vmatprep.subr.bf16.mxu0 0
    %958 = vmatpush1.bf16.msra.mxu0 0
    %959 = vmatprep.subr.bf16.mxu0 0
    %960 = vmatpush1.bf16.msra.mxu0 0
    %961 = vmatprep.subr.bf16.mxu0 0
    %962 = vmatpush1.bf16.msra.mxu0 0
    %963 = vmatprep.mubr.bf16.mxu0 0
    %964 = vmatmul.mubr.bf16.gmra.mrb[0].mxu0 0
    %v965 = vpop.f32.mrb[0].mxu0
    %v966 = vadd.f32 %v728, %v965
    %v967 = vpop.f32.mrb[0].mxu0
    %v968 = vadd.f32 %v729, %v967
    %v969 = vpop.f32.mrb[0].mxu0
    %v970 = vpop.f32.mrb[0].mxu0
    %971 = vdwg.mxu0
    %v972 = vpack.c.bf16 %v925, %v925
    %v973 = vpack.c.bf16 %v927, %v927
    %v974 = vpack.c.bf16 %v966, %v966
    %v975 = vpack.c.bf16 %v968, %v968
    %v976 = vxor.u32 %v972, 2147516416
    %v978 = vmul.bf16 %v976, 1069105081
    %v979 = vpow.bf16.pop %v978
    %v980 = vadd.bf16 %v979, 1065369472
    %v981 = vrcp.bf16.pop %v980
    %v982 = vmul.bf16 1065369472, %v981
    %v983 = vxor.u32 %v973, 2147516416
    %v985 = vmul.bf16 %v983, 1069105081
    %v986 = vpow.bf16.pop %v985
    %v987 = vadd.bf16 %v986, 1065369472
    %v988 = vrcp.bf16.pop %v987
    %v989 = vmul.bf16 1065369472, %v988
    %v990 = vtanh.bf16.pop %v974
    %v991 = vxor.u32 %v975, 2147516416
    %v993 = vmul.bf16 %v991, 1069105081
    %v994 = vpow.bf16.pop %v993
    %v995 = vadd.bf16 %v994, 1065369472
    %v996 = vrcp.bf16.pop %v995
    %v997 = vmul.bf16 1065369472, %v996
    %v998 = vunpack.c.l.bf16 %v989
    %v999 = vmul.f32 %v998, 0.0
    %v1000 = vmul.bf16 %v982, %v990
    %v1001 = vunpack.c.l.bf16 %v1000
    %v1002 = vadd.f32 %v999, %v1001
    %v1003 = vpack.c.bf16 %v1002, %v1002
    %v1004 = vtanh.bf16.pop %v1003
    %v1005 = vmul.bf16 %v997, %v1004
    %1006 = vst [vmem:[#allocation3] sm:$0xf] %v1005
    %s1007 = scalar_lea.vmem [#allocation2], 16
    %v1008 = vld [vmem:[%s1007] sm:$0xff]
    %v1009 = vld [vmem:[%s1007 + $0x8] sm:$0xff]
    %v1010 = vunpack.c.l.bf16 %v1008
    %v1011 = vunpack.c.h.bf16 %v1008
    %v1012 = vunpack.c.l.bf16 %v1009
    %v1013 = vunpack.c.h.bf16 %v1009
    %1014 = vmatprep.subr.bf16.mxu0 %v827
    %1015 = vmatpush1.bf16.msra.mxu0 %v826
    %1016 = vmatprep.subr.bf16.mxu0 %v831
    %1017 = vmatpush1.bf16.msra.mxu0 %v830
    %1018 = vmatprep.subr.bf16.mxu0 %v835
    %1019 = vmatpush1.bf16.msra.mxu0 %v834
    %1020 = vmatprep.subr.bf16.mxu0 %v839
    %1021 = vmatpush1.bf16.msra.mxu0 %v838
    %1022 = vmatprep.subr.bf16.mxu0 %v843
    %1023 = vmatpush1.bf16.msra.mxu0 %v842
    %1024 = vmatprep.subr.bf16.mxu0 %v847
    %1025 = vmatpush1.bf16.msra.mxu0 %v846
    %1026 = vmatprep.subr.bf16.mxu0 %v851
    %1027 = vmatpush1.bf16.msra.mxu0 %v850
    %1028 = vmatprep.subr.bf16.mxu0 %v855
    %1029 = vmatpush1.bf16.msra.mxu0 %v854
    %1030 = vmatprep.subr.bf16.mxu0 0
    %1031 = vmatpush1.bf16.msra.mxu0 0
    %1032 = vmatprep.subr.bf16.mxu0 0
    %1033 = vmatpush1.bf16.msra.mxu0 0
    %1034 = vmatprep.subr.bf16.mxu0 0
    %1035 = vmatpush1.bf16.msra.mxu0 0
    %1036 = vmatprep.subr.bf16.mxu0 0
    %1037 = vmatpush1.bf16.msra.mxu0 0
    %1038 = vmatprep.subr.bf16.mxu0 0
    %1039 = vmatpush1.bf16.msra.mxu0 0
    %1040 = vmatprep.subr.bf16.mxu0 0
    %1041 = vmatpush1.bf16.msra.mxu0 0
    %1042 = vmatprep.subr.bf16.mxu0 0
    %1043 = vmatpush1.bf16.msra.mxu0 0
    %1044 = vmatprep.subr.bf16.mxu0 0
    %1045 = vmatpush1.bf16.msra.mxu0 0
    %1046 = vmatprep.mubr.bf16.mxu0 0
    %1047 = vmatmul.mubr.bf16.gmra.mrb[0].mxu0 %v1005
    %v1048 = vpop.f32.mrb[0].mxu0
    %v1049 = vadd.f32 %v1010, %v1048
    %v1050 = vpop.f32.mrb[0].mxu0
    %v1051 = vadd.f32 %v1011, %v1050
    %v1052 = vpop.f32.mrb[0].mxu0
    %v1053 = vpop.f32.mrb[0].mxu0
    %1054 = vdwg.mxu0
    %1055 = vmatprep.subr.bf16.mxu0 %v829
    %1056 = vmatpush1.bf16.msra.mxu0 %v828
    %1057 = vmatprep.subr.bf16.mxu0 %v833
    %1058 = vmatpush1.bf16.msra.mxu0 %v832
    %1059 = vmatprep.subr.bf16.mxu0 %v837
    %1060 = vmatpush1.bf16.msra.mxu0 %v836
    %1061 = vmatprep.subr.bf16.mxu0 %v841
    %1062 = vmatpush1.bf16.msra.mxu0 %v840
    %1063 = vmatprep.subr.bf16.mxu0 %v845
    %1064 = vmatpush1.bf16.msra.mxu0 %v844
    %1065 = vmatprep.subr.bf16.mxu0 %v849
    %1066 = vmatpush1.bf16.msra.mxu0 %v848
    %1067 = vmatprep.subr.bf16.mxu0 %v853
    %1068 = vmatpush1.bf16.msra.mxu0 %v852
    %1069 = vmatprep.subr.bf16.mxu0 %v857
    %1070 = vmatpush1.bf16.msra.mxu0 %v856
    %1071 = vmatprep.subr.bf16.mxu0 0
    %1072 = vmatpush1.bf16.msra.mxu0 0
    %1073 = vmatprep.subr.bf16.mxu0 0
    %1074 = vmatpush1.bf16.msra.mxu0 0
    %1075 = vmatprep.subr.bf16.mxu0 0
    %1076 = vmatpush1.bf16.msra.mxu0 0
    %1077 = vmatprep.subr.bf16.mxu0 0
    %1078 = vmatpush1.bf16.msra.mxu0 0
    %1079 = vmatprep.subr.bf16.mxu0 0
    %1080 = vmatpush1.bf16.msra.mxu0 0
    %1081 = vmatprep.subr.bf16.mxu0 0
    %1082 = vmatpush1.bf16.msra.mxu0 0
    %1083 = vmatprep.subr.bf16.mxu0 0
    %1084 = vmatpush1.bf16.msra.mxu0 0
    %1085 = vmatprep.subr.bf16.mxu0 0
    %1086 = vmatpush1.bf16.msra.mxu0 0
    %1087 = vmatprep.mubr.bf16.mxu0 0
    %1088 = vmatmul.mubr.bf16.gmra.mrb[0].mxu0 %v1005
    %v1089 = vpop.f32.mrb[0].mxu0
    %v1090 = vadd.f32 %v1012, %v1089
    %v1091 = vpop.f32.mrb[0].mxu0
    %v1092 = vadd.f32 %v1013, %v1091
    %v1093 = vpop.f32.mrb[0].mxu0
    %v1094 = vpop.f32.mrb[0].mxu0
    %1095 = vdwg.mxu0
    %v1096 = vpack.c.bf16 %v1049, %v1049
    %v1097 = vpack.c.bf16 %v1051, %v1051
    %v1098 = vpack.c.bf16 %v1090, %v1090
    %v1099 = vpack.c.bf16 %v1092, %v1092
    %v1100 = vxor.u32 %v1096, 2147516416
    %v1102 = vmul.bf16 %v1100, 1069105081
    %v1103 = vpow.bf16.pop %v1102
    %v1104 = vadd.bf16 %v1103, 1065369472
    %v1105 = vrcp.bf16.pop %v1104
    %v1106 = vmul.bf16 1065369472, %v1105
    %v1107 = vxor.u32 %v1097, 2147516416
    %v1109 = vmul.bf16 %v1107, 1069105081
    %v1110 = vpow.bf16.pop %v1109
    %v1111 = vadd.bf16 %v1110, 1065369472
    %v1112 = vrcp.bf16.pop %v1111
    %v1113 = vmul.bf16 1065369472, %v1112
    %v1114 = vtanh.bf16.pop %v1098
    %v1115 = vxor.u32 %v1099, 2147516416
    %v1117 = vmul.bf16 %v1115, 1069105081
    %v1118 = vpow.bf16.pop %v1117
    %v1119 = vadd.bf16 %v1118, 1065369472
    %v1120 = vrcp.bf16.pop %v1119
    %v1121 = vmul.bf16 1065369472, %v1120
    %v1122 = vunpack.c.l.bf16 %v1113
    %v1123 = vmul.f32 %v1122, %v1002
    %v1124 = vmul.bf16 %v1106, %v1114
    %v1125 = vunpack.c.l.bf16 %v1124
    %v1126 = vadd.f32 %v1123, %v1125
    %v1127 = vpack.c.bf16 %v1126, %v1126
    %v1128 = vtanh.bf16.pop %v1127
    %v1129 = vmul.bf16 %v1121, %v1128
    %s1130 = scalar_lea.vmem [#allocation3], 4
    %1131 = vst [vmem:[%s1130] sm:$0xf] %v1129
    %s1132 = scalar_lea.vmem [#allocation2], 32
    %v1133 = vld [vmem:[%s1132] sm:$0xff]
    %v1134 = vld [vmem:[%s1132 + $0x8] sm:$0xff]
    %v1135 = vunpack.c.l.bf16 %v1133
    %v1136 = vunpack.c.h.bf16 %v1133
    %v1137 = vunpack.c.l.bf16 %v1134
    %v1138 = vunpack.c.h.bf16 %v1134
    %1139 = vmatprep.subr.bf16.mxu0 %v827
    %1140 = vmatpush1.bf16.msra.mxu0 %v826
    %1141 = vmatprep.subr.bf16.mxu0 %v831
    %1142 = vmatpush1.bf16.msra.mxu0 %v830
    %1143 = vmatprep.subr.bf16.mxu0 %v835
    %1144 = vmatpush1.bf16.msra.mxu0 %v834
    %1145 = vmatprep.subr.bf16.mxu0 %v839
    %1146 = vmatpush1.bf16.msra.mxu0 %v838
    %1147 = vmatprep.subr.bf16.mxu0 %v843
    %1148 = vmatpush1.bf16.msra.mxu0 %v842
    %1149 = vmatprep.subr.bf16.mxu0 %v847
    %1150 = vmatpush1.bf16.msra.mxu0 %v846
    %1151 = vmatprep.subr.bf16.mxu0 %v851
    %1152 = vmatpush1.bf16.msra.mxu0 %v850
    %1153 = vmatprep.subr.bf16.mxu0 %v855
    %1154 = vmatpush1.bf16.msra.mxu0 %v854
    %1155 = vmatprep.subr.bf16.mxu0 0
    %1156 = vmatpush1.bf16.msra.mxu0 0
    %1157 = vmatprep.subr.bf16.mxu0 0
    %1158 = vmatpush1.bf16.msra.mxu0 0
    %1159 = vmatprep.subr.bf16.mxu0 0
    %1160 = vmatpush1.bf16.msra.mxu0 0
    %1161 = vmatprep.subr.bf16.mxu0 0
    %1162 = vmatpush1.bf16.msra.mxu0 0
    %1163 = vmatprep.subr.bf16.mxu0 0
    %1164 = vmatpush1.bf16.msra.mxu0 0
    %1165 = vmatprep.subr.bf16.mxu0 0
    %1166 = vmatpush1.bf16.msra.mxu0 0
    %1167 = vmatprep.subr.bf16.mxu0 0
    %1168 = vmatpush1.bf16.msra.mxu0 0
    %1169 = vmatprep.subr.bf16.mxu0 0
    %1170 = vmatpush1.bf16.msra.mxu0 0
    %1171 = vmatprep.mubr.bf16.mxu0 0
    %1172 = vmatmul.mubr.bf16.gmra.mrb[0].mxu0 %v1129
    %v1173 = vpop.f32.mrb[0].mxu0
    %v1174 = vadd.f32 %v1135, %v1173
    %v1175 = vpop.f32.mrb[0].mxu0
    %v1176 = vadd.f32 %v1136, %v1175
    %v1177 = vpop.f32.mrb[0].mxu0
    %v1178 = vpop.f32.mrb[0].mxu0
    %1179 = vdwg.mxu0
    %1180 = vmatprep.subr.bf16.mxu0 %v829
    %1181 = vmatpush1.bf16.msra.mxu0 %v828
    %1182 = vmatprep.subr.bf16.mxu0 %v833
    %1183 = vmatpush1.bf16.msra.mxu0 %v832
    %1184 = vmatprep.subr.bf16.mxu0 %v837
    %1185 = vmatpush1.bf16.msra.mxu0 %v836
    %1186 = vmatprep.subr.bf16.mxu0 %v841
    %1187 = vmatpush1.bf16.msra.mxu0 %v840
    %1188 = vmatprep.subr.bf16.mxu0 %v845
    %1189 = vmatpush1.bf16.msra.mxu0 %v844
    %1190 = vmatprep.subr.bf16.mxu0 %v849
    %1191 = vmatpush1.bf16.msra.mxu0 %v848
    %1192 = vmatprep.subr.bf16.mxu0 %v853
    %1193 = vmatpush1.bf16.msra.mxu0 %v852
    %1194 = vmatprep.subr.bf16.mxu0 %v857
    %1195 = vmatpush1.bf16.msra.mxu0 %v856
    %1196 = vmatprep.subr.bf16.mxu0 0
    %1197 = vmatpush1.bf16.msra.mxu0 0
    %1198 = vmatprep.subr.bf16.mxu0 0
    %1199 = vmatpush1.bf16.msra.mxu0 0
    %1200 = vmatprep.subr.bf16.mxu0 0
    %1201 = vmatpush1.bf16.msra.mxu0 0
    %1202 = vmatprep.subr.bf16.mxu0 0
    %1203 = vmatpush1.bf16.msra.mxu0 0
    %1204 = vmatprep.subr.bf16.mxu0 0
    %1205 = vmatpush1.bf16.msra.mxu0 0
    %1206 = vmatprep.subr.bf16.mxu0 0
    %1207 = vmatpush1.bf16.msra.mxu0 0
    %1208 = vmatprep.subr.bf16.mxu0 0
    %1209 = vmatpush1.bf16.msra.mxu0 0
    %1210 = vmatprep.subr.bf16.mxu0 0
    %1211 = vmatpush1.bf16.msra.mxu0 0
    %1212 = vmatprep.mubr.bf16.mxu0 0
    %1213 = vmatmul.mubr.bf16.gmra.mrb[0].mxu0 %v1129
    %v1214 = vpop.f32.mrb[0].mxu0
    %v1215 = vadd.f32 %v1137, %v1214
    %v1216 = vpop.f32.mrb[0].mxu0
    %v1217 = vadd.f32 %v1138, %v1216
    %v1218 = vpop.f32.mrb[0].mxu0
    %v1219 = vpop.f32.mrb[0].mxu0
    %1220 = vdwg.mxu0
    %v1221 = vpack.c.bf16 %v1174, %v1174
    %v1222 = vpack.c.bf16 %v1176, %v1176
    %v1223 = vpack.c.bf16 %v1215, %v1215
    %v1224 = vpack.c.bf16 %v1217, %v1217
    %v1225 = vxor.u32 %v1221, 2147516416
    %v1227 = vmul.bf16 %v1225, 1069105081
    %v1228 = vpow.bf16.pop %v1227
    %v1229 = vadd.bf16 %v1228, 1065369472
    %v1230 = vrcp.bf16.pop %v1229
    %v1231 = vmul.bf16 1065369472, %v1230
    %v1232 = vxor.u32 %v1222, 2147516416
    %v1234 = vmul.bf16 %v1232, 1069105081
    %v1235 = vpow.bf16.pop %v1234
    %v1236 = vadd.bf16 %v1235, 1065369472
    %v1237 = vrcp.bf16.pop %v1236
    %v1238 = vmul.bf16 1065369472, %v1237
    %v1239 = vtanh.bf16.pop %v1223
    %v1240 = vxor.u32 %v1224, 2147516416
    %v1242 = vmul.bf16 %v1240, 1069105081
    %v1243 = vpow.bf16.pop %v1242
    %v1244 = vadd.bf16 %v1243, 1065369472
    %v1245 = vrcp.bf16.pop %v1244
    %v1246 = vmul.bf16 1065369472, %v1245
    %v1247 = vunpack.c.l.bf16 %v1238
    %v1248 = vmul.f32 %v1247, %v1126
    %v1249 = vmul.bf16 %v1231, %v1239
    %v1250 = vunpack.c.l.bf16 %v1249
    %v1251 = vadd.f32 %v1248, %v1250
    %v1252 = vpack.c.bf16 %v1251, %v1251
    %v1253 = vtanh.bf16.pop %v1252
    %v1254 = vmul.bf16 %v1246, %v1253
    %s1255 = scalar_lea.vmem [#allocation3], 8
    %1256 = vst [vmem:[%s1255] sm:$0xf] %v1254
    %s1257 = scalar_lea.vmem [#allocation2], 48
    %v1258 = vld [vmem:[%s1257] sm:$0xff]
    %v1259 = vld [vmem:[%s1257 + $0x8] sm:$0xff]
    %v1260 = vunpack.c.l.bf16 %v1258
    %v1261 = vunpack.c.h.bf16 %v1258
    %v1262 = vunpack.c.l.bf16 %v1259
    %v1263 = vunpack.c.h.bf16 %v1259
    %1264 = vmatprep.subr.bf16.mxu0 %v827
    %1265 = vmatpush1.bf16.msra.mxu0 %v826
    %1266 = vmatprep.subr.bf16.mxu0 %v831
    %1267 = vmatpush1.bf16.msra.mxu0 %v830
    %1268 = vmatprep.subr.bf16.mxu0 %v835
    %1269 = vmatpush1.bf16.msra.mxu0 %v834
    %1270 = vmatprep.subr.bf16.mxu0 %v839
    %1271 = vmatpush1.bf16.msra.mxu0 %v838
    %1272 = vmatprep.subr.bf16.mxu0 %v843
    %1273 = vmatpush1.bf16.msra.mxu0 %v842
    %1274 = vmatprep.subr.bf16.mxu0 %v847
    %1275 = vmatpush1.bf16.msra.mxu0 %v846
    %1276 = vmatprep.subr.bf16.mxu0 %v851
    %1277 = vmatpush1.bf16.msra.mxu0 %v850
    %1278 = vmatprep.subr.bf16.mxu0 %v855
    %1279 = vmatpush1.bf16.msra.mxu0 %v854
    %1280 = vmatprep.subr.bf16.mxu0 0
    %1281 = vmatpush1.bf16.msra.mxu0 0
    %1282 = vmatprep.subr.bf16.mxu0 0
    %1283 = vmatpush1.bf16.msra.mxu0 0
    %1284 = vmatprep.subr.bf16.mxu0 0
    %1285 = vmatpush1.bf16.msra.mxu0 0
    %1286 = vmatprep.subr.bf16.mxu0 0
    %1287 = vmatpush1.bf16.msra.mxu0 0
    %1288 = vmatprep.subr.bf16.mxu0 0
    %1289 = vmatpush1.bf16.msra.mxu0 0
    %1290 = vmatprep.subr.bf16.mxu0 0
    %1291 = vmatpush1.bf16.msra.mxu0 0
    %1292 = vmatprep.subr.bf16.mxu0 0
    %1293 = vmatpush1.bf16.msra.mxu0 0
    %1294 = vmatprep.subr.bf16.mxu0 0
    %1295 = vmatpush1.bf16.msra.mxu0 0
    %1296 = vmatprep.mubr.bf16.mxu0 0
    %1297 = vmatmul.mubr.bf16.gmra.mrb[0].mxu0 %v1254
    %v1298 = vpop.f32.mrb[0].mxu0
    %v1299 = vadd.f32 %v1260, %v1298
    %v1300 = vpop.f32.mrb[0].mxu0
    %v1301 = vadd.f32 %v1261, %v1300
    %v1302 = vpop.f32.mrb[0].mxu0
    %v1303 = vpop.f32.mrb[0].mxu0
    %1304 = vdwg.mxu0
    %1305 = vmatprep.subr.bf16.mxu0 %v829
    %1306 = vmatpush1.bf16.msra.mxu0 %v828
    %1307 = vmatprep.subr.bf16.mxu0 %v833
    %1308 = vmatpush1.bf16.msra.mxu0 %v832
    %1309 = vmatprep.subr.bf16.mxu0 %v837
    %1310 = vmatpush1.bf16.msra.mxu0 %v836
    %1311 = vmatprep.subr.bf16.mxu0 %v841
    %1312 = vmatpush1.bf16.msra.mxu0 %v840
    %1313 = vmatprep.subr.bf16.mxu0 %v845
    %1314 = vmatpush1.bf16.msra.mxu0 %v844
    %1315 = vmatprep.subr.bf16.mxu0 %v849
    %1316 = vmatpush1.bf16.msra.mxu0 %v848
    %1317 = vmatprep.subr.bf16.mxu0 %v853
    %1318 = vmatpush1.bf16.msra.mxu0 %v852
    %1319 = vmatprep.subr.bf16.mxu0 %v857
    %1320 = vmatpush1.bf16.msra.mxu0 %v856
    %1321 = vmatprep.subr.bf16.mxu0 0
    %1322 = vmatpush1.bf16.msra.mxu0 0
    %1323 = vmatprep.subr.bf16.mxu0 0
    %1324 = vmatpush1.bf16.msra.mxu0 0
    %1325 = vmatprep.subr.bf16.mxu0 0
    %1326 = vmatpush1.bf16.msra.mxu0 0
    %1327 = vmatprep.subr.bf16.mxu0 0
    %1328 = vmatpush1.bf16.msra.mxu0 0
    %1329 = vmatprep.subr.bf16.mxu0 0
    %1330 = vmatpush1.bf16.msra.mxu0 0
    %1331 = vmatprep.subr.bf16.mxu0 0
    %1332 = vmatpush1.bf16.msra.mxu0 0
    %1333 = vmatprep.subr.bf16.mxu0 0
    %1334 = vmatpush1.bf16.msra.mxu0 0
    %1335 = vmatprep.subr.bf16.mxu0 0
    %1336 = vmatpush1.bf16.msra.mxu0 0
    %1337 = vmatprep.mubr.bf16.mxu0 0
    %1338 = vmatmul.mubr.bf16.gmra.mrb[0].mxu0 %v1254
    %v1339 = vpop.f32.mrb[0].mxu0
    %v1340 = vadd.f32 %v1262, %v1339
    %v1341 = vpop.f32.mrb[0].mxu0
    %v1342 = vadd.f32 %v1263, %v1341
    %v1343 = vpop.f32.mrb[0].mxu0
    %v1344 = vpop.f32.mrb[0].mxu0
    %1345 = vdwg.mxu0
    %v1346 = vpack.c.bf16 %v1299, %v1299
    %v1347 = vpack.c.bf16 %v1301, %v1301
    %v1348 = vpack.c.bf16 %v1340, %v1340
    %v1349 = vpack.c.bf16 %v1342, %v1342
    %v1350 = vxor.u32 %v1346, 2147516416
    %v1352 = vmul.bf16 %v1350, 1069105081
    %v1353 = vpow.bf16.pop %v1352
    %v1354 = vadd.bf16 %v1353, 1065369472
    %v1355 = vrcp.bf16.pop %v1354
    %v1356 = vmul.bf16 1065369472, %v1355
    %v1357 = vxor.u32 %v1347, 2147516416
    %v1359 = vmul.bf16 %v1357, 1069105081
    %v1360 = vpow.bf16.pop %v1359
    %v1361 = vadd.bf16 %v1360, 1065369472
    %v1362 = vrcp.bf16.pop %v1361
    %v1363 = vmul.bf16 1065369472, %v1362
    %v1364 = vtanh.bf16.pop %v1348
    %v1365 = vxor.u32 %v1349, 2147516416
    %v1367 = vmul.bf16 %v1365, 1069105081
    %v1368 = vpow.bf16.pop %v1367
    %v1369 = vadd.bf16 %v1368, 1065369472
    %v1370 = vrcp.bf16.pop %v1369
    %v1371 = vmul.bf16 1065369472, %v1370
    %v1372 = vunpack.c.l.bf16 %v1363
    %v1373 = vmul.f32 %v1372, %v1251
    %v1374 = vmul.bf16 %v1356, %v1364
    %v1375 = vunpack.c.l.bf16 %v1374
    %v1376 = vadd.f32 %v1373, %v1375
    %v1377 = vpack.c.bf16 %v1376, %v1376
    %v1378 = vtanh.bf16.pop %v1377
    %v1379 = vmul.bf16 %v1371, %v1378
    %s1380 = scalar_lea.vmem [#allocation3], 12
    %1381 = vst [vmem:[%s1380] sm:$0xf] %v1379
    %s1382 = scalar_lea.vmem [#allocation2], 64
    %v1383 = vld [vmem:[%s1382] sm:$0xff]
    %v1384 = vld [vmem:[%s1382 + $0x8] sm:$0xff]
    %v1385 = vunpack.c.l.bf16 %v1383
    %v1386 = vunpack.c.h.bf16 %v1383
    %v1387 = vunpack.c.l.bf16 %v1384
    %v1388 = vunpack.c.h.bf16 %v1384
    %1389 = vmatprep.subr.bf16.mxu0 %v827
    %1390 = vmatpush1.bf16.msra.mxu0 %v826
    %1391 = vmatprep.subr.bf16.mxu0 %v831
    %1392 = vmatpush1.bf16.msra.mxu0 %v830
    %1393 = vmatprep.subr.bf16.mxu0 %v835
    %1394 = vmatpush1.bf16.msra.mxu0 %v834
    %1395 = vmatprep.subr.bf16.mxu0 %v839
    %1396 = vmatpush1.bf16.msra.mxu0 %v838
    %1397 = vmatprep.subr.bf16.mxu0 %v843
    %1398 = vmatpush1.bf16.msra.mxu0 %v842
    %1399 = vmatprep.subr.bf16.mxu0 %v847
    %1400 = vmatpush1.bf16.msra.mxu0 %v846
    %1401 = vmatprep.subr.bf16.mxu0 %v851
    %1402 = vmatpush1.bf16.msra.mxu0 %v850
    %1403 = vmatprep.subr.bf16.mxu0 %v855
    %1404 = vmatpush1.bf16.msra.mxu0 %v854
    %1405 = vmatprep.subr.bf16.mxu0 0
    %1406 = vmatpush1.bf16.msra.mxu0 0
    %1407 = vmatprep.subr.bf16.mxu0 0
    %1408 = vmatpush1.bf16.msra.mxu0 0
    %1409 = vmatprep.subr.bf16.mxu0 0
    %1410 = vmatpush1.bf16.msra.mxu0 0
    %1411 = vmatprep.subr.bf16.mxu0 0
    %1412 = vmatpush1.bf16.msra.mxu0 0
    %1413 = vmatprep.subr.bf16.mxu0 0
    %1414 = vmatpush1.bf16.msra.mxu0 0
    %1415 = vmatprep.subr.bf16.mxu0 0
    %1416 = vmatpush1.bf16.msra.mxu0 0
    %1417 = vmatprep.subr.bf16.mxu0 0
    %1418 = vmatpush1.bf16.msra.mxu0 0
    %1419 = vmatprep.subr.bf16.mxu0 0
    %1420 = vmatpush1.bf16.msra.mxu0 0
    %1421 = vmatprep.mubr.bf16.mxu0 0
    %1422 = vmatmul.mubr.bf16.gmra.mrb[0].mxu0 %v1379
    %v1423 = vpop.f32.mrb[0].mxu0
    %v1424 = vadd.f32 %v1385, %v1423
    %v1425 = vpop.f32.mrb[0].mxu0
    %v1426 = vadd.f32 %v1386, %v1425
    %v1427 = vpop.f32.mrb[0].mxu0
    %v1428 = vpop.f32.mrb[0].mxu0
    %1429 = vdwg.mxu0
    %1430 = vmatprep.subr.bf16.mxu0 %v829
    %1431 = vmatpush1.bf16.msra.mxu0 %v828
    %1432 = vmatprep.subr.bf16.mxu0 %v833
    %1433 = vmatpush1.bf16.msra.mxu0 %v832
    %1434 = vmatprep.subr.bf16.mxu0 %v837
    %1435 = vmatpush1.bf16.msra.mxu0 %v836
    %1436 = vmatprep.subr.bf16.mxu0 %v841
    %1437 = vmatpush1.bf16.msra.mxu0 %v840
    %1438 = vmatprep.subr.bf16.mxu0 %v845
    %1439 = vmatpush1.bf16.msra.mxu0 %v844
    %1440 = vmatprep.subr.bf16.mxu0 %v849
    %1441 = vmatpush1.bf16.msra.mxu0 %v848
    %1442 = vmatprep.subr.bf16.mxu0 %v853
    %1443 = vmatpush1.bf16.msra.mxu0 %v852
    %1444 = vmatprep.subr.bf16.mxu0 %v857
    %1445 = vmatpush1.bf16.msra.mxu0 %v856
    %1446 = vmatprep.subr.bf16.mxu0 0
    %1447 = vmatpush1.bf16.msra.mxu0 0
    %1448 = vmatprep.subr.bf16.mxu0 0
    %1449 = vmatpush1.bf16.msra.mxu0 0
    %1450 = vmatprep.subr.bf16.mxu0 0
    %1451 = vmatpush1.bf16.msra.mxu0 0
    %1452 = vmatprep.subr.bf16.mxu0 0
    %1453 = vmatpush1.bf16.msra.mxu0 0
    %1454 = vmatprep.subr.bf16.mxu0 0
    %1455 = vmatpush1.bf16.msra.mxu0 0
    %1456 = vmatprep.subr.bf16.mxu0 0
    %1457 = vmatpush1.bf16.msra.mxu0 0
    %1458 = vmatprep.subr.bf16.mxu0 0
    %1459 = vmatpush1.bf16.msra.mxu0 0
    %1460 = vmatprep.subr.bf16.mxu0 0
    %1461 = vmatpush1.bf16.msra.mxu0 0
    %1462 = vmatprep.mubr.bf16.mxu0 0
    %1463 = vmatmul.mubr.bf16.gmra.mrb[0].mxu0 %v1379
    %v1464 = vpop.f32.mrb[0].mxu0
    %v1465 = vadd.f32 %v1387, %v1464
    %v1466 = vpop.f32.mrb[0].mxu0
    %v1467 = vadd.f32 %v1388, %v1466
    %v1468 = vpop.f32.mrb[0].mxu0
    %v1469 = vpop.f32.mrb[0].mxu0
    %1470 = vdwg.mxu0
    %v1471 = vpack.c.bf16 %v1424, %v1424
    %v1472 = vpack.c.bf16 %v1426, %v1426
    %v1473 = vpack.c.bf16 %v1465, %v1465
    %v1474 = vpack.c.bf16 %v1467, %v1467
    %v1475 = vxor.u32 %v1471, 2147516416
    %v1477 = vmul.bf16 %v1475, 1069105081
    %v1478 = vpow.bf16.pop %v1477
    %v1479 = vadd.bf16 %v1478, 1065369472
    %v1480 = vrcp.bf16.pop %v1479
    %v1481 = vmul.bf16 1065369472, %v1480
    %v1482 = vxor.u32 %v1472, 2147516416
    %v1484 = vmul.bf16 %v1482, 1069105081
    %v1485 = vpow.bf16.pop %v1484
    %v1486 = vadd.bf16 %v1485, 1065369472
    %v1487 = vrcp.bf16.pop %v1486
    %v1488 = vmul.bf16 1065369472, %v1487
    %v1489 = vtanh.bf16.pop %v1473
    %v1490 = vxor.u32 %v1474, 2147516416
    %v1492 = vmul.bf16 %v1490, 1069105081
    %v1493 = vpow.bf16.pop %v1492
    %v1494 = vadd.bf16 %v1493, 1065369472
    %v1495 = vrcp.bf16.pop %v1494
    %v1496 = vmul.bf16 1065369472, %v1495
    %v1497 = vunpack.c.l.bf16 %v1488
    %v1498 = vmul.f32 %v1497, %v1376
    %v1499 = vmul.bf16 %v1481, %v1489
    %v1500 = vunpack.c.l.bf16 %v1499
    %v1501 = vadd.f32 %v1498, %v1500
    %v1502 = vpack.c.bf16 %v1501, %v1501
    %v1503 = vtanh.bf16.pop %v1502
    %v1504 = vmul.bf16 %v1496, %v1503
    %s1505 = scalar_lea.vmem [#allocation3], 16
    %1506 = vst [vmem:[%s1505] sm:$0xf] %v1504
    %s1507 = scalar_lea.vmem [#allocation2], 80
    %v1508 = vld [vmem:[%s1507] sm:$0xff]
    %v1509 = vld [vmem:[%s1507 + $0x8] sm:$0xff]
    %v1510 = vunpack.c.l.bf16 %v1508
    %v1511 = vunpack.c.h.bf16 %v1508
    %v1512 = vunpack.c.l.bf16 %v1509
    %v1513 = vunpack.c.h.bf16 %v1509
    %1514 = vmatprep.subr.bf16.mxu0 %v827
    %1515 = vmatpush1.bf16.msra.mxu0 %v826
    %1516 = vmatprep.subr.bf16.mxu0 %v831
    %1517 = vmatpush1.bf16.msra.mxu0 %v830
    %1518 = vmatprep.subr.bf16.mxu0 %v835
    %1519 = vmatpush1.bf16.msra.mxu0 %v834
    %1520 = vmatprep.subr.bf16.mxu0 %v839
    %1521 = vmatpush1.bf16.msra.mxu0 %v838
    %1522 = vmatprep.subr.bf16.mxu0 %v843
    %1523 = vmatpush1.bf16.msra.mxu0 %v842
    %1524 = vmatprep.subr.bf16.mxu0 %v847
    %1525 = vmatpush1.bf16.msra.mxu0 %v846
    %1526 = vmatprep.subr.bf16.mxu0 %v851
    %1527 = vmatpush1.bf16.msra.mxu0 %v850
    %1528 = vmatprep.subr.bf16.mxu0 %v855
    %1529 = vmatpush1.bf16.msra.mxu0 %v854
    %1530 = vmatprep.subr.bf16.mxu0 0
    %1531 = vmatpush1.bf16.msra.mxu0 0
    %1532 = vmatprep.subr.bf16.mxu0 0
    %1533 = vmatpush1.bf16.msra.mxu0 0
    %1534 = vmatprep.subr.bf16.mxu0 0
    %1535 = vmatpush1.bf16.msra.mxu0 0
    %1536 = vmatprep.subr.bf16.mxu0 0
    %1537 = vmatpush1.bf16.msra.mxu0 0
    %1538 = vmatprep.subr.bf16.mxu0 0
    %1539 = vmatpush1.bf16.msra.mxu0 0
    %1540 = vmatprep.subr.bf16.mxu0 0
    %1541 = vmatpush1.bf16.msra.mxu0 0
    %1542 = vmatprep.subr.bf16.mxu0 0
    %1543 = vmatpush1.bf16.msra.mxu0 0
    %1544 = vmatprep.subr.bf16.mxu0 0
    %1545 = vmatpush1.bf16.msra.mxu0 0
    %1546 = vmatprep.mubr.bf16.mxu0 0
    %1547 = vmatmul.mubr.bf16.gmra.mrb[0].mxu0 %v1504
    %v1548 = vpop.f32.mrb[0].mxu0
    %v1549 = vadd.f32 %v1510, %v1548
    %v1550 = vpop.f32.mrb[0].mxu0
    %v1551 = vadd.f32 %v1511, %v1550
    %v1552 = vpop.f32.mrb[0].mxu0
    %v1553 = vpop.f32.mrb[0].mxu0
    %1554 = vdwg.mxu0
    %1555 = vmatprep.subr.bf16.mxu0 %v829
    %1556 = vmatpush1.bf16.msra.mxu0 %v828
    %1557 = vmatprep.subr.bf16.mxu0 %v833
    %1558 = vmatpush1.bf16.msra.mxu0 %v832
    %1559 = vmatprep.subr.bf16.mxu0 %v837
    %1560 = vmatpush1.bf16.msra.mxu0 %v836
    %1561 = vmatprep.subr.bf16.mxu0 %v841
    %1562 = vmatpush1.bf16.msra.mxu0 %v840
    %1563 = vmatprep.subr.bf16.mxu0 %v845
    %1564 = vmatpush1.bf16.msra.mxu0 %v844
    %1565 = vmatprep.subr.bf16.mxu0 %v849
    %1566 = vmatpush1.bf16.msra.mxu0 %v848
    %1567 = vmatprep.subr.bf16.mxu0 %v853
    %1568 = vmatpush1.bf16.msra.mxu0 %v852
    %1569 = vmatprep.subr.bf16.mxu0 %v857
    %1570 = vmatpush1.bf16.msra.mxu0 %v856
    %1571 = vmatprep.subr.bf16.mxu0 0
    %1572 = vmatpush1.bf16.msra.mxu0 0
    %1573 = vmatprep.subr.bf16.mxu0 0
    %1574 = vmatpush1.bf16.msra.mxu0 0
    %1575 = vmatprep.subr.bf16.mxu0 0
    %1576 = vmatpush1.bf16.msra.mxu0 0
    %1577 = vmatprep.subr.bf16.mxu0 0
    %1578 = vmatpush1.bf16.msra.mxu0 0
    %1579 = vmatprep.subr.bf16.mxu0 0
    %1580 = vmatpush1.bf16.msra.mxu0 0
    %1581 = vmatprep.subr.bf16.mxu0 0
    %1582 = vmatpush1.bf16.msra.mxu0 0
    %1583 = vmatprep.subr.bf16.mxu0 0
    %1584 = vmatpush1.bf16.msra.mxu0 0
    %1585 = vmatprep.subr.bf16.mxu0 0
    %1586 = vmatpush1.bf16.msra.mxu0 0
    %1587 = vmatprep.mubr.bf16.mxu0 0
    %1588 = vmatmul.mubr.bf16.gmra.mrb[0].mxu0 %v1504
    %v1589 = vpop.f32.mrb[0].mxu0
    %v1590 = vadd.f32 %v1512, %v1589
    %v1591 = vpop.f32.mrb[0].mxu0
    %v1592 = vadd.f32 %v1513, %v1591
    %v1593 = vpop.f32.mrb[0].mxu0
    %v1594 = vpop.f32.mrb[0].mxu0
    %1595 = vdwg.mxu0
    %v1596 = vpack.c.bf16 %v1549, %v1549
    %v1597 = vpack.c.bf16 %v1551, %v1551
    %v1598 = vpack.c.bf16 %v1590, %v1590
    %v1599 = vpack.c.bf16 %v1592, %v1592
    %v1600 = vxor.u32 %v1596, 2147516416
    %v1602 = vmul.bf16 %v1600, 1069105081
    %v1603 = vpow.bf16.pop %v1602
    %v1604 = vadd.bf16 %v1603, 1065369472
    %v1605 = vrcp.bf16.pop %v1604
    %v1606 = vmul.bf16 1065369472, %v1605
    %v1607 = vxor.u32 %v1597, 2147516416
    %v1609 = vmul.bf16 %v1607, 1069105081
    %v1610 = vpow.bf16.pop %v1609
    %v1611 = vadd.bf16 %v1610, 1065369472
    %v1612 = vrcp.bf16.pop %v1611
    %v1613 = vmul.bf16 1065369472, %v1612
    %v1614 = vtanh.bf16.pop %v1598
    %v1615 = vxor.u32 %v1599, 2147516416
    %v1617 = vmul.bf16 %v1615, 1069105081
    %v1618 = vpow.bf16.pop %v1617
    %v1619 = vadd.bf16 %v1618, 1065369472
    %v1620 = vrcp.bf16.pop %v1619
    %v1621 = vmul.bf16 1065369472, %v1620
    %v1622 = vunpack.c.l.bf16 %v1613
    %v1623 = vmul.f32 %v1622, %v1501
    %v1624 = vmul.bf16 %v1606, %v1614
    %v1625 = vunpack.c.l.bf16 %v1624
    %v1626 = vadd.f32 %v1623, %v1625
    %v1627 = vpack.c.bf16 %v1626, %v1626
    %v1628 = vtanh.bf16.pop %v1627
    %v1629 = vmul.bf16 %v1621, %v1628
    %s1630 = scalar_lea.vmem [#allocation3], 20
    %1631 = vst [vmem:[%s1630] sm:$0xf] %v1629
    %s1632 = scalar_lea.vmem [#allocation2], 96
    %v1633 = vld [vmem:[%s1632] sm:$0xff]
    %v1634 = vld [vmem:[%s1632 + $0x8] sm:$0xff]
    %v1635 = vunpack.c.l.bf16 %v1633
    %v1636 = vunpack.c.h.bf16 %v1633
    %v1637 = vunpack.c.l.bf16 %v1634
    %v1638 = vunpack.c.h.bf16 %v1634
    %1639 = vmatprep.subr.bf16.mxu0 %v827
    %1640 = vmatpush1.bf16.msra.mxu0 %v826
    %1641 = vmatprep.subr.bf16.mxu0 %v831
    %1642 = vmatpush1.bf16.msra.mxu0 %v830
    %1643 = vmatprep.subr.bf16.mxu0 %v835
    %1644 = vmatpush1.bf16.msra.mxu0 %v834
    %1645 = vmatprep.subr.bf16.mxu0 %v839
    %1646 = vmatpush1.bf16.msra.mxu0 %v838
    %1647 = vmatprep.subr.bf16.mxu0 %v843
    %1648 = vmatpush1.bf16.msra.mxu0 %v842
    %1649 = vmatprep.subr.bf16.mxu0 %v847
    %1650 = vmatpush1.bf16.msra.mxu0 %v846
    %1651 = vmatprep.subr.bf16.mxu0 %v851
    %1652 = vmatpush1.bf16.msra.mxu0 %v850
    %1653 = vmatprep.subr.bf16.mxu0 %v855
    %1654 = vmatpush1.bf16.msra.mxu0 %v854
    %1655 = vmatprep.subr.bf16.mxu0 0
    %1656 = vmatpush1.bf16.msra.mxu0 0
    %1657 = vmatprep.subr.bf16.mxu0 0
    %1658 = vmatpush1.bf16.msra.mxu0 0
    %1659 = vmatprep.subr.bf16.mxu0 0
    %1660 = vmatpush1.bf16.msra.mxu0 0
    %1661 = vmatprep.subr.bf16.mxu0 0
    %1662 = vmatpush1.bf16.msra.mxu0 0
    %1663 = vmatprep.subr.bf16.mxu0 0
    %1664 = vmatpush1.bf16.msra.mxu0 0
    %1665 = vmatprep.subr.bf16.mxu0 0
    %1666 = vmatpush1.bf16.msra.mxu0 0
    %1667 = vmatprep.subr.bf16.mxu0 0
    %1668 = vmatpush1.bf16.msra.mxu0 0
    %1669 = vmatprep.subr.bf16.mxu0 0
    %1670 = vmatpush1.bf16.msra.mxu0 0
    %1671 = vmatprep.mubr.bf16.mxu0 0
    %1672 = vmatmul.mubr.bf16.gmra.mrb[0].mxu0 %v1629
    %v1673 = vpop.f32.mrb[0].mxu0
    %v1674 = vadd.f32 %v1635, %v1673
    %v1675 = vpop.f32.mrb[0].mxu0
    %v1676 = vadd.f32 %v1636, %v1675
    %v1677 = vpop.f32.mrb[0].mxu0
    %v1678 = vpop.f32.mrb[0].mxu0
    %1679 = vdwg.mxu0
    %1680 = vmatprep.subr.bf16.mxu0 %v829
    %1681 = vmatpush1.bf16.msra.mxu0 %v828
    %1682 = vmatprep.subr.bf16.mxu0 %v833
    %1683 = vmatpush1.bf16.msra.mxu0 %v832
    %1684 = vmatprep.subr.bf16.mxu0 %v837
    %1685 = vmatpush1.bf16.msra.mxu0 %v836
    %1686 = vmatprep.subr.bf16.mxu0 %v841
    %1687 = vmatpush1.bf16.msra.mxu0 %v840
    %1688 = vmatprep.subr.bf16.mxu0 %v845
    %1689 = vmatpush1.bf16.msra.mxu0 %v844
    %1690 = vmatprep.subr.bf16.mxu0 %v849
    %1691 = vmatpush1.bf16.msra.mxu0 %v848
    %1692 = vmatprep.subr.bf16.mxu0 %v853
    %1693 = vmatpush1.bf16.msra.mxu0 %v852
    %1694 = vmatprep.subr.bf16.mxu0 %v857
    %1695 = vmatpush1.bf16.msra.mxu0 %v856
    %1696 = vmatprep.subr.bf16.mxu0 0
    %1697 = vmatpush1.bf16.msra.mxu0 0
    %1698 = vmatprep.subr.bf16.mxu0 0
    %1699 = vmatpush1.bf16.msra.mxu0 0
    %1700 = vmatprep.subr.bf16.mxu0 0
    %1701 = vmatpush1.bf16.msra.mxu0 0
    %1702 = vmatprep.subr.bf16.mxu0 0
    %1703 = vmatpush1.bf16.msra.mxu0 0
    %1704 = vmatprep.subr.bf16.mxu0 0
    %1705 = vmatpush1.bf16.msra.mxu0 0
    %1706 = vmatprep.subr.bf16.mxu0 0
    %1707 = vmatpush1.bf16.msra.mxu0 0
    %1708 = vmatprep.subr.bf16.mxu0 0
    %1709 = vmatpush1.bf16.msra.mxu0 0
    %1710 = vmatprep.subr.bf16.mxu0 0
    %1711 = vmatpush1.bf16.msra.mxu0 0
    %1712 = vmatprep.mubr.bf16.mxu0 0
    %1713 = vmatmul.mubr.bf16.gmra.mrb[0].mxu0 %v1629
    %v1714 = vpop.f32.mrb[0].mxu0
    %v1715 = vadd.f32 %v1637, %v1714
    %v1716 = vpop.f32.mrb[0].mxu0
    %v1717 = vadd.f32 %v1638, %v1716
    %v1718 = vpop.f32.mrb[0].mxu0
    %v1719 = vpop.f32.mrb[0].mxu0
    %1720 = vdwg.mxu0
    %v1721 = vpack.c.bf16 %v1674, %v1674
    %v1722 = vpack.c.bf16 %v1676, %v1676
    %v1723 = vpack.c.bf16 %v1715, %v1715
    %v1724 = vpack.c.bf16 %v1717, %v1717
    %v1725 = vxor.u32 %v1721, 2147516416
    %v1727 = vmul.bf16 %v1725, 1069105081
    %v1728 = vpow.bf16.pop %v1727
    %v1729 = vadd.bf16 %v1728, 1065369472
    %v1730 = vrcp.bf16.pop %v1729
    %v1731 = vmul.bf16 1065369472, %v1730
    %v1732 = vxor.u32 %v1722, 2147516416
    %v1734 = vmul.bf16 %v1732, 1069105081
    %v1735 = vpow.bf16.pop %v1734
    %v1736 = vadd.bf16 %v1735, 1065369472
    %v1737 = vrcp.bf16.pop %v1736
    %v1738 = vmul.bf16 1065369472, %v1737
    %v1739 = vtanh.bf16.pop %v1723
    %v1740 = vxor.u32 %v1724, 2147516416
    %v1742 = vmul.bf16 %v1740, 1069105081
    %v1743 = vpow.bf16.pop %v1742
    %v1744 = vadd.bf16 %v1743, 1065369472
    %v1745 = vrcp.bf16.pop %v1744
    %v1746 = vmul.bf16 1065369472, %v1745
    %v1747 = vunpack.c.l.bf16 %v1738
    %v1748 = vmul.f32 %v1747, %v1626
    %v1749 = vmul.bf16 %v1731, %v1739
    %v1750 = vunpack.c.l.bf16 %v1749
    %v1751 = vadd.f32 %v1748, %v1750
    %v1752 = vpack.c.bf16 %v1751, %v1751
    %v1753 = vtanh.bf16.pop %v1752
    %v1754 = vmul.bf16 %v1746, %v1753
    %s1755 = scalar_lea.vmem [#allocation3], 24
    %1756 = vst [vmem:[%s1755] sm:$0xf] %v1754
    %s1757 = scalar_lea.vmem [#allocation2], 112
    %v1758 = vld [vmem:[%s1757] sm:$0xff]
    %v1759 = vld [vmem:[%s1757 + $0x8] sm:$0xff]
    %v1760 = vunpack.c.l.bf16 %v1758
    %v1761 = vunpack.c.h.bf16 %v1758
    %v1762 = vunpack.c.l.bf16 %v1759
    %v1763 = vunpack.c.h.bf16 %v1759
    %1764 = vmatprep.subr.bf16.mxu0 %v827
    %1765 = vmatpush1.bf16.msra.mxu0 %v826
    %1766 = vmatprep.subr.bf16.mxu0 %v831
    %1767 = vmatpush1.bf16.msra.mxu0 %v830
    %1768 = vmatprep.subr.bf16.mxu0 %v835
    %1769 = vmatpush1.bf16.msra.mxu0 %v834
    %1770 = vmatprep.subr.bf16.mxu0 %v839
    %1771 = vmatpush1.bf16.msra.mxu0 %v838
    %1772 = vmatprep.subr.bf16.mxu0 %v843
    %1773 = vmatpush1.bf16.msra.mxu0 %v842
    %1774 = vmatprep.subr.bf16.mxu0 %v847
    %1775 = vmatpush1.bf16.msra.mxu0 %v846
    %1776 = vmatprep.subr.bf16.mxu0 %v851
    %1777 = vmatpush1.bf16.msra.mxu0 %v850
    %1778 = vmatprep.subr.bf16.mxu0 %v855
    %1779 = vmatpush1.bf16.msra.mxu0 %v854
    %1780 = vmatprep.subr.bf16.mxu0 0
    %1781 = vmatpush1.bf16.msra.mxu0 0
    %1782 = vmatprep.subr.bf16.mxu0 0
    %1783 = vmatpush1.bf16.msra.mxu0 0
    %1784 = vmatprep.subr.bf16.mxu0 0
    %1785 = vmatpush1.bf16.msra.mxu0 0
    %1786 = vmatprep.subr.bf16.mxu0 0
    %1787 = vmatpush1.bf16.msra.mxu0 0
    %1788 = vmatprep.subr.bf16.mxu0 0
    %1789 = vmatpush1.bf16.msra.mxu0 0
    %1790 = vmatprep.subr.bf16.mxu0 0
    %1791 = vmatpush1.bf16.msra.mxu0 0
    %1792 = vmatprep.subr.bf16.mxu0 0
    %1793 = vmatpush1.bf16.msra.mxu0 0
    %1794 = vmatprep.subr.bf16.mxu0 0
    %1795 = vmatpush1.bf16.msra.mxu0 0
    %1796 = vmatprep.mubr.bf16.mxu0 0
    %1797 = vmatmul.mubr.bf16.gmra.mrb[0].mxu0 %v1754
    %v1798 = vpop.f32.mrb[0].mxu0
    %v1799 = vadd.f32 %v1760, %v1798
    %v1800 = vpop.f32.mrb[0].mxu0
    %v1801 = vadd.f32 %v1761, %v1800
    %v1802 = vpop.f32.mrb[0].mxu0
    %v1803 = vpop.f32.mrb[0].mxu0
    %1804 = vdwg.mxu0
    %1805 = vmatprep.subr.bf16.mxu0 %v829
    %1806 = vmatpush1.bf16.msra.mxu0 %v828
    %1807 = vmatprep.subr.bf16.mxu0 %v833
    %1808 = vmatpush1.bf16.msra.mxu0 %v832
    %1809 = vmatprep.subr.bf16.mxu0 %v837
    %1810 = vmatpush1.bf16.msra.mxu0 %v836
    %1811 = vmatprep.subr.bf16.mxu0 %v841
    %1812 = vmatpush1.bf16.msra.mxu0 %v840
    %1813 = vmatprep.subr.bf16.mxu0 %v845
    %1814 = vmatpush1.bf16.msra.mxu0 %v844
    %1815 = vmatprep.subr.bf16.mxu0 %v849
    %1816 = vmatpush1.bf16.msra.mxu0 %v848
    %1817 = vmatprep.subr.bf16.mxu0 %v853
    %1818 = vmatpush1.bf16.msra.mxu0 %v852
    %1819 = vmatprep.subr.bf16.mxu0 %v857
    %1820 = vmatpush1.bf16.msra.mxu0 %v856
    %1821 = vmatprep.subr.bf16.mxu0 0
    %1822 = vmatpush1.bf16.msra.mxu0 0
    %1823 = vmatprep.subr.bf16.mxu0 0
    %1824 = vmatpush1.bf16.msra.mxu0 0
    %1825 = vmatprep.subr.bf16.mxu0 0
    %1826 = vmatpush1.bf16.msra.mxu0 0
    %1827 = vmatprep.subr.bf16.mxu0 0
    %1828 = vmatpush1.bf16.msra.mxu0 0
    %1829 = vmatprep.subr.bf16.mxu0 0
    %1830 = vmatpush1.bf16.msra.mxu0 0
    %1831 = vmatprep.subr.bf16.mxu0 0
    %1832 = vmatpush1.bf16.msra.mxu0 0
    %1833 = vmatprep.subr.bf16.mxu0 0
    %1834 = vmatpush1.bf16.msra.mxu0 0
    %1835 = vmatprep.subr.bf16.mxu0 0
    %1836 = vmatpush1.bf16.msra.mxu0 0
    %1837 = vmatprep.mubr.bf16.mxu0 0
    %1838 = vmatmul.mubr.bf16.gmra.mrb[0].mxu0 %v1754
    %v1839 = vpop.f32.mrb[0].mxu0
    %v1840 = vadd.f32 %v1762, %v1839
    %v1841 = vpop.f32.mrb[0].mxu0
    %v1842 = vadd.f32 %v1763, %v1841
    %v1843 = vpop.f32.mrb[0].mxu0
    %v1844 = vpop.f32.mrb[0].mxu0
    %1845 = vdwg.mxu0
    %v1846 = vpack.c.bf16 %v1799, %v1799
    %v1847 = vpack.c.bf16 %v1801, %v1801
    %v1848 = vpack.c.bf16 %v1840, %v1840
    %v1849 = vpack.c.bf16 %v1842, %v1842
    %v1850 = vxor.u32 %v1846, 2147516416
    %v1852 = vmul.bf16 %v1850, 1069105081
    %v1853 = vpow.bf16.pop %v1852
    %v1854 = vadd.bf16 %v1853, 1065369472
    %v1855 = vrcp.bf16.pop %v1854
    %v1856 = vmul.bf16 1065369472, %v1855
    %v1857 = vxor.u32 %v1847, 2147516416
    %v1859 = vmul.bf16 %v1857, 1069105081
    %v1860 = vpow.bf16.pop %v1859
    %v1861 = vadd.bf16 %v1860, 1065369472
    %v1862 = vrcp.bf16.pop %v1861
    %v1863 = vmul.bf16 1065369472, %v1862
    %v1864 = vtanh.bf16.pop %v1848
    %v1865 = vxor.u32 %v1849, 2147516416
    %v1867 = vmul.bf16 %v1865, 1069105081
    %v1868 = vpow.bf16.pop %v1867
    %v1869 = vadd.bf16 %v1868, 1065369472
    %v1870 = vrcp.bf16.pop %v1869
    %v1871 = vmul.bf16 1065369472, %v1870
    %v1872 = vunpack.c.l.bf16 %v1863
    %v1873 = vmul.f32 %v1872, %v1751
    %v1874 = vmul.bf16 %v1856, %v1864
    %v1875 = vunpack.c.l.bf16 %v1874
    %v1876 = vadd.f32 %v1873, %v1875
    %v1877 = vpack.c.bf16 %v1876, %v1876
    %v1878 = vtanh.bf16.pop %v1877
    %v1879 = vmul.bf16 %v1871, %v1878
    %s1880 = scalar_lea.vmem [#allocation3], 28
    %1881 = vst [vmem:[%s1880] sm:$0xf] %v1879
    %v1882 = vld [vmem:[#allocation3] sm:$0xf]
    %v1883 = vld [vmem:[#allocation3 + $0x4] sm:$0xf]
    %v1884 = vld [vmem:[#allocation3 + $0x8] sm:$0xf]
    %v1885 = vld [vmem:[#allocation3 + $0xc] sm:$0xf]
    %v1886 = vld [vmem:[#allocation3 + $0x10] sm:$0xf]
    %v1887 = vld [vmem:[#allocation3 + $0x14] sm:$0xf]
    %v1888 = vld [vmem:[#allocation3 + $0x18] sm:$0xf]
    %v1889 = vld [vmem:[#allocation3 + $0x1c] sm:$0xf]
    %v1890 = vld [vmem:[#allocation10] sm:$0xff]
    %v1891 = vld [vmem:[#allocation10 + $0x8] sm:$0xff]
    %v1892 = vld [vmem:[#allocation10 + $0x10] sm:$0xff]
    %v1893 = vld [vmem:[#allocation10 + $0x18] sm:$0xff]
    %v1894 = vld [vmem:[#allocation10 + $0x20] sm:$0xff]
    %v1895 = vld [vmem:[#allocation10 + $0x28] sm:$0xff]
    %v1896 = vld [vmem:[#allocation10 + $0x30] sm:$0xff]
    %v1897 = vld [vmem:[#allocation10 + $0x38] sm:$0xff]
    %v1898 = vld [vmem:[#allocation10 + $0x40] sm:$0xff]
    %v1899 = vld [vmem:[#allocation10 + $0x48] sm:$0xff]
    %v1900 = vld [vmem:[#allocation10 + $0x50] sm:$0xff]
    %v1901 = vld [vmem:[#allocation10 + $0x58] sm:$0xff]
    %v1902 = vld [vmem:[#allocation10 + $0x60] sm:$0xff]
    %v1903 = vld [vmem:[#allocation10 + $0x68] sm:$0xff]
    %v1904 = vld [vmem:[#allocation10 + $0x70] sm:$0xff]
    %v1905 = vld [vmem:[#allocation10 + $0x78] sm:$0xff]
    %v1906 = vld [vmem:[#allocation10 + $0x80] sm:$0xff]
    %v1907 = vld [vmem:[#allocation10 + $0x88] sm:$0xff]
    %v1908 = vld [vmem:[#allocation10 + $0x90] sm:$0xff]
    %v1909 = vld [vmem:[#allocation10 + $0x98] sm:$0xff]
    %v1910 = vld [vmem:[#allocation10 + $0xa0] sm:$0xff]
    %v1911 = vld [vmem:[#allocation10 + $0xa8] sm:$0xff]
    %v1912 = vld [vmem:[#allocation10 + $0xb0] sm:$0xff]
    %v1913 = vld [vmem:[#allocation10 + $0xb8] sm:$0xff]
    %v1914 = vld [vmem:[#allocation10 + $0xc0] sm:$0xff]
    %v1915 = vld [vmem:[#allocation10 + $0xc8] sm:$0xff]
    %v1916 = vld [vmem:[#allocation10 + $0xd0] sm:$0xff]
    %v1917 = vld [vmem:[#allocation10 + $0xd8] sm:$0xff]
    %v1918 = vld [vmem:[#allocation10 + $0xe0] sm:$0xff]
    %v1919 = vld [vmem:[#allocation10 + $0xe8] sm:$0xff]
    %v1920 = vld [vmem:[#allocation10 + $0xf0] sm:$0xff]
    %v1921 = vld [vmem:[#allocation10 + $0xf8] sm:$0xff]
    %v1922 = vld [vmem:[%s6] sm:$0xf]
    %v1924 = vlaneseq
    %v1925 = vshrl.u32 %v1924, 7
    %v1926 = vsub.s32 0, %v1925
    %v1927 = vrot.slane %v1922, %v1926
    %v1928 = vlaneseq
    %v1929 = vshrl.u32 %v1928, 7
    %v1930 = vsub.s32 1, %v1929
    %v1931 = vrot.slane %v1922, %v1930
    %v1932 = vlaneseq
    %v1933 = vshrl.u32 %v1932, 7
    %v1934 = vsub.s32 2, %v1933
    %v1935 = vrot.slane %v1922, %v1934
    %v1936 = vlaneseq
    %v1937 = vshrl.u32 %v1936, 7
    %v1938 = vsub.s32 3, %v1937
    %v1939 = vrot.slane %v1922, %v1938
    %v1952 = vunpack.c.l.b16 %v1882
    %v1953 = vunpack.c.l.b16 %v1883
    %v1954 = vunpack.c.l.b16 %v1884
    %v1955 = vunpack.c.l.b16 %v1885
    %v1956 = vunpack.c.l.b16 %v1886
    %v1957 = vunpack.c.l.b16 %v1887
    %v1958 = vunpack.c.l.b16 %v1888
    %v1959 = vunpack.c.l.b16 %v1889
    %v1960 = vpack.c.b16 %v1953, %v1952
    %v1961 = vpack.c.b16 %v1955, %v1954
    %v1962 = vpack.c.b16 %v1957, %v1956
    %v1963 = vpack.c.b16 %v1959, %v1958
    %v2000 = vunpack.c.l.b16 %v1890
    %v2001 = vunpack.c.h.b16 %v1890
    %v2002 = vunpack.c.l.b16 %v1891
    %v2003 = vunpack.c.h.b16 %v1891
    %v2004 = vunpack.c.l.b16 %v1892
    %v2005 = vunpack.c.h.b16 %v1892
    %v2006 = vunpack.c.l.b16 %v1893
    %v2007 = vunpack.c.h.b16 %v1893
    %v2008 = vunpack.c.l.b16 %v1894
    %v2009 = vunpack.c.h.b16 %v1894
    %v2010 = vunpack.c.l.b16 %v1895
    %v2011 = vunpack.c.h.b16 %v1895
    %v2012 = vunpack.c.l.b16 %v1896
    %v2013 = vunpack.c.h.b16 %v1896
    %v2014 = vunpack.c.l.b16 %v1897
    %v2015 = vunpack.c.h.b16 %v1897
    %v2016 = vunpack.c.l.b16 %v1898
    %v2017 = vunpack.c.h.b16 %v1898
    %v2018 = vunpack.c.l.b16 %v1899
    %v2019 = vunpack.c.h.b16 %v1899
    %v2020 = vunpack.c.l.b16 %v1900
    %v2021 = vunpack.c.h.b16 %v1900
    %v2022 = vunpack.c.l.b16 %v1901
    %v2023 = vunpack.c.h.b16 %v1901
    %v2024 = vunpack.c.l.b16 %v1902
    %v2025 = vunpack.c.h.b16 %v1902
    %v2026 = vunpack.c.l.b16 %v1903
    %v2027 = vunpack.c.h.b16 %v1903
    %v2028 = vunpack.c.l.b16 %v1904
    %v2029 = vunpack.c.h.b16 %v1904
    %v2030 = vunpack.c.l.b16 %v1905
    %v2031 = vunpack.c.h.b16 %v1905
    %v2032 = vunpack.c.l.b16 %v1906
    %v2033 = vunpack.c.h.b16 %v1906
    %v2034 = vunpack.c.l.b16 %v1907
    %v2035 = vunpack.c.h.b16 %v1907
    %v2036 = vunpack.c.l.b16 %v1908
    %v2037 = vunpack.c.h.b16 %v1908
    %v2038 = vunpack.c.l.b16 %v1909
    %v2039 = vunpack.c.h.b16 %v1909
    %v2040 = vunpack.c.l.b16 %v1910
    %v2041 = vunpack.c.h.b16 %v1910
    %v2042 = vunpack.c.l.b16 %v1911
    %v2043 = vunpack.c.h.b16 %v1911
    %v2044 = vunpack.c.l.b16 %v1912
    %v2045 = vunpack.c.h.b16 %v1912
    %v2046 = vunpack.c.l.b16 %v1913
    %v2047 = vunpack.c.h.b16 %v1913
    %v2048 = vunpack.c.l.b16 %v1914
    %v2049 = vunpack.c.h.b16 %v1914
    %v2050 = vunpack.c.l.b16 %v1915
    %v2051 = vunpack.c.h.b16 %v1915
    %v2052 = vunpack.c.l.b16 %v1916
    %v2053 = vunpack.c.h.b16 %v1916
    %v2054 = vunpack.c.l.b16 %v1917
    %v2055 = vunpack.c.h.b16 %v1917
    %v2056 = vunpack.c.l.b16 %v1918
    %v2057 = vunpack.c.h.b16 %v1918
    %v2058 = vunpack.c.l.b16 %v1919
    %v2059 = vunpack.c.h.b16 %v1919
    %v2060 = vunpack.c.l.b16 %v1920
    %v2061 = vunpack.c.h.b16 %v1920
    %v2062 = vunpack.c.l.b16 %v1921
    %v2063 = vunpack.c.h.b16 %v1921
    %v2064 = vpack.c.b16 %v2004, %v2000
    %v2065 = vpack.c.b16 %v2005, %v2001
    %v2066 = vpack.c.b16 %v2006, %v2002
    %v2067 = vpack.c.b16 %v2007, %v2003
    %v2068 = vpack.c.b16 %v2012, %v2008
    %v2069 = vpack.c.b16 %v2013, %v2009
    %v2070 = vpack.c.b16 %v2014, %v2010
    %v2071 = vpack.c.b16 %v2015, %v2011
    %v2072 = vpack.c.b16 %v2020, %v2016
    %v2073 = vpack.c.b16 %v2021, %v2017
    %v2074 = vpack.c.b16 %v2022, %v2018
    %v2075 = vpack.c.b16 %v2023, %v2019
    %v2076 = vpack.c.b16 %v2028, %v2024
    %v2077 = vpack.c.b16 %v2029, %v2025
    %v2078 = vpack.c.b16 %v2030, %v2026
    %v2079 = vpack.c.b16 %v2031, %v2027
    %v2080 = vpack.c.b16 %v2036, %v2032
    %v2081 = vpack.c.b16 %v2037, %v2033
    %v2082 = vpack.c.b16 %v2038, %v2034
    %v2083 = vpack.c.b16 %v2039, %v2035
    %v2084 = vpack.c.b16 %v2044, %v2040
    %v2085 = vpack.c.b16 %v2045, %v2041
    %v2086 = vpack.c.b16 %v2046, %v2042
    %v2087 = vpack.c.b16 %v2047, %v2043
    %v2088 = vpack.c.b16 %v2052, %v2048
    %v2089 = vpack.c.b16 %v2053, %v2049
    %v2090 = vpack.c.b16 %v2054, %v2050
    %v2091 = vpack.c.b16 %v2055, %v2051
    %v2092 = vpack.c.b16 %v2060, %v2056
    %v2093 = vpack.c.b16 %v2061, %v2057
    %v2094 = vpack.c.b16 %v2062, %v2058
    %v2095 = vpack.c.b16 %v2063, %v2059
    %2128 = vmatprep.subr.bf16.mxu0 %v2065
    %2129 = vmatpush1.bf16.msra.mxu0 %v2064
    %2130 = vmatprep.subr.bf16.mxu0 %v2069
    %2131 = vmatpush1.bf16.msra.mxu0 %v2068
    %2132 = vmatprep.subr.bf16.mxu0 %v2073
    %2133 = vmatpush1.bf16.msra.mxu0 %v2072
    %2134 = vmatprep.subr.bf16.mxu0 %v2077
    %2135 = vmatpush1.bf16.msra.mxu0 %v2076
    %2136 = vmatprep.subr.bf16.mxu0 %v2081
    %2137 = vmatpush1.bf16.msra.mxu0 %v2080
    %2138 = vmatprep.subr.bf16.mxu0 %v2085
    %2139 = vmatpush1.bf16.msra.mxu0 %v2084
    %2140 = vmatprep.subr.bf16.mxu0 %v2089
    %2141 = vmatpush1.bf16.msra.mxu0 %v2088
    %2142 = vmatprep.subr.bf16.mxu0 %v2093
    %2143 = vmatpush1.bf16.msra.mxu0 %v2092
    %2144 = vmatprep.subr.bf16.mxu0 0
    %2145 = vmatpush1.bf16.msra.mxu0 0
    %2146 = vmatprep.subr.bf16.mxu0 0
    %2147 = vmatpush1.bf16.msra.mxu0 0
    %2148 = vmatprep.subr.bf16.mxu0 0
    %2149 = vmatpush1.bf16.msra.mxu0 0
    %2150 = vmatprep.subr.bf16.mxu0 0
    %2151 = vmatpush1.bf16.msra.mxu0 0
    %2152 = vmatprep.subr.bf16.mxu0 0
    %2153 = vmatpush1.bf16.msra.mxu0 0
    %2154 = vmatprep.subr.bf16.mxu0 0
    %2155 = vmatpush1.bf16.msra.mxu0 0
    %2156 = vmatprep.subr.bf16.mxu0 0
    %2157 = vmatpush1.bf16.msra.mxu0 0
    %2158 = vmatprep.subr.bf16.mxu0 0
    %2159 = vmatpush1.bf16.msra.mxu0 0
    %2160 = vmatprep.mubr.bf16.mxu0 0
    %2161 = vmatmul.mubr.bf16.gmra.mrb[0].mxu0 %v1960
    %v2162 = vpop.f32.mrb[0].mxu0
    %v2163 = vadd.f32 %v1927, %v2162
    %v2164 = vpop.f32.mrb[0].mxu0
    %v2165 = vadd.f32 %v1931, %v2164
    %v2166 = vpop.f32.mrb[0].mxu0
    %v2167 = vadd.f32 %v1927, %v2166
    %v2168 = vpop.f32.mrb[0].mxu0
    %v2169 = vadd.f32 %v1931, %v2168
    %2170 = vmatprep.mubr.bf16.mxu0 0
    %2171 = vmatmul.mubr.bf16.gmra.mrb[0].mxu0 %v1961
    %v2172 = vpop.f32.mrb[0].mxu0
    %v2173 = vadd.f32 %v1927, %v2172
    %v2174 = vpop.f32.mrb[0].mxu0
    %v2175 = vadd.f32 %v1931, %v2174
    %v2176 = vpop.f32.mrb[0].mxu0
    %v2177 = vadd.f32 %v1927, %v2176
    %v2178 = vpop.f32.mrb[0].mxu0
    %v2179 = vadd.f32 %v1931, %v2178
    %2180 = vmatprep.mubr.bf16.mxu0 0
    %2181 = vmatmul.mubr.bf16.gmra.mrb[0].mxu0 %v1962
    %v2182 = vpop.f32.mrb[0].mxu0
    %v2183 = vadd.f32 %v1927, %v2182
    %v2184 = vpop.f32.mrb[0].mxu0
    %v2185 = vadd.f32 %v1931, %v2184
    %v2186 = vpop.f32.mrb[0].mxu0
    %v2187 = vadd.f32 %v1927, %v2186
    %v2188 = vpop.f32.mrb[0].mxu0
    %v2189 = vadd.f32 %v1931, %v2188
    %2190 = vmatprep.mubr.bf16.mxu0 0
    %2191 = vmatmul.mubr.bf16.gmra.mrb[0].mxu0 %v1963
    %v2192 = vpop.f32.mrb[0].mxu0
    %v2193 = vadd.f32 %v1927, %v2192
    %v2194 = vpop.f32.mrb[0].mxu0
    %v2195 = vadd.f32 %v1931, %v2194
    %v2196 = vpop.f32.mrb[0].mxu0
    %v2197 = vadd.f32 %v1927, %v2196
    %v2198 = vpop.f32.mrb[0].mxu0
    %v2199 = vadd.f32 %v1931, %v2198
    %2200 = vdwg.mxu0
    %2201 = vmatprep.subr.bf16.mxu0 %v2067
    %2202 = vmatpush1.bf16.msra.mxu0 %v2066
    %2203 = vmatprep.subr.bf16.mxu0 %v2071
    %2204 = vmatpush1.bf16.msra.mxu0 %v2070
    %2205 = vmatprep.subr.bf16.mxu0 %v2075
    %2206 = vmatpush1.bf16.msra.mxu0 %v2074
    %2207 = vmatprep.subr.bf16.mxu0 %v2079
    %2208 = vmatpush1.bf16.msra.mxu0 %v2078
    %2209 = vmatprep.subr.bf16.mxu0 %v2083
    %2210 = vmatpush1.bf16.msra.mxu0 %v2082
    %2211 = vmatprep.subr.bf16.mxu0 %v2087
    %2212 = vmatpush1.bf16.msra.mxu0 %v2086
    %2213 = vmatprep.subr.bf16.mxu0 %v2091
    %2214 = vmatpush1.bf16.msra.mxu0 %v2090
    %2215 = vmatprep.subr.bf16.mxu0 %v2095
    %2216 = vmatpush1.bf16.msra.mxu0 %v2094
    %2217 = vmatprep.subr.bf16.mxu0 0
    %2218 = vmatpush1.bf16.msra.mxu0 0
    %2219 = vmatprep.subr.bf16.mxu0 0
    %2220 = vmatpush1.bf16.msra.mxu0 0
    %2221 = vmatprep.subr.bf16.mxu0 0
    %2222 = vmatpush1.bf16.msra.mxu0 0
    %2223 = vmatprep.subr.bf16.mxu0 0
    %2224 = vmatpush1.bf16.msra.mxu0 0
    %2225 = vmatprep.subr.bf16.mxu0 0
    %2226 = vmatpush1.bf16.msra.mxu0 0
    %2227 = vmatprep.subr.bf16.mxu0 0
    %2228 = vmatpush1.bf16.msra.mxu0 0
    %2229 = vmatprep.subr.bf16.mxu0 0
    %2230 = vmatpush1.bf16.msra.mxu0 0
    %2231 = vmatprep.subr.bf16.mxu0 0
    %2232 = vmatpush1.bf16.msra.mxu0 0
    %2233 = vmatprep.mubr.bf16.mxu0 0
    %2234 = vmatmul.mubr.bf16.gmra.mrb[0].mxu0 %v1960
    %v2235 = vpop.f32.mrb[0].mxu0
    %v2236 = vadd.f32 %v1935, %v2235
    %v2237 = vpop.f32.mrb[0].mxu0
    %v2238 = vadd.f32 %v1939, %v2237
    %v2239 = vpop.f32.mrb[0].mxu0
    %v2240 = vadd.f32 %v1935, %v2239
    %v2241 = vpop.f32.mrb[0].mxu0
    %v2242 = vadd.f32 %v1939, %v2241
    %2243 = vmatprep.mubr.bf16.mxu0 0
    %2244 = vmatmul.mubr.bf16.gmra.mrb[0].mxu0 %v1961
    %v2245 = vpop.f32.mrb[0].mxu0
    %v2246 = vadd.f32 %v1935, %v2245
    %v2247 = vpop.f32.mrb[0].mxu0
    %v2248 = vadd.f32 %v1939, %v2247
    %v2249 = vpop.f32.mrb[0].mxu0
    %v2250 = vadd.f32 %v1935, %v2249
    %v2251 = vpop.f32.mrb[0].mxu0
    %v2252 = vadd.f32 %v1939, %v2251
    %2253 = vmatprep.mubr.bf16.mxu0 0
    %2254 = vmatmul.mubr.bf16.gmra.mrb[0].mxu0 %v1962
    %v2255 = vpop.f32.mrb[0].mxu0
    %v2256 = vadd.f32 %v1935, %v2255
    %v2257 = vpop.f32.mrb[0].mxu0
    %v2258 = vadd.f32 %v1939, %v2257
    %v2259 = vpop.f32.mrb[0].mxu0
    %v2260 = vadd.f32 %v1935, %v2259
    %v2261 = vpop.f32.mrb[0].mxu0
    %v2262 = vadd.f32 %v1939, %v2261
    %2263 = vmatprep.mubr.bf16.mxu0 0
    %2264 = vmatmul.mubr.bf16.gmra.mrb[0].mxu0 %v1963
    %v2265 = vpop.f32.mrb[0].mxu0
    %v2266 = vadd.f32 %v1935, %v2265
    %v2267 = vpop.f32.mrb[0].mxu0
    %v2268 = vadd.f32 %v1939, %v2267
    %v2269 = vpop.f32.mrb[0].mxu0
    %v2270 = vadd.f32 %v1935, %v2269
    %v2271 = vpop.f32.mrb[0].mxu0
    %v2272 = vadd.f32 %v1939, %v2271
    %2273 = vdwg.mxu0
    %v2274 = vpack.c.bf16 %v2163, %v2163
    %v2275 = vpack.c.bf16 %v2165, %v2165
    %v2276 = vpack.c.bf16 %v2236, %v2236
    %v2277 = vpack.c.bf16 %v2238, %v2238
    %v2278 = vpack.c.bf16 %v2167, %v2167
    %v2279 = vpack.c.bf16 %v2169, %v2169
    %v2280 = vpack.c.bf16 %v2240, %v2240
    %v2281 = vpack.c.bf16 %v2242, %v2242
    %v2282 = vpack.c.bf16 %v2173, %v2173
    %v2283 = vpack.c.bf16 %v2175, %v2175
    %v2284 = vpack.c.bf16 %v2246, %v2246
    %v2285 = vpack.c.bf16 %v2248, %v2248
    %v2286 = vpack.c.bf16 %v2177, %v2177
    %v2287 = vpack.c.bf16 %v2179, %v2179
    %v2288 = vpack.c.bf16 %v2250, %v2250
    %v2289 = vpack.c.bf16 %v2252, %v2252
    %v2290 = vpack.c.bf16 %v2183, %v2183
    %v2291 = vpack.c.bf16 %v2185, %v2185
    %v2292 = vpack.c.bf16 %v2256, %v2256
    %v2293 = vpack.c.bf16 %v2258, %v2258
    %v2294 = vpack.c.bf16 %v2187, %v2187
    %v2295 = vpack.c.bf16 %v2189, %v2189
    %v2296 = vpack.c.bf16 %v2260, %v2260
    %v2297 = vpack.c.bf16 %v2262, %v2262
    %v2298 = vpack.c.bf16 %v2193, %v2193
    %v2299 = vpack.c.bf16 %v2195, %v2195
    %v2300 = vpack.c.bf16 %v2266, %v2266
    %v2301 = vpack.c.bf16 %v2268, %v2268
    %v2302 = vpack.c.bf16 %v2197, %v2197
    %v2303 = vpack.c.bf16 %v2199, %v2199
    %v2304 = vpack.c.bf16 %v2270, %v2270
    %v2305 = vpack.c.bf16 %v2272, %v2272
    %v2338 = vunpack.c.l.b16 %v2274
    %v2339 = vunpack.c.l.b16 %v2275
    %v2340 = vunpack.c.l.b16 %v2276
    %v2341 = vunpack.c.l.b16 %v2277
    %v2342 = vunpack.c.l.b16 %v2278
    %v2343 = vunpack.c.l.b16 %v2279
    %v2344 = vunpack.c.l.b16 %v2280
    %v2345 = vunpack.c.l.b16 %v2281
    %v2346 = vunpack.c.l.b16 %v2282
    %v2347 = vunpack.c.l.b16 %v2283
    %v2348 = vunpack.c.l.b16 %v2284
    %v2349 = vunpack.c.l.b16 %v2285
    %v2350 = vunpack.c.l.b16 %v2286
    %v2351 = vunpack.c.l.b16 %v2287
    %v2352 = vunpack.c.l.b16 %v2288
    %v2353 = vunpack.c.l.b16 %v2289
    %v2354 = vunpack.c.l.b16 %v2290
    %v2355 = vunpack.c.l.b16 %v2291
    %v2356 = vunpack.c.l.b16 %v2292
    %v2357 = vunpack.c.l.b16 %v2293
    %v2358 = vunpack.c.l.b16 %v2294
    %v2359 = vunpack.c.l.b16 %v2295
    %v2360 = vunpack.c.l.b16 %v2296
    %v2361 = vunpack.c.l.b16 %v2297
    %v2362 = vunpack.c.l.b16 %v2298
    %v2363 = vunpack.c.l.b16 %v2299
    %v2364 = vunpack.c.l.b16 %v2300
    %v2365 = vunpack.c.l.b16 %v2301
    %v2366 = vunpack.c.l.b16 %v2302
    %v2367 = vunpack.c.l.b16 %v2303
    %v2368 = vunpack.c.l.b16 %v2304
    %v2369 = vunpack.c.l.b16 %v2305
    %v2370 = vpack.c.b16 %v2339, %v2338
    %v2371 = vpack.c.b16 %v2341, %v2340
    %v2372 = vpack.c.b16 %v2343, %v2342
    %v2373 = vpack.c.b16 %v2345, %v2344
    %v2374 = vpack.c.b16 %v2347, %v2346
    %v2375 = vpack.c.b16 %v2349, %v2348
    %v2376 = vpack.c.b16 %v2351, %v2350
    %v2377 = vpack.c.b16 %v2353, %v2352
    %v2378 = vpack.c.b16 %v2355, %v2354
    %v2379 = vpack.c.b16 %v2357, %v2356
    %v2380 = vpack.c.b16 %v2359, %v2358
    %v2381 = vpack.c.b16 %v2361, %v2360
    %v2382 = vpack.c.b16 %v2363, %v2362
    %v2383 = vpack.c.b16 %v2365, %v2364
    %v2384 = vpack.c.b16 %v2367, %v2366
    %v2385 = vpack.c.b16 %v2369, %v2368
    %2402 = vst [vmem:[#allocation2] sm:$0xff] %v2370
    %2403 = vst [vmem:[#allocation2 + $0x8] sm:$0xff] %v2371
    %2404 = vst [vmem:[#allocation2 + $0x10] sm:$0xff] %v2372
    %2405 = vst [vmem:[#allocation2 + $0x18] sm:$0xff] %v2373
    %2406 = vst [vmem:[#allocation2 + $0x20] sm:$0xff] %v2374
    %2407 = vst [vmem:[#allocation2 + $0x28] sm:$0xff] %v2375
    %2408 = vst [vmem:[#allocation2 + $0x30] sm:$0xff] %v2376
    %2409 = vst [vmem:[#allocation2 + $0x38] sm:$0xff] %v2377
    %2410 = vst [vmem:[#allocation2 + $0x40] sm:$0xff] %v2378
    %2411 = vst [vmem:[#allocation2 + $0x48] sm:$0xff] %v2379
    %2412 = vst [vmem:[#allocation2 + $0x50] sm:$0xff] %v2380
    %2413 = vst [vmem:[#allocation2 + $0x58] sm:$0xff] %v2381
    %2414 = vst [vmem:[#allocation2 + $0x60] sm:$0xff] %v2382
    %2415 = vst [vmem:[#allocation2 + $0x68] sm:$0xff] %v2383
    %2416 = vst [vmem:[#allocation2 + $0x70] sm:$0xff] %v2384
    %2417 = vst [vmem:[#allocation2 + $0x78] sm:$0xff] %v2385
    %v2418 = vld [vmem:[#allocation12] sm:$0xff]
    %v2419 = vld [vmem:[#allocation12 + $0x8] sm:$0xff]
    %v2420 = vld [vmem:[#allocation12 + $0x10] sm:$0xff]
    %v2421 = vld [vmem:[#allocation12 + $0x18] sm:$0xff]
    %v2422 = vld [vmem:[#allocation12 + $0x20] sm:$0xff]
    %v2423 = vld [vmem:[#allocation12 + $0x28] sm:$0xff]
    %v2424 = vld [vmem:[#allocation12 + $0x30] sm:$0xff]
    %v2425 = vld [vmem:[#allocation12 + $0x38] sm:$0xff]
    %v2426 = vld [vmem:[#allocation12 + $0x40] sm:$0xff]
    %v2427 = vld [vmem:[#allocation12 + $0x48] sm:$0xff]
    %v2428 = vld [vmem:[#allocation12 + $0x50] sm:$0xff]
    %v2429 = vld [vmem:[#allocation12 + $0x58] sm:$0xff]
    %v2430 = vld [vmem:[#allocation12 + $0x60] sm:$0xff]
    %v2431 = vld [vmem:[#allocation12 + $0x68] sm:$0xff]
    %v2432 = vld [vmem:[#allocation12 + $0x70] sm:$0xff]
    %v2433 = vld [vmem:[#allocation12 + $0x78] sm:$0xff]
    %v2434 = vld [vmem:[#allocation12 + $0x80] sm:$0xff]
    %v2435 = vld [vmem:[#allocation12 + $0x88] sm:$0xff]
    %v2436 = vld [vmem:[#allocation12 + $0x90] sm:$0xff]
    %v2437 = vld [vmem:[#allocation12 + $0x98] sm:$0xff]
    %v2438 = vld [vmem:[#allocation12 + $0xa0] sm:$0xff]
    %v2439 = vld [vmem:[#allocation12 + $0xa8] sm:$0xff]
    %v2440 = vld [vmem:[#allocation12 + $0xb0] sm:$0xff]
    %v2441 = vld [vmem:[#allocation12 + $0xb8] sm:$0xff]
    %v2442 = vld [vmem:[#allocation12 + $0xc0] sm:$0xff]
    %v2443 = vld [vmem:[#allocation12 + $0xc8] sm:$0xff]
    %v2444 = vld [vmem:[#allocation12 + $0xd0] sm:$0xff]
    %v2445 = vld [vmem:[#allocation12 + $0xd8] sm:$0xff]
    %v2446 = vld [vmem:[#allocation12 + $0xe0] sm:$0xff]
    %v2447 = vld [vmem:[#allocation12 + $0xe8] sm:$0xff]
    %v2448 = vld [vmem:[#allocation12 + $0xf0] sm:$0xff]
    %v2449 = vld [vmem:[#allocation12 + $0xf8] sm:$0xff]
    %v2450 = vld [vmem:[#allocation2] sm:$0xff]
    %v2451 = vld [vmem:[#allocation2 + $0x8] sm:$0xff]
    %v2452 = vunpack.c.l.bf16 %v2450
    %v2453 = vunpack.c.h.bf16 %v2450
    %v2454 = vunpack.c.l.bf16 %v2451
    %v2455 = vunpack.c.h.bf16 %v2451
    %v2488 = vunpack.c.l.b16 %v2418
    %v2489 = vunpack.c.h.b16 %v2418
    %v2490 = vunpack.c.l.b16 %v2419
    %v2491 = vunpack.c.h.b16 %v2419
    %v2492 = vunpack.c.l.b16 %v2420
    %v2493 = vunpack.c.h.b16 %v2420
    %v2494 = vunpack.c.l.b16 %v2421
    %v2495 = vunpack.c.h.b16 %v2421
    %v2496 = vunpack.c.l.b16 %v2422
    %v2497 = vunpack.c.h.b16 %v2422
    %v2498 = vunpack.c.l.b16 %v2423
    %v2499 = vunpack.c.h.b16 %v2423
    %v2500 = vunpack.c.l.b16 %v2424
    %v2501 = vunpack.c.h.b16 %v2424
    %v2502 = vunpack.c.l.b16 %v2425
    %v2503 = vunpack.c.h.b16 %v2425
    %v2504 = vunpack.c.l.b16 %v2426
    %v2505 = vunpack.c.h.b16 %v2426
    %v2506 = vunpack.c.l.b16 %v2427
    %v2507 = vunpack.c.h.b16 %v2427
    %v2508 = vunpack.c.l.b16 %v2428
    %v2509 = vunpack.c.h.b16 %v2428
    %v2510 = vunpack.c.l.b16 %v2429
    %v2511 = vunpack.c.h.b16 %v2429
    %v2512 = vunpack.c.l.b16 %v2430
    %v2513 = vunpack.c.h.b16 %v2430
    %v2514 = vunpack.c.l.b16 %v2431
    %v2515 = vunpack.c.h.b16 %v2431
    %v2516 = vunpack.c.l.b16 %v2432
    %v2517 = vunpack.c.h.b16 %v2432
    %v2518 = vunpack.c.l.b16 %v2433
    %v2519 = vunpack.c.h.b16 %v2433
    %v2520 = vunpack.c.l.b16 %v2434
    %v2521 = vunpack.c.h.b16 %v2434
    %v2522 = vunpack.c.l.b16 %v2435
    %v2523 = vunpack.c.h.b16 %v2435
    %v2524 = vunpack.c.l.b16 %v2436
    %v2525 = vunpack.c.h.b16 %v2436
    %v2526 = vunpack.c.l.b16 %v2437
    %v2527 = vunpack.c.h.b16 %v2437
    %v2528 = vunpack.c.l.b16 %v2438
    %v2529 = vunpack.c.h.b16 %v2438
    %v2530 = vunpack.c.l.b16 %v2439
    %v2531 = vunpack.c.h.b16 %v2439
    %v2532 = vunpack.c.l.b16 %v2440
    %v2533 = vunpack.c.h.b16 %v2440
    %v2534 = vunpack.c.l.b16 %v2441
    %v2535 = vunpack.c.h.b16 %v2441
    %v2536 = vunpack.c.l.b16 %v2442
    %v2537 = vunpack.c.h.b16 %v2442
    %v2538 = vunpack.c.l.b16 %v2443
    %v2539 = vunpack.c.h.b16 %v2443
    %v2540 = vunpack.c.l.b16 %v2444
    %v2541 = vunpack.c.h.b16 %v2444
    %v2542 = vunpack.c.l.b16 %v2445
    %v2543 = vunpack.c.h.b16 %v2445
    %v2544 = vunpack.c.l.b16 %v2446
    %v2545 = vunpack.c.h.b16 %v2446
    %v2546 = vunpack.c.l.b16 %v2447
    %v2547 = vunpack.c.h.b16 %v2447
    %v2548 = vunpack.c.l.b16 %v2448
    %v2549 = vunpack.c.h.b16 %v2448
    %v2550 = vunpack.c.l.b16 %v2449
    %v2551 = vunpack.c.h.b16 %v2449
    %v2552 = vpack.c.b16 %v2492, %v2488
    %v2553 = vpack.c.b16 %v2493, %v2489
    %v2554 = vpack.c.b16 %v2494, %v2490
    %v2555 = vpack.c.b16 %v2495, %v2491
    %v2556 = vpack.c.b16 %v2500, %v2496
    %v2557 = vpack.c.b16 %v2501, %v2497
    %v2558 = vpack.c.b16 %v2502, %v2498
    %v2559 = vpack.c.b16 %v2503, %v2499
    %v2560 = vpack.c.b16 %v2508, %v2504
    %v2561 = vpack.c.b16 %v2509, %v2505
    %v2562 = vpack.c.b16 %v2510, %v2506
    %v2563 = vpack.c.b16 %v2511, %v2507
    %v2564 = vpack.c.b16 %v2516, %v2512
    %v2565 = vpack.c.b16 %v2517, %v2513
    %v2566 = vpack.c.b16 %v2518, %v2514
    %v2567 = vpack.c.b16 %v2519, %v2515
    %v2568 = vpack.c.b16 %v2524, %v2520
    %v2569 = vpack.c.b16 %v2525, %v2521
    %v2570 = vpack.c.b16 %v2526, %v2522
    %v2571 = vpack.c.b16 %v2527, %v2523
    %v2572 = vpack.c.b16 %v2532, %v2528
    %v2573 = vpack.c.b16 %v2533, %v2529
    %v2574 = vpack.c.b16 %v2534, %v2530
    %v2575 = vpack.c.b16 %v2535, %v2531
    %v2576 = vpack.c.b16 %v2540, %v2536
    %v2577 = vpack.c.b16 %v2541, %v2537
    %v2578 = vpack.c.b16 %v2542, %v2538
    %v2579 = vpack.c.b16 %v2543, %v2539
    %v2580 = vpack.c.b16 %v2548, %v2544
    %v2581 = vpack.c.b16 %v2549, %v2545
    %v2582 = vpack.c.b16 %v2550, %v2546
    %v2583 = vpack.c.b16 %v2551, %v2547
    %2616 = vmatprep.subr.bf16.mxu0 %v2553
    %2617 = vmatpush1.bf16.msra.mxu0 %v2552
    %2618 = vmatprep.subr.bf16.mxu0 %v2557
    %2619 = vmatpush1.bf16.msra.mxu0 %v2556
    %2620 = vmatprep.subr.bf16.mxu0 %v2561
    %2621 = vmatpush1.bf16.msra.mxu0 %v2560
    %2622 = vmatprep.subr.bf16.mxu0 %v2565
    %2623 = vmatpush1.bf16.msra.mxu0 %v2564
    %2624 = vmatprep.subr.bf16.mxu0 %v2569
    %2625 = vmatpush1.bf16.msra.mxu0 %v2568
    %2626 = vmatprep.subr.bf16.mxu0 %v2573
    %2627 = vmatpush1.bf16.msra.mxu0 %v2572
    %2628 = vmatprep.subr.bf16.mxu0 %v2577
    %2629 = vmatpush1.bf16.msra.mxu0 %v2576
    %2630 = vmatprep.subr.bf16.mxu0 %v2581
    %2631 = vmatpush1.bf16.msra.mxu0 %v2580
    %2632 = vmatprep.subr.bf16.mxu0 0
    %2633 = vmatpush1.bf16.msra.mxu0 0
    %2634 = vmatprep.subr.bf16.mxu0 0
    %2635 = vmatpush1.bf16.msra.mxu0 0
    %2636 = vmatprep.subr.bf16.mxu0 0
    %2637 = vmatpush1.bf16.msra.mxu0 0
    %2638 = vmatprep.subr.bf16.mxu0 0
    %2639 = vmatpush1.bf16.msra.mxu0 0
    %2640 = vmatprep.subr.bf16.mxu0 0
    %2641 = vmatpush1.bf16.msra.mxu0 0
    %2642 = vmatprep.subr.bf16.mxu0 0
    %2643 = vmatpush1.bf16.msra.mxu0 0
    %2644 = vmatprep.subr.bf16.mxu0 0
    %2645 = vmatpush1.bf16.msra.mxu0 0
    %2646 = vmatprep.subr.bf16.mxu0 0
    %2647 = vmatpush1.bf16.msra.mxu0 0
    %2648 = vmatprep.mubr.bf16.mxu0 0
    %2649 = vmatmul.mubr.bf16.gmra.mrb[0].mxu0 0
    %v2650 = vpop.f32.mrb[0].mxu0
    %v2651 = vadd.f32 %v2452, %v2650
    %v2652 = vpop.f32.mrb[0].mxu0
    %v2653 = vadd.f32 %v2453, %v2652
    %v2654 = vpop.f32.mrb[0].mxu0
    %v2655 = vpop.f32.mrb[0].mxu0
    %2656 = vdwg.mxu0
    %2657 = vmatprep.subr.bf16.mxu0 %v2555
    %2658 = vmatpush1.bf16.msra.mxu0 %v2554
    %2659 = vmatprep.subr.bf16.mxu0 %v2559
    %2660 = vmatpush1.bf16.msra.mxu0 %v2558
    %2661 = vmatprep.subr.bf16.mxu0 %v2563
    %2662 = vmatpush1.bf16.msra.mxu0 %v2562
    %2663 = vmatprep.subr.bf16.mxu0 %v2567
    %2664 = vmatpush1.bf16.msra.mxu0 %v2566
    %2665 = vmatprep.subr.bf16.mxu0 %v2571
    %2666 = vmatpush1.bf16.msra.mxu0 %v2570
    %2667 = vmatprep.subr.bf16.mxu0 %v2575
    %2668 = vmatpush1.bf16.msra.mxu0 %v2574
    %2669 = vmatprep.subr.bf16.mxu0 %v2579
    %2670 = vmatpush1.bf16.msra.mxu0 %v2578
    %2671 = vmatprep.subr.bf16.mxu0 %v2583
    %2672 = vmatpush1.bf16.msra.mxu0 %v2582
    %2673 = vmatprep.subr.bf16.mxu0 0
    %2674 = vmatpush1.bf16.msra.mxu0 0
    %2675 = vmatprep.subr.bf16.mxu0 0
    %2676 = vmatpush1.bf16.msra.mxu0 0
    %2677 = vmatprep.subr.bf16.mxu0 0
    %2678 = vmatpush1.bf16.msra.mxu0 0
    %2679 = vmatprep.subr.bf16.mxu0 0
    %2680 = vmatpush1.bf16.msra.mxu0 0
    %2681 = vmatprep.subr.bf16.mxu0 0
    %2682 = vmatpush1.bf16.msra.mxu0 0
    %2683 = vmatprep.subr.bf16.mxu0 0
    %2684 = vmatpush1.bf16.msra.mxu0 0
    %2685 = vmatprep.subr.bf16.mxu0 0
    %2686 = vmatpush1.bf16.msra.mxu0 0
    %2687 = vmatprep.subr.bf16.mxu0 0
    %2688 = vmatpush1.bf16.msra.mxu0 0
    %2689 = vmatprep.mubr.bf16.mxu0 0
    %2690 = vmatmul.mubr.bf16.gmra.mrb[0].mxu0 0
    %v2691 = vpop.f32.mrb[0].mxu0
    %v2692 = vadd.f32 %v2454, %v2691
    %v2693 = vpop.f32.mrb[0].mxu0
    %v2694 = vadd.f32 %v2455, %v2693
    %v2695 = vpop.f32.mrb[0].mxu0
    %v2696 = vpop.f32.mrb[0].mxu0
    %2697 = vdwg.mxu0
    %v2698 = vpack.c.bf16 %v2651, %v2651
    %v2699 = vpack.c.bf16 %v2653, %v2653
    %v2700 = vpack.c.bf16 %v2692, %v2692
    %v2701 = vpack.c.bf16 %v2694, %v2694
    %v2702 = vxor.u32 %v2698, 2147516416
    %v2704 = vmul.bf16 %v2702, 1069105081
    %v2705 = vpow.bf16.pop %v2704
    %v2706 = vadd.bf16 %v2705, 1065369472
    %v2707 = vrcp.bf16.pop %v2706
    %v2708 = vmul.bf16 1065369472, %v2707
    %v2709 = vxor.u32 %v2699, 2147516416
    %v2711 = vmul.bf16 %v2709, 1069105081
    %v2712 = vpow.bf16.pop %v2711
    %v2713 = vadd.bf16 %v2712, 1065369472
    %v2714 = vrcp.bf16.pop %v2713
    %v2715 = vmul.bf16 1065369472, %v2714
    %v2716 = vtanh.bf16.pop %v2700
    %v2717 = vxor.u32 %v2701, 2147516416
    %v2719 = vmul.bf16 %v2717, 1069105081
    %v2720 = vpow.bf16.pop %v2719
    %v2721 = vadd.bf16 %v2720, 1065369472
    %v2722 = vrcp.bf16.pop %v2721
    %v2723 = vmul.bf16 1065369472, %v2722
    %v2724 = vunpack.c.l.bf16 %v2715
    %v2725 = vmul.f32 %v2724, 0.0
    %v2726 = vmul.bf16 %v2708, %v2716
    %v2727 = vunpack.c.l.bf16 %v2726
    %v2728 = vadd.f32 %v2725, %v2727
    %v2729 = vpack.c.bf16 %v2728, %v2728
    %v2730 = vtanh.bf16.pop %v2729
    %v2731 = vmul.bf16 %v2723, %v2730
    %v2732 = vmax.bf16 %v2731, 0
    %v2733 = vld [vmem:[#allocation13] sm:$0xf]
    %v2734 = vld [vmem:[#allocation13 + $0x4] sm:$0xf]
    %v2735 = vld [vmem:[#allocation13 + $0x8] sm:$0xf]
    %v2736 = vld [vmem:[#allocation13 + $0xc] sm:$0xf]
    %v2737 = vld [vmem:[#allocation13 + $0x10] sm:$0xf]
    %v2738 = vld [vmem:[#allocation13 + $0x14] sm:$0xf]
    %v2739 = vld [vmem:[#allocation13 + $0x18] sm:$0xf]
    %v2740 = vld [vmem:[#allocation13 + $0x1c] sm:$0xf]
    %v2741 = vld [vmem:[#allocation13 + $0x20] sm:$0xf]
    %v2742 = vld [vmem:[#allocation13 + $0x24] sm:$0xf]
    %v2743 = vld [vmem:[#allocation13 + $0x28] sm:$0xf]
    %v2744 = vld [vmem:[#allocation13 + $0x2c] sm:$0xf]
    %v2745 = vld [vmem:[#allocation13 + $0x30] sm:$0xf]
    %v2746 = vld [vmem:[#allocation13 + $0x34] sm:$0xf]
    %v2747 = vld [vmem:[#allocation13 + $0x38] sm:$0xf]
    %v2748 = vld [vmem:[#allocation13 + $0x3c] sm:$0xf]
    %v2749 = vld [vmem:[%s1007] sm:$0xff]
    %v2750 = vld [vmem:[%s1007 + $0x8] sm:$0xff]
    %v2751 = vunpack.c.l.bf16 %v2749
    %v2752 = vunpack.c.h.bf16 %v2749
    %v2753 = vunpack.c.l.bf16 %v2750
    %v2754 = vunpack.c.h.bf16 %v2750
    %2755 = vmatprep.subr.bf16.mxu0 %v2553
    %2756 = vmatpush1.bf16.msra.mxu0 %v2552
    %2757 = vmatprep.subr.bf16.mxu0 %v2557
    %2758 = vmatpush1.bf16.msra.mxu0 %v2556
    %2759 = vmatprep.subr.bf16.mxu0 %v2561
    %2760 = vmatpush1.bf16.msra.mxu0 %v2560
    %2761 = vmatprep.subr.bf16.mxu0 %v2565
    %2762 = vmatpush1.bf16.msra.mxu0 %v2564
    %2763 = vmatprep.subr.bf16.mxu0 %v2569
    %2764 = vmatpush1.bf16.msra.mxu0 %v2568
    %2765 = vmatprep.subr.bf16.mxu0 %v2573
    %2766 = vmatpush1.bf16.msra.mxu0 %v2572
    %2767 = vmatprep.subr.bf16.mxu0 %v2577
    %2768 = vmatpush1.bf16.msra.mxu0 %v2576
    %2769 = vmatprep.subr.bf16.mxu0 %v2581
    %2770 = vmatpush1.bf16.msra.mxu0 %v2580
    %2771 = vmatprep.subr.bf16.mxu0 0
    %2772 = vmatpush1.bf16.msra.mxu0 0
    %2773 = vmatprep.subr.bf16.mxu0 0
    %2774 = vmatpush1.bf16.msra.mxu0 0
    %2775 = vmatprep.subr.bf16.mxu0 0
    %2776 = vmatpush1.bf16.msra.mxu0 0
    %2777 = vmatprep.subr.bf16.mxu0 0
    %2778 = vmatpush1.bf16.msra.mxu0 0
    %2779 = vmatprep.subr.bf16.mxu0 0
    %2780 = vmatpush1.bf16.msra.mxu0 0
    %2781 = vmatprep.subr.bf16.mxu0 0
    %2782 = vmatpush1.bf16.msra.mxu0 0
    %2783 = vmatprep.subr.bf16.mxu0 0
    %2784 = vmatpush1.bf16.msra.mxu0 0
    %2785 = vmatprep.subr.bf16.mxu0 0
    %2786 = vmatpush1.bf16.msra.mxu0 0
    %2787 = vmatprep.mubr.bf16.mxu0 0
    %2788 = vmatmul.mubr.bf16.gmra.mrb[0].mxu0 %v2731
    %v2789 = vpop.f32.mrb[0].mxu0
    %v2790 = vadd.f32 %v2751, %v2789
    %v2791 = vpop.f32.mrb[0].mxu0
    %v2792 = vadd.f32 %v2752, %v2791
    %v2793 = vpop.f32.mrb[0].mxu0
    %v2794 = vpop.f32.mrb[0].mxu0
    %2795 = vdwg.mxu0
    %2796 = vmatprep.subr.bf16.mxu0 %v2555
    %2797 = vmatpush1.bf16.msra.mxu0 %v2554
    %2798 = vmatprep.subr.bf16.mxu0 %v2559
    %2799 = vmatpush1.bf16.msra.mxu0 %v2558
    %2800 = vmatprep.subr.bf16.mxu0 %v2563
    %2801 = vmatpush1.bf16.msra.mxu0 %v2562
    %2802 = vmatprep.subr.bf16.mxu0 %v2567
    %2803 = vmatpush1.bf16.msra.mxu0 %v2566
    %2804 = vmatprep.subr.bf16.mxu0 %v2571
    %2805 = vmatpush1.bf16.msra.mxu0 %v2570
    %2806 = vmatprep.subr.bf16.mxu0 %v2575
    %2807 = vmatpush1.bf16.msra.mxu0 %v2574
    %2808 = vmatprep.subr.bf16.mxu0 %v2579
    %2809 = vmatpush1.bf16.msra.mxu0 %v2578
    %2810 = vmatprep.subr.bf16.mxu0 %v2583
    %2811 = vmatpush1.bf16.msra.mxu0 %v2582
    %2812 = vmatprep.subr.bf16.mxu0 0
    %2813 = vmatpush1.bf16.msra.mxu0 0
    %2814 = vmatprep.subr.bf16.mxu0 0
    %2815 = vmatpush1.bf16.msra.mxu0 0
    %2816 = vmatprep.subr.bf16.mxu0 0
    %2817 = vmatpush1.bf16.msra.mxu0 0
    %2818 = vmatprep.subr.bf16.mxu0 0
    %2819 = vmatpush1.bf16.msra.mxu0 0
    %2820 = vmatprep.subr.bf16.mxu0 0
    %2821 = vmatpush1.bf16.msra.mxu0 0
    %2822 = vmatprep.subr.bf16.mxu0 0
    %2823 = vmatpush1.bf16.msra.mxu0 0
    %2824 = vmatprep.subr.bf16.mxu0 0
    %2825 = vmatpush1.bf16.msra.mxu0 0
    %2826 = vmatprep.subr.bf16.mxu0 0
    %2827 = vmatpush1.bf16.msra.mxu0 0
    %2828 = vmatprep.mubr.bf16.mxu0 0
    %2829 = vmatmul.mubr.bf16.gmra.mrb[0].mxu0 %v2731
    %v2830 = vpop.f32.mrb[0].mxu0
    %v2831 = vadd.f32 %v2753, %v2830
    %v2832 = vpop.f32.mrb[0].mxu0
    %v2833 = vadd.f32 %v2754, %v2832
    %v2834 = vpop.f32.mrb[0].mxu0
    %v2835 = vpop.f32.mrb[0].mxu0
    %2836 = vdwg.mxu0
    %v2837 = vpack.c.bf16 %v2790, %v2790
    %v2838 = vpack.c.bf16 %v2792, %v2792
    %v2839 = vpack.c.bf16 %v2831, %v2831
    %v2840 = vpack.c.bf16 %v2833, %v2833
    %v2841 = vxor.u32 %v2837, 2147516416
    %v2843 = vmul.bf16 %v2841, 1069105081
    %v2844 = vpow.bf16.pop %v2843
    %v2845 = vadd.bf16 %v2844, 1065369472
    %v2846 = vrcp.bf16.pop %v2845
    %v2847 = vmul.bf16 1065369472, %v2846
    %v2848 = vxor.u32 %v2838, 2147516416
    %v2850 = vmul.bf16 %v2848, 1069105081
    %v2851 = vpow.bf16.pop %v2850
    %v2852 = vadd.bf16 %v2851, 1065369472
    %v2853 = vrcp.bf16.pop %v2852
    %v2854 = vmul.bf16 1065369472, %v2853
    %v2855 = vtanh.bf16.pop %v2839
    %v2856 = vxor.u32 %v2840, 2147516416
    %v2858 = vmul.bf16 %v2856, 1069105081
    %v2859 = vpow.bf16.pop %v2858
    %v2860 = vadd.bf16 %v2859, 1065369472
    %v2861 = vrcp.bf16.pop %v2860
    %v2862 = vmul.bf16 1065369472, %v2861
    %v2863 = vunpack.c.l.bf16 %v2854
    %v2864 = vmul.f32 %v2863, %v2728
    %v2865 = vmul.bf16 %v2847, %v2855
    %v2866 = vunpack.c.l.bf16 %v2865
    %v2867 = vadd.f32 %v2864, %v2866
    %v2868 = vpack.c.bf16 %v2867, %v2867
    %v2869 = vtanh.bf16.pop %v2868
    %v2870 = vmul.bf16 %v2862, %v2869
    %v2871 = vmax.bf16 %v2870, 0
    %s2872 = scalar_lea.vmem [#allocation13], 64
    %v2873 = vld [vmem:[%s2872] sm:$0xf]
    %v2874 = vld [vmem:[%s2872 + $0x4] sm:$0xf]
    %v2875 = vld [vmem:[%s2872 + $0x8] sm:$0xf]
    %v2876 = vld [vmem:[%s2872 + $0xc] sm:$0xf]
    %v2877 = vld [vmem:[%s2872 + $0x10] sm:$0xf]
    %v2878 = vld [vmem:[%s2872 + $0x14] sm:$0xf]
    %v2879 = vld [vmem:[%s2872 + $0x18] sm:$0xf]
    %v2880 = vld [vmem:[%s2872 + $0x1c] sm:$0xf]
    %v2881 = vld [vmem:[%s2872 + $0x20] sm:$0xf]
    %v2882 = vld [vmem:[%s2872 + $0x24] sm:$0xf]
    %v2883 = vld [vmem:[%s2872 + $0x28] sm:$0xf]
    %v2884 = vld [vmem:[%s2872 + $0x2c] sm:$0xf]
    %v2885 = vld [vmem:[%s2872 + $0x30] sm:$0xf]
    %v2886 = vld [vmem:[%s2872 + $0x34] sm:$0xf]
    %v2887 = vld [vmem:[%s2872 + $0x38] sm:$0xf]
    %v2888 = vld [vmem:[%s2872 + $0x3c] sm:$0xf]
    %v2905 = vunpack.c.l.b16 %v2873
    %v2906 = vunpack.c.l.b16 %v2874
    %v2907 = vunpack.c.l.b16 %v2875
    %v2908 = vunpack.c.l.b16 %v2876
    %v2909 = vunpack.c.l.b16 %v2877
    %v2910 = vunpack.c.l.b16 %v2878
    %v2911 = vunpack.c.l.b16 %v2879
    %v2912 = vunpack.c.l.b16 %v2880
    %v2913 = vunpack.c.l.b16 %v2881
    %v2914 = vunpack.c.l.b16 %v2882
    %v2915 = vunpack.c.l.b16 %v2883
    %v2916 = vunpack.c.l.b16 %v2884
    %v2917 = vunpack.c.l.b16 %v2885
    %v2918 = vunpack.c.l.b16 %v2886
    %v2919 = vunpack.c.l.b16 %v2887
    %v2920 = vunpack.c.l.b16 %v2888
    %v2921 = vpack.c.b16 %v2906, %v2905
    %v2922 = vpack.c.b16 %v2908, %v2907
    %v2923 = vpack.c.b16 %v2910, %v2909
    %v2924 = vpack.c.b16 %v2912, %v2911
    %v2925 = vpack.c.b16 %v2914, %v2913
    %v2926 = vpack.c.b16 %v2916, %v2915
    %v2927 = vpack.c.b16 %v2918, %v2917
    %v2928 = vpack.c.b16 %v2920, %v2919
    %2937 = vmatprep.subr.bf16.mxu0 0
    %2938 = vmatpush1.bf16.msra.mxu0 %v2921
    %2939 = vmatprep.subr.bf16.mxu0 0
    %2940 = vmatpush1.bf16.msra.mxu0 %v2922
    %2941 = vmatprep.subr.bf16.mxu0 0
    %2942 = vmatpush1.bf16.msra.mxu0 %v2923
    %2943 = vmatprep.subr.bf16.mxu0 0
    %2944 = vmatpush1.bf16.msra.mxu0 %v2924
    %2945 = vmatprep.subr.bf16.mxu0 0
    %2946 = vmatpush1.bf16.msra.mxu0 %v2925
    %2947 = vmatprep.subr.bf16.mxu0 0
    %2948 = vmatpush1.bf16.msra.mxu0 %v2926
    %2949 = vmatprep.subr.bf16.mxu0 0
    %2950 = vmatpush1.bf16.msra.mxu0 %v2927
    %2951 = vmatprep.subr.bf16.mxu0 0
    %2952 = vmatpush1.bf16.msra.mxu0 %v2928
    %2953 = vmatprep.subr.bf16.mxu0 0
    %2954 = vmatpush1.bf16.msra.mxu0 0
    %2955 = vmatprep.subr.bf16.mxu0 0
    %2956 = vmatpush1.bf16.msra.mxu0 0
    %2957 = vmatprep.subr.bf16.mxu0 0
    %2958 = vmatpush1.bf16.msra.mxu0 0
    %2959 = vmatprep.subr.bf16.mxu0 0
    %2960 = vmatpush1.bf16.msra.mxu0 0
    %2961 = vmatprep.subr.bf16.mxu0 0
    %2962 = vmatpush1.bf16.msra.mxu0 0
    %2963 = vmatprep.subr.bf16.mxu0 0
    %2964 = vmatpush1.bf16.msra.mxu0 0
    %2965 = vmatprep.subr.bf16.mxu0 0
    %2966 = vmatpush1.bf16.msra.mxu0 0
    %2967 = vmatprep.subr.bf16.mxu0 0
    %2968 = vmatpush1.bf16.msra.mxu0 0
    %2969 = vmatprep.mubr.bf16.mxu0 0
    %2970 = vmatmul.mubr.bf16.gmra.mrb[0].mxu0 %v2871
    %v2971 = vpop.f32.mrb[0].mxu0
    %v2972 = vadd.f32 0.0, %v2971
    %v2973 = vpop.f32.mrb[0].mxu0
    %v2974 = vpop.f32.mrb[0].mxu0
    %v2975 = vpop.f32.mrb[0].mxu0
    %2976 = vdwg.mxu0
    %v2993 = vunpack.c.l.b16 %v2733
    %v2994 = vunpack.c.l.b16 %v2734
    %v2995 = vunpack.c.l.b16 %v2735
    %v2996 = vunpack.c.l.b16 %v2736
    %v2997 = vunpack.c.l.b16 %v2737
    %v2998 = vunpack.c.l.b16 %v2738
    %v2999 = vunpack.c.l.b16 %v2739
    %v3000 = vunpack.c.l.b16 %v2740
    %v3001 = vunpack.c.l.b16 %v2741
    %v3002 = vunpack.c.l.b16 %v2742
    %v3003 = vunpack.c.l.b16 %v2743
    %v3004 = vunpack.c.l.b16 %v2744
    %v3005 = vunpack.c.l.b16 %v2745
    %v3006 = vunpack.c.l.b16 %v2746
    %v3007 = vunpack.c.l.b16 %v2747
    %v3008 = vunpack.c.l.b16 %v2748
    %v3009 = vpack.c.b16 %v2994, %v2993
    %v3010 = vpack.c.b16 %v2996, %v2995
    %v3011 = vpack.c.b16 %v2998, %v2997
    %v3012 = vpack.c.b16 %v3000, %v2999
    %v3013 = vpack.c.b16 %v3002, %v3001
    %v3014 = vpack.c.b16 %v3004, %v3003
    %v3015 = vpack.c.b16 %v3006, %v3005
    %v3016 = vpack.c.b16 %v3008, %v3007
    %3025 = vmatprep.subr.bf16.mxu0 0
    %3026 = vmatpush1.bf16.msra.mxu0 %v3009
    %3027 = vmatprep.subr.bf16.mxu0 0
    %3028 = vmatpush1.bf16.msra.mxu0 %v3010
    %3029 = vmatprep.subr.bf16.mxu0 0
    %3030 = vmatpush1.bf16.msra.mxu0 %v3011
    %3031 = vmatprep.subr.bf16.mxu0 0
    %3032 = vmatpush1.bf16.msra.mxu0 %v3012
    %3033 = vmatprep.subr.bf16.mxu0 0
    %3034 = vmatpush1.bf16.msra.mxu0 %v3013
    %3035 = vmatprep.subr.bf16.mxu0 0
    %3036 = vmatpush1.bf16.msra.mxu0 %v3014
    %3037 = vmatprep.subr.bf16.mxu0 0
    %3038 = vmatpush1.bf16.msra.mxu0 %v3015
    %3039 = vmatprep.subr.bf16.mxu0 0
    %3040 = vmatpush1.bf16.msra.mxu0 %v3016
    %3041 = vmatprep.subr.bf16.mxu0 0
    %3042 = vmatpush1.bf16.msra.mxu0 0
    %3043 = vmatprep.subr.bf16.mxu0 0
    %3044 = vmatpush1.bf16.msra.mxu0 0
    %3045 = vmatprep.subr.bf16.mxu0 0
    %3046 = vmatpush1.bf16.msra.mxu0 0
    %3047 = vmatprep.subr.bf16.mxu0 0
    %3048 = vmatpush1.bf16.msra.mxu0 0
    %3049 = vmatprep.subr.bf16.mxu0 0
    %3050 = vmatpush1.bf16.msra.mxu0 0
    %3051 = vmatprep.subr.bf16.mxu0 0
    %3052 = vmatpush1.bf16.msra.mxu0 0
    %3053 = vmatprep.subr.bf16.mxu0 0
    %3054 = vmatpush1.bf16.msra.mxu0 0
    %3055 = vmatprep.subr.bf16.mxu0 0
    %3056 = vmatpush1.bf16.msra.mxu0 0
    %3057 = vmatprep.mubr.bf16.mxu0 0
    %3058 = vmatmul.mubr.bf16.gmra.mrb[0].mxu0 %v2732
    %v3059 = vpop.f32.mrb[0].mxu0
    %v3060 = vadd.f32 %v2972, %v3059
    %v3061 = vpop.f32.mrb[0].mxu0
    %v3062 = vpop.f32.mrb[0].mxu0
    %v3063 = vpop.f32.mrb[0].mxu0
    %3064 = vdwg.mxu0
    %v3065 = vld [vmem:[%s1132] sm:$0xff]
    %v3066 = vld [vmem:[%s1132 + $0x8] sm:$0xff]
    %v3067 = vunpack.c.l.bf16 %v3065
    %v3068 = vunpack.c.h.bf16 %v3065
    %v3069 = vunpack.c.l.bf16 %v3066
    %v3070 = vunpack.c.h.bf16 %v3066
    %3071 = vmatprep.subr.bf16.mxu0 %v2553
    %3072 = vmatpush1.bf16.msra.mxu0 %v2552
    %3073 = vmatprep.subr.bf16.mxu0 %v2557
    %3074 = vmatpush1.bf16.msra.mxu0 %v2556
    %3075 = vmatprep.subr.bf16.mxu0 %v2561
    %3076 = vmatpush1.bf16.msra.mxu0 %v2560
    %3077 = vmatprep.subr.bf16.mxu0 %v2565
    %3078 = vmatpush1.bf16.msra.mxu0 %v2564
    %3079 = vmatprep.subr.bf16.mxu0 %v2569
    %3080 = vmatpush1.bf16.msra.mxu0 %v2568
    %3081 = vmatprep.subr.bf16.mxu0 %v2573
    %3082 = vmatpush1.bf16.msra.mxu0 %v2572
    %3083 = vmatprep.subr.bf16.mxu0 %v2577
    %3084 = vmatpush1.bf16.msra.mxu0 %v2576
    %3085 = vmatprep.subr.bf16.mxu0 %v2581
    %3086 = vmatpush1.bf16.msra.mxu0 %v2580
    %3087 = vmatprep.subr.bf16.mxu0 0
    %3088 = vmatpush1.bf16.msra.mxu0 0
    %3089 = vmatprep.subr.bf16.mxu0 0
    %3090 = vmatpush1.bf16.msra.mxu0 0
    %3091 = vmatprep.subr.bf16.mxu0 0
    %3092 = vmatpush1.bf16.msra.mxu0 0
    %3093 = vmatprep.subr.bf16.mxu0 0
    %3094 = vmatpush1.bf16.msra.mxu0 0
    %3095 = vmatprep.subr.bf16.mxu0 0
    %3096 = vmatpush1.bf16.msra.mxu0 0
    %3097 = vmatprep.subr.bf16.mxu0 0
    %3098 = vmatpush1.bf16.msra.mxu0 0
    %3099 = vmatprep.subr.bf16.mxu0 0
    %3100 = vmatpush1.bf16.msra.mxu0 0
    %3101 = vmatprep.subr.bf16.mxu0 0
    %3102 = vmatpush1.bf16.msra.mxu0 0
    %3103 = vmatprep.mubr.bf16.mxu0 0
    %3104 = vmatmul.mubr.bf16.gmra.mrb[0].mxu0 %v2870
    %v3105 = vpop.f32.mrb[0].mxu0
    %v3106 = vadd.f32 %v3067, %v3105
    %v3107 = vpop.f32.mrb[0].mxu0
    %v3108 = vadd.f32 %v3068, %v3107
    %v3109 = vpop.f32.mrb[0].mxu0
    %v3110 = vpop.f32.mrb[0].mxu0
    %3111 = vdwg.mxu0
    %3112 = vmatprep.subr.bf16.mxu0 %v2555
    %3113 = vmatpush1.bf16.msra.mxu0 %v2554
    %3114 = vmatprep.subr.bf16.mxu0 %v2559
    %3115 = vmatpush1.bf16.msra.mxu0 %v2558
    %3116 = vmatprep.subr.bf16.mxu0 %v2563
    %3117 = vmatpush1.bf16.msra.mxu0 %v2562
    %3118 = vmatprep.subr.bf16.mxu0 %v2567
    %3119 = vmatpush1.bf16.msra.mxu0 %v2566
    %3120 = vmatprep.subr.bf16.mxu0 %v2571
    %3121 = vmatpush1.bf16.msra.mxu0 %v2570
    %3122 = vmatprep.subr.bf16.mxu0 %v2575
    %3123 = vmatpush1.bf16.msra.mxu0 %v2574
    %3124 = vmatprep.subr.bf16.mxu0 %v2579
    %3125 = vmatpush1.bf16.msra.mxu0 %v2578
    %3126 = vmatprep.subr.bf16.mxu0 %v2583
    %3127 = vmatpush1.bf16.msra.mxu0 %v2582
    %3128 = vmatprep.subr.bf16.mxu0 0
    %3129 = vmatpush1.bf16.msra.mxu0 0
    %3130 = vmatprep.subr.bf16.mxu0 0
    %3131 = vmatpush1.bf16.msra.mxu0 0
    %3132 = vmatprep.subr.bf16.mxu0 0
    %3133 = vmatpush1.bf16.msra.mxu0 0
    %3134 = vmatprep.subr.bf16.mxu0 0
    %3135 = vmatpush1.bf16.msra.mxu0 0
    %3136 = vmatprep.subr.bf16.mxu0 0
    %3137 = vmatpush1.bf16.msra.mxu0 0
    %3138 = vmatprep.subr.bf16.mxu0 0
    %3139 = vmatpush1.bf16.msra.mxu0 0
    %3140 = vmatprep.subr.bf16.mxu0 0
    %3141 = vmatpush1.bf16.msra.mxu0 0
    %3142 = vmatprep.subr.bf16.mxu0 0
    %3143 = vmatpush1.bf16.msra.mxu0 0
    %3144 = vmatprep.mubr.bf16.mxu0 0
    %3145 = vmatmul.mubr.bf16.gmra.mrb[0].mxu0 %v2870
    %v3146 = vpop.f32.mrb[0].mxu0
    %v3147 = vadd.f32 %v3069, %v3146
    %v3148 = vpop.f32.mrb[0].mxu0
    %v3149 = vadd.f32 %v3070, %v3148
    %v3150 = vpop.f32.mrb[0].mxu0
    %v3151 = vpop.f32.mrb[0].mxu0
    %3152 = vdwg.mxu0
    %v3153 = vpack.c.bf16 %v3106, %v3106
    %v3154 = vpack.c.bf16 %v3108, %v3108
    %v3155 = vpack.c.bf16 %v3147, %v3147
    %v3156 = vpack.c.bf16 %v3149, %v3149
    %v3157 = vxor.u32 %v3153, 2147516416
    %v3159 = vmul.bf16 %v3157, 1069105081
    %v3160 = vpow.bf16.pop %v3159
    %v3161 = vadd.bf16 %v3160, 1065369472
    %v3162 = vrcp.bf16.pop %v3161
    %v3163 = vmul.bf16 1065369472, %v3162
    %v3164 = vxor.u32 %v3154, 2147516416
    %v3166 = vmul.bf16 %v3164, 1069105081
    %v3167 = vpow.bf16.pop %v3166
    %v3168 = vadd.bf16 %v3167, 1065369472
    %v3169 = vrcp.bf16.pop %v3168
    %v3170 = vmul.bf16 1065369472, %v3169
    %v3171 = vtanh.bf16.pop %v3155
    %v3172 = vxor.u32 %v3156, 2147516416
    %v3174 = vmul.bf16 %v3172, 1069105081
    %v3175 = vpow.bf16.pop %v3174
    %v3176 = vadd.bf16 %v3175, 1065369472
    %v3177 = vrcp.bf16.pop %v3176
    %v3178 = vmul.bf16 1065369472, %v3177
    %v3179 = vunpack.c.l.bf16 %v3170
    %v3180 = vmul.f32 %v3179, %v2867
    %v3181 = vmul.bf16 %v3163, %v3171
    %v3182 = vunpack.c.l.bf16 %v3181
    %v3183 = vadd.f32 %v3180, %v3182
    %v3184 = vpack.c.bf16 %v3183, %v3183
    %v3185 = vtanh.bf16.pop %v3184
    %v3186 = vmul.bf16 %v3178, %v3185
    %v3187 = vmax.bf16 %v3186, 0
    %s3188 = scalar_lea.vmem [#allocation13], 128
    %v3189 = vld [vmem:[%s3188] sm:$0xf]
    %v3190 = vld [vmem:[%s3188 + $0x4] sm:$0xf]
    %v3191 = vld [vmem:[%s3188 + $0x8] sm:$0xf]
    %v3192 = vld [vmem:[%s3188 + $0xc] sm:$0xf]
    %v3193 = vld [vmem:[%s3188 + $0x10] sm:$0xf]
    %v3194 = vld [vmem:[%s3188 + $0x14] sm:$0xf]
    %v3195 = vld [vmem:[%s3188 + $0x18] sm:$0xf]
    %v3196 = vld [vmem:[%s3188 + $0x1c] sm:$0xf]
    %v3197 = vld [vmem:[%s3188 + $0x20] sm:$0xf]
    %v3198 = vld [vmem:[%s3188 + $0x24] sm:$0xf]
    %v3199 = vld [vmem:[%s3188 + $0x28] sm:$0xf]
    %v3200 = vld [vmem:[%s3188 + $0x2c] sm:$0xf]
    %v3201 = vld [vmem:[%s3188 + $0x30] sm:$0xf]
    %v3202 = vld [vmem:[%s3188 + $0x34] sm:$0xf]
    %v3203 = vld [vmem:[%s3188 + $0x38] sm:$0xf]
    %v3204 = vld [vmem:[%s3188 + $0x3c] sm:$0xf]
    %v3221 = vunpack.c.l.b16 %v3189
    %v3222 = vunpack.c.l.b16 %v3190
    %v3223 = vunpack.c.l.b16 %v3191
    %v3224 = vunpack.c.l.b16 %v3192
    %v3225 = vunpack.c.l.b16 %v3193
    %v3226 = vunpack.c.l.b16 %v3194
    %v3227 = vunpack.c.l.b16 %v3195
    %v3228 = vunpack.c.l.b16 %v3196
    %v3229 = vunpack.c.l.b16 %v3197
    %v3230 = vunpack.c.l.b16 %v3198
    %v3231 = vunpack.c.l.b16 %v3199
    %v3232 = vunpack.c.l.b16 %v3200
    %v3233 = vunpack.c.l.b16 %v3201
    %v3234 = vunpack.c.l.b16 %v3202
    %v3235 = vunpack.c.l.b16 %v3203
    %v3236 = vunpack.c.l.b16 %v3204
    %v3237 = vpack.c.b16 %v3222, %v3221
    %v3238 = vpack.c.b16 %v3224, %v3223
    %v3239 = vpack.c.b16 %v3226, %v3225
    %v3240 = vpack.c.b16 %v3228, %v3227
    %v3241 = vpack.c.b16 %v3230, %v3229
    %v3242 = vpack.c.b16 %v3232, %v3231
    %v3243 = vpack.c.b16 %v3234, %v3233
    %v3244 = vpack.c.b16 %v3236, %v3235
    %3253 = vmatprep.subr.bf16.mxu0 0
    %3254 = vmatpush1.bf16.msra.mxu0 %v3237
    %3255 = vmatprep.subr.bf16.mxu0 0
    %3256 = vmatpush1.bf16.msra.mxu0 %v3238
    %3257 = vmatprep.subr.bf16.mxu0 0
    %3258 = vmatpush1.bf16.msra.mxu0 %v3239
    %3259 = vmatprep.subr.bf16.mxu0 0
    %3260 = vmatpush1.bf16.msra.mxu0 %v3240
    %3261 = vmatprep.subr.bf16.mxu0 0
    %3262 = vmatpush1.bf16.msra.mxu0 %v3241
    %3263 = vmatprep.subr.bf16.mxu0 0
    %3264 = vmatpush1.bf16.msra.mxu0 %v3242
    %3265 = vmatprep.subr.bf16.mxu0 0
    %3266 = vmatpush1.bf16.msra.mxu0 %v3243
    %3267 = vmatprep.subr.bf16.mxu0 0
    %3268 = vmatpush1.bf16.msra.mxu0 %v3244
    %3269 = vmatprep.subr.bf16.mxu0 0
    %3270 = vmatpush1.bf16.msra.mxu0 0
    %3271 = vmatprep.subr.bf16.mxu0 0
    %3272 = vmatpush1.bf16.msra.mxu0 0
    %3273 = vmatprep.subr.bf16.mxu0 0
    %3274 = vmatpush1.bf16.msra.mxu0 0
    %3275 = vmatprep.subr.bf16.mxu0 0
    %3276 = vmatpush1.bf16.msra.mxu0 0
    %3277 = vmatprep.subr.bf16.mxu0 0
    %3278 = vmatpush1.bf16.msra.mxu0 0
    %3279 = vmatprep.subr.bf16.mxu0 0
    %3280 = vmatpush1.bf16.msra.mxu0 0
    %3281 = vmatprep.subr.bf16.mxu0 0
    %3282 = vmatpush1.bf16.msra.mxu0 0
    %3283 = vmatprep.subr.bf16.mxu0 0
    %3284 = vmatpush1.bf16.msra.mxu0 0
    %3285 = vmatprep.mubr.bf16.mxu0 0
    %3286 = vmatmul.mubr.bf16.gmra.mrb[0].mxu0 %v3187
    %v3287 = vpop.f32.mrb[0].mxu0
    %v3288 = vadd.f32 0.0, %v3287
    %v3289 = vpop.f32.mrb[0].mxu0
    %v3290 = vpop.f32.mrb[0].mxu0
    %v3291 = vpop.f32.mrb[0].mxu0
    %3292 = vdwg.mxu0
    %v3293 = vadd.f32 %v3060, %v3288
    %v3294 = vld [vmem:[%s1257] sm:$0xff]
    %v3295 = vld [vmem:[%s1257 + $0x8] sm:$0xff]
    %v3296 = vunpack.c.l.bf16 %v3294
    %v3297 = vunpack.c.h.bf16 %v3294
    %v3298 = vunpack.c.l.bf16 %v3295
    %v3299 = vunpack.c.h.bf16 %v3295
    %3300 = vmatprep.subr.bf16.mxu0 %v2553
    %3301 = vmatpush1.bf16.msra.mxu0 %v2552
    %3302 = vmatprep.subr.bf16.mxu0 %v2557
    %3303 = vmatpush1.bf16.msra.mxu0 %v2556
    %3304 = vmatprep.subr.bf16.mxu0 %v2561
    %3305 = vmatpush1.bf16.msra.mxu0 %v2560
    %3306 = vmatprep.subr.bf16.mxu0 %v2565
    %3307 = vmatpush1.bf16.msra.mxu0 %v2564
    %3308 = vmatprep.subr.bf16.mxu0 %v2569
    %3309 = vmatpush1.bf16.msra.mxu0 %v2568
    %3310 = vmatprep.subr.bf16.mxu0 %v2573
    %3311 = vmatpush1.bf16.msra.mxu0 %v2572
    %3312 = vmatprep.subr.bf16.mxu0 %v2577
    %3313 = vmatpush1.bf16.msra.mxu0 %v2576
    %3314 = vmatprep.subr.bf16.mxu0 %v2581
    %3315 = vmatpush1.bf16.msra.mxu0 %v2580
    %3316 = vmatprep.subr.bf16.mxu0 0
    %3317 = vmatpush1.bf16.msra.mxu0 0
    %3318 = vmatprep.subr.bf16.mxu0 0
    %3319 = vmatpush1.bf16.msra.mxu0 0
    %3320 = vmatprep.subr.bf16.mxu0 0
    %3321 = vmatpush1.bf16.msra.mxu0 0
    %3322 = vmatprep.subr.bf16.mxu0 0
    %3323 = vmatpush1.bf16.msra.mxu0 0
    %3324 = vmatprep.subr.bf16.mxu0 0
    %3325 = vmatpush1.bf16.msra.mxu0 0
    %3326 = vmatprep.subr.bf16.mxu0 0
    %3327 = vmatpush1.bf16.msra.mxu0 0
    %3328 = vmatprep.subr.bf16.mxu0 0
    %3329 = vmatpush1.bf16.msra.mxu0 0
    %3330 = vmatprep.subr.bf16.mxu0 0
    %3331 = vmatpush1.bf16.msra.mxu0 0
    %3332 = vmatprep.mubr.bf16.mxu0 0
    %3333 = vmatmul.mubr.bf16.gmra.mrb[0].mxu0 %v3186
    %v3334 = vpop.f32.mrb[0].mxu0
    %v3335 = vadd.f32 %v3296, %v3334
    %v3336 = vpop.f32.mrb[0].mxu0
    %v3337 = vadd.f32 %v3297, %v3336
    %v3338 = vpop.f32.mrb[0].mxu0
    %v3339 = vpop.f32.mrb[0].mxu0
    %3340 = vdwg.mxu0
    %3341 = vmatprep.subr.bf16.mxu0 %v2555
    %3342 = vmatpush1.bf16.msra.mxu0 %v2554
    %3343 = vmatprep.subr.bf16.mxu0 %v2559
    %3344 = vmatpush1.bf16.msra.mxu0 %v2558
    %3345 = vmatprep.subr.bf16.mxu0 %v2563
    %3346 = vmatpush1.bf16.msra.mxu0 %v2562
    %3347 = vmatprep.subr.bf16.mxu0 %v2567
    %3348 = vmatpush1.bf16.msra.mxu0 %v2566
    %3349 = vmatprep.subr.bf16.mxu0 %v2571
    %3350 = vmatpush1.bf16.msra.mxu0 %v2570
    %3351 = vmatprep.subr.bf16.mxu0 %v2575
    %3352 = vmatpush1.bf16.msra.mxu0 %v2574
    %3353 = vmatprep.subr.bf16.mxu0 %v2579
    %3354 = vmatpush1.bf16.msra.mxu0 %v2578
    %3355 = vmatprep.subr.bf16.mxu0 %v2583
    %3356 = vmatpush1.bf16.msra.mxu0 %v2582
    %3357 = vmatprep.subr.bf16.mxu0 0
    %3358 = vmatpush1.bf16.msra.mxu0 0
    %3359 = vmatprep.subr.bf16.mxu0 0
    %3360 = vmatpush1.bf16.msra.mxu0 0
    %3361 = vmatprep.subr.bf16.mxu0 0
    %3362 = vmatpush1.bf16.msra.mxu0 0
    %3363 = vmatprep.subr.bf16.mxu0 0
    %3364 = vmatpush1.bf16.msra.mxu0 0
    %3365 = vmatprep.subr.bf16.mxu0 0
    %3366 = vmatpush1.bf16.msra.mxu0 0
    %3367 = vmatprep.subr.bf16.mxu0 0
    %3368 = vmatpush1.bf16.msra.mxu0 0
    %3369 = vmatprep.subr.bf16.mxu0 0
    %3370 = vmatpush1.bf16.msra.mxu0 0
    %3371 = vmatprep.subr.bf16.mxu0 0
    %3372 = vmatpush1.bf16.msra.mxu0 0
    %3373 = vmatprep.mubr.bf16.mxu0 0
    %3374 = vmatmul.mubr.bf16.gmra.mrb[0].mxu0 %v3186
    %v3375 = vpop.f32.mrb[0].mxu0
    %v3376 = vadd.f32 %v3298, %v3375
    %v3377 = vpop.f32.mrb[0].mxu0
    %v3378 = vadd.f32 %v3299, %v3377
    %v3379 = vpop.f32.mrb[0].mxu0
    %v3380 = vpop.f32.mrb[0].mxu0
    %3381 = vdwg.mxu0
    %v3382 = vpack.c.bf16 %v3335, %v3335
    %v3383 = vpack.c.bf16 %v3337, %v3337
    %v3384 = vpack.c.bf16 %v3376, %v3376
    %v3385 = vpack.c.bf16 %v3378, %v3378
    %v3386 = vxor.u32 %v3382, 2147516416
    %v3388 = vmul.bf16 %v3386, 1069105081
    %v3389 = vpow.bf16.pop %v3388
    %v3390 = vadd.bf16 %v3389, 1065369472
    %v3391 = vrcp.bf16.pop %v3390
    %v3392 = vmul.bf16 1065369472, %v3391
    %v3393 = vxor.u32 %v3383, 2147516416
    %v3395 = vmul.bf16 %v3393, 1069105081
    %v3396 = vpow.bf16.pop %v3395
    %v3397 = vadd.bf16 %v3396, 1065369472
    %v3398 = vrcp.bf16.pop %v3397
    %v3399 = vmul.bf16 1065369472, %v3398
    %v3400 = vtanh.bf16.pop %v3384
    %v3401 = vxor.u32 %v3385, 2147516416
    %v3403 = vmul.bf16 %v3401, 1069105081
    %v3404 = vpow.bf16.pop %v3403
    %v3405 = vadd.bf16 %v3404, 1065369472
    %v3406 = vrcp.bf16.pop %v3405
    %v3407 = vmul.bf16 1065369472, %v3406
    %v3408 = vunpack.c.l.bf16 %v3399
    %v3409 = vmul.f32 %v3408, %v3183
    %v3410 = vmul.bf16 %v3392, %v3400
    %v3411 = vunpack.c.l.bf16 %v3410
    %v3412 = vadd.f32 %v3409, %v3411
    %v3413 = vpack.c.bf16 %v3412, %v3412
    %v3414 = vtanh.bf16.pop %v3413
    %v3415 = vmul.bf16 %v3407, %v3414
    %v3416 = vmax.bf16 %v3415, 0
    %s3417 = scalar_lea.vmem [#allocation13], 192
    %v3418 = vld [vmem:[%s3417] sm:$0xf]
    %v3419 = vld [vmem:[%s3417 + $0x4] sm:$0xf]
    %v3420 = vld [vmem:[%s3417 + $0x8] sm:$0xf]
    %v3421 = vld [vmem:[%s3417 + $0xc] sm:$0xf]
    %v3422 = vld [vmem:[%s3417 + $0x10] sm:$0xf]
    %v3423 = vld [vmem:[%s3417 + $0x14] sm:$0xf]
    %v3424 = vld [vmem:[%s3417 + $0x18] sm:$0xf]
    %v3425 = vld [vmem:[%s3417 + $0x1c] sm:$0xf]
    %v3426 = vld [vmem:[%s3417 + $0x20] sm:$0xf]
    %v3427 = vld [vmem:[%s3417 + $0x24] sm:$0xf]
    %v3428 = vld [vmem:[%s3417 + $0x28] sm:$0xf]
    %v3429 = vld [vmem:[%s3417 + $0x2c] sm:$0xf]
    %v3430 = vld [vmem:[%s3417 + $0x30] sm:$0xf]
    %v3431 = vld [vmem:[%s3417 + $0x34] sm:$0xf]
    %v3432 = vld [vmem:[%s3417 + $0x38] sm:$0xf]
    %v3433 = vld [vmem:[%s3417 + $0x3c] sm:$0xf]
    %v3450 = vunpack.c.l.b16 %v3418
    %v3451 = vunpack.c.l.b16 %v3419
    %v3452 = vunpack.c.l.b16 %v3420
    %v3453 = vunpack.c.l.b16 %v3421
    %v3454 = vunpack.c.l.b16 %v3422
    %v3455 = vunpack.c.l.b16 %v3423
    %v3456 = vunpack.c.l.b16 %v3424
    %v3457 = vunpack.c.l.b16 %v3425
    %v3458 = vunpack.c.l.b16 %v3426
    %v3459 = vunpack.c.l.b16 %v3427
    %v3460 = vunpack.c.l.b16 %v3428
    %v3461 = vunpack.c.l.b16 %v3429
    %v3462 = vunpack.c.l.b16 %v3430
    %v3463 = vunpack.c.l.b16 %v3431
    %v3464 = vunpack.c.l.b16 %v3432
    %v3465 = vunpack.c.l.b16 %v3433
    %v3466 = vpack.c.b16 %v3451, %v3450
    %v3467 = vpack.c.b16 %v3453, %v3452
    %v3468 = vpack.c.b16 %v3455, %v3454
    %v3469 = vpack.c.b16 %v3457, %v3456
    %v3470 = vpack.c.b16 %v3459, %v3458
    %v3471 = vpack.c.b16 %v3461, %v3460
    %v3472 = vpack.c.b16 %v3463, %v3462
    %v3473 = vpack.c.b16 %v3465, %v3464
    %3482 = vmatprep.subr.bf16.mxu0 0
    %3483 = vmatpush1.bf16.msra.mxu0 %v3466
    %3484 = vmatprep.subr.bf16.mxu0 0
    %3485 = vmatpush1.bf16.msra.mxu0 %v3467
    %3486 = vmatprep.subr.bf16.mxu0 0
    %3487 = vmatpush1.bf16.msra.mxu0 %v3468
    %3488 = vmatprep.subr.bf16.mxu0 0
    %3489 = vmatpush1.bf16.msra.mxu0 %v3469
    %3490 = vmatprep.subr.bf16.mxu0 0
    %3491 = vmatpush1.bf16.msra.mxu0 %v3470
    %3492 = vmatprep.subr.bf16.mxu0 0
    %3493 = vmatpush1.bf16.msra.mxu0 %v3471
    %3494 = vmatprep.subr.bf16.mxu0 0
    %3495 = vmatpush1.bf16.msra.mxu0 %v3472
    %3496 = vmatprep.subr.bf16.mxu0 0
    %3497 = vmatpush1.bf16.msra.mxu0 %v3473
    %3498 = vmatprep.subr.bf16.mxu0 0
    %3499 = vmatpush1.bf16.msra.mxu0 0
    %3500 = vmatprep.subr.bf16.mxu0 0
    %3501 = vmatpush1.bf16.msra.mxu0 0
    %3502 = vmatprep.subr.bf16.mxu0 0
    %3503 = vmatpush1.bf16.msra.mxu0 0
    %3504 = vmatprep.subr.bf16.mxu0 0
    %3505 = vmatpush1.bf16.msra.mxu0 0
    %3506 = vmatprep.subr.bf16.mxu0 0
    %3507 = vmatpush1.bf16.msra.mxu0 0
    %3508 = vmatprep.subr.bf16.mxu0 0
    %3509 = vmatpush1.bf16.msra.mxu0 0
    %3510 = vmatprep.subr.bf16.mxu0 0
    %3511 = vmatpush1.bf16.msra.mxu0 0
    %3512 = vmatprep.subr.bf16.mxu0 0
    %3513 = vmatpush1.bf16.msra.mxu0 0
    %3514 = vmatprep.mubr.bf16.mxu0 0
    %3515 = vmatmul.mubr.bf16.gmra.mrb[0].mxu0 %v3416
    %v3516 = vpop.f32.mrb[0].mxu0
    %v3517 = vadd.f32 0.0, %v3516
    %v3518 = vpop.f32.mrb[0].mxu0
    %v3519 = vpop.f32.mrb[0].mxu0
    %v3520 = vpop.f32.mrb[0].mxu0
    %3521 = vdwg.mxu0
    %v3522 = vadd.f32 %v3293, %v3517
    %v3523 = vld [vmem:[%s1382] sm:$0xff]
    %v3524 = vld [vmem:[%s1382 + $0x8] sm:$0xff]
    %v3525 = vunpack.c.l.bf16 %v3523
    %v3526 = vunpack.c.h.bf16 %v3523
    %v3527 = vunpack.c.l.bf16 %v3524
    %v3528 = vunpack.c.h.bf16 %v3524
    %3529 = vmatprep.subr.bf16.mxu0 %v2553
    %3530 = vmatpush1.bf16.msra.mxu0 %v2552
    %3531 = vmatprep.subr.bf16.mxu0 %v2557
    %3532 = vmatpush1.bf16.msra.mxu0 %v2556
    %3533 = vmatprep.subr.bf16.mxu0 %v2561
    %3534 = vmatpush1.bf16.msra.mxu0 %v2560
    %3535 = vmatprep.subr.bf16.mxu0 %v2565
    %3536 = vmatpush1.bf16.msra.mxu0 %v2564
    %3537 = vmatprep.subr.bf16.mxu0 %v2569
    %3538 = vmatpush1.bf16.msra.mxu0 %v2568
    %3539 = vmatprep.subr.bf16.mxu0 %v2573
    %3540 = vmatpush1.bf16.msra.mxu0 %v2572
    %3541 = vmatprep.subr.bf16.mxu0 %v2577
    %3542 = vmatpush1.bf16.msra.mxu0 %v2576
    %3543 = vmatprep.subr.bf16.mxu0 %v2581
    %3544 = vmatpush1.bf16.msra.mxu0 %v2580
    %3545 = vmatprep.subr.bf16.mxu0 0
    %3546 = vmatpush1.bf16.msra.mxu0 0
    %3547 = vmatprep.subr.bf16.mxu0 0
    %3548 = vmatpush1.bf16.msra.mxu0 0
    %3549 = vmatprep.subr.bf16.mxu0 0
    %3550 = vmatpush1.bf16.msra.mxu0 0
    %3551 = vmatprep.subr.bf16.mxu0 0
    %3552 = vmatpush1.bf16.msra.mxu0 0
    %3553 = vmatprep.subr.bf16.mxu0 0
    %3554 = vmatpush1.bf16.msra.mxu0 0
    %3555 = vmatprep.subr.bf16.mxu0 0
    %3556 = vmatpush1.bf16.msra.mxu0 0
    %3557 = vmatprep.subr.bf16.mxu0 0
    %3558 = vmatpush1.bf16.msra.mxu0 0
    %3559 = vmatprep.subr.bf16.mxu0 0
    %3560 = vmatpush1.bf16.msra.mxu0 0
    %3561 = vmatprep.mubr.bf16.mxu0 0
    %3562 = vmatmul.mubr.bf16.gmra.mrb[0].mxu0 %v3415
    %v3563 = vpop.f32.mrb[0].mxu0
    %v3564 = vadd.f32 %v3525, %v3563
    %v3565 = vpop.f32.mrb[0].mxu0
    %v3566 = vadd.f32 %v3526, %v3565
    %v3567 = vpop.f32.mrb[0].mxu0
    %v3568 = vpop.f32.mrb[0].mxu0
    %3569 = vdwg.mxu0
    %3570 = vmatprep.subr.bf16.mxu0 %v2555
    %3571 = vmatpush1.bf16.msra.mxu0 %v2554
    %3572 = vmatprep.subr.bf16.mxu0 %v2559
    %3573 = vmatpush1.bf16.msra.mxu0 %v2558
    %3574 = vmatprep.subr.bf16.mxu0 %v2563
    %3575 = vmatpush1.bf16.msra.mxu0 %v2562
    %3576 = vmatprep.subr.bf16.mxu0 %v2567
    %3577 = vmatpush1.bf16.msra.mxu0 %v2566
    %3578 = vmatprep.subr.bf16.mxu0 %v2571
    %3579 = vmatpush1.bf16.msra.mxu0 %v2570
    %3580 = vmatprep.subr.bf16.mxu0 %v2575
    %3581 = vmatpush1.bf16.msra.mxu0 %v2574
    %3582 = vmatprep.subr.bf16.mxu0 %v2579
    %3583 = vmatpush1.bf16.msra.mxu0 %v2578
    %3584 = vmatprep.subr.bf16.mxu0 %v2583
    %3585 = vmatpush1.bf16.msra.mxu0 %v2582
    %3586 = vmatprep.subr.bf16.mxu0 0
    %3587 = vmatpush1.bf16.msra.mxu0 0
    %3588 = vmatprep.subr.bf16.mxu0 0
    %3589 = vmatpush1.bf16.msra.mxu0 0
    %3590 = vmatprep.subr.bf16.mxu0 0
    %3591 = vmatpush1.bf16.msra.mxu0 0
    %3592 = vmatprep.subr.bf16.mxu0 0
    %3593 = vmatpush1.bf16.msra.mxu0 0
    %3594 = vmatprep.subr.bf16.mxu0 0
    %3595 = vmatpush1.bf16.msra.mxu0 0
    %3596 = vmatprep.subr.bf16.mxu0 0
    %3597 = vmatpush1.bf16.msra.mxu0 0
    %3598 = vmatprep.subr.bf16.mxu0 0
    %3599 = vmatpush1.bf16.msra.mxu0 0
    %3600 = vmatprep.subr.bf16.mxu0 0
    %3601 = vmatpush1.bf16.msra.mxu0 0
    %3602 = vmatprep.mubr.bf16.mxu0 0
    %3603 = vmatmul.mubr.bf16.gmra.mrb[0].mxu0 %v3415
    %v3604 = vpop.f32.mrb[0].mxu0
    %v3605 = vadd.f32 %v3527, %v3604
    %v3606 = vpop.f32.mrb[0].mxu0
    %v3607 = vadd.f32 %v3528, %v3606
    %v3608 = vpop.f32.mrb[0].mxu0
    %v3609 = vpop.f32.mrb[0].mxu0
    %3610 = vdwg.mxu0
    %v3611 = vpack.c.bf16 %v3564, %v3564
    %v3612 = vpack.c.bf16 %v3566, %v3566
    %v3613 = vpack.c.bf16 %v3605, %v3605
    %v3614 = vpack.c.bf16 %v3607, %v3607
    %v3615 = vxor.u32 %v3611, 2147516416
    %v3617 = vmul.bf16 %v3615, 1069105081
    %v3618 = vpow.bf16.pop %v3617
    %v3619 = vadd.bf16 %v3618, 1065369472
    %v3620 = vrcp.bf16.pop %v3619
    %v3621 = vmul.bf16 1065369472, %v3620
    %v3622 = vxor.u32 %v3612, 2147516416
    %v3624 = vmul.bf16 %v3622, 1069105081
    %v3625 = vpow.bf16.pop %v3624
    %v3626 = vadd.bf16 %v3625, 1065369472
    %v3627 = vrcp.bf16.pop %v3626
    %v3628 = vmul.bf16 1065369472, %v3627
    %v3629 = vtanh.bf16.pop %v3613
    %v3630 = vxor.u32 %v3614, 2147516416
    %v3632 = vmul.bf16 %v3630, 1069105081
    %v3633 = vpow.bf16.pop %v3632
    %v3634 = vadd.bf16 %v3633, 1065369472
    %v3635 = vrcp.bf16.pop %v3634
    %v3636 = vmul.bf16 1065369472, %v3635
    %v3637 = vunpack.c.l.bf16 %v3628
    %v3638 = vmul.f32 %v3637, %v3412
    %v3639 = vmul.bf16 %v3621, %v3629
    %v3640 = vunpack.c.l.bf16 %v3639
    %v3641 = vadd.f32 %v3638, %v3640
    %v3642 = vpack.c.bf16 %v3641, %v3641
    %v3643 = vtanh.bf16.pop %v3642
    %v3644 = vmul.bf16 %v3636, %v3643
    %v3645 = vmax.bf16 %v3644, 0
    %s3646 = scalar_lea.vmem [#allocation13], 256
    %v3647 = vld [vmem:[%s3646] sm:$0xf]
    %v3648 = vld [vmem:[%s3646 + $0x4] sm:$0xf]
    %v3649 = vld [vmem:[%s3646 + $0x8] sm:$0xf]
    %v3650 = vld [vmem:[%s3646 + $0xc] sm:$0xf]
    %v3651 = vld [vmem:[%s3646 + $0x10] sm:$0xf]
    %v3652 = vld [vmem:[%s3646 + $0x14] sm:$0xf]
    %v3653 = vld [vmem:[%s3646 + $0x18] sm:$0xf]
    %v3654 = vld [vmem:[%s3646 + $0x1c] sm:$0xf]
    %v3655 = vld [vmem:[%s3646 + $0x20] sm:$0xf]
    %v3656 = vld [vmem:[%s3646 + $0x24] sm:$0xf]
    %v3657 = vld [vmem:[%s3646 + $0x28] sm:$0xf]
    %v3658 = vld [vmem:[%s3646 + $0x2c] sm:$0xf]
    %v3659 = vld [vmem:[%s3646 + $0x30] sm:$0xf]
    %v3660 = vld [vmem:[%s3646 + $0x34] sm:$0xf]
    %v3661 = vld [vmem:[%s3646 + $0x38] sm:$0xf]
    %v3662 = vld [vmem:[%s3646 + $0x3c] sm:$0xf]
    %v3679 = vunpack.c.l.b16 %v3647
    %v3680 = vunpack.c.l.b16 %v3648
    %v3681 = vunpack.c.l.b16 %v3649
    %v3682 = vunpack.c.l.b16 %v3650
    %v3683 = vunpack.c.l.b16 %v3651
    %v3684 = vunpack.c.l.b16 %v3652
    %v3685 = vunpack.c.l.b16 %v3653
    %v3686 = vunpack.c.l.b16 %v3654
    %v3687 = vunpack.c.l.b16 %v3655
    %v3688 = vunpack.c.l.b16 %v3656
    %v3689 = vunpack.c.l.b16 %v3657
    %v3690 = vunpack.c.l.b16 %v3658
    %v3691 = vunpack.c.l.b16 %v3659
    %v3692 = vunpack.c.l.b16 %v3660
    %v3693 = vunpack.c.l.b16 %v3661
    %v3694 = vunpack.c.l.b16 %v3662
    %v3695 = vpack.c.b16 %v3680, %v3679
    %v3696 = vpack.c.b16 %v3682, %v3681
    %v3697 = vpack.c.b16 %v3684, %v3683
    %v3698 = vpack.c.b16 %v3686, %v3685
    %v3699 = vpack.c.b16 %v3688, %v3687
    %v3700 = vpack.c.b16 %v3690, %v3689
    %v3701 = vpack.c.b16 %v3692, %v3691
    %v3702 = vpack.c.b16 %v3694, %v3693
    %3711 = vmatprep.subr.bf16.mxu0 0
    %3712 = vmatpush1.bf16.msra.mxu0 %v3695
    %3713 = vmatprep.subr.bf16.mxu0 0
    %3714 = vmatpush1.bf16.msra.mxu0 %v3696
    %3715 = vmatprep.subr.bf16.mxu0 0
    %3716 = vmatpush1.bf16.msra.mxu0 %v3697
    %3717 = vmatprep.subr.bf16.mxu0 0
    %3718 = vmatpush1.bf16.msra.mxu0 %v3698
    %3719 = vmatprep.subr.bf16.mxu0 0
    %3720 = vmatpush1.bf16.msra.mxu0 %v3699
    %3721 = vmatprep.subr.bf16.mxu0 0
    %3722 = vmatpush1.bf16.msra.mxu0 %v3700
    %3723 = vmatprep.subr.bf16.mxu0 0
    %3724 = vmatpush1.bf16.msra.mxu0 %v3701
    %3725 = vmatprep.subr.bf16.mxu0 0
    %3726 = vmatpush1.bf16.msra.mxu0 %v3702
    %3727 = vmatprep.subr.bf16.mxu0 0
    %3728 = vmatpush1.bf16.msra.mxu0 0
    %3729 = vmatprep.subr.bf16.mxu0 0
    %3730 = vmatpush1.bf16.msra.mxu0 0
    %3731 = vmatprep.subr.bf16.mxu0 0
    %3732 = vmatpush1.bf16.msra.mxu0 0
    %3733 = vmatprep.subr.bf16.mxu0 0
    %3734 = vmatpush1.bf16.msra.mxu0 0
    %3735 = vmatprep.subr.bf16.mxu0 0
    %3736 = vmatpush1.bf16.msra.mxu0 0
    %3737 = vmatprep.subr.bf16.mxu0 0
    %3738 = vmatpush1.bf16.msra.mxu0 0
    %3739 = vmatprep.subr.bf16.mxu0 0
    %3740 = vmatpush1.bf16.msra.mxu0 0
    %3741 = vmatprep.subr.bf16.mxu0 0
    %3742 = vmatpush1.bf16.msra.mxu0 0
    %3743 = vmatprep.mubr.bf16.mxu0 0
    %3744 = vmatmul.mubr.bf16.gmra.mrb[0].mxu0 %v3645
    %v3745 = vpop.f32.mrb[0].mxu0
    %v3746 = vadd.f32 0.0, %v3745
    %v3747 = vpop.f32.mrb[0].mxu0
    %v3748 = vpop.f32.mrb[0].mxu0
    %v3749 = vpop.f32.mrb[0].mxu0
    %3750 = vdwg.mxu0
    %v3751 = vadd.f32 %v3522, %v3746
    %v3752 = vld [vmem:[%s1507] sm:$0xff]
    %v3753 = vld [vmem:[%s1507 + $0x8] sm:$0xff]
    %v3754 = vunpack.c.l.bf16 %v3752
    %v3755 = vunpack.c.h.bf16 %v3752
    %v3756 = vunpack.c.l.bf16 %v3753
    %v3757 = vunpack.c.h.bf16 %v3753
    %3758 = vmatprep.subr.bf16.mxu0 %v2553
    %3759 = vmatpush1.bf16.msra.mxu0 %v2552
    %3760 = vmatprep.subr.bf16.mxu0 %v2557
    %3761 = vmatpush1.bf16.msra.mxu0 %v2556
    %3762 = vmatprep.subr.bf16.mxu0 %v2561
    %3763 = vmatpush1.bf16.msra.mxu0 %v2560
    %3764 = vmatprep.subr.bf16.mxu0 %v2565
    %3765 = vmatpush1.bf16.msra.mxu0 %v2564
    %3766 = vmatprep.subr.bf16.mxu0 %v2569
    %3767 = vmatpush1.bf16.msra.mxu0 %v2568
    %3768 = vmatprep.subr.bf16.mxu0 %v2573
    %3769 = vmatpush1.bf16.msra.mxu0 %v2572
    %3770 = vmatprep.subr.bf16.mxu0 %v2577
    %3771 = vmatpush1.bf16.msra.mxu0 %v2576
    %3772 = vmatprep.subr.bf16.mxu0 %v2581
    %3773 = vmatpush1.bf16.msra.mxu0 %v2580
    %3774 = vmatprep.subr.bf16.mxu0 0
    %3775 = vmatpush1.bf16.msra.mxu0 0
    %3776 = vmatprep.subr.bf16.mxu0 0
    %3777 = vmatpush1.bf16.msra.mxu0 0
    %3778 = vmatprep.subr.bf16.mxu0 0
    %3779 = vmatpush1.bf16.msra.mxu0 0
    %3780 = vmatprep.subr.bf16.mxu0 0
    %3781 = vmatpush1.bf16.msra.mxu0 0
    %3782 = vmatprep.subr.bf16.mxu0 0
    %3783 = vmatpush1.bf16.msra.mxu0 0
    %3784 = vmatprep.subr.bf16.mxu0 0
    %3785 = vmatpush1.bf16.msra.mxu0 0
    %3786 = vmatprep.subr.bf16.mxu0 0
    %3787 = vmatpush1.bf16.msra.mxu0 0
    %3788 = vmatprep.subr.bf16.mxu0 0
    %3789 = vmatpush1.bf16.msra.mxu0 0
    %3790 = vmatprep.mubr.bf16.mxu0 0
    %3791 = vmatmul.mubr.bf16.gmra.mrb[0].mxu0 %v3644
    %v3792 = vpop.f32.mrb[0].mxu0
    %v3793 = vadd.f32 %v3754, %v3792
    %v3794 = vpop.f32.mrb[0].mxu0
    %v3795 = vadd.f32 %v3755, %v3794
    %v3796 = vpop.f32.mrb[0].mxu0
    %v3797 = vpop.f32.mrb[0].mxu0
    %3798 = vdwg.mxu0
    %3799 = vmatprep.subr.bf16.mxu0 %v2555
    %3800 = vmatpush1.bf16.msra.mxu0 %v2554
    %3801 = vmatprep.subr.bf16.mxu0 %v2559
    %3802 = vmatpush1.bf16.msra.mxu0 %v2558
    %3803 = vmatprep.subr.bf16.mxu0 %v2563
    %3804 = vmatpush1.bf16.msra.mxu0 %v2562
    %3805 = vmatprep.subr.bf16.mxu0 %v2567
    %3806 = vmatpush1.bf16.msra.mxu0 %v2566
    %3807 = vmatprep.subr.bf16.mxu0 %v2571
    %3808 = vmatpush1.bf16.msra.mxu0 %v2570
    %3809 = vmatprep.subr.bf16.mxu0 %v2575
    %3810 = vmatpush1.bf16.msra.mxu0 %v2574
    %3811 = vmatprep.subr.bf16.mxu0 %v2579
    %3812 = vmatpush1.bf16.msra.mxu0 %v2578
    %3813 = vmatprep.subr.bf16.mxu0 %v2583
    %3814 = vmatpush1.bf16.msra.mxu0 %v2582
    %3815 = vmatprep.subr.bf16.mxu0 0
    %3816 = vmatpush1.bf16.msra.mxu0 0
    %3817 = vmatprep.subr.bf16.mxu0 0
    %3818 = vmatpush1.bf16.msra.mxu0 0
    %3819 = vmatprep.subr.bf16.mxu0 0
    %3820 = vmatpush1.bf16.msra.mxu0 0
    %3821 = vmatprep.subr.bf16.mxu0 0
    %3822 = vmatpush1.bf16.msra.mxu0 0
    %3823 = vmatprep.subr.bf16.mxu0 0
    %3824 = vmatpush1.bf16.msra.mxu0 0
    %3825 = vmatprep.subr.bf16.mxu0 0
    %3826 = vmatpush1.bf16.msra.mxu0 0
    %3827 = vmatprep.subr.bf16.mxu0 0
    %3828 = vmatpush1.bf16.msra.mxu0 0
    %3829 = vmatprep.subr.bf16.mxu0 0
    %3830 = vmatpush1.bf16.msra.mxu0 0
    %3831 = vmatprep.mubr.bf16.mxu0 0
    %3832 = vmatmul.mubr.bf16.gmra.mrb[0].mxu0 %v3644
    %v3833 = vpop.f32.mrb[0].mxu0
    %v3834 = vadd.f32 %v3756, %v3833
    %v3835 = vpop.f32.mrb[0].mxu0
    %v3836 = vadd.f32 %v3757, %v3835
    %v3837 = vpop.f32.mrb[0].mxu0
    %v3838 = vpop.f32.mrb[0].mxu0
    %3839 = vdwg.mxu0
    %v3840 = vpack.c.bf16 %v3793, %v3793
    %v3841 = vpack.c.bf16 %v3795, %v3795
    %v3842 = vpack.c.bf16 %v3834, %v3834
    %v3843 = vpack.c.bf16 %v3836, %v3836
    %v3844 = vxor.u32 %v3840, 2147516416
    %v3846 = vmul.bf16 %v3844, 1069105081
    %v3847 = vpow.bf16.pop %v3846
    %v3848 = vadd.bf16 %v3847, 1065369472
    %v3849 = vrcp.bf16.pop %v3848
    %v3850 = vmul.bf16 1065369472, %v3849
    %v3851 = vxor.u32 %v3841, 2147516416
    %v3853 = vmul.bf16 %v3851, 1069105081
    %v3854 = vpow.bf16.pop %v3853
    %v3855 = vadd.bf16 %v3854, 1065369472
    %v3856 = vrcp.bf16.pop %v3855
    %v3857 = vmul.bf16 1065369472, %v3856
    %v3858 = vtanh.bf16.pop %v3842
    %v3859 = vxor.u32 %v3843, 2147516416
    %v3861 = vmul.bf16 %v3859, 1069105081
    %v3862 = vpow.bf16.pop %v3861
    %v3863 = vadd.bf16 %v3862, 1065369472
    %v3864 = vrcp.bf16.pop %v3863
    %v3865 = vmul.bf16 1065369472, %v3864
    %v3866 = vunpack.c.l.bf16 %v3857
    %v3867 = vmul.f32 %v3866, %v3641
    %v3868 = vmul.bf16 %v3850, %v3858
    %v3869 = vunpack.c.l.bf16 %v3868
    %v3870 = vadd.f32 %v3867, %v3869
    %v3871 = vpack.c.bf16 %v3870, %v3870
    %v3872 = vtanh.bf16.pop %v3871
    %v3873 = vmul.bf16 %v3865, %v3872
    %v3874 = vmax.bf16 %v3873, 0
    %s3875 = scalar_lea.vmem [#allocation13], 320
    %v3876 = vld [vmem:[%s3875] sm:$0xf]
    %v3877 = vld [vmem:[%s3875 + $0x4] sm:$0xf]
    %v3878 = vld [vmem:[%s3875 + $0x8] sm:$0xf]
    %v3879 = vld [vmem:[%s3875 + $0xc] sm:$0xf]
    %v3880 = vld [vmem:[%s3875 + $0x10] sm:$0xf]
    %v3881 = vld [vmem:[%s3875 + $0x14] sm:$0xf]
    %v3882 = vld [vmem:[%s3875 + $0x18] sm:$0xf]
    %v3883 = vld [vmem:[%s3875 + $0x1c] sm:$0xf]
    %v3884 = vld [vmem:[%s3875 + $0x20] sm:$0xf]
    %v3885 = vld [vmem:[%s3875 + $0x24] sm:$0xf]
    %v3886 = vld [vmem:[%s3875 + $0x28] sm:$0xf]
    %v3887 = vld [vmem:[%s3875 + $0x2c] sm:$0xf]
    %v3888 = vld [vmem:[%s3875 + $0x30] sm:$0xf]
    %v3889 = vld [vmem:[%s3875 + $0x34] sm:$0xf]
    %v3890 = vld [vmem:[%s3875 + $0x38] sm:$0xf]
    %v3891 = vld [vmem:[%s3875 + $0x3c] sm:$0xf]
    %v3908 = vunpack.c.l.b16 %v3876
    %v3909 = vunpack.c.l.b16 %v3877
    %v3910 = vunpack.c.l.b16 %v3878
    %v3911 = vunpack.c.l.b16 %v3879
    %v3912 = vunpack.c.l.b16 %v3880
    %v3913 = vunpack.c.l.b16 %v3881
    %v3914 = vunpack.c.l.b16 %v3882
    %v3915 = vunpack.c.l.b16 %v3883
    %v3916 = vunpack.c.l.b16 %v3884
    %v3917 = vunpack.c.l.b16 %v3885
    %v3918 = vunpack.c.l.b16 %v3886
    %v3919 = vunpack.c.l.b16 %v3887
    %v3920 = vunpack.c.l.b16 %v3888
    %v3921 = vunpack.c.l.b16 %v3889
    %v3922 = vunpack.c.l.b16 %v3890
    %v3923 = vunpack.c.l.b16 %v3891
    %v3924 = vpack.c.b16 %v3909, %v3908
    %v3925 = vpack.c.b16 %v3911, %v3910
    %v3926 = vpack.c.b16 %v3913, %v3912
    %v3927 = vpack.c.b16 %v3915, %v3914
    %v3928 = vpack.c.b16 %v3917, %v3916
    %v3929 = vpack.c.b16 %v3919, %v3918
    %v3930 = vpack.c.b16 %v3921, %v3920
    %v3931 = vpack.c.b16 %v3923, %v3922
    %3940 = vmatprep.subr.bf16.mxu0 0
    %3941 = vmatpush1.bf16.msra.mxu0 %v3924
    %3942 = vmatprep.subr.bf16.mxu0 0
    %3943 = vmatpush1.bf16.msra.mxu0 %v3925
    %3944 = vmatprep.subr.bf16.mxu0 0
    %3945 = vmatpush1.bf16.msra.mxu0 %v3926
    %3946 = vmatprep.subr.bf16.mxu0 0
    %3947 = vmatpush1.bf16.msra.mxu0 %v3927
    %3948 = vmatprep.subr.bf16.mxu0 0
    %3949 = vmatpush1.bf16.msra.mxu0 %v3928
    %3950 = vmatprep.subr.bf16.mxu0 0
    %3951 = vmatpush1.bf16.msra.mxu0 %v3929
    %3952 = vmatprep.subr.bf16.mxu0 0
    %3953 = vmatpush1.bf16.msra.mxu0 %v3930
    %3954 = vmatprep.subr.bf16.mxu0 0
    %3955 = vmatpush1.bf16.msra.mxu0 %v3931
    %3956 = vmatprep.subr.bf16.mxu0 0
    %3957 = vmatpush1.bf16.msra.mxu0 0
    %3958 = vmatprep.subr.bf16.mxu0 0
    %3959 = vmatpush1.bf16.msra.mxu0 0
    %3960 = vmatprep.subr.bf16.mxu0 0
    %3961 = vmatpush1.bf16.msra.mxu0 0
    %3962 = vmatprep.subr.bf16.mxu0 0
    %3963 = vmatpush1.bf16.msra.mxu0 0
    %3964 = vmatprep.subr.bf16.mxu0 0
    %3965 = vmatpush1.bf16.msra.mxu0 0
    %3966 = vmatprep.subr.bf16.mxu0 0
    %3967 = vmatpush1.bf16.msra.mxu0 0
    %3968 = vmatprep.subr.bf16.mxu0 0
    %3969 = vmatpush1.bf16.msra.mxu0 0
    %3970 = vmatprep.subr.bf16.mxu0 0
    %3971 = vmatpush1.bf16.msra.mxu0 0
    %3972 = vmatprep.mubr.bf16.mxu0 0
    %3973 = vmatmul.mubr.bf16.gmra.mrb[0].mxu0 %v3874
    %v3974 = vpop.f32.mrb[0].mxu0
    %v3975 = vadd.f32 0.0, %v3974
    %v3976 = vpop.f32.mrb[0].mxu0
    %v3977 = vpop.f32.mrb[0].mxu0
    %v3978 = vpop.f32.mrb[0].mxu0
    %3979 = vdwg.mxu0
    %v3980 = vadd.f32 %v3751, %v3975
    %v3981 = vld [vmem:[%s1632] sm:$0xff]
    %v3982 = vld [vmem:[%s1632 + $0x8] sm:$0xff]
    %v3983 = vunpack.c.l.bf16 %v3981
    %v3984 = vunpack.c.h.bf16 %v3981
    %v3985 = vunpack.c.l.bf16 %v3982
    %v3986 = vunpack.c.h.bf16 %v3982
    %3987 = vmatprep.subr.bf16.mxu0 %v2553
    %3988 = vmatpush1.bf16.msra.mxu0 %v2552
    %3989 = vmatprep.subr.bf16.mxu0 %v2557
    %3990 = vmatpush1.bf16.msra.mxu0 %v2556
    %3991 = vmatprep.subr.bf16.mxu0 %v2561
    %3992 = vmatpush1.bf16.msra.mxu0 %v2560
    %3993 = vmatprep.subr.bf16.mxu0 %v2565
    %3994 = vmatpush1.bf16.msra.mxu0 %v2564
    %3995 = vmatprep.subr.bf16.mxu0 %v2569
    %3996 = vmatpush1.bf16.msra.mxu0 %v2568
    %3997 = vmatprep.subr.bf16.mxu0 %v2573
    %3998 = vmatpush1.bf16.msra.mxu0 %v2572
    %3999 = vmatprep.subr.bf16.mxu0 %v2577
    %4000 = vmatpush1.bf16.msra.mxu0 %v2576
    %4001 = vmatprep.subr.bf16.mxu0 %v2581
    %4002 = vmatpush1.bf16.msra.mxu0 %v2580
    %4003 = vmatprep.subr.bf16.mxu0 0
    %4004 = vmatpush1.bf16.msra.mxu0 0
    %4005 = vmatprep.subr.bf16.mxu0 0
    %4006 = vmatpush1.bf16.msra.mxu0 0
    %4007 = vmatprep.subr.bf16.mxu0 0
    %4008 = vmatpush1.bf16.msra.mxu0 0
    %4009 = vmatprep.subr.bf16.mxu0 0
    %4010 = vmatpush1.bf16.msra.mxu0 0
    %4011 = vmatprep.subr.bf16.mxu0 0
    %4012 = vmatpush1.bf16.msra.mxu0 0
    %4013 = vmatprep.subr.bf16.mxu0 0
    %4014 = vmatpush1.bf16.msra.mxu0 0
    %4015 = vmatprep.subr.bf16.mxu0 0
    %4016 = vmatpush1.bf16.msra.mxu0 0
    %4017 = vmatprep.subr.bf16.mxu0 0
    %4018 = vmatpush1.bf16.msra.mxu0 0
    %4019 = vmatprep.mubr.bf16.mxu0 0
    %4020 = vmatmul.mubr.bf16.gmra.mrb[0].mxu0 %v3873
    %v4021 = vpop.f32.mrb[0].mxu0
    %v4022 = vadd.f32 %v3983, %v4021
    %v4023 = vpop.f32.mrb[0].mxu0
    %v4024 = vadd.f32 %v3984, %v4023
    %v4025 = vpop.f32.mrb[0].mxu0
    %v4026 = vpop.f32.mrb[0].mxu0
    %4027 = vdwg.mxu0
    %4028 = vmatprep.subr.bf16.mxu0 %v2555
    %4029 = vmatpush1.bf16.msra.mxu0 %v2554
    %4030 = vmatprep.subr.bf16.mxu0 %v2559
    %4031 = vmatpush1.bf16.msra.mxu0 %v2558
    %4032 = vmatprep.subr.bf16.mxu0 %v2563
    %4033 = vmatpush1.bf16.msra.mxu0 %v2562
    %4034 = vmatprep.subr.bf16.mxu0 %v2567
    %4035 = vmatpush1.bf16.msra.mxu0 %v2566
    %4036 = vmatprep.subr.bf16.mxu0 %v2571
    %4037 = vmatpush1.bf16.msra.mxu0 %v2570
    %4038 = vmatprep.subr.bf16.mxu0 %v2575
    %4039 = vmatpush1.bf16.msra.mxu0 %v2574
    %4040 = vmatprep.subr.bf16.mxu0 %v2579
    %4041 = vmatpush1.bf16.msra.mxu0 %v2578
    %4042 = vmatprep.subr.bf16.mxu0 %v2583
    %4043 = vmatpush1.bf16.msra.mxu0 %v2582
    %4044 = vmatprep.subr.bf16.mxu0 0
    %4045 = vmatpush1.bf16.msra.mxu0 0
    %4046 = vmatprep.subr.bf16.mxu0 0
    %4047 = vmatpush1.bf16.msra.mxu0 0
    %4048 = vmatprep.subr.bf16.mxu0 0
    %4049 = vmatpush1.bf16.msra.mxu0 0
    %4050 = vmatprep.subr.bf16.mxu0 0
    %4051 = vmatpush1.bf16.msra.mxu0 0
    %4052 = vmatprep.subr.bf16.mxu0 0
    %4053 = vmatpush1.bf16.msra.mxu0 0
    %4054 = vmatprep.subr.bf16.mxu0 0
    %4055 = vmatpush1.bf16.msra.mxu0 0
    %4056 = vmatprep.subr.bf16.mxu0 0
    %4057 = vmatpush1.bf16.msra.mxu0 0
    %4058 = vmatprep.subr.bf16.mxu0 0
    %4059 = vmatpush1.bf16.msra.mxu0 0
    %4060 = vmatprep.mubr.bf16.mxu0 0
    %4061 = vmatmul.mubr.bf16.gmra.mrb[0].mxu0 %v3873
    %v4062 = vpop.f32.mrb[0].mxu0
    %v4063 = vadd.f32 %v3985, %v4062
    %v4064 = vpop.f32.mrb[0].mxu0
    %v4065 = vadd.f32 %v3986, %v4064
    %v4066 = vpop.f32.mrb[0].mxu0
    %v4067 = vpop.f32.mrb[0].mxu0
    %4068 = vdwg.mxu0
    %v4069 = vpack.c.bf16 %v4022, %v4022
    %v4070 = vpack.c.bf16 %v4024, %v4024
    %v4071 = vpack.c.bf16 %v4063, %v4063
    %v4072 = vpack.c.bf16 %v4065, %v4065
    %v4073 = vxor.u32 %v4069, 2147516416
    %v4075 = vmul.bf16 %v4073, 1069105081
    %v4076 = vpow.bf16.pop %v4075
    %v4077 = vadd.bf16 %v4076, 1065369472
    %v4078 = vrcp.bf16.pop %v4077
    %v4079 = vmul.bf16 1065369472, %v4078
    %v4080 = vxor.u32 %v4070, 2147516416
    %v4082 = vmul.bf16 %v4080, 1069105081
    %v4083 = vpow.bf16.pop %v4082
    %v4084 = vadd.bf16 %v4083, 1065369472
    %v4085 = vrcp.bf16.pop %v4084
    %v4086 = vmul.bf16 1065369472, %v4085
    %v4087 = vtanh.bf16.pop %v4071
    %v4088 = vxor.u32 %v4072, 2147516416
    %v4090 = vmul.bf16 %v4088, 1069105081
    %v4091 = vpow.bf16.pop %v4090
    %v4092 = vadd.bf16 %v4091, 1065369472
    %v4093 = vrcp.bf16.pop %v4092
    %v4094 = vmul.bf16 1065369472, %v4093
    %v4095 = vunpack.c.l.bf16 %v4086
    %v4096 = vmul.f32 %v4095, %v3870
    %v4097 = vmul.bf16 %v4079, %v4087
    %v4098 = vunpack.c.l.bf16 %v4097
    %v4099 = vadd.f32 %v4096, %v4098
    %v4100 = vpack.c.bf16 %v4099, %v4099
    %v4101 = vtanh.bf16.pop %v4100
    %v4102 = vmul.bf16 %v4094, %v4101
    %v4103 = vmax.bf16 %v4102, 0
    %s4104 = scalar_lea.vmem [#allocation13], 384
    %v4105 = vld [vmem:[%s4104] sm:$0xf]
    %v4106 = vld [vmem:[%s4104 + $0x4] sm:$0xf]
    %v4107 = vld [vmem:[%s4104 + $0x8] sm:$0xf]
    %v4108 = vld [vmem:[%s4104 + $0xc] sm:$0xf]
    %v4109 = vld [vmem:[%s4104 + $0x10] sm:$0xf]
    %v4110 = vld [vmem:[%s4104 + $0x14] sm:$0xf]
    %v4111 = vld [vmem:[%s4104 + $0x18] sm:$0xf]
    %v4112 = vld [vmem:[%s4104 + $0x1c] sm:$0xf]
    %v4113 = vld [vmem:[%s4104 + $0x20] sm:$0xf]
    %v4114 = vld [vmem:[%s4104 + $0x24] sm:$0xf]
    %v4115 = vld [vmem:[%s4104 + $0x28] sm:$0xf]
    %v4116 = vld [vmem:[%s4104 + $0x2c] sm:$0xf]
    %v4117 = vld [vmem:[%s4104 + $0x30] sm:$0xf]
    %v4118 = vld [vmem:[%s4104 + $0x34] sm:$0xf]
    %v4119 = vld [vmem:[%s4104 + $0x38] sm:$0xf]
    %v4120 = vld [vmem:[%s4104 + $0x3c] sm:$0xf]
    %v4137 = vunpack.c.l.b16 %v4105
    %v4138 = vunpack.c.l.b16 %v4106
    %v4139 = vunpack.c.l.b16 %v4107
    %v4140 = vunpack.c.l.b16 %v4108
    %v4141 = vunpack.c.l.b16 %v4109
    %v4142 = vunpack.c.l.b16 %v4110
    %v4143 = vunpack.c.l.b16 %v4111
    %v4144 = vunpack.c.l.b16 %v4112
    %v4145 = vunpack.c.l.b16 %v4113
    %v4146 = vunpack.c.l.b16 %v4114
    %v4147 = vunpack.c.l.b16 %v4115
    %v4148 = vunpack.c.l.b16 %v4116
    %v4149 = vunpack.c.l.b16 %v4117
    %v4150 = vunpack.c.l.b16 %v4118
    %v4151 = vunpack.c.l.b16 %v4119
    %v4152 = vunpack.c.l.b16 %v4120
    %v4153 = vpack.c.b16 %v4138, %v4137
    %v4154 = vpack.c.b16 %v4140, %v4139
    %v4155 = vpack.c.b16 %v4142, %v4141
    %v4156 = vpack.c.b16 %v4144, %v4143
    %v4157 = vpack.c.b16 %v4146, %v4145
    %v4158 = vpack.c.b16 %v4148, %v4147
    %v4159 = vpack.c.b16 %v4150, %v4149
    %v4160 = vpack.c.b16 %v4152, %v4151
    %4169 = vmatprep.subr.bf16.mxu0 0
    %4170 = vmatpush1.bf16.msra.mxu0 %v4153
    %4171 = vmatprep.subr.bf16.mxu0 0
    %4172 = vmatpush1.bf16.msra.mxu0 %v4154
    %4173 = vmatprep.subr.bf16.mxu0 0
    %4174 = vmatpush1.bf16.msra.mxu0 %v4155
    %4175 = vmatprep.subr.bf16.mxu0 0
    %4176 = vmatpush1.bf16.msra.mxu0 %v4156
    %4177 = vmatprep.subr.bf16.mxu0 0
    %4178 = vmatpush1.bf16.msra.mxu0 %v4157
    %4179 = vmatprep.subr.bf16.mxu0 0
    %4180 = vmatpush1.bf16.msra.mxu0 %v4158
    %4181 = vmatprep.subr.bf16.mxu0 0
    %4182 = vmatpush1.bf16.msra.mxu0 %v4159
    %4183 = vmatprep.subr.bf16.mxu0 0
    %4184 = vmatpush1.bf16.msra.mxu0 %v4160
    %4185 = vmatprep.subr.bf16.mxu0 0
    %4186 = vmatpush1.bf16.msra.mxu0 0
    %4187 = vmatprep.subr.bf16.mxu0 0
    %4188 = vmatpush1.bf16.msra.mxu0 0
    %4189 = vmatprep.subr.bf16.mxu0 0
    %4190 = vmatpush1.bf16.msra.mxu0 0
    %4191 = vmatprep.subr.bf16.mxu0 0
    %4192 = vmatpush1.bf16.msra.mxu0 0
    %4193 = vmatprep.subr.bf16.mxu0 0
    %4194 = vmatpush1.bf16.msra.mxu0 0
    %4195 = vmatprep.subr.bf16.mxu0 0
    %4196 = vmatpush1.bf16.msra.mxu0 0
    %4197 = vmatprep.subr.bf16.mxu0 0
    %4198 = vmatpush1.bf16.msra.mxu0 0
    %4199 = vmatprep.subr.bf16.mxu0 0
    %4200 = vmatpush1.bf16.msra.mxu0 0
    %4201 = vmatprep.mubr.bf16.mxu0 0
    %4202 = vmatmul.mubr.bf16.gmra.mrb[0].mxu0 %v4103
    %v4203 = vpop.f32.mrb[0].mxu0
    %v4204 = vadd.f32 0.0, %v4203
    %v4205 = vpop.f32.mrb[0].mxu0
    %v4206 = vpop.f32.mrb[0].mxu0
    %v4207 = vpop.f32.mrb[0].mxu0
    %4208 = vdwg.mxu0
    %v4209 = vadd.f32 %v3980, %v4204
    %v4210 = vld [vmem:[%s1757] sm:$0xff]
    %v4211 = vld [vmem:[%s1757 + $0x8] sm:$0xff]
    %v4212 = vunpack.c.l.bf16 %v4210
    %v4213 = vunpack.c.h.bf16 %v4210
    %v4214 = vunpack.c.l.bf16 %v4211
    %v4215 = vunpack.c.h.bf16 %v4211
    %4216 = vmatprep.subr.bf16.mxu0 %v2553
    %4217 = vmatpush1.bf16.msra.mxu0 %v2552
    %4218 = vmatprep.subr.bf16.mxu0 %v2557
    %4219 = vmatpush1.bf16.msra.mxu0 %v2556
    %4220 = vmatprep.subr.bf16.mxu0 %v2561
    %4221 = vmatpush1.bf16.msra.mxu0 %v2560
    %4222 = vmatprep.subr.bf16.mxu0 %v2565
    %4223 = vmatpush1.bf16.msra.mxu0 %v2564
    %4224 = vmatprep.subr.bf16.mxu0 %v2569
    %4225 = vmatpush1.bf16.msra.mxu0 %v2568
    %4226 = vmatprep.subr.bf16.mxu0 %v2573
    %4227 = vmatpush1.bf16.msra.mxu0 %v2572
    %4228 = vmatprep.subr.bf16.mxu0 %v2577
    %4229 = vmatpush1.bf16.msra.mxu0 %v2576
    %4230 = vmatprep.subr.bf16.mxu0 %v2581
    %4231 = vmatpush1.bf16.msra.mxu0 %v2580
    %4232 = vmatprep.subr.bf16.mxu0 0
    %4233 = vmatpush1.bf16.msra.mxu0 0
    %4234 = vmatprep.subr.bf16.mxu0 0
    %4235 = vmatpush1.bf16.msra.mxu0 0
    %4236 = vmatprep.subr.bf16.mxu0 0
    %4237 = vmatpush1.bf16.msra.mxu0 0
    %4238 = vmatprep.subr.bf16.mxu0 0
    %4239 = vmatpush1.bf16.msra.mxu0 0
    %4240 = vmatprep.subr.bf16.mxu0 0
    %4241 = vmatpush1.bf16.msra.mxu0 0
    %4242 = vmatprep.subr.bf16.mxu0 0
    %4243 = vmatpush1.bf16.msra.mxu0 0
    %4244 = vmatprep.subr.bf16.mxu0 0
    %4245 = vmatpush1.bf16.msra.mxu0 0
    %4246 = vmatprep.subr.bf16.mxu0 0
    %4247 = vmatpush1.bf16.msra.mxu0 0
    %4248 = vmatprep.mubr.bf16.mxu0 0
    %4249 = vmatmul.mubr.bf16.gmra.mrb[0].mxu0 %v4102
    %v4250 = vpop.f32.mrb[0].mxu0
    %v4251 = vadd.f32 %v4212, %v4250
    %v4252 = vpop.f32.mrb[0].mxu0
    %v4253 = vadd.f32 %v4213, %v4252
    %v4254 = vpop.f32.mrb[0].mxu0
    %v4255 = vpop.f32.mrb[0].mxu0
    %4256 = vdwg.mxu0
    %4257 = vmatprep.subr.bf16.mxu0 %v2555
    %4258 = vmatpush1.bf16.msra.mxu0 %v2554
    %4259 = vmatprep.subr.bf16.mxu0 %v2559
    %4260 = vmatpush1.bf16.msra.mxu0 %v2558
    %4261 = vmatprep.subr.bf16.mxu0 %v2563
    %4262 = vmatpush1.bf16.msra.mxu0 %v2562
    %4263 = vmatprep.subr.bf16.mxu0 %v2567
    %4264 = vmatpush1.bf16.msra.mxu0 %v2566
    %4265 = vmatprep.subr.bf16.mxu0 %v2571
    %4266 = vmatpush1.bf16.msra.mxu0 %v2570
    %4267 = vmatprep.subr.bf16.mxu0 %v2575
    %4268 = vmatpush1.bf16.msra.mxu0 %v2574
    %4269 = vmatprep.subr.bf16.mxu0 %v2579
    %4270 = vmatpush1.bf16.msra.mxu0 %v2578
    %4271 = vmatprep.subr.bf16.mxu0 %v2583
    %4272 = vmatpush1.bf16.msra.mxu0 %v2582
    %4273 = vmatprep.subr.bf16.mxu0 0
    %4274 = vmatpush1.bf16.msra.mxu0 0
    %4275 = vmatprep.subr.bf16.mxu0 0
    %4276 = vmatpush1.bf16.msra.mxu0 0
    %4277 = vmatprep.subr.bf16.mxu0 0
    %4278 = vmatpush1.bf16.msra.mxu0 0
    %4279 = vmatprep.subr.bf16.mxu0 0
    %4280 = vmatpush1.bf16.msra.mxu0 0
    %4281 = vmatprep.subr.bf16.mxu0 0
    %4282 = vmatpush1.bf16.msra.mxu0 0
    %4283 = vmatprep.subr.bf16.mxu0 0
    %4284 = vmatpush1.bf16.msra.mxu0 0
    %4285 = vmatprep.subr.bf16.mxu0 0
    %4286 = vmatpush1.bf16.msra.mxu0 0
    %4287 = vmatprep.subr.bf16.mxu0 0
    %4288 = vmatpush1.bf16.msra.mxu0 0
    %4289 = vmatprep.mubr.bf16.mxu0 0
    %4290 = vmatmul.mubr.bf16.gmra.mrb[0].mxu0 %v4102
    %v4291 = vpop.f32.mrb[0].mxu0
    %v4292 = vadd.f32 %v4214, %v4291
    %v4293 = vpop.f32.mrb[0].mxu0
    %v4294 = vadd.f32 %v4215, %v4293
    %v4295 = vpop.f32.mrb[0].mxu0
    %v4296 = vpop.f32.mrb[0].mxu0
    %4297 = vdwg.mxu0
    %v4298 = vpack.c.bf16 %v4251, %v4251
    %v4299 = vpack.c.bf16 %v4253, %v4253
    %v4300 = vpack.c.bf16 %v4292, %v4292
    %v4301 = vpack.c.bf16 %v4294, %v4294
    %v4302 = vxor.u32 %v4298, 2147516416
    %v4304 = vmul.bf16 %v4302, 1069105081
    %v4305 = vpow.bf16.pop %v4304
    %v4306 = vadd.bf16 %v4305, 1065369472
    %v4307 = vrcp.bf16.pop %v4306
    %v4308 = vmul.bf16 1065369472, %v4307
    %v4309 = vxor.u32 %v4299, 2147516416
    %v4311 = vmul.bf16 %v4309, 1069105081
    %v4312 = vpow.bf16.pop %v4311
    %v4313 = vadd.bf16 %v4312, 1065369472
    %v4314 = vrcp.bf16.pop %v4313
    %v4315 = vmul.bf16 1065369472, %v4314
    %v4316 = vtanh.bf16.pop %v4300
    %v4317 = vxor.u32 %v4301, 2147516416
    %v4319 = vmul.bf16 %v4317, 1069105081
    %v4320 = vpow.bf16.pop %v4319
    %v4321 = vadd.bf16 %v4320, 1065369472
    %v4322 = vrcp.bf16.pop %v4321
    %v4323 = vmul.bf16 1065369472, %v4322
    %v4324 = vunpack.c.l.bf16 %v4315
    %v4325 = vmul.f32 %v4324, %v4099
    %v4326 = vmul.bf16 %v4308, %v4316
    %v4327 = vunpack.c.l.bf16 %v4326
    %v4328 = vadd.f32 %v4325, %v4327
    %v4329 = vpack.c.bf16 %v4328, %v4328
    %v4330 = vtanh.bf16.pop %v4329
    %v4331 = vmul.bf16 %v4323, %v4330
    %v4332 = vmax.bf16 %v4331, 0
    %s4333 = scalar_lea.vmem [#allocation13], 448
    %v4334 = vld [vmem:[%s4333] sm:$0xf]
    %v4335 = vld [vmem:[%s4333 + $0x4] sm:$0xf]
    %v4336 = vld [vmem:[%s4333 + $0x8] sm:$0xf]
    %v4337 = vld [vmem:[%s4333 + $0xc] sm:$0xf]
    %v4338 = vld [vmem:[%s4333 + $0x10] sm:$0xf]
    %v4339 = vld [vmem:[%s4333 + $0x14] sm:$0xf]
    %v4340 = vld [vmem:[%s4333 + $0x18] sm:$0xf]
    %v4341 = vld [vmem:[%s4333 + $0x1c] sm:$0xf]
    %v4342 = vld [vmem:[%s4333 + $0x20] sm:$0xf]
    %v4343 = vld [vmem:[%s4333 + $0x24] sm:$0xf]
    %v4344 = vld [vmem:[%s4333 + $0x28] sm:$0xf]
    %v4345 = vld [vmem:[%s4333 + $0x2c] sm:$0xf]
    %v4346 = vld [vmem:[%s4333 + $0x30] sm:$0xf]
    %v4347 = vld [vmem:[%s4333 + $0x34] sm:$0xf]
    %v4348 = vld [vmem:[%s4333 + $0x38] sm:$0xf]
    %v4349 = vld [vmem:[%s4333 + $0x3c] sm:$0xf]
    %v4366 = vunpack.c.l.b16 %v4334
    %v4367 = vunpack.c.l.b16 %v4335
    %v4368 = vunpack.c.l.b16 %v4336
    %v4369 = vunpack.c.l.b16 %v4337
    %v4370 = vunpack.c.l.b16 %v4338
    %v4371 = vunpack.c.l.b16 %v4339
    %v4372 = vunpack.c.l.b16 %v4340
    %v4373 = vunpack.c.l.b16 %v4341
    %v4374 = vunpack.c.l.b16 %v4342
    %v4375 = vunpack.c.l.b16 %v4343
    %v4376 = vunpack.c.l.b16 %v4344
    %v4377 = vunpack.c.l.b16 %v4345
    %v4378 = vunpack.c.l.b16 %v4346
    %v4379 = vunpack.c.l.b16 %v4347
    %v4380 = vunpack.c.l.b16 %v4348
    %v4381 = vunpack.c.l.b16 %v4349
    %v4382 = vpack.c.b16 %v4367, %v4366
    %v4383 = vpack.c.b16 %v4369, %v4368
    %v4384 = vpack.c.b16 %v4371, %v4370
    %v4385 = vpack.c.b16 %v4373, %v4372
    %v4386 = vpack.c.b16 %v4375, %v4374
    %v4387 = vpack.c.b16 %v4377, %v4376
    %v4388 = vpack.c.b16 %v4379, %v4378
    %v4389 = vpack.c.b16 %v4381, %v4380
    %4398 = vmatprep.subr.bf16.mxu0 0
    %4399 = vmatpush1.bf16.msra.mxu0 %v4382
    %4400 = vmatprep.subr.bf16.mxu0 0
    %4401 = vmatpush1.bf16.msra.mxu0 %v4383
    %4402 = vmatprep.subr.bf16.mxu0 0
    %4403 = vmatpush1.bf16.msra.mxu0 %v4384
    %4404 = vmatprep.subr.bf16.mxu0 0
    %4405 = vmatpush1.bf16.msra.mxu0 %v4385
    %4406 = vmatprep.subr.bf16.mxu0 0
    %4407 = vmatpush1.bf16.msra.mxu0 %v4386
    %4408 = vmatprep.subr.bf16.mxu0 0
    %4409 = vmatpush1.bf16.msra.mxu0 %v4387
    %4410 = vmatprep.subr.bf16.mxu0 0
    %4411 = vmatpush1.bf16.msra.mxu0 %v4388
    %4412 = vmatprep.subr.bf16.mxu0 0
    %4413 = vmatpush1.bf16.msra.mxu0 %v4389
    %4414 = vmatprep.subr.bf16.mxu0 0
    %4415 = vmatpush1.bf16.msra.mxu0 0
    %4416 = vmatprep.subr.bf16.mxu0 0
    %4417 = vmatpush1.bf16.msra.mxu0 0
    %4418 = vmatprep.subr.bf16.mxu0 0
    %4419 = vmatpush1.bf16.msra.mxu0 0
    %4420 = vmatprep.subr.bf16.mxu0 0
    %4421 = vmatpush1.bf16.msra.mxu0 0
    %4422 = vmatprep.subr.bf16.mxu0 0
    %4423 = vmatpush1.bf16.msra.mxu0 0
    %4424 = vmatprep.subr.bf16.mxu0 0
    %4425 = vmatpush1.bf16.msra.mxu0 0
    %4426 = vmatprep.subr.bf16.mxu0 0
    %4427 = vmatpush1.bf16.msra.mxu0 0
    %4428 = vmatprep.subr.bf16.mxu0 0
    %4429 = vmatpush1.bf16.msra.mxu0 0
    %4430 = vmatprep.mubr.bf16.mxu0 0
    %4431 = vmatmul.mubr.bf16.gmra.mrb[0].mxu0 %v4332
    %v4432 = vpop.f32.mrb[0].mxu0
    %v4433 = vadd.f32 0.0, %v4432
    %v4434 = vpop.f32.mrb[0].mxu0
    %v4435 = vpop.f32.mrb[0].mxu0
    %v4436 = vpop.f32.mrb[0].mxu0
    %4437 = vdwg.mxu0
    %v4438 = vadd.f32 %v4209, %v4433
    %v4439 = vld [vmem:[%s8] sm:$0x1]
    %v4441 = vlaneseq
    %v4442 = vshrl.u32 %v4441, 7
    %v4443 = vsub.s32 0, %v4442
    %v4444 = vrot.slane %v4439, %v4443
    %v4446 = vadd.f32 %v4438, %v4444
    %v4447 = vmax.f32 %v4446, 0.0
    %v4448 = vpack.c.bf16 %v4447, %v4447
    %v4449 = vld [vmem:[#allocation15] sm:$0xf]
    %v4450 = vld [vmem:[#allocation15 + $0x4] sm:$0xf]
    %v4451 = vld [vmem:[#allocation15 + $0x8] sm:$0xf]
    %v4452 = vld [vmem:[#allocation15 + $0xc] sm:$0xf]
    %v4453 = vld [vmem:[#allocation15 + $0x10] sm:$0xf]
    %v4454 = vld [vmem:[#allocation15 + $0x14] sm:$0xf]
    %v4455 = vld [vmem:[#allocation15 + $0x18] sm:$0xf]
    %v4456 = vld [vmem:[#allocation15 + $0x1c] sm:$0xf]
    %v4457 = vld [vmem:[#allocation15 + $0x20] sm:$0xf]
    %v4458 = vld [vmem:[#allocation15 + $0x24] sm:$0xf]
    %v4459 = vld [vmem:[#allocation15 + $0x28] sm:$0xf]
    %v4460 = vld [vmem:[#allocation15 + $0x2c] sm:$0xf]
    %v4461 = vld [vmem:[#allocation15 + $0x30] sm:$0xf]
    %v4462 = vld [vmem:[#allocation15 + $0x34] sm:$0xf]
    %v4463 = vld [vmem:[#allocation15 + $0x38] sm:$0xf]
    %v4464 = vld [vmem:[#allocation15 + $0x3c] sm:$0xf]
    %v4465 = vld [vmem:[%s10] sm:$0x1]
    %v4467 = vlaneseq
    %v4468 = vshrl.u32 %v4467, 7
    %v4469 = vsub.s32 0, %v4468
    %v4470 = vrot.slane %v4465, %v4469
    %v4488 = vunpack.c.l.b16 %v4449
    %v4489 = vunpack.c.l.b16 %v4450
    %v4490 = vunpack.c.l.b16 %v4451
    %v4491 = vunpack.c.l.b16 %v4452
    %v4492 = vunpack.c.l.b16 %v4453
    %v4493 = vunpack.c.l.b16 %v4454
    %v4494 = vunpack.c.l.b16 %v4455
    %v4495 = vunpack.c.l.b16 %v4456
    %v4496 = vunpack.c.l.b16 %v4457
    %v4497 = vunpack.c.l.b16 %v4458
    %v4498 = vunpack.c.l.b16 %v4459
    %v4499 = vunpack.c.l.b16 %v4460
    %v4500 = vunpack.c.l.b16 %v4461
    %v4501 = vunpack.c.l.b16 %v4462
    %v4502 = vunpack.c.l.b16 %v4463
    %v4503 = vunpack.c.l.b16 %v4464
    %v4504 = vpack.c.b16 %v4489, %v4488
    %v4505 = vpack.c.b16 %v4491, %v4490
    %v4506 = vpack.c.b16 %v4493, %v4492
    %v4507 = vpack.c.b16 %v4495, %v4494
    %v4508 = vpack.c.b16 %v4497, %v4496
    %v4509 = vpack.c.b16 %v4499, %v4498
    %v4510 = vpack.c.b16 %v4501, %v4500
    %v4511 = vpack.c.b16 %v4503, %v4502
    %4520 = vmatprep.subr.bf16.mxu0 0
    %4521 = vmatpush1.bf16.msra.mxu0 %v4504
    %4522 = vmatprep.subr.bf16.mxu0 0
    %4523 = vmatpush1.bf16.msra.mxu0 %v4505
    %4524 = vmatprep.subr.bf16.mxu0 0
    %4525 = vmatpush1.bf16.msra.mxu0 %v4506
    %4526 = vmatprep.subr.bf16.mxu0 0
    %4527 = vmatpush1.bf16.msra.mxu0 %v4507
    %4528 = vmatprep.subr.bf16.mxu0 0
    %4529 = vmatpush1.bf16.msra.mxu0 %v4508
    %4530 = vmatprep.subr.bf16.mxu0 0
    %4531 = vmatpush1.bf16.msra.mxu0 %v4509
    %4532 = vmatprep.subr.bf16.mxu0 0
    %4533 = vmatpush1.bf16.msra.mxu0 %v4510
    %4534 = vmatprep.subr.bf16.mxu0 0
    %4535 = vmatpush1.bf16.msra.mxu0 %v4511
    %4536 = vmatprep.subr.bf16.mxu0 0
    %4537 = vmatpush1.bf16.msra.mxu0 0
    %4538 = vmatprep.subr.bf16.mxu0 0
    %4539 = vmatpush1.bf16.msra.mxu0 0
    %4540 = vmatprep.subr.bf16.mxu0 0
    %4541 = vmatpush1.bf16.msra.mxu0 0
    %4542 = vmatprep.subr.bf16.mxu0 0
    %4543 = vmatpush1.bf16.msra.mxu0 0
    %4544 = vmatprep.subr.bf16.mxu0 0
    %4545 = vmatpush1.bf16.msra.mxu0 0
    %4546 = vmatprep.subr.bf16.mxu0 0
    %4547 = vmatpush1.bf16.msra.mxu0 0
    %4548 = vmatprep.subr.bf16.mxu0 0
    %4549 = vmatpush1.bf16.msra.mxu0 0
    %4550 = vmatprep.subr.bf16.mxu0 0
    %4551 = vmatpush1.bf16.msra.mxu0 0
    %4552 = vmatprep.mubr.bf16.mxu0 0
    %4553 = vmatmul.mubr.bf16.gmra.mrb[0].mxu0 %v4448
    %v4554 = vpop.f32.mrb[0].mxu0
    %v4555 = vadd.f32 %v4470, %v4554
    %v4556 = vpop.f32.mrb[0].mxu0
    %v4557 = vpop.f32.mrb[0].mxu0
    %v4558 = vpop.f32.mrb[0].mxu0
    %4559 = vdwg.mxu0
    %v4560 = vmax.f32 %v4555, 0.0
    %v4561 = vpack.c.bf16 %v4560, %v4560
    %v4562 = vld [vmem:[#allocation16] sm:$0xf]
    %v4563 = vld [vmem:[#allocation16 + $0x4] sm:$0xf]
    %v4564 = vld [vmem:[#allocation16 + $0x8] sm:$0xf]
    %v4565 = vld [vmem:[#allocation16 + $0xc] sm:$0xf]
    %v4566 = vld [vmem:[#allocation16 + $0x10] sm:$0xf]
    %v4567 = vld [vmem:[#allocation16 + $0x14] sm:$0xf]
    %v4568 = vld [vmem:[#allocation16 + $0x18] sm:$0xf]
    %v4569 = vld [vmem:[#allocation16 + $0x1c] sm:$0xf]
    %v4570 = vld [vmem:[#allocation16 + $0x20] sm:$0xf]
    %v4571 = vld [vmem:[#allocation16 + $0x24] sm:$0xf]
    %v4572 = vld [vmem:[#allocation16 + $0x28] sm:$0xf]
    %v4573 = vld [vmem:[#allocation16 + $0x2c] sm:$0xf]
    %v4574 = vld [vmem:[#allocation16 + $0x30] sm:$0xf]
    %v4575 = vld [vmem:[#allocation16 + $0x34] sm:$0xf]
    %v4576 = vld [vmem:[#allocation16 + $0x38] sm:$0xf]
    %v4577 = vld [vmem:[#allocation16 + $0x3c] sm:$0xf]
    %v4578 = vld [vmem:[%s12] sm:$0x1]
    %v4580 = vlaneseq
    %v4581 = vshrl.u32 %v4580, 7
    %v4582 = vsub.s32 0, %v4581
    %v4583 = vrot.slane %v4578, %v4582
    %v4601 = vunpack.c.l.b16 %v4562
    %v4602 = vunpack.c.l.b16 %v4563
    %v4603 = vunpack.c.l.b16 %v4564
    %v4604 = vunpack.c.l.b16 %v4565
    %v4605 = vunpack.c.l.b16 %v4566
    %v4606 = vunpack.c.l.b16 %v4567
    %v4607 = vunpack.c.l.b16 %v4568
    %v4608 = vunpack.c.l.b16 %v4569
    %v4609 = vunpack.c.l.b16 %v4570
    %v4610 = vunpack.c.l.b16 %v4571
    %v4611 = vunpack.c.l.b16 %v4572
    %v4612 = vunpack.c.l.b16 %v4573
    %v4613 = vunpack.c.l.b16 %v4574
    %v4614 = vunpack.c.l.b16 %v4575
    %v4615 = vunpack.c.l.b16 %v4576
    %v4616 = vunpack.c.l.b16 %v4577
    %v4617 = vpack.c.b16 %v4602, %v4601
    %v4618 = vpack.c.b16 %v4604, %v4603
    %v4619 = vpack.c.b16 %v4606, %v4605
    %v4620 = vpack.c.b16 %v4608, %v4607
    %v4621 = vpack.c.b16 %v4610, %v4609
    %v4622 = vpack.c.b16 %v4612, %v4611
    %v4623 = vpack.c.b16 %v4614, %v4613
    %v4624 = vpack.c.b16 %v4616, %v4615
    %4633 = vmatprep.subr.bf16.mxu0 0
    %4634 = vmatpush1.bf16.msra.mxu0 %v4617
    %4635 = vmatprep.subr.bf16.mxu0 0
    %4636 = vmatpush1.bf16.msra.mxu0 %v4618
    %4637 = vmatprep.subr.bf16.mxu0 0
    %4638 = vmatpush1.bf16.msra.mxu0 %v4619
    %4639 = vmatprep.subr.bf16.mxu0 0
    %4640 = vmatpush1.bf16.msra.mxu0 %v4620
    %4641 = vmatprep.subr.bf16.mxu0 0
    %4642 = vmatpush1.bf16.msra.mxu0 %v4621
    %4643 = vmatprep.subr.bf16.mxu0 0
    %4644 = vmatpush1.bf16.msra.mxu0 %v4622
    %4645 = vmatprep.subr.bf16.mxu0 0
    %4646 = vmatpush1.bf16.msra.mxu0 %v4623
    %4647 = vmatprep.subr.bf16.mxu0 0
    %4648 = vmatpush1.bf16.msra.mxu0 %v4624
    %4649 = vmatprep.subr.bf16.mxu0 0
    %4650 = vmatpush1.bf16.msra.mxu0 0
    %4651 = vmatprep.subr.bf16.mxu0 0
    %4652 = vmatpush1.bf16.msra.mxu0 0
    %4653 = vmatprep.subr.bf16.mxu0 0
    %4654 = vmatpush1.bf16.msra.mxu0 0
    %4655 = vmatprep.subr.bf16.mxu0 0
    %4656 = vmatpush1.bf16.msra.mxu0 0
    %4657 = vmatprep.subr.bf16.mxu0 0
    %4658 = vmatpush1.bf16.msra.mxu0 0
    %4659 = vmatprep.subr.bf16.mxu0 0
    %4660 = vmatpush1.bf16.msra.mxu0 0
    %4661 = vmatprep.subr.bf16.mxu0 0
    %4662 = vmatpush1.bf16.msra.mxu0 0
    %4663 = vmatprep.subr.bf16.mxu0 0
    %4664 = vmatpush1.bf16.msra.mxu0 0
    %4665 = vmatprep.mubr.bf16.mxu0 0
    %4666 = vmatmul.mubr.bf16.gmra.mrb[0].mxu0 %v4561
    %v4667 = vpop.f32.mrb[0].mxu0
    %v4668 = vadd.f32 %v4583, %v4667
    %v4669 = vpop.f32.mrb[0].mxu0
    %v4670 = vpop.f32.mrb[0].mxu0
    %v4671 = vpop.f32.mrb[0].mxu0
    %4672 = vdwg.mxu0
    %4673 = vst [vmem:[#allocation18] sm:$0xff] %v4668
    // Predicated region
    $region86: #{tpu_custom_call.1} parent=1 // pred_check
      _
    $region87: #{tpu_custom_call.1} parent=1 // pred_check_branch
      %4675 = sbr.rel (0) target = $region89
    $region88: #{tpu_custom_call.1} parent=1 // pred_region
      %s4677 = ssub.s32 128, 128
      %4678 = vsyncadd [#allocation6], %s4677
      %s4680 = sshll.u32 [#allocation18], 4
      %s4681 = int_to_ptr.vmem [resolvable:$true] %s4680
      %4683 = dma.vmem_to_hbm [thread:$0]  %s4681, 128, %s13, [#allocation6]
    $region89: #{tpu_custom_call.1} parent=1 // pred_fallthru
      _
    // Predicated region
    $region90: #{tpu_custom_call.1} parent=1 // pred_check
      _
    $region91: #{tpu_custom_call.1} parent=1 // pred_check_branch
      %4685 = sbr.rel (0) target = $region93
    $region92: #{tpu_custom_call.1} parent=1 // pred_region
      %4686 = dma.done [#allocation6], 128
    $region93: #{tpu_custom_call.1} parent=1 // pred_fallthru
      _
    %4687 = vsyncpa [#allocation5], 1
    %4688 = vsyncpa [#allocation8], 1
    %4689 = vsyncpa [#allocation11], 1
    %4690 = vsyncpa [#allocation14], 1
    %4691 = vsyncpa [#allocation17], 1
    %4692 = vsyncpa [#allocation6], 1

// kernel: tpu_custom_call.1
$region0: #{tpu_custom_call.1}
  #allocation0 [shape = 'u32[]', space=smem, size = 0x4, offset = 0x4, fixed_abs, tag = 'smem constant byte address 0x4 - core index']
  #allocation1 [shape = 'u32[144,128]{1,0:T(1,128)}', space=vmem, size = 0x12000, scoped, tag = 'internal scratch']
  #allocation2 [shape = 'bf16[8,8,512]{2,1,0:T(8,128)(2,1)}', space=vmem, size = 0x10000, scoped, tag = 'scratch operand']
  #allocation3 [shape = 'bf16[8,8,128]{2,1,0:T(8,128)(2,1)}', space=vmem, size = 0x4000, scoped, tag = 'scratch operand']
  %s0 = inlined_call_operand.hbm [shape: bf16[8,8,128], index: 0, kind: input, shape index: {}]
  %s1 = inlined_call_operand.hbm [shape: bf16[128,512], index: 1, kind: input, shape index: {}]
  %s2 = inlined_call_operand.hbm [shape: bf16[128,512], index: 2, kind: input, shape index: {}]
  %s3 = inlined_call_operand.vmem [shape: f32[1,512], index: 3, kind: input, shape index: {}]
  %s4 = inlined_call_operand.hbm [shape: bf16[128,512], index: 4, kind: input, shape index: {}]
  %s5 = inlined_call_operand.hbm [shape: bf16[128,512], index: 5, kind: input, shape index: {}]
  %s6 = inlined_call_operand.vmem [shape: f32[1,512], index: 6, kind: input, shape index: {}]
  %s7 = inlined_call_operand.hbm [shape: bf16[8,128,128], index: 7, kind: input, shape index: {}]
  %s8 = inlined_call_operand.vmem [shape: f32[1,128], index: 8, kind: input, shape index: {}]
  %s9 = inlined_call_operand.hbm [shape: bf16[128,128], index: 9, kind: input, shape index: {}]
  %s10 = inlined_call_operand.vmem [shape: f32[1,128], index: 10, kind: input, shape index: {}]
  %s11 = inlined_call_operand.hbm [shape: bf16[128,128], index: 11, kind: input, shape index: {}]
  %s12 = inlined_call_operand.vmem [shape: f32[1,128], index: 12, kind: input, shape index: {}]
  %s13 = inlined_call_operand.hbm [shape: f32[8,128], index: 13, kind: output, shape index: {}]
  %s14 = sld [smem:[#allocation0]]
  $region94: #{tpu_custom_call.1} parent=0
    _
  %s16 = ssub.s32 1, %s14
  %s17 = scalar_select 0, %s16, %s14
  $region1: #{tpu_custom_call.1} parent=0
    #allocation4 [shape = 'u8[16384]{0}', space=vmem, size = 0x4000, scoped, tag = 'input window, operand 0, single buffered']
    #allocation5 [shape = 's32[1]{0}', space=sflag, size = 0x4, scoped, tag = 'scoped memory for tpu_custom_call.1']
    #allocation6 [shape = 's32[1]{0}', space=sflag, size = 0x4, scoped, tag = 'scoped memory for tpu_custom_call.1']
    #allocation7 [shape = 'u8[131072]{0}', space=vmem, size = 0x20000, scoped, tag = 'input window, operand 1, single buffered']
    #allocation8 [shape = 's32[1]{0}', space=sflag, size = 0x4, scoped, tag = 'scoped memory for tpu_custom_call.1']
    #allocation9 [shape = 'u8[131072]{0}', space=vmem, size = 0x20000, scoped, tag = 'input window, operand 2, single buffered']
    #allocation10 [shape = 'u8[131072]{0}', space=vmem, size = 0x20000, scoped, tag = 'input window, operand 4, single buffered']
    #allocation11 [shape = 's32[1]{0}', space=sflag, size = 0x4, scoped, tag = 'scoped memory for tpu_custom_call.1']
    #allocation12 [shape = 'u8[131072]{0}', space=vmem, size = 0x20000, scoped, tag = 'input window, operand 5, single buffered']
    #allocation13 [shape = 'u8[262144]{0}', space=vmem, size = 0x40000, scoped, tag = 'input window, operand 7, single buffered']
    #allocation14 [shape = 's32[1]{0}', space=sflag, size = 0x4, scoped, tag = 'scoped memory for tpu_custom_call.1']
    #allocation15 [shape = 'u8[32768]{0}', space=vmem, size = 0x8000, scoped, tag = 'input window, operand 9, single buffered']
    #allocation16 [shape = 'u8[32768]{0}', space=vmem, size = 0x8000, scoped, tag = 'input window, operand 11, single buffered']
    #allocation17 [shape = 's32[1]{0}', space=sflag, size = 0x4, scoped, tag = 'scoped memory for tpu_custom_call.1']
    #allocation18 [shape = 'u8[4096]{0}', space=vmem, size = 0x1000, scoped, tag = 'output window, operand 0, single buffered']
    %18 = vsyncpa [#allocation5], 0
    %19 = vsyncpa [#allocation8], 0
    %20 = vsyncpa [#allocation11], 0
    %21 = vsyncpa [#allocation14], 0
    %22 = vsyncpa [#allocation17], 0
    %23 = vsyncpa [#allocation6], 0
    // Predicated region
    $region2: #{tpu_custom_call.1} parent=1 // pred_check
      _
    $region3: #{tpu_custom_call.1} parent=1 // pred_check_branch
      %25 = sbr.rel (0) target = $region5
    $region4: #{tpu_custom_call.1} parent=1 // pred_region
      %s27 = ssub.s32 512, 512
      %28 = vsyncadd [#allocation5], %s27
      %s29 = sshll.u32 [#allocation4], 4
      %s30 = int_to_ptr.vmem [resolvable:$true] %s29
      %35 = dma.hbm_to_vmem [thread:$0]  %s0, 512, %s30, [#allocation5], 64, 64, 4
    $region5: #{tpu_custom_call.1} parent=1 // pred_fallthru
      _
    // Predicated region
    $region6: #{tpu_custom_call.1} parent=1 // pred_check
      _
    $region7: #{tpu_custom_call.1} parent=1 // pred_check_branch
      %37 = sbr.rel (0) target = $region9
    $region8: #{tpu_custom_call.1} parent=1 // pred_region
      %s39 = ssub.s32 4096, 4096
      %40 = vsyncadd [#allocation8], %s39
      %s41 = sshll.u32 [#allocation7], 4
      %s42 = int_to_ptr.vmem [resolvable:$true] %s41
      %47 = dma.hbm_to_vmem [thread:$0]  %s1, 4096, %s42, [#allocation8], 256, 256, 16
    $region9: #{tpu_custom_call.1} parent=1 // pred_fallthru
      _
    // Predicated region
    $region10: #{tpu_custom_call.1} parent=1 // pred_check
      _
    $region11: #{tpu_custom_call.1} parent=1 // pred_check_branch
      %49 = sbr.rel (0) target = $region13
    $region12: #{tpu_custom_call.1} parent=1 // pred_region
      %s51 = ssub.s32 4096, 4096
      %52 = vsyncadd [#allocation8], %s51
      %s53 = sshll.u32 [#allocation9], 4
      %s54 = int_to_ptr.vmem [resolvable:$true] %s53
      %59 = dma.hbm_to_vmem [thread:$0]  %s2, 4096, %s54, [#allocation8], 256, 256, 16
    $region13: #{tpu_custom_call.1} parent=1 // pred_fallthru
      _
    // Predicated region
    $region14: #{tpu_custom_call.1} parent=1 // pred_check
      _
    $region15: #{tpu_custom_call.1} parent=1 // pred_check_branch
      %61 = sbr.rel (0) target = $region17
    $region16: #{tpu_custom_call.1} parent=1 // pred_region
      _
    $region17: #{tpu_custom_call.1} parent=1 // pred_fallthru
      _
    // Predicated region
    $region18: #{tpu_custom_call.1} parent=1 // pred_check
      _
    $region19: #{tpu_custom_call.1} parent=1 // pred_check_branch
      %63 = sbr.rel (0) target = $region21
    $region20: #{tpu_custom_call.1} parent=1 // pred_region
      %s65 = ssub.s32 4096, 4096
      %66 = vsyncadd [#allocation11], %s65
      %s67 = sshll.u32 [#allocation10], 4
      %s68 = int_to_ptr.vmem [resolvable:$true] %s67
      %73 = dma.hbm_to_vmem [thread:$0]  %s4, 4096, %s68, [#allocation11], 256, 256, 16
    $region21: #{tpu_custom_call.1} parent=1 // pred_fallthru
      _
    // Predicated region
    $region22: #{tpu_custom_call.1} parent=1 // pred_check
      _
    $region23: #{tpu_custom_call.1} parent=1 // pred_check_branch
      %75 = sbr.rel (0) target = $region25
    $region24: #{tpu_custom_call.1} parent=1 // pred_region
      %s77 = ssub.s32 4096, 4096
      %78 = vsyncadd [#allocation11], %s77
      %s79 = sshll.u32 [#allocation12], 4
      %s80 = int_to_ptr.vmem [resolvable:$true] %s79
      %85 = dma.hbm_to_vmem [thread:$0]  %s5, 4096, %s80, [#allocation11], 256, 256, 16
    $region25: #{tpu_custom_call.1} parent=1 // pred_fallthru
      _
    // Predicated region
    $region26: #{tpu_custom_call.1} parent=1 // pred_check
      _
    $region27: #{tpu_custom_call.1} parent=1 // pred_check_branch
      %87 = sbr.rel (0) target = $region29
    $region28: #{tpu_custom_call.1} parent=1 // pred_region
      _
    $region29: #{tpu_custom_call.1} parent=1 // pred_fallthru
      _
    // Predicated region
    $region30: #{tpu_custom_call.1} parent=1 // pred_check
      _
    $region31: #{tpu_custom_call.1} parent=1 // pred_check_branch
      %89 = sbr.rel (0) target = $region33
    $region32: #{tpu_custom_call.1} parent=1 // pred_region
      %s91 = ssub.s32 8192, 8192
      %92 = vsyncadd [#allocation14], %s91
      %s93 = sshll.u32 [#allocation13], 4
      %s94 = int_to_ptr.vmem [resolvable:$true] %s93
      %99 = dma.hbm_to_vmem [thread:$0]  %s7, 8192, %s94, [#allocation14], 64, 64, 4
    $region33: #{tpu_custom_call.1} parent=1 // pred_fallthru
      _
    // Predicated region
    $region34: #{tpu_custom_call.1} parent=1 // pred_check
      _
    $region35: #{tpu_custom_call.1} parent=1 // pred_check_branch
      %101 = sbr.rel (0) target = $region37
    $region36: #{tpu_custom_call.1} parent=1 // pred_region
      _
    $region37: #{tpu_custom_call.1} parent=1 // pred_fallthru
      _
    // Predicated region
    $region38: #{tpu_custom_call.1} parent=1 // pred_check
      _
    $region39: #{tpu_custom_call.1} parent=1 // pred_check_branch
      %103 = sbr.rel (0) target = $region41
    $region40: #{tpu_custom_call.1} parent=1 // pred_region
      %s105 = ssub.s32 1024, 1024
      %106 = vsyncadd [#allocation14], %s105
      %s107 = sshll.u32 [#allocation15], 4
      %s108 = int_to_ptr.vmem [resolvable:$true] %s107
      %113 = dma.hbm_to_vmem [thread:$0]  %s9, 1024, %s108, [#allocation14], 64, 64, 4
    $region41: #{tpu_custom_call.1} parent=1 // pred_fallthru
      _
    // Predicated region
    $region42: #{tpu_custom_call.1} parent=1 // pred_check
      _
    $region43: #{tpu_custom_call.1} parent=1 // pred_check_branch
      %115 = sbr.rel (0) target = $region45
    $region44: #{tpu_custom_call.1} parent=1 // pred_region
      _
    $region45: #{tpu_custom_call.1} parent=1 // pred_fallthru
      _
    // Predicated region
    $region46: #{tpu_custom_call.1} parent=1 // pred_check
      _
    $region47: #{tpu_custom_call.1} parent=1 // pred_check_branch
      %117 = sbr.rel (0) target = $region49
    $region48: #{tpu_custom_call.1} parent=1 // pred_region
      %s119 = ssub.s32 1024, 1024
      %120 = vsyncadd [#allocation17], %s119
      %s121 = sshll.u32 [#allocation16], 4
      %s122 = int_to_ptr.vmem [resolvable:$true] %s121
      %127 = dma.hbm_to_vmem [thread:$0]  %s11, 1024, %s122, [#allocation17], 64, 64, 4
    $region49: #{tpu_custom_call.1} parent=1 // pred_fallthru
      _
    // Predicated region
    $region50: #{tpu_custom_call.1} parent=1 // pred_check
      _
    $region51: #{tpu_custom_call.1} parent=1 // pred_check_branch
      %129 = sbr.rel (0) target = $region53
    $region52: #{tpu_custom_call.1} parent=1 // pred_region
      _
    $region53: #{tpu_custom_call.1} parent=1 // pred_fallthru
      _
    // Predicated region
    $region54: #{tpu_custom_call.1} parent=1 // pred_check
      _
    $region55: #{tpu_custom_call.1} parent=1 // pred_check_branch
      %131 = sbr.rel (0) target = $region57
    $region56: #{tpu_custom_call.1} parent=1 // pred_region
      %132 = dma.done [#allocation5], 512
    $region57: #{tpu_custom_call.1} parent=1 // pred_fallthru
      _
    // Predicated region
    $region58: #{tpu_custom_call.1} parent=1 // pred_check
      _
    $region59: #{tpu_custom_call.1} parent=1 // pred_check_branch
      %134 = sbr.rel (0) target = $region61
    $region60: #{tpu_custom_call.1} parent=1 // pred_region
      %135 = dma.done [#allocation8], 4096
    $region61: #{tpu_custom_call.1} parent=1 // pred_fallthru
      _
    // Predicated region
    $region62: #{tpu_custom_call.1} parent=1 // pred_check
      _
    $region63: #{tpu_custom_call.1} parent=1 // pred_check_branch
      %137 = sbr.rel (0) target = $region65
    $region64: #{tpu_custom_call.1} parent=1 // pred_region
      %138 = dma.done [#allocation8], 4096
    $region65: #{tpu_custom_call.1} parent=1 // pred_fallthru
      _
    // Predicated region
    $region66: #{tpu_custom_call.1} parent=1 // pred_check
      _
    $region67: #{tpu_custom_call.1} parent=1 // pred_check_branch
      %140 = sbr.rel (0) target = $region69
    $region68: #{tpu_custom_call.1} parent=1 // pred_region
      %141 = dma.done [#allocation11], 4096
    $region69: #{tpu_custom_call.1} parent=1 // pred_fallthru
      _
    // Predicated region
    $region70: #{tpu_custom_call.1} parent=1 // pred_check
      _
    $region71: #{tpu_custom_call.1} parent=1 // pred_check_branch
      %143 = sbr.rel (0) target = $region73
    $region72: #{tpu_custom_call.1} parent=1 // pred_region
      %144 = dma.done [#allocation11], 4096
    $region73: #{tpu_custom_call.1} parent=1 // pred_fallthru
      _
    // Predicated region
    $region74: #{tpu_custom_call.1} parent=1 // pred_check
      _
    $region75: #{tpu_custom_call.1} parent=1 // pred_check_branch
      %146 = sbr.rel (0) target = $region77
    $region76: #{tpu_custom_call.1} parent=1 // pred_region
      %147 = dma.done [#allocation14], 8192
    $region77: #{tpu_custom_call.1} parent=1 // pred_fallthru
      _
    // Predicated region
    $region78: #{tpu_custom_call.1} parent=1 // pred_check
      _
    $region79: #{tpu_custom_call.1} parent=1 // pred_check_branch
      %149 = sbr.rel (0) target = $region81
    $region80: #{tpu_custom_call.1} parent=1 // pred_region
      %150 = dma.done [#allocation14], 1024
    $region81: #{tpu_custom_call.1} parent=1 // pred_fallthru
      _
    // Predicated region
    $region82: #{tpu_custom_call.1} parent=1 // pred_check
      _
    $region83: #{tpu_custom_call.1} parent=1 // pred_check_branch
      %152 = sbr.rel (0) target = $region85
    $region84: #{tpu_custom_call.1} parent=1 // pred_region
      %153 = dma.done [#allocation17], 1024
    $region85: #{tpu_custom_call.1} parent=1 // pred_fallthru
      _
    %v156 = vld [vmem:[#allocation4] sm:$0xf]
    %v157 = vld [vmem:[#allocation4 + $0x4] sm:$0xf]
    %v158 = vld [vmem:[#allocation4 + $0x8] sm:$0xf]
    %v159 = vld [vmem:[#allocation4 + $0xc] sm:$0xf]
    %v160 = vld [vmem:[#allocation4 + $0x10] sm:$0xf]
    %v161 = vld [vmem:[#allocation4 + $0x14] sm:$0xf]
    %v162 = vld [vmem:[#allocation4 + $0x18] sm:$0xf]
    %v163 = vld [vmem:[#allocation4 + $0x1c] sm:$0xf]
    %v164 = vld [vmem:[#allocation7] sm:$0xff]
    %v165 = vld [vmem:[#allocation7 + $0x8] sm:$0xff]
    %v166 = vld [vmem:[#allocation7 + $0x10] sm:$0xff]
    %v167 = vld [vmem:[#allocation7 + $0x18] sm:$0xff]
    %v168 = vld [vmem:[#allocation7 + $0x20] sm:$0xff]
    %v169 = vld [vmem:[#allocation7 + $0x28] sm:$0xff]
    %v170 = vld [vmem:[#allocation7 + $0x30] sm:$0xff]
    %v171 = vld [vmem:[#allocation7 + $0x38] sm:$0xff]
    %v172 = vld [vmem:[#allocation7 + $0x40] sm:$0xff]
    %v173 = vld [vmem:[#allocation7 + $0x48] sm:$0xff]
    %v174 = vld [vmem:[#allocation7 + $0x50] sm:$0xff]
    %v175 = vld [vmem:[#allocation7 + $0x58] sm:$0xff]
    %v176 = vld [vmem:[#allocation7 + $0x60] sm:$0xff]
    %v177 = vld [vmem:[#allocation7 + $0x68] sm:$0xff]
    %v178 = vld [vmem:[#allocation7 + $0x70] sm:$0xff]
    %v179 = vld [vmem:[#allocation7 + $0x78] sm:$0xff]
    %v180 = vld [vmem:[#allocation7 + $0x80] sm:$0xff]
    %v181 = vld [vmem:[#allocation7 + $0x88] sm:$0xff]
    %v182 = vld [vmem:[#allocation7 + $0x90] sm:$0xff]
    %v183 = vld [vmem:[#allocation7 + $0x98] sm:$0xff]
    %v184 = vld [vmem:[#allocation7 + $0xa0] sm:$0xff]
    %v185 = vld [vmem:[#allocation7 + $0xa8] sm:$0xff]
    %v186 = vld [vmem:[#allocation7 + $0xb0] sm:$0xff]
    %v187 = vld [vmem:[#allocation7 + $0xb8] sm:$0xff]
    %v188 = vld [vmem:[#allocation7 + $0xc0] sm:$0xff]
    %v189 = vld [vmem:[#allocation7 + $0xc8] sm:$0xff]
    %v190 = vld [vmem:[#allocation7 + $0xd0] sm:$0xff]
    %v191 = vld [vmem:[#allocation7 + $0xd8] sm:$0xff]
    %v192 = vld [vmem:[#allocation7 + $0xe0] sm:$0xff]
    %v193 = vld [vmem:[#allocation7 + $0xe8] sm:$0xff]
    %v194 = vld [vmem:[#allocation7 + $0xf0] sm:$0xff]
    %v195 = vld [vmem:[#allocation7 + $0xf8] sm:$0xff]
    %v196 = vld [vmem:[%s3] sm:$0xf]
    %v198 = vlaneseq
    %v199 = vshrl.u32 %v198, 7
    %v200 = vsub.s32 0, %v199
    %v201 = vrot.slane %v196, %v200
    %v202 = vlaneseq
    %v203 = vshrl.u32 %v202, 7
    %v204 = vsub.s32 1, %v203
    %v205 = vrot.slane %v196, %v204
    %v206 = vlaneseq
    %v207 = vshrl.u32 %v206, 7
    %v208 = vsub.s32 2, %v207
    %v209 = vrot.slane %v196, %v208
    %v210 = vlaneseq
    %v211 = vshrl.u32 %v210, 7
    %v212 = vsub.s32 3, %v211
    %v213 = vrot.slane %v196, %v212
    %v226 = vunpack.c.l.b16 %v156
    %v227 = vunpack.c.l.b16 %v157
    %v228 = vunpack.c.l.b16 %v158
    %v229 = vunpack.c.l.b16 %v159
    %v230 = vunpack.c.l.b16 %v160
    %v231 = vunpack.c.l.b16 %v161
    %v232 = vunpack.c.l.b16 %v162
    %v233 = vunpack.c.l.b16 %v163
    %v234 = vpack.c.b16 %v227, %v226
    %v235 = vpack.c.b16 %v229, %v228
    %v236 = vpack.c.b16 %v231, %v230
    %v237 = vpack.c.b16 %v233, %v232
    %v274 = vunpack.c.l.b16 %v164
    %v275 = vunpack.c.h.b16 %v164
    %v276 = vunpack.c.l.b16 %v165
    %v277 = vunpack.c.h.b16 %v165
    %v278 = vunpack.c.l.b16 %v166
    %v279 = vunpack.c.h.b16 %v166
    %v280 = vunpack.c.l.b16 %v167
    %v281 = vunpack.c.h.b16 %v167
    %v282 = vunpack.c.l.b16 %v168
    %v283 = vunpack.c.h.b16 %v168
    %v284 = vunpack.c.l.b16 %v169
    %v285 = vunpack.c.h.b16 %v169
    %v286 = vunpack.c.l.b16 %v170
    %v287 = vunpack.c.h.b16 %v170
    %v288 = vunpack.c.l.b16 %v171
    %v289 = vunpack.c.h.b16 %v171
    %v290 = vunpack.c.l.b16 %v172
    %v291 = vunpack.c.h.b16 %v172
    %v292 = vunpack.c.l.b16 %v173
    %v293 = vunpack.c.h.b16 %v173
    %v294 = vunpack.c.l.b16 %v174
    %v295 = vunpack.c.h.b16 %v174
    %v296 = vunpack.c.l.b16 %v175
    %v297 = vunpack.c.h.b16 %v175
    %v298 = vunpack.c.l.b16 %v176
    %v299 = vunpack.c.h.b16 %v176
    %v300 = vunpack.c.l.b16 %v177
    %v301 = vunpack.c.h.b16 %v177
    %v302 = vunpack.c.l.b16 %v178
    %v303 = vunpack.c.h.b16 %v178
    %v304 = vunpack.c.l.b16 %v179
    %v305 = vunpack.c.h.b16 %v179
    %v306 = vunpack.c.l.b16 %v180
    %v307 = vunpack.c.h.b16 %v180
    %v308 = vunpack.c.l.b16 %v181
    %v309 = vunpack.c.h.b16 %v181
    %v310 = vunpack.c.l.b16 %v182
    %v311 = vunpack.c.h.b16 %v182
    %v312 = vunpack.c.l.b16 %v183
    %v313 = vunpack.c.h.b16 %v183
    %v314 = vunpack.c.l.b16 %v184
    %v315 = vunpack.c.h.b16 %v184
    %v316 = vunpack.c.l.b16 %v185
    %v317 = vunpack.c.h.b16 %v185
    %v318 = vunpack.c.l.b16 %v186
    %v319 = vunpack.c.h.b16 %v186
    %v320 = vunpack.c.l.b16 %v187
    %v321 = vunpack.c.h.b16 %v187
    %v322 = vunpack.c.l.b16 %v188
    %v323 = vunpack.c.h.b16 %v188
    %v324 = vunpack.c.l.b16 %v189
    %v325 = vunpack.c.h.b16 %v189
    %v326 = vunpack.c.l.b16 %v190
    %v327 = vunpack.c.h.b16 %v190
    %v328 = vunpack.c.l.b16 %v191
    %v329 = vunpack.c.h.b16 %v191
    %v330 = vunpack.c.l.b16 %v192
    %v331 = vunpack.c.h.b16 %v192
    %v332 = vunpack.c.l.b16 %v193
    %v333 = vunpack.c.h.b16 %v193
    %v334 = vunpack.c.l.b16 %v194
    %v335 = vunpack.c.h.b16 %v194
    %v336 = vunpack.c.l.b16 %v195
    %v337 = vunpack.c.h.b16 %v195
    %v338 = vpack.c.b16 %v278, %v274
    %v339 = vpack.c.b16 %v279, %v275
    %v340 = vpack.c.b16 %v280, %v276
    %v341 = vpack.c.b16 %v281, %v277
    %v342 = vpack.c.b16 %v286, %v282
    %v343 = vpack.c.b16 %v287, %v283
    %v344 = vpack.c.b16 %v288, %v284
    %v345 = vpack.c.b16 %v289, %v285
    %v346 = vpack.c.b16 %v294, %v290
    %v347 = vpack.c.b16 %v295, %v291
    %v348 = vpack.c.b16 %v296, %v292
    %v349 = vpack.c.b16 %v297, %v293
    %v350 = vpack.c.b16 %v302, %v298
    %v351 = vpack.c.b16 %v303, %v299
    %v352 = vpack.c.b16 %v304, %v300
    %v353 = vpack.c.b16 %v305, %v301
    %v354 = vpack.c.b16 %v310, %v306
    %v355 = vpack.c.b16 %v311, %v307
    %v356 = vpack.c.b16 %v312, %v308
    %v357 = vpack.c.b16 %v313, %v309
    %v358 = vpack.c.b16 %v318, %v314
    %v359 = vpack.c.b16 %v319, %v315
    %v360 = vpack.c.b16 %v320, %v316
    %v361 = vpack.c.b16 %v321, %v317
    %v362 = vpack.c.b16 %v326, %v322
    %v363 = vpack.c.b16 %v327, %v323
    %v364 = vpack.c.b16 %v328, %v324
    %v365 = vpack.c.b16 %v329, %v325
    %v366 = vpack.c.b16 %v334, %v330
    %v367 = vpack.c.b16 %v335, %v331
    %v368 = vpack.c.b16 %v336, %v332
    %v369 = vpack.c.b16 %v337, %v333
    %402 = vmatprep.subr.bf16.mxu0 %v339
    %403 = vmatpush1.bf16.msra.mxu0 %v338
    %404 = vmatprep.subr.bf16.mxu0 %v343
    %405 = vmatpush1.bf16.msra.mxu0 %v342
    %406 = vmatprep.subr.bf16.mxu0 %v347
    %407 = vmatpush1.bf16.msra.mxu0 %v346
    %408 = vmatprep.subr.bf16.mxu0 %v351
    %409 = vmatpush1.bf16.msra.mxu0 %v350
    %410 = vmatprep.subr.bf16.mxu0 %v355
    %411 = vmatpush1.bf16.msra.mxu0 %v354
    %412 = vmatprep.subr.bf16.mxu0 %v359
    %413 = vmatpush1.bf16.msra.mxu0 %v358
    %414 = vmatprep.subr.bf16.mxu0 %v363
    %415 = vmatpush1.bf16.msra.mxu0 %v362
    %416 = vmatprep.subr.bf16.mxu0 %v367
    %417 = vmatpush1.bf16.msra.mxu0 %v366
    %418 = vmatprep.subr.bf16.mxu0 0
    %419 = vmatpush1.bf16.msra.mxu0 0
    %420 = vmatprep.subr.bf16.mxu0 0
    %421 = vmatpush1.bf16.msra.mxu0 0
    %422 = vmatprep.subr.bf16.mxu0 0
    %423 = vmatpush1.bf16.msra.mxu0 0
    %424 = vmatprep.subr.bf16.mxu0 0
    %425 = vmatpush1.bf16.msra.mxu0 0
    %426 = vmatprep.subr.bf16.mxu0 0
    %427 = vmatpush1.bf16.msra.mxu0 0
    %428 = vmatprep.subr.bf16.mxu0 0
    %429 = vmatpush1.bf16.msra.mxu0 0
    %430 = vmatprep.subr.bf16.mxu0 0
    %431 = vmatpush1.bf16.msra.mxu0 0
    %432 = vmatprep.subr.bf16.mxu0 0
    %433 = vmatpush1.bf16.msra.mxu0 0
    %434 = vmatprep.mubr.bf16.mxu0 0
    %435 = vmatmul.mubr.bf16.gmra.mrb[0].mxu0 %v234
    %v436 = vpop.f32.mrb[0].mxu0
    %v437 = vadd.f32 %v201, %v436
    %v438 = vpop.f32.mrb[0].mxu0
    %v439 = vadd.f32 %v205, %v438
    %v440 = vpop.f32.mrb[0].mxu0
    %v441 = vadd.f32 %v201, %v440
    %v442 = vpop.f32.mrb[0].mxu0
    %v443 = vadd.f32 %v205, %v442
    %444 = vmatprep.mubr.bf16.mxu0 0
    %445 = vmatmul.mubr.bf16.gmra.mrb[0].mxu0 %v235
    %v446 = vpop.f32.mrb[0].mxu0
    %v447 = vadd.f32 %v201, %v446
    %v448 = vpop.f32.mrb[0].mxu0
    %v449 = vadd.f32 %v205, %v448
    %v450 = vpop.f32.mrb[0].mxu0
    %v451 = vadd.f32 %v201, %v450
    %v452 = vpop.f32.mrb[0].mxu0
    %v453 = vadd.f32 %v205, %v452
    %454 = vmatprep.mubr.bf16.mxu0 0
    %455 = vmatmul.mubr.bf16.gmra.mrb[0].mxu0 %v236
    %v456 = vpop.f32.mrb[0].mxu0
    %v457 = vadd.f32 %v201, %v456
    %v458 = vpop.f32.mrb[0].mxu0
    %v459 = vadd.f32 %v205, %v458
    %v460 = vpop.f32.mrb[0].mxu0
    %v461 = vadd.f32 %v201, %v460
    %v462 = vpop.f32.mrb[0].mxu0
    %v463 = vadd.f32 %v205, %v462
    %464 = vmatprep.mubr.bf16.mxu0 0
    %465 = vmatmul.mubr.bf16.gmra.mrb[0].mxu0 %v237
    %v466 = vpop.f32.mrb[0].mxu0
    %v467 = vadd.f32 %v201, %v466
    %v468 = vpop.f32.mrb[0].mxu0
    %v469 = vadd.f32 %v205, %v468
    %v470 = vpop.f32.mrb[0].mxu0
    %v471 = vadd.f32 %v201, %v470
    %v472 = vpop.f32.mrb[0].mxu0
    %v473 = vadd.f32 %v205, %v472
    %474 = vdwg.mxu0
    %475 = vmatprep.subr.bf16.mxu0 %v341
    %476 = vmatpush1.bf16.msra.mxu0 %v340
    %477 = vmatprep.subr.bf16.mxu0 %v345
    %478 = vmatpush1.bf16.msra.mxu0 %v344
    %479 = vmatprep.subr.bf16.mxu0 %v349
    %480 = vmatpush1.bf16.msra.mxu0 %v348
    %481 = vmatprep.subr.bf16.mxu0 %v353
    %482 = vmatpush1.bf16.msra.mxu0 %v352
    %483 = vmatprep.subr.bf16.mxu0 %v357
    %484 = vmatpush1.bf16.msra.mxu0 %v356
    %485 = vmatprep.subr.bf16.mxu0 %v361
    %486 = vmatpush1.bf16.msra.mxu0 %v360
    %487 = vmatprep.subr.bf16.mxu0 %v365
    %488 = vmatpush1.bf16.msra.mxu0 %v364
    %489 = vmatprep.subr.bf16.mxu0 %v369
    %490 = vmatpush1.bf16.msra.mxu0 %v368
    %491 = vmatprep.subr.bf16.mxu0 0
    %492 = vmatpush1.bf16.msra.mxu0 0
    %493 = vmatprep.subr.bf16.mxu0 0
    %494 = vmatpush1.bf16.msra.mxu0 0
    %495 = vmatprep.subr.bf16.mxu0 0
    %496 = vmatpush1.bf16.msra.mxu0 0
    %497 = vmatprep.subr.bf16.mxu0 0
    %498 = vmatpush1.bf16.msra.mxu0 0
    %499 = vmatprep.subr.bf16.mxu0 0
    %500 = vmatpush1.bf16.msra.mxu0 0
    %501 = vmatprep.subr.bf16.mxu0 0
    %502 = vmatpush1.bf16.msra.mxu0 0
    %503 = vmatprep.subr.bf16.mxu0 0
    %504 = vmatpush1.bf16.msra.mxu0 0
    %505 = vmatprep.subr.bf16.mxu0 0
    %506 = vmatpush1.bf16.msra.mxu0 0
    %507 = vmatprep.mubr.bf16.mxu0 0
    %508 = vmatmul.mubr.bf16.gmra.mrb[0].mxu0 %v234
    %v509 = vpop.f32.mrb[0].mxu0
    %v510 = vadd.f32 %v209, %v509
    %v511 = vpop.f32.mrb[0].mxu0
    %v512 = vadd.f32 %v213, %v511
    %v513 = vpop.f32.mrb[0].mxu0
    %v514 = vadd.f32 %v209, %v513
    %v515 = vpop.f32.mrb[0].mxu0
    %v516 = vadd.f32 %v213, %v515
    %517 = vmatprep.mubr.bf16.mxu0 0
    %518 = vmatmul.mubr.bf16.gmra.mrb[0].mxu0 %v235
    %v519 = vpop.f32.mrb[0].mxu0
    %v520 = vadd.f32 %v209, %v519
    %v521 = vpop.f32.mrb[0].mxu0
    %v522 = vadd.f32 %v213, %v521
    %v523 = vpop.f32.mrb[0].mxu0
    %v524 = vadd.f32 %v209, %v523
    %v525 = vpop.f32.mrb[0].mxu0
    %v526 = vadd.f32 %v213, %v525
    %527 = vmatprep.mubr.bf16.mxu0 0
    %528 = vmatmul.mubr.bf16.gmra.mrb[0].mxu0 %v236
    %v529 = vpop.f32.mrb[0].mxu0
    %v530 = vadd.f32 %v209, %v529
    %v531 = vpop.f32.mrb[0].mxu0
    %v532 = vadd.f32 %v213, %v531
    %v533 = vpop.f32.mrb[0].mxu0
    %v534 = vadd.f32 %v209, %v533
    %v535 = vpop.f32.mrb[0].mxu0
    %v536 = vadd.f32 %v213, %v535
    %537 = vmatprep.mubr.bf16.mxu0 0
    %538 = vmatmul.mubr.bf16.gmra.mrb[0].mxu0 %v237
    %v539 = vpop.f32.mrb[0].mxu0
    %v540 = vadd.f32 %v209, %v539
    %v541 = vpop.f32.mrb[0].mxu0
    %v542 = vadd.f32 %v213, %v541
    %v543 = vpop.f32.mrb[0].mxu0
    %v544 = vadd.f32 %v209, %v543
    %v545 = vpop.f32.mrb[0].mxu0
    %v546 = vadd.f32 %v213, %v545
    %547 = vdwg.mxu0
    %v548 = vpack.c.bf16 %v437, %v437
    %v549 = vpack.c.bf16 %v439, %v439
    %v550 = vpack.c.bf16 %v510, %v510
    %v551 = vpack.c.bf16 %v512, %v512
    %v552 = vpack.c.bf16 %v441, %v441
    %v553 = vpack.c.bf16 %v443, %v443
    %v554 = vpack.c.bf16 %v514, %v514
    %v555 = vpack.c.bf16 %v516, %v516
    %v556 = vpack.c.bf16 %v447, %v447
    %v557 = vpack.c.bf16 %v449, %v449
    %v558 = vpack.c.bf16 %v520, %v520
    %v559 = vpack.c.bf16 %v522, %v522
    %v560 = vpack.c.bf16 %v451, %v451
    %v561 = vpack.c.bf16 %v453, %v453
    %v562 = vpack.c.bf16 %v524, %v524
    %v563 = vpack.c.bf16 %v526, %v526
    %v564 = vpack.c.bf16 %v457, %v457
    %v565 = vpack.c.bf16 %v459, %v459
    %v566 = vpack.c.bf16 %v530, %v530
    %v567 = vpack.c.bf16 %v532, %v532
    %v568 = vpack.c.bf16 %v461, %v461
    %v569 = vpack.c.bf16 %v463, %v463
    %v570 = vpack.c.bf16 %v534, %v534
    %v571 = vpack.c.bf16 %v536, %v536
    %v572 = vpack.c.bf16 %v467, %v467
    %v573 = vpack.c.bf16 %v469, %v469
    %v574 = vpack.c.bf16 %v540, %v540
    %v575 = vpack.c.bf16 %v542, %v542
    %v576 = vpack.c.bf16 %v471, %v471
    %v577 = vpack.c.bf16 %v473, %v473
    %v578 = vpack.c.bf16 %v544, %v544
    %v579 = vpack.c.bf16 %v546, %v546
    %v612 = vunpack.c.l.b16 %v548
    %v613 = vunpack.c.l.b16 %v549
    %v614 = vunpack.c.l.b16 %v550
    %v615 = vunpack.c.l.b16 %v551
    %v616 = vunpack.c.l.b16 %v552
    %v617 = vunpack.c.l.b16 %v553
    %v618 = vunpack.c.l.b16 %v554
    %v619 = vunpack.c.l.b16 %v555
    %v620 = vunpack.c.l.b16 %v556
    %v621 = vunpack.c.l.b16 %v557
    %v622 = vunpack.c.l.b16 %v558
    %v623 = vunpack.c.l.b16 %v559
    %v624 = vunpack.c.l.b16 %v560
    %v625 = vunpack.c.l.b16 %v561
    %v626 = vunpack.c.l.b16 %v562
    %v627 = vunpack.c.l.b16 %v563
    %v628 = vunpack.c.l.b16 %v564
    %v629 = vunpack.c.l.b16 %v565
    %v630 = vunpack.c.l.b16 %v566
    %v631 = vunpack.c.l.b16 %v567
    %v632 = vunpack.c.l.b16 %v568
    %v633 = vunpack.c.l.b16 %v569
    %v634 = vunpack.c.l.b16 %v570
    %v635 = vunpack.c.l.b16 %v571
    %v636 = vunpack.c.l.b16 %v572
    %v637 = vunpack.c.l.b16 %v573
    %v638 = vunpack.c.l.b16 %v574
    %v639 = vunpack.c.l.b16 %v575
    %v640 = vunpack.c.l.b16 %v576
    %v641 = vunpack.c.l.b16 %v577
    %v642 = vunpack.c.l.b16 %v578
    %v643 = vunpack.c.l.b16 %v579
    %v644 = vpack.c.b16 %v613, %v612
    %v645 = vpack.c.b16 %v615, %v614
    %v646 = vpack.c.b16 %v617, %v616
    %v647 = vpack.c.b16 %v619, %v618
    %v648 = vpack.c.b16 %v621, %v620
    %v649 = vpack.c.b16 %v623, %v622
    %v650 = vpack.c.b16 %v625, %v624
    %v651 = vpack.c.b16 %v627, %v626
    %v652 = vpack.c.b16 %v629, %v628
    %v653 = vpack.c.b16 %v631, %v630
    %v654 = vpack.c.b16 %v633, %v632
    %v655 = vpack.c.b16 %v635, %v634
    %v656 = vpack.c.b16 %v637, %v636
    %v657 = vpack.c.b16 %v639, %v638
    %v658 = vpack.c.b16 %v641, %v640
    %v659 = vpack.c.b16 %v643, %v642
    %676 = vst [vmem:[#allocation2] sm:$0xff] %v644
    %677 = vst [vmem:[#allocation2 + $0x8] sm:$0xff] %v645
    %678 = vst [vmem:[#allocation2 + $0x10] sm:$0xff] %v646
    %679 = vst [vmem:[#allocation2 + $0x18] sm:$0xff] %v647
    %680 = vst [vmem:[#allocation2 + $0x20] sm:$0xff] %v648
    %681 = vst [vmem:[#allocation2 + $0x28] sm:$0xff] %v649
    %682 = vst [vmem:[#allocation2 + $0x30] sm:$0xff] %v650
    %683 = vst [vmem:[#allocation2 + $0x38] sm:$0xff] %v651
    %684 = vst [vmem:[#allocation2 + $0x40] sm:$0xff] %v652
    %685 = vst [vmem:[#allocation2 + $0x48] sm:$0xff] %v653
    %686 = vst [vmem:[#allocation2 + $0x50] sm:$0xff] %v654
    %687 = vst [vmem:[#allocation2 + $0x58] sm:$0xff] %v655
    %688 = vst [vmem:[#allocation2 + $0x60] sm:$0xff] %v656
    %689 = vst [vmem:[#allocation2 + $0x68] sm:$0xff] %v657
    %690 = vst [vmem:[#allocation2 + $0x70] sm:$0xff] %v658
    %691 = vst [vmem:[#allocation2 + $0x78] sm:$0xff] %v659
    %v692 = vld [vmem:[#allocation9] sm:$0xff]
    %v693 = vld [vmem:[#allocation9 + $0x8] sm:$0xff]
    %v694 = vld [vmem:[#allocation9 + $0x10] sm:$0xff]
    %v695 = vld [vmem:[#allocation9 + $0x18] sm:$0xff]
    %v696 = vld [vmem:[#allocation9 + $0x20] sm:$0xff]
    %v697 = vld [vmem:[#allocation9 + $0x28] sm:$0xff]
    %v698 = vld [vmem:[#allocation9 + $0x30] sm:$0xff]
    %v699 = vld [vmem:[#allocation9 + $0x38] sm:$0xff]
    %v700 = vld [vmem:[#allocation9 + $0x40] sm:$0xff]
    %v701 = vld [vmem:[#allocation9 + $0x48] sm:$0xff]
    %v702 = vld [vmem:[#allocation9 + $0x50] sm:$0xff]
    %v703 = vld [vmem:[#allocation9 + $0x58] sm:$0xff]
    %v704 = vld [vmem:[#allocation9 + $0x60] sm:$0xff]
    %v705 = vld [vmem:[#allocation9 + $0x68] sm:$0xff]
    %v706 = vld [vmem:[#allocation9 + $0x70] sm:$0xff]
    %v707 = vld [vmem:[#allocation9 + $0x78] sm:$0xff]
    %v708 = vld [vmem:[#allocation9 + $0x80] sm:$0xff]
    %v709 = vld [vmem:[#allocation9 + $0x88] sm:$0xff]
    %v710 = vld [vmem:[#allocation9 + $0x90] sm:$0xff]
    %v711 = vld [vmem:[#allocation9 + $0x98] sm:$0xff]
    %v712 = vld [vmem:[#allocation9 + $0xa0] sm:$0xff]
    %v713 = vld [vmem:[#allocation9 + $0xa8] sm:$0xff]
    %v714 = vld [vmem:[#allocation9 + $0xb0] sm:$0xff]
    %v715 = vld [vmem:[#allocation9 + $0xb8] sm:$0xff]
    %v716 = vld [vmem:[#allocation9 + $0xc0] sm:$0xff]
    %v717 = vld [vmem:[#allocation9 + $0xc8] sm:$0xff]
    %v718 = vld [vmem:[#allocation9 + $0xd0] sm:$0xff]
    %v719 = vld [vmem:[#allocation9 + $0xd8] sm:$0xff]
    %v720 = vld [vmem:[#allocation9 + $0xe0] sm:$0xff]
    %v721 = vld [vmem:[#allocation9 + $0xe8] sm:$0xff]
    %v722 = vld [vmem:[#allocation9 + $0xf0] sm:$0xff]
    %v723 = vld [vmem:[#allocation9 + $0xf8] sm:$0xff]
    %v724 = vld [vmem:[#allocation2] sm:$0xff]
    %v725 = vld [vmem:[#allocation2 + $0x8] sm:$0xff]
    %v726 = vunpack.c.l.bf16 %v724
    %v727 = vunpack.c.h.bf16 %v724
    %v728 = vunpack.c.l.bf16 %v725
    %v729 = vunpack.c.h.bf16 %v725
    %v762 = vunpack.c.l.b16 %v692
    %v763 = vunpack.c.h.b16 %v692
    %v764 = vunpack.c.l.b16 %v693
    %v765 = vunpack.c.h.b16 %v693
    %v766 = vunpack.c.l.b16 %v694
    %v767 = vunpack.c.h.b16 %v694
    %v768 = vunpack.c.l.b16 %v695
    %v769 = vunpack.c.h.b16 %v695
    %v770 = vunpack.c.l.b16 %v696
    %v771 = vunpack.c.h.b16 %v696
    %v772 = vunpack.c.l.b16 %v697
    %v773 = vunpack.c.h.b16 %v697
    %v774 = vunpack.c.l.b16 %v698
    %v775 = vunpack.c.h.b16 %v698
    %v776 = vunpack.c.l.b16 %v699
    %v777 = vunpack.c.h.b16 %v699
    %v778 = vunpack.c.l.b16 %v700
    %v779 = vunpack.c.h.b16 %v700
    %v780 = vunpack.c.l.b16 %v701
    %v781 = vunpack.c.h.b16 %v701
    %v782 = vunpack.c.l.b16 %v702
    %v783 = vunpack.c.h.b16 %v702
    %v784 = vunpack.c.l.b16 %v703
    %v785 = vunpack.c.h.b16 %v703
    %v786 = vunpack.c.l.b16 %v704
    %v787 = vunpack.c.h.b16 %v704
    %v788 = vunpack.c.l.b16 %v705
    %v789 = vunpack.c.h.b16 %v705
    %v790 = vunpack.c.l.b16 %v706
    %v791 = vunpack.c.h.b16 %v706
    %v792 = vunpack.c.l.b16 %v707
    %v793 = vunpack.c.h.b16 %v707
    %v794 = vunpack.c.l.b16 %v708
    %v795 = vunpack.c.h.b16 %v708
    %v796 = vunpack.c.l.b16 %v709
    %v797 = vunpack.c.h.b16 %v709
    %v798 = vunpack.c.l.b16 %v710
    %v799 = vunpack.c.h.b16 %v710
    %v800 = vunpack.c.l.b16 %v711
    %v801 = vunpack.c.h.b16 %v711
    %v802 = vunpack.c.l.b16 %v712
    %v803 = vunpack.c.h.b16 %v712
    %v804 = vunpack.c.l.b16 %v713
    %v805 = vunpack.c.h.b16 %v713
    %v806 = vunpack.c.l.b16 %v714
    %v807 = vunpack.c.h.b16 %v714
    %v808 = vunpack.c.l.b16 %v715
    %v809 = vunpack.c.h.b16 %v715
    %v810 = vunpack.c.l.b16 %v716
    %v811 = vunpack.c.h.b16 %v716
    %v812 = vunpack.c.l.b16 %v717
    %v813 = vunpack.c.h.b16 %v717
    %v814 = vunpack.c.l.b16 %v718
    %v815 = vunpack.c.h.b16 %v718
    %v816 = vunpack.c.l.b16 %v719
    %v817 = vunpack.c.h.b16 %v719
    %v818 = vunpack.c.l.b16 %v720
    %v819 = vunpack.c.h.b16 %v720
    %v820 = vunpack.c.l.b16 %v721
    %v821 = vunpack.c.h.b16 %v721
    %v822 = vunpack.c.l.b16 %v722
    %v823 = vunpack.c.h.b16 %v722
    %v824 = vunpack.c.l.b16 %v723
    %v825 = vunpack.c.h.b16 %v723
    %v826 = vpack.c.b16 %v766, %v762
    %v827 = vpack.c.b16 %v767, %v763
    %v828 = vpack.c.b16 %v768, %v764
    %v829 = vpack.c.b16 %v769, %v765
    %v830 = vpack.c.b16 %v774, %v770
    %v831 = vpack.c.b16 %v775, %v771
    %v832 = vpack.c.b16 %v776, %v772
    %v833 = vpack.c.b16 %v777, %v773
    %v834 = vpack.c.b16 %v782, %v778
    %v835 = vpack.c.b16 %v783, %v779
    %v836 = vpack.c.b16 %v784, %v780
    %v837 = vpack.c.b16 %v785, %v781
    %v838 = vpack.c.b16 %v790, %v786
    %v839 = vpack.c.b16 %v791, %v787
    %v840 = vpack.c.b16 %v792, %v788
    %v841 = vpack.c.b16 %v793, %v789
    %v842 = vpack.c.b16 %v798, %v794
    %v843 = vpack.c.b16 %v799, %v795
    %v844 = vpack.c.b16 %v800, %v796
    %v845 = vpack.c.b16 %v801, %v797
    %v846 = vpack.c.b16 %v806, %v802
    %v847 = vpack.c.b16 %v807, %v803
    %v848 = vpack.c.b16 %v808, %v804
    %v849 = vpack.c.b16 %v809, %v805
    %v850 = vpack.c.b16 %v814, %v810
    %v851 = vpack.c.b16 %v815, %v811
    %v852 = vpack.c.b16 %v816, %v812
    %v853 = vpack.c.b16 %v817, %v813
    %v854 = vpack.c.b16 %v822, %v818
    %v855 = vpack.c.b16 %v823, %v819
    %v856 = vpack.c.b16 %v824, %v820
    %v857 = vpack.c.b16 %v825, %v821
    %890 = vmatprep.subr.bf16.mxu0 %v827
    %891 = vmatpush1.bf16.msra.mxu0 %v826
    %892 = vmatprep.subr.bf16.mxu0 %v831
    %893 = vmatpush1.bf16.msra.mxu0 %v830
    %894 = vmatprep.subr.bf16.mxu0 %v835
    %895 = vmatpush1.bf16.msra.mxu0 %v834
    %896 = vmatprep.subr.bf16.mxu0 %v839
    %897 = vmatpush1.bf16.msra.mxu0 %v838
    %898 = vmatprep.subr.bf16.mxu0 %v843
    %899 = vmatpush1.bf16.msra.mxu0 %v842
    %900 = vmatprep.subr.bf16.mxu0 %v847
    %901 = vmatpush1.bf16.msra.mxu0 %v846
    %902 = vmatprep.subr.bf16.mxu0 %v851
    %903 = vmatpush1.bf16.msra.mxu0 %v850
    %904 = vmatprep.subr.bf16.mxu0 %v855
    %905 = vmatpush1.bf16.msra.mxu0 %v854
    %906 = vmatprep.subr.bf16.mxu0 0
    %907 = vmatpush1.bf16.msra.mxu0 0
    %908 = vmatprep.subr.bf16.mxu0 0
    %909 = vmatpush1.bf16.msra.mxu0 0
    %910 = vmatprep.subr.bf16.mxu0 0
    %911 = vmatpush1.bf16.msra.mxu0 0
    %912 = vmatprep.subr.bf16.mxu0 0
    %913 = vmatpush1.bf16.msra.mxu0 0
    %914 = vmatprep.subr.bf16.mxu0 0
    %915 = vmatpush1.bf16.msra.mxu0 0
    %916 = vmatprep.subr.bf16.mxu0 0
    %917 = vmatpush1.bf16.msra.mxu0 0
    %918 = vmatprep.subr.bf16.mxu0 0
    %919 = vmatpush1.bf16.msra.mxu0 0
    %920 = vmatprep.subr.bf16.mxu0 0
    %921 = vmatpush1.bf16.msra.mxu0 0
    %922 = vmatprep.mubr.bf16.mxu0 0
    %923 = vmatmul.mubr.bf16.gmra.mrb[0].mxu0 0
    %v924 = vpop.f32.mrb[0].mxu0
    %v925 = vadd.f32 %v726, %v924
    %v926 = vpop.f32.mrb[0].mxu0
    %v927 = vadd.f32 %v727, %v926
    %v928 = vpop.f32.mrb[0].mxu0
    %v929 = vpop.f32.mrb[0].mxu0
    %930 = vdwg.mxu0
    %931 = vmatprep.subr.bf16.mxu0 %v829
    %932 = vmatpush1.bf16.msra.mxu0 %v828
    %933 = vmatprep.subr.bf16.mxu0 %v833
    %934 = vmatpush1.bf16.msra.mxu0 %v832
    %935 = vmatprep.subr.bf16.mxu0 %v837
    %936 = vmatpush1.bf16.msra.mxu0 %v836
    %937 = vmatprep.subr.bf16.mxu0 %v841
    %938 = vmatpush1.bf16.msra.mxu0 %v840
    %939 = vmatprep.subr.bf16.mxu0 %v845
    %940 = vmatpush1.bf16.msra.mxu0 %v844
    %941 = vmatprep.subr.bf16.mxu0 %v849
    %942 = vmatpush1.bf16.msra.mxu0 %v848
    %943 = vmatprep.subr.bf16.mxu0 %v853
    %944 = vmatpush1.bf16.msra.mxu0 %v852
    %945 = vmatprep.subr.bf16.mxu0 %v857
    %946 = vmatpush1.bf16.msra.mxu0 %v856
    %947 = vmatprep.subr.bf16.mxu0 0
    %948 = vmatpush1.bf16.msra.mxu0 0
    %949 = vmatprep.subr.bf16.mxu0 0
    %950 = vmatpush1.bf16.msra.mxu0 0
    %951 = vmatprep.subr.bf16.mxu0 0
    %952 = vmatpush1.bf16.msra.mxu0 0
    %953 = vmatprep.subr.bf16.mxu0 0
    %954 = vmatpush1.bf16.msra.mxu0 0
    %955 = vmatprep.subr.bf16.mxu0 0
    %956 = vmatpush1.bf16.msra.mxu0 0
    %957 = vmatprep.subr.bf16.mxu0 0
    %958 = vmatpush1.bf16.msra.mxu0 0
    %959 = vmatprep.subr.bf16.mxu0 0
    %960 = vmatpush1.bf16.msra.mxu0 0
    %961 = vmatprep.subr.bf16.mxu0 0
    %962 = vmatpush1.bf16.msra.mxu0 0
    %963 = vmatprep.mubr.bf16.mxu0 0
    %964 = vmatmul.mubr.bf16.gmra.mrb[0].mxu0 0
    %v965 = vpop.f32.mrb[0].mxu0
    %v966 = vadd.f32 %v728, %v965
    %v967 = vpop.f32.mrb[0].mxu0
    %v968 = vadd.f32 %v729, %v967
    %v969 = vpop.f32.mrb[0].mxu0
    %v970 = vpop.f32.mrb[0].mxu0
    %971 = vdwg.mxu0
    %v972 = vpack.c.bf16 %v925, %v925
    %v973 = vpack.c.bf16 %v927, %v927
    %v974 = vpack.c.bf16 %v966, %v966
    %v975 = vpack.c.bf16 %v968, %v968
    %v976 = vxor.u32 %v972, 2147516416
    %v978 = vmul.bf16 %v976, 1069105081
    %v979 = vpow.bf16.pop %v978
    %v980 = vadd.bf16 %v979, 1065369472
    %v981 = vrcp.bf16.pop %v980
    %v982 = vmul.bf16 1065369472, %v981
    %v983 = vxor.u32 %v973, 2147516416
    %v985 = vmul.bf16 %v983, 1069105081
    %v986 = vpow.bf16.pop %v985
    %v987 = vadd.bf16 %v986, 1065369472
    %v988 = vrcp.bf16.pop %v987
    %v989 = vmul.bf16 1065369472, %v988
    %v990 = vtanh.bf16.pop %v974
    %v991 = vxor.u32 %v975, 2147516416
    %v993 = vmul.bf16 %v991, 1069105081
    %v994 = vpow.bf16.pop %v993
    %v995 = vadd.bf16 %v994, 1065369472
    %v996 = vrcp.bf16.pop %v995
    %v997 = vmul.bf16 1065369472, %v996
    %v998 = vunpack.c.l.bf16 %v989
    %v999 = vmul.f32 %v998, 0.0
    %v1000 = vmul.bf16 %v982, %v990
    %v1001 = vunpack.c.l.bf16 %v1000
    %v1002 = vadd.f32 %v999, %v1001
    %v1003 = vpack.c.bf16 %v1002, %v1002
    %v1004 = vtanh.bf16.pop %v1003
    %v1005 = vmul.bf16 %v997, %v1004
    %1006 = vst [vmem:[#allocation3] sm:$0xf] %v1005
    %s1007 = scalar_lea.vmem [#allocation2], 16
    %v1008 = vld [vmem:[%s1007] sm:$0xff]
    %v1009 = vld [vmem:[%s1007 + $0x8] sm:$0xff]
    %v1010 = vunpack.c.l.bf16 %v1008
    %v1011 = vunpack.c.h.bf16 %v1008
    %v1012 = vunpack.c.l.bf16 %v1009
    %v1013 = vunpack.c.h.bf16 %v1009
    %1014 = vmatprep.subr.bf16.mxu0 %v827
    %1015 = vmatpush1.bf16.msra.mxu0 %v826
    %1016 = vmatprep.subr.bf16.mxu0 %v831
    %1017 = vmatpush1.bf16.msra.mxu0 %v830
    %1018 = vmatprep.subr.bf16.mxu0 %v835
    %1019 = vmatpush1.bf16.msra.mxu0 %v834
    %1020 = vmatprep.subr.bf16.mxu0 %v839
    %1021 = vmatpush1.bf16.msra.mxu0 %v838
    %1022 = vmatprep.subr.bf16.mxu0 %v843
    %1023 = vmatpush1.bf16.msra.mxu0 %v842
    %1024 = vmatprep.subr.bf16.mxu0 %v847
    %1025 = vmatpush1.bf16.msra.mxu0 %v846
    %1026 = vmatprep.subr.bf16.mxu0 %v851
    %1027 = vmatpush1.bf16.msra.mxu0 %v850
    %1028 = vmatprep.subr.bf16.mxu0 %v855
    %1029 = vmatpush1.bf16.msra.mxu0 %v854
    %1030 = vmatprep.subr.bf16.mxu0 0
    %1031 = vmatpush1.bf16.msra.mxu0 0
    %1032 = vmatprep.subr.bf16.mxu0 0
    %1033 = vmatpush1.bf16.msra.mxu0 0
    %1034 = vmatprep.subr.bf16.mxu0 0
    %1035 = vmatpush1.bf16.msra.mxu0 0
    %1036 = vmatprep.subr.bf16.mxu0 0
    %1037 = vmatpush1.bf16.msra.mxu0 0
    %1038 = vmatprep.subr.bf16.mxu0 0
    %1039 = vmatpush1.bf16.msra.mxu0 0
    %1040 = vmatprep.subr.bf16.mxu0 0
    %1041 = vmatpush1.bf16.msra.mxu0 0
    %1042 = vmatprep.subr.bf16.mxu0 0
    %1043 = vmatpush1.bf16.msra.mxu0 0
    %1044 = vmatprep.subr.bf16.mxu0 0
    %1045 = vmatpush1.bf16.msra.mxu0 0
    %1046 = vmatprep.mubr.bf16.mxu0 0
    %1047 = vmatmul.mubr.bf16.gmra.mrb[0].mxu0 %v1005
    %v1048 = vpop.f32.mrb[0].mxu0
    %v1049 = vadd.f32 %v1010, %v1048
    %v1050 = vpop.f32.mrb[0].mxu0
    %v1051 = vadd.f32 %v1011, %v1050
    %v1052 = vpop.f32.mrb[0].mxu0
    %v1053 = vpop.f32.mrb[0].mxu0
    %1054 = vdwg.mxu0
    %1055 = vmatprep.subr.bf16.mxu0 %v829
    %1056 = vmatpush1.bf16.msra.mxu0 %v828
    %1057 = vmatprep.subr.bf16.mxu0 %v833
    %1058 = vmatpush1.bf16.msra.mxu0 %v832
    %1059 = vmatprep.subr.bf16.mxu0 %v837
    %1060 = vmatpush1.bf16.msra.mxu0 %v836
    %1061 = vmatprep.subr.bf16.mxu0 %v841
    %1062 = vmatpush1.bf16.msra.mxu0 %v840
    %1063 = vmatprep.subr.bf16.mxu0 %v845
    %1064 = vmatpush1.bf16.msra.mxu0 %v844
    %1065 = vmatprep.subr.bf16.mxu0 %v849
    %1066 = vmatpush1.bf16.msra.mxu0 %v848
    %1067 = vmatprep.subr.bf16.mxu0 %v853
    %1068 = vmatpush1.bf16.msra.mxu0 %v852
    %1069 = vmatprep.subr.bf16.mxu0 %v857
    %1070 = vmatpush1.bf16.msra.mxu0 %v856
    %1071 = vmatprep.subr.bf16.mxu0 0
    %1072 = vmatpush1.bf16.msra.mxu0 0
    %1073 = vmatprep.subr.bf16.mxu0 0
    %1074 = vmatpush1.bf16.msra.mxu0 0
    %1075 = vmatprep.subr.bf16.mxu0 0
    %1076 = vmatpush1.bf16.msra.mxu0 0
    %1077 = vmatprep.subr.bf16.mxu0 0
    %1078 = vmatpush1.bf16.msra.mxu0 0
    %1079 = vmatprep.subr.bf16.mxu0 0
    %1080 = vmatpush1.bf16.msra.mxu0 0
    %1081 = vmatprep.subr.bf16.mxu0 0
    %1082 = vmatpush1.bf16.msra.mxu0 0
    %1083 = vmatprep.subr.bf16.mxu0 0
    %1084 = vmatpush1.bf16.msra.mxu0 0
    %1085 = vmatprep.subr.bf16.mxu0 0
    %1086 = vmatpush1.bf16.msra.mxu0 0
    %1087 = vmatprep.mubr.bf16.mxu0 0
    %1088 = vmatmul.mubr.bf16.gmra.mrb[0].mxu0 %v1005
    %v1089 = vpop.f32.mrb[0].mxu0
    %v1090 = vadd.f32 %v1012, %v1089
    %v1091 = vpop.f32.mrb[0].mxu0
    %v1092 = vadd.f32 %v1013, %v1091
    %v1093 = vpop.f32.mrb[0].mxu0
    %v1094 = vpop.f32.mrb[0].mxu0
    %1095 = vdwg.mxu0
    %v1096 = vpack.c.bf16 %v1049, %v1049
    %v1097 = vpack.c.bf16 %v1051, %v1051
    %v1098 = vpack.c.bf16 %v1090, %v1090
    %v1099 = vpack.c.bf16 %v1092, %v1092
    %v1100 = vxor.u32 %v1096, 2147516416
    %v1102 = vmul.bf16 %v1100, 1069105081
    %v1103 = vpow.bf16.pop %v1102
    %v1104 = vadd.bf16 %v1103, 1065369472
    %v1105 = vrcp.bf16.pop %v1104
    %v1106 = vmul.bf16 1065369472, %v1105
    %v1107 = vxor.u32 %v1097, 2147516416
    %v1109 = vmul.bf16 %v1107, 1069105081
    %v1110 = vpow.bf16.pop %v1109
    %v1111 = vadd.bf16 %v1110, 1065369472
    %v1112 = vrcp.bf16.pop %v1111
    %v1113 = vmul.bf16 1065369472, %v1112
    %v1114 = vtanh.bf16.pop %v1098
    %v1115 = vxor.u32 %v1099, 2147516416
    %v1117 = vmul.bf16 %v1115, 1069105081
    %v1118 = vpow.bf16.pop %v1117
    %v1119 = vadd.bf16 %v1118, 1065369472
    %v1120 = vrcp.bf16.pop %v1119
    %v1121 = vmul.bf16 1065369472, %v1120
    %v1122 = vunpack.c.l.bf16 %v1113
    %v1123 = vmul.f32 %v1122, %v1002
    %v1124 = vmul.bf16 %v1106, %v1114
    %v1125 = vunpack.c.l.bf16 %v1124
    %v1126 = vadd.f32 %v1123, %v1125
    %v1127 = vpack.c.bf16 %v1126, %v1126
    %v1128 = vtanh.bf16.pop %v1127
    %v1129 = vmul.bf16 %v1121, %v1128
    %s1130 = scalar_lea.vmem [#allocation3], 4
    %1131 = vst [vmem:[%s1130] sm:$0xf] %v1129
    %s1132 = scalar_lea.vmem [#allocation2], 32
    %v1133 = vld [vmem:[%s1132] sm:$0xff]
    %v1134 = vld [vmem:[%s1132 + $0x8] sm:$0xff]
    %v1135 = vunpack.c.l.bf16 %v1133
    %v1136 = vunpack.c.h.bf16 %v1133
    %v1137 = vunpack.c.l.bf16 %v1134
    %v1138 = vunpack.c.h.bf16 %v1134
    %1139 = vmatprep.subr.bf16.mxu0 %v827
    %1140 = vmatpush1.bf16.msra.mxu0 %v826
    %1141 = vmatprep.subr.bf16.mxu0 %v831
    %1142 = vmatpush1.bf16.msra.mxu0 %v830
    %1143 = vmatprep.subr.bf16.mxu0 %v835
    %1144 = vmatpush1.bf16.msra.mxu0 %v834
    %1145 = vmatprep.subr.bf16.mxu0 %v839
    %1146 = vmatpush1.bf16.msra.mxu0 %v838
    %1147 = vmatprep.subr.bf16.mxu0 %v843
    %1148 = vmatpush1.bf16.msra.mxu0 %v842
    %1149 = vmatprep.subr.bf16.mxu0 %v847
    %1150 = vmatpush1.bf16.msra.mxu0 %v846
    %1151 = vmatprep.subr.bf16.mxu0 %v851
    %1152 = vmatpush1.bf16.msra.mxu0 %v850
    %1153 = vmatprep.subr.bf16.mxu0 %v855
    %1154 = vmatpush1.bf16.msra.mxu0 %v854
    %1155 = vmatprep.subr.bf16.mxu0 0
    %1156 = vmatpush1.bf16.msra.mxu0 0
    %1157 = vmatprep.subr.bf16.mxu0 0
    %1158 = vmatpush1.bf16.msra.mxu0 0
    %1159 = vmatprep.subr.bf16.mxu0 0
    %1160 = vmatpush1.bf16.msra.mxu0 0
    %1161 = vmatprep.subr.bf16.mxu0 0
    %1162 = vmatpush1.bf16.msra.mxu0 0
    %1163 = vmatprep.subr.bf16.mxu0 0
    %1164 = vmatpush1.bf16.msra.mxu0 0
    %1165 = vmatprep.subr.bf16.mxu0 0
    %1166 = vmatpush1.bf16.msra.mxu0 0
    %1167 = vmatprep.subr.bf16.mxu0 0
    %1168 = vmatpush1.bf16.msra.mxu0 0
    %1169 = vmatprep.subr.bf16.mxu0 0
    %1170 = vmatpush1.bf16.msra.mxu0 0
    %1171 = vmatprep.mubr.bf16.mxu0 0
    %1172 = vmatmul.mubr.bf16.gmra.mrb[0].mxu0 %v1129
    %v1173 = vpop.f32.mrb[0].mxu0
    %v1174 = vadd.f32 %v1135, %v1173
    %v1175 = vpop.f32.mrb[0].mxu0
    %v1176 = vadd.f32 %v1136, %v1175
    %v1177 = vpop.f32.mrb[0].mxu0
    %v1178 = vpop.f32.mrb[0].mxu0
    %1179 = vdwg.mxu0
    %1180 = vmatprep.subr.bf16.mxu0 %v829
    %1181 = vmatpush1.bf16.msra.mxu0 %v828
    %1182 = vmatprep.subr.bf16.mxu0 %v833
    %1183 = vmatpush1.bf16.msra.mxu0 %v832
    %1184 = vmatprep.subr.bf16.mxu0 %v837
    %1185 = vmatpush1.bf16.msra.mxu0 %v836
    %1186 = vmatprep.subr.bf16.mxu0 %v841
    %1187 = vmatpush1.bf16.msra.mxu0 %v840
    %1188 = vmatprep.subr.bf16.mxu0 %v845
    %1189 = vmatpush1.bf16.msra.mxu0 %v844
    %1190 = vmatprep.subr.bf16.mxu0 %v849
    %1191 = vmatpush1.bf16.msra.mxu0 %v848
    %1192 = vmatprep.subr.bf16.mxu0 %v853
    %1193 = vmatpush1.bf16.msra.mxu0 %v852
    %1194 = vmatprep.subr.bf16.mxu0 %v857
    %1195 = vmatpush1.bf16.msra.mxu0 %v856
    %1196 = vmatprep.subr.bf16.mxu0 0
    %1197 = vmatpush1.bf16.msra.mxu0 0
    %1198 = vmatprep.subr.bf16.mxu0 0
    %1199 = vmatpush1.bf16.msra.mxu0 0
    %1200 = vmatprep.subr.bf16.mxu0 0
    %1201 = vmatpush1.bf16.msra.mxu0 0
    %1202 = vmatprep.subr.bf16.mxu0 0
    %1203 = vmatpush1.bf16.msra.mxu0 0
    %1204 = vmatprep.subr.bf16.mxu0 0
    %1205 = vmatpush1.bf16.msra.mxu0 0
    %1206 = vmatprep.subr.bf16.mxu0 0
    %1207 = vmatpush1.bf16.msra.mxu0 0
    %1208 = vmatprep.subr.bf16.mxu0 0
    %1209 = vmatpush1.bf16.msra.mxu0 0
    %1210 = vmatprep.subr.bf16.mxu0 0
    %1211 = vmatpush1.bf16.msra.mxu0 0
    %1212 = vmatprep.mubr.bf16.mxu0 0
    %1213 = vmatmul.mubr.bf16.gmra.mrb[0].mxu0 %v1129
    %v1214 = vpop.f32.mrb[0].mxu0
    %v1215 = vadd.f32 %v1137, %v1214
    %v1216 = vpop.f32.mrb[0].mxu0
    %v1217 = vadd.f32 %v1138, %v1216
    %v1218 = vpop.f32.mrb[0].mxu0
    %v1219 = vpop.f32.mrb[0].mxu0
    %1220 = vdwg.mxu0
    %v1221 = vpack.c.bf16 %v1174, %v1174
    %v1222 = vpack.c.bf16 %v1176, %v1176
    %v1223 = vpack.c.bf16 %v1215, %v1215
    %v1224 = vpack.c.bf16 %v1217, %v1217
    %v1225 = vxor.u32 %v1221, 2147516416
    %v1227 = vmul.bf16 %v1225, 1069105081
    %v1228 = vpow.bf16.pop %v1227
    %v1229 = vadd.bf16 %v1228, 1065369472
    %v1230 = vrcp.bf16.pop %v1229
    %v1231 = vmul.bf16 1065369472, %v1230
    %v1232 = vxor.u32 %v1222, 2147516416
    %v1234 = vmul.bf16 %v1232, 1069105081
    %v1235 = vpow.bf16.pop %v1234
    %v1236 = vadd.bf16 %v1235, 1065369472
    %v1237 = vrcp.bf16.pop %v1236
    %v1238 = vmul.bf16 1065369472, %v1237
    %v1239 = vtanh.bf16.pop %v1223
    %v1240 = vxor.u32 %v1224, 2147516416
    %v1242 = vmul.bf16 %v1240, 1069105081
    %v1243 = vpow.bf16.pop %v1242
    %v1244 = vadd.bf16 %v1243, 1065369472
    %v1245 = vrcp.bf16.pop %v1244
    %v1246 = vmul.bf16 1065369472, %v1245
    %v1247 = vunpack.c.l.bf16 %v1238
    %v1248 = vmul.f32 %v1247, %v1126
    %v1249 = vmul.bf16 %v1231, %v1239
    %v1250 = vunpack.c.l.bf16 %v1249
    %v1251 = vadd.f32 %v1248, %v1250
    %v1252 = vpack.c.bf16 %v1251, %v1251
    %v1253 = vtanh.bf16.pop %v1252
    %v1254 = vmul.bf16 %v1246, %v1253
    %s1255 = scalar_lea.vmem [#allocation3], 8
    %1256 = vst [vmem:[%s1255] sm:$0xf] %v1254
    %s1257 = scalar_lea.vmem [#allocation2], 48
    %v1258 = vld [vmem:[%s1257] sm:$0xff]
    %v1259 = vld [vmem:[%s1257 + $0x8] sm:$0xff]
    %v1260 = vunpack.c.l.bf16 %v1258
    %v1261 = vunpack.c.h.bf16 %v1258
    %v1262 = vunpack.c.l.bf16 %v1259
    %v1263 = vunpack.c.h.bf16 %v1259
    %1264 = vmatprep.subr.bf16.mxu0 %v827
    %1265 = vmatpush1.bf16.msra.mxu0 %v826
    %1266 = vmatprep.subr.bf16.mxu0 %v831
    %1267 = vmatpush1.bf16.msra.mxu0 %v830
    %1268 = vmatprep.subr.bf16.mxu0 %v835
    %1269 = vmatpush1.bf16.msra.mxu0 %v834
    %1270 = vmatprep.subr.bf16.mxu0 %v839
    %1271 = vmatpush1.bf16.msra.mxu0 %v838
    %1272 = vmatprep.subr.bf16.mxu0 %v843
    %1273 = vmatpush1.bf16.msra.mxu0 %v842
    %1274 = vmatprep.subr.bf16.mxu0 %v847
    %1275 = vmatpush1.bf16.msra.mxu0 %v846
    %1276 = vmatprep.subr.bf16.mxu0 %v851
    %1277 = vmatpush1.bf16.msra.mxu0 %v850
    %1278 = vmatprep.subr.bf16.mxu0 %v855
    %1279 = vmatpush1.bf16.msra.mxu0 %v854
    %1280 = vmatprep.subr.bf16.mxu0 0
    %1281 = vmatpush1.bf16.msra.mxu0 0
    %1282 = vmatprep.subr.bf16.mxu0 0
    %1283 = vmatpush1.bf16.msra.mxu0 0
    %1284 = vmatprep.subr.bf16.mxu0 0
    %1285 = vmatpush1.bf16.msra.mxu0 0
    %1286 = vmatprep.subr.bf16.mxu0 0
    %1287 = vmatpush1.bf16.msra.mxu0 0
    %1288 = vmatprep.subr.bf16.mxu0 0
    %1289 = vmatpush1.bf16.msra.mxu0 0
    %1290 = vmatprep.subr.bf16.mxu0 0
    %1291 = vmatpush1.bf16.msra.mxu0 0
    %1292 = vmatprep.subr.bf16.mxu0 0
    %1293 = vmatpush1.bf16.msra.mxu0 0
    %1294 = vmatprep.subr.bf16.mxu0 0
    %1295 = vmatpush1.bf16.msra.mxu0 0
    %1296 = vmatprep.mubr.bf16.mxu0 0
    %1297 = vmatmul.mubr.bf16.gmra.mrb[0].mxu0 %v1254
    %v1298 = vpop.f32.mrb[0].mxu0
    %v1299 = vadd.f32 %v1260, %v1298
    %v1300 = vpop.f32.mrb[0].mxu0
    %v1301 = vadd.f32 %v1261, %v1300
    %v1302 = vpop.f32.mrb[0].mxu0
    %v1303 = vpop.f32.mrb[0].mxu0
    %1304 = vdwg.mxu0
    %1305 = vmatprep.subr.bf16.mxu0 %v829
    %1306 = vmatpush1.bf16.msra.mxu0 %v828
    %1307 = vmatprep.subr.bf16.mxu0 %v833
    %1308 = vmatpush1.bf16.msra.mxu0 %v832
    %1309 = vmatprep.subr.bf16.mxu0 %v837
    %1310 = vmatpush1.bf16.msra.mxu0 %v836
    %1311 = vmatprep.subr.bf16.mxu0 %v841
    %1312 = vmatpush1.bf16.msra.mxu0 %v840
    %1313 = vmatprep.subr.bf16.mxu0 %v845
    %1314 = vmatpush1.bf16.msra.mxu0 %v844
    %1315 = vmatprep.subr.bf16.mxu0 %v849
    %1316 = vmatpush1.bf16.msra.mxu0 %v848
    %1317 = vmatprep.subr.bf16.mxu0 %v853
    %1318 = vmatpush1.bf16.msra.mxu0 %v852
    %1319 = vmatprep.subr.bf16.mxu0 %v857
    %1320 = vmatpush1.bf16.msra.mxu0 %v856
    %1321 = vmatprep.subr.bf16.mxu0 0
    %1322 = vmatpush1.bf16.msra.mxu0 0
    %1323 = vmatprep.subr.bf16.mxu0 0
    %1324 = vmatpush1.bf16.msra.mxu0 0
    %1325 = vmatprep.subr.bf16.mxu0 0
    %1326 = vmatpush1.bf16.msra.mxu0 0
    %1327 = vmatprep.subr.bf16.mxu0 0
    %1328 = vmatpush1.bf16.msra.mxu0 0
    %1329 = vmatprep.subr.bf16.mxu0 0
    %1330 = vmatpush1.bf16.msra.mxu0 0
    %1331 = vmatprep.subr.bf16.mxu0 0
    %1332 = vmatpush1.bf16.msra.mxu0 0
    %1333 = vmatprep.subr.bf16.mxu0 0
    %1334 = vmatpush1.bf16.msra.mxu0 0
    %1335 = vmatprep.subr.bf16.mxu0 0
    %1336 = vmatpush1.bf16.msra.mxu0 0
    %1337 = vmatprep.mubr.bf16.mxu0 0
    %1338 = vmatmul.mubr.bf16.gmra.mrb[0].mxu0 %v1254
    %v1339 = vpop.f32.mrb[0].mxu0
    %v1340 = vadd.f32 %v1262, %v1339
    %v1341 = vpop.f32.mrb[0].mxu0
    %v1342 = vadd.f32 %v1263, %v1341
    %v1343 = vpop.f32.mrb[0].mxu0
    %v1344 = vpop.f32.mrb[0].mxu0
    %1345 = vdwg.mxu0
    %v1346 = vpack.c.bf16 %v1299, %v1299
    %v1347 = vpack.c.bf16 %v1301, %v1301
    %v1348 = vpack.c.bf16 %v1340, %v1340
    %v1349 = vpack.c.bf16 %v1342, %v1342
    %v1350 = vxor.u32 %v1346, 2147516416
    %v1352 = vmul.bf16 %v1350, 1069105081
    %v1353 = vpow.bf16.pop %v1352
    %v1354 = vadd.bf16 %v1353, 1065369472
    %v1355 = vrcp.bf16.pop %v1354
    %v1356 = vmul.bf16 1065369472, %v1355
    %v1357 = vxor.u32 %v1347, 2147516416
    %v1359 = vmul.bf16 %v1357, 1069105081
    %v1360 = vpow.bf16.pop %v1359
    %v1361 = vadd.bf16 %v1360, 1065369472
    %v1362 = vrcp.bf16.pop %v1361
    %v1363 = vmul.bf16 1065369472, %v1362
    %v1364 = vtanh.bf16.pop %v1348
    %v1365 = vxor.u32 %v1349, 2147516416
    %v1367 = vmul.bf16 %v1365, 1069105081
    %v1368 = vpow.bf16.pop %v1367
    %v1369 = vadd.bf16 %v1368, 1065369472
    %v1370 = vrcp.bf16.pop %v1369
    %v1371 = vmul.bf16 1065369472, %v1370
    %v1372 = vunpack.c.l.bf16 %v1363
    %v1373 = vmul.f32 %v1372, %v1251
    %v1374 = vmul.bf16 %v1356, %v1364
    %v1375 = vunpack.c.l.bf16 %v1374
    %v1376 = vadd.f32 %v1373, %v1375
    %v1377 = vpack.c.bf16 %v1376, %v1376
    %v1378 = vtanh.bf16.pop %v1377
    %v1379 = vmul.bf16 %v1371, %v1378
    %s1380 = scalar_lea.vmem [#allocation3], 12
    %1381 = vst [vmem:[%s1380] sm:$0xf] %v1379
    %s1382 = scalar_lea.vmem [#allocation2], 64
    %v1383 = vld [vmem:[%s1382] sm:$0xff]
    %v1384 = vld [vmem:[%s1382 + $0x8] sm:$0xff]
    %v1385 = vunpack.c.l.bf16 %v1383
    %v1386 = vunpack.c.h.bf16 %v1383
    %v1387 = vunpack.c.l.bf16 %v1384
    %v1388 = vunpack.c.h.bf16 %v1384
    %1389 = vmatprep.subr.bf16.mxu0 %v827
    %1390 = vmatpush1.bf16.msra.mxu0 %v826
    %1391 = vmatprep.subr.bf16.mxu0 %v831
    %1392 = vmatpush1.bf16.msra.mxu0 %v830
    %1393 = vmatprep.subr.bf16.mxu0 %v835
    %1394 = vmatpush1.bf16.msra.mxu0 %v834
    %1395 = vmatprep.subr.bf16.mxu0 %v839
    %1396 = vmatpush1.bf16.msra.mxu0 %v838
    %1397 = vmatprep.subr.bf16.mxu0 %v843
    %1398 = vmatpush1.bf16.msra.mxu0 %v842
    %1399 = vmatprep.subr.bf16.mxu0 %v847
    %1400 = vmatpush1.bf16.msra.mxu0 %v846
    %1401 = vmatprep.subr.bf16.mxu0 %v851
    %1402 = vmatpush1.bf16.msra.mxu0 %v850
    %1403 = vmatprep.subr.bf16.mxu0 %v855
    %1404 = vmatpush1.bf16.msra.mxu0 %v854
    %1405 = vmatprep.subr.bf16.mxu0 0
    %1406 = vmatpush1.bf16.msra.mxu0 0
    %1407 = vmatprep.subr.bf16.mxu0 0
    %1408 = vmatpush1.bf16.msra.mxu0 0
    %1409 = vmatprep.subr.bf16.mxu0 0
    %1410 = vmatpush1.bf16.msra.mxu0 0
    %1411 = vmatprep.subr.bf16.mxu0 0
    %1412 = vmatpush1.bf16.msra.mxu0 0
    %1413 = vmatprep.subr.bf16.mxu0 0
    %1414 = vmatpush1.bf16.msra.mxu0 0
    %1415 = vmatprep.subr.bf16.mxu0 0
    %1416 = vmatpush1.bf16.msra.mxu0 0
    %1417 = vmatprep.subr.bf16.mxu0 0
    %1418 = vmatpush1.bf16.msra.mxu0 0
    %1419 = vmatprep.subr.bf16.mxu0 0
    %1420 = vmatpush1.bf16.msra.mxu0 0
    %1421 = vmatprep.mubr.bf16.mxu0 0
    %1422 = vmatmul.mubr.bf16.gmra.mrb[0].mxu0 %v1379
    %v1423 = vpop.f32.mrb[0].mxu0
    %v1424 = vadd.f32 %v1385, %v1423
    %v1425 = vpop.f32.mrb[0].mxu0
    %v1426 = vadd.f32 %v1386, %v1425
    %v1427 = vpop.f32.mrb[0].mxu0
    %v1428 = vpop.f32.mrb[0].mxu0
    %1429 = vdwg.mxu0
    %1430 = vmatprep.subr.bf16.mxu0 %v829
    %1431 = vmatpush1.bf16.msra.mxu0 %v828
    %1432 = vmatprep.subr.bf16.mxu0 %v833
    %1433 = vmatpush1.bf16.msra.mxu0 %v832
    %1434 = vmatprep.subr.bf16.mxu0 %v837
    %1435 = vmatpush1.bf16.msra.mxu0 %v836
    %1436 = vmatprep.subr.bf16.mxu0 %v841
    %1437 = vmatpush1.bf16.msra.mxu0 %v840
    %1438 = vmatprep.subr.bf16.mxu0 %v845
    %1439 = vmatpush1.bf16.msra.mxu0 %v844
    %1440 = vmatprep.subr.bf16.mxu0 %v849
    %1441 = vmatpush1.bf16.msra.mxu0 %v848
    %1442 = vmatprep.subr.bf16.mxu0 %v853
    %1443 = vmatpush1.bf16.msra.mxu0 %v852
    %1444 = vmatprep.subr.bf16.mxu0 %v857
    %1445 = vmatpush1.bf16.msra.mxu0 %v856
    %1446 = vmatprep.subr.bf16.mxu0 0
    %1447 = vmatpush1.bf16.msra.mxu0 0
    %1448 = vmatprep.subr.bf16.mxu0 0
    %1449 = vmatpush1.bf16.msra.mxu0 0
    %1450 = vmatprep.subr.bf16.mxu0 0
    %1451 = vmatpush1.bf16.msra.mxu0 0
    %1452 = vmatprep.subr.bf16.mxu0 0
    %1453 = vmatpush1.bf16.msra.mxu0 0
    %1454 = vmatprep.subr.bf16.mxu0 0
    %1455 = vmatpush1.bf16.msra.mxu0 0
    %1456 = vmatprep.subr.bf16.mxu0 0
    %1457 = vmatpush1.bf16.msra.mxu0 0
    %1458 = vmatprep.subr.bf16.mxu0 0
    %1459 = vmatpush1.bf16.msra.mxu0 0
    %1460 = vmatprep.subr.bf16.mxu0 0
    %1461 = vmatpush1.bf16.msra.mxu0 0
    %1462 = vmatprep.mubr.bf16.mxu0 0
    %1463 = vmatmul.mubr.bf16.gmra.mrb[0].mxu0 %v1379
    %v1464 = vpop.f32.mrb[0].mxu0
    %v1465 = vadd.f32 %v1387, %v1464
    %v1466 = vpop.f32.mrb[0].mxu0
    %v1467 = vadd.f32 %v1388, %v1466
    %v1468 = vpop.f32.mrb[0].mxu0
    %v1469 = vpop.f32.mrb[0].mxu0
    %1470 = vdwg.mxu0
    %v1471 = vpack.c.bf16 %v1424, %v1424
    %v1472 = vpack.c.bf16 %v1426, %v1426
    %v1473 = vpack.c.bf16 %v1465, %v1465
    %v1474 = vpack.c.bf16 %v1467, %v1467
    %v1475 = vxor.u32 %v1471, 2147516416
    %v1477 = vmul.bf16 %v1475, 1069105081
    %v1478 = vpow.bf16.pop %v1477
    %v1479 = vadd.bf16 %v1478, 1065369472
    %v1480 = vrcp.bf16.pop %v1479
    %v1481 = vmul.bf16 1065369472, %v1480
    %v1482 = vxor.u32 %v1472, 2147516416
    %v1484 = vmul.bf16 %v1482, 1069105081
    %v1485 = vpow.bf16.pop %v1484
    %v1486 = vadd.bf16 %v1485, 1065369472
    %v1487 = vrcp.bf16.pop %v1486
    %v1488 = vmul.bf16 1065369472, %v1487
    %v1489 = vtanh.bf16.pop %v1473
    %v1490 = vxor.u32 %v1474, 2147516416
    %v1492 = vmul.bf16 %v1490, 1069105081
    %v1493 = vpow.bf16.pop %v1492
    %v1494 = vadd.bf16 %v1493, 1065369472
    %v1495 = vrcp.bf16.pop %v1494
    %v1496 = vmul.bf16 1065369472, %v1495
    %v1497 = vunpack.c.l.bf16 %v1488
    %v1498 = vmul.f32 %v1497, %v1376
    %v1499 = vmul.bf16 %v1481, %v1489
    %v1500 = vunpack.c.l.bf16 %v1499
    %v1501 = vadd.f32 %v1498, %v1500
    %v1502 = vpack.c.bf16 %v1501, %v1501
    %v1503 = vtanh.bf16.pop %v1502
    %v1504 = vmul.bf16 %v1496, %v1503
    %s1505 = scalar_lea.vmem [#allocation3], 16
    %1506 = vst [vmem:[%s1505] sm:$0xf] %v1504
    %s1507 = scalar_lea.vmem [#allocation2], 80
    %v1508 = vld [vmem:[%s1507] sm:$0xff]
    %v1509 = vld [vmem:[%s1507 + $0x8] sm:$0xff]
    %v1510 = vunpack.c.l.bf16 %v1508
    %v1511 = vunpack.c.h.bf16 %v1508
    %v1512 = vunpack.c.l.bf16 %v1509
    %v1513 = vunpack.c.h.bf16 %v1509
    %1514 = vmatprep.subr.bf16.mxu0 %v827
    %1515 = vmatpush1.bf16.msra.mxu0 %v826
    %1516 = vmatprep.subr.bf16.mxu0 %v831
    %1517 = vmatpush1.bf16.msra.mxu0 %v830
    %1518 = vmatprep.subr.bf16.mxu0 %v835
    %1519 = vmatpush1.bf16.msra.mxu0 %v834
    %1520 = vmatprep.subr.bf16.mxu0 %v839
    %1521 = vmatpush1.bf16.msra.mxu0 %v838
    %1522 = vmatprep.subr.bf16.mxu0 %v843
    %1523 = vmatpush1.bf16.msra.mxu0 %v842
    %1524 = vmatprep.subr.bf16.mxu0 %v847
    %1525 = vmatpush1.bf16.msra.mxu0 %v846
    %1526 = vmatprep.subr.bf16.mxu0 %v851
    %1527 = vmatpush1.bf16.msra.mxu0 %v850
    %1528 = vmatprep.subr.bf16.mxu0 %v855
    %1529 = vmatpush1.bf16.msra.mxu0 %v854
    %1530 = vmatprep.subr.bf16.mxu0 0
    %1531 = vmatpush1.bf16.msra.mxu0 0
    %1532 = vmatprep.subr.bf16.mxu0 0
    %1533 = vmatpush1.bf16.msra.mxu0 0
    %1534 = vmatprep.subr.bf16.mxu0 0
    %1535 = vmatpush1.bf16.msra.mxu0 0
    %1536 = vmatprep.subr.bf16.mxu0 0
    %1537 = vmatpush1.bf16.msra.mxu0 0
    %1538 = vmatprep.subr.bf16.mxu0 0
    %1539 = vmatpush1.bf16.msra.mxu0 0
    %1540 = vmatprep.subr.bf16.mxu0 0
    %1541 = vmatpush1.bf16.msra.mxu0 0
    %1542 = vmatprep.subr.bf16.mxu0 0
    %1543 = vmatpush1.bf16.msra.mxu0 0
    %1544 = vmatprep.subr.bf16.mxu0 0
    %1545 = vmatpush1.bf16.msra.mxu0 0
    %1546 = vmatprep.mubr.bf16.mxu0 0
    %1547 = vmatmul.mubr.bf16.gmra.mrb[0].mxu0 %v1504
    %v1548 = vpop.f32.mrb[0].mxu0
    %v1549 = vadd.f32 %v1510, %v1548
    %v1550 = vpop.f32.mrb[0].mxu0
    %v1551 = vadd.f32 %v1511, %v1550
    %v1552 = vpop.f32.mrb[0].mxu0
    %v1553 = vpop.f32.mrb[0].mxu0
    %1554 = vdwg.mxu0
    %1555 = vmatprep.subr.bf16.mxu0 %v829
    %1556 = vmatpush1.bf16.msra.mxu0 %v828
    %1557 = vmatprep.subr.bf16.mxu0 %v833
    %1558 = vmatpush1.bf16.msra.mxu0 %v832
    %1559 = vmatprep.subr.bf16.mxu0 %v837
    %1560 = vmatpush1.bf16.msra.mxu0 %v836
    %1561 = vmatprep.subr.bf16.mxu0 %v841
    %1562 = vmatpush1.bf16.msra.mxu0 %v840
    %1563 = vmatprep.subr.bf16.mxu0 %v845
    %1564 = vmatpush1.bf16.msra.mxu0 %v844
    %1565 = vmatprep.subr.bf16.mxu0 %v849
    %1566 = vmatpush1.bf16.msra.mxu0 %v848
    %1567 = vmatprep.subr.bf16.mxu0 %v853
    %1568 = vmatpush1.bf16.msra.mxu0 %v852
    %1569 = vmatprep.subr.bf16.mxu0 %v857
    %1570 = vmatpush1.bf16.msra.mxu0 %v856
    %1571 = vmatprep.subr.bf16.mxu0 0
    %1572 = vmatpush1.bf16.msra.mxu0 0
    %1573 = vmatprep.subr.bf16.mxu0 0
    %1574 = vmatpush1.bf16.msra.mxu0 0
    %1575 = vmatprep.subr.bf16.mxu0 0
    %1576 = vmatpush1.bf16.msra.mxu0 0
    %1577 = vmatprep.subr.bf16.mxu0 0
    %1578 = vmatpush1.bf16.msra.mxu0 0
    %1579 = vmatprep.subr.bf16.mxu0 0
    %1580 = vmatpush1.bf16.msra.mxu0 0
    %1581 = vmatprep.subr.bf16.mxu0 0
    %1582 = vmatpush1.bf16.msra.mxu0 0
    %1583 = vmatprep.subr.bf16.mxu0 0
    %1584 = vmatpush1.bf16.msra.mxu0 0
    %1585 = vmatprep.subr.bf16.mxu0 0
    %1586 = vmatpush1.bf16.msra.mxu0 0
    %1587 = vmatprep.mubr.bf16.mxu0 0
    %1588 = vmatmul.mubr.bf16.gmra.mrb[0].mxu0 %v1504
    %v1589 = vpop.f32.mrb[0].mxu0
    %v1590 = vadd.f32 %v1512, %v1589
    %v1591 = vpop.f32.mrb[0].mxu0
    %v1592 = vadd.f32 %v1513, %v1591
    %v1593 = vpop.f32.mrb[0].mxu0
    %v1594 = vpop.f32.mrb[0].mxu0
    %1595 = vdwg.mxu0
    %v1596 = vpack.c.bf16 %v1549, %v1549
    %v1597 = vpack.c.bf16 %v1551, %v1551
    %v1598 = vpack.c.bf16 %v1590, %v1590
    %v1599 = vpack.c.bf16 %v1592, %v1592
    %v1600 = vxor.u32 %v1596, 2147516416
    %v1602 = vmul.bf16 %v1600, 1069105081
    %v1603 = vpow.bf16.pop %v1602
    %v1604 = vadd.bf16 %v1603, 1065369472
    %v1605 = vrcp.bf16.pop %v1604
    %v1606 = vmul.bf16 1065369472, %v1605
    %v1607 = vxor.u32 %v1597, 2147516416
    %v1609 = vmul.bf16 %v1607, 1069105081
    %v1610 = vpow.bf16.pop %v1609
    %v1611 = vadd.bf16 %v1610, 1065369472
    %v1612 = vrcp.bf16.pop %v1611
    %v1613 = vmul.bf16 1065369472, %v1612
    %v1614 = vtanh.bf16.pop %v1598
    %v1615 = vxor.u32 %v1599, 2147516416
    %v1617 = vmul.bf16 %v1615, 1069105081
    %v1618 = vpow.bf16.pop %v1617
    %v1619 = vadd.bf16 %v1618, 1065369472
    %v1620 = vrcp.bf16.pop %v1619
    %v1621 = vmul.bf16 1065369472, %v1620
    %v1622 = vunpack.c.l.bf16 %v1613
    %v1623 = vmul.f32 %v1622, %v1501
    %v1624 = vmul.bf16 %v1606, %v1614
    %v1625 = vunpack.c.l.bf16 %v1624
    %v1626 = vadd.f32 %v1623, %v1625
    %v1627 = vpack.c.bf16 %v1626, %v1626
    %v1628 = vtanh.bf16.pop %v1627
    %v1629 = vmul.bf16 %v1621, %v1628
    %s1630 = scalar_lea.vmem [#allocation3], 20
    %1631 = vst [vmem:[%s1630] sm:$0xf] %v1629
    %s1632 = scalar_lea.vmem [#allocation2], 96
    %v1633 = vld [vmem:[%s1632] sm:$0xff]
    %v1634 = vld [vmem:[%s1632 + $0x8] sm:$0xff]
    %v1635 = vunpack.c.l.bf16 %v1633
    %v1636 = vunpack.c.h.bf16 %v1633
    %v1637 = vunpack.c.l.bf16 %v1634
    %v1638 = vunpack.c.h.bf16 %v1634
    %1639 = vmatprep.subr.bf16.mxu0 %v827
    %1640 = vmatpush1.bf16.msra.mxu0 %v826
    %1641 = vmatprep.subr.bf16.mxu0 %v831
    %1642 = vmatpush1.bf16.msra.mxu0 %v830
    %1643 = vmatprep.subr.bf16.mxu0 %v835
    %1644 = vmatpush1.bf16.msra.mxu0 %v834
    %1645 = vmatprep.subr.bf16.mxu0 %v839
    %1646 = vmatpush1.bf16.msra.mxu0 %v838
    %1647 = vmatprep.subr.bf16.mxu0 %v843
    %1648 = vmatpush1.bf16.msra.mxu0 %v842
    %1649 = vmatprep.subr.bf16.mxu0 %v847
    %1650 = vmatpush1.bf16.msra.mxu0 %v846
    %1651 = vmatprep.subr.bf16.mxu0 %v851
    %1652 = vmatpush1.bf16.msra.mxu0 %v850
    %1653 = vmatprep.subr.bf16.mxu0 %v855
    %1654 = vmatpush1.bf16.msra.mxu0 %v854
    %1655 = vmatprep.subr.bf16.mxu0 0
    %1656 = vmatpush1.bf16.msra.mxu0 0
    %1657 = vmatprep.subr.bf16.mxu0 0
    %1658 = vmatpush1.bf16.msra.mxu0 0
    %1659 = vmatprep.subr.bf16.mxu0 0
    %1660 = vmatpush1.bf16.msra.mxu0 0
    %1661 = vmatprep.subr.bf16.mxu0 0
    %1662 = vmatpush1.bf16.msra.mxu0 0
    %1663 = vmatprep.subr.bf16.mxu0 0
    %1664 = vmatpush1.bf16.msra.mxu0 0
    %1665 = vmatprep.subr.bf16.mxu0 0
    %1666 = vmatpush1.bf16.msra.mxu0 0
    %1667 = vmatprep.subr.bf16.mxu0 0
    %1668 = vmatpush1.bf16.msra.mxu0 0
    %1669 = vmatprep.subr.bf16.mxu0 0
    %1670 = vmatpush1.bf16.msra.mxu0 0
    %1671 = vmatprep.mubr.bf16.mxu0 0
    %1672 = vmatmul.mubr.bf16.gmra.mrb[0].mxu0 %v1629
    %v1673 = vpop.f32.mrb[0].mxu0
    %v1674 = vadd.f32 %v1635, %v1673
    %v1675 = vpop.f32.mrb[0].mxu0
    %v1676 = vadd.f32 %v1636, %v1675
    %v1677 = vpop.f32.mrb[0].mxu0
    %v1678 = vpop.f32.mrb[0].mxu0
    %1679 = vdwg.mxu0
    %1680 = vmatprep.subr.bf16.mxu0 %v829
    %1681 = vmatpush1.bf16.msra.mxu0 %v828
    %1682 = vmatprep.subr.bf16.mxu0 %v833
    %1683 = vmatpush1.bf16.msra.mxu0 %v832
    %1684 = vmatprep.subr.bf16.mxu0 %v837
    %1685 = vmatpush1.bf16.msra.mxu0 %v836
    %1686 = vmatprep.subr.bf16.mxu0 %v841
    %1687 = vmatpush1.bf16.msra.mxu0 %v840
    %1688 = vmatprep.subr.bf16.mxu0 %v845
    %1689 = vmatpush1.bf16.msra.mxu0 %v844
    %1690 = vmatprep.subr.bf16.mxu0 %v849
    %1691 = vmatpush1.bf16.msra.mxu0 %v848
    %1692 = vmatprep.subr.bf16.mxu0 %v853
    %1693 = vmatpush1.bf16.msra.mxu0 %v852
    %1694 = vmatprep.subr.bf16.mxu0 %v857
    %1695 = vmatpush1.bf16.msra.mxu0 %v856
    %1696 = vmatprep.subr.bf16.mxu0 0
    %1697 = vmatpush1.bf16.msra.mxu0 0
    %1698 = vmatprep.subr.bf16.mxu0 0
    %1699 = vmatpush1.bf16.msra.mxu0 0
    %1700 = vmatprep.subr.bf16.mxu0 0
    %1701 = vmatpush1.bf16.msra.mxu0 0
    %1702 = vmatprep.subr.bf16.mxu0 0
    %1703 = vmatpush1.bf16.msra.mxu0 0
    %1704 = vmatprep.subr.bf16.mxu0 0
    %1705 = vmatpush1.bf16.msra.mxu0 0
    %1706 = vmatprep.subr.bf16.mxu0 0
    %1707 = vmatpush1.bf16.msra.mxu0 0
    %1708 = vmatprep.subr.bf16.mxu0 0
    %1709 = vmatpush1.bf16.msra.mxu0 0
    %1710 = vmatprep.subr.bf16.mxu0 0
    %1711 = vmatpush1.bf16.msra.mxu0 0
    %1712 = vmatprep.mubr.bf16.mxu0 0
    %1713 = vmatmul.mubr.bf16.gmra.mrb[0].mxu0 %v1629
    %v1714 = vpop.f32.mrb[0].mxu0
    %v1715 = vadd.f32 %v1637, %v1714
    %v1716 = vpop.f32.mrb[0].mxu0
    %v1717 = vadd.f32 %v1638, %v1716
    %v1718 = vpop.f32.mrb[0].mxu0
    %v1719 = vpop.f32.mrb[0].mxu0
    %1720 = vdwg.mxu0
    %v1721 = vpack.c.bf16 %v1674, %v1674
    %v1722 = vpack.c.bf16 %v1676, %v1676
    %v1723 = vpack.c.bf16 %v1715, %v1715
    %v1724 = vpack.c.bf16 %v1717, %v1717
    %v1725 = vxor.u32 %v1721, 2147516416
    %v1727 = vmul.bf16 %v1725, 1069105081
    %v1728 = vpow.bf16.pop %v1727
    %v1729 = vadd.bf16 %v1728, 1065369472
    %v1730 = vrcp.bf16.pop %v1729
    %v1731 = vmul.bf16 1065369472, %v1730
    %v1732 = vxor.u32 %v1722, 2147516416
    %v1734 = vmul.bf16 %v1732, 1069105081
    %v1735 = vpow.bf16.pop %v1734
    %v1736 = vadd.bf16 %v1735, 1065369472
    %v1737 = vrcp.bf16.pop %v1736
    %v1738 = vmul.bf16 1065369472, %v1737
    %v1739 = vtanh.bf16.pop %v1723
    %v1740 = vxor.u32 %v1724, 2147516416
    %v1742 = vmul.bf16 %v1740, 1069105081
    %v1743 = vpow.bf16.pop %v1742
    %v1744 = vadd.bf16 %v1743, 1065369472
    %v1745 = vrcp.bf16.pop %v1744
    %v1746 = vmul.bf16 1065369472, %v1745
    %v1747 = vunpack.c.l.bf16 %v1738
    %v1748 = vmul.f32 %v1747, %v1626
    %v1749 = vmul.bf16 %v1731, %v1739
    %v1750 = vunpack.c.l.bf16 %v1749
    %v1751 = vadd.f32 %v1748, %v1750
    %v1752 = vpack.c.bf16 %v1751, %v1751
    %v1753 = vtanh.bf16.pop %v1752
    %v1754 = vmul.bf16 %v1746, %v1753
    %s1755 = scalar_lea.vmem [#allocation3], 24
    %1756 = vst [vmem:[%s1755] sm:$0xf] %v1754
    %s1757 = scalar_lea.vmem [#allocation2], 112
    %v1758 = vld [vmem:[%s1757] sm:$0xff]
    %v1759 = vld [vmem:[%s1757 + $0x8] sm:$0xff]
    %v1760 = vunpack.c.l.bf16 %v1758
    %v1761 = vunpack.c.h.bf16 %v1758
    %v1762 = vunpack.c.l.bf16 %v1759
    %v1763 = vunpack.c.h.bf16 %v1759
    %1764 = vmatprep.subr.bf16.mxu0 %v827
    %1765 = vmatpush1.bf16.msra.mxu0 %v826
    %1766 = vmatprep.subr.bf16.mxu0 %v831
    %1767 = vmatpush1.bf16.msra.mxu0 %v830
    %1768 = vmatprep.subr.bf16.mxu0 %v835
    %1769 = vmatpush1.bf16.msra.mxu0 %v834
    %1770 = vmatprep.subr.bf16.mxu0 %v839
    %1771 = vmatpush1.bf16.msra.mxu0 %v838
    %1772 = vmatprep.subr.bf16.mxu0 %v843
    %1773 = vmatpush1.bf16.msra.mxu0 %v842
    %1774 = vmatprep.subr.bf16.mxu0 %v847
    %1775 = vmatpush1.bf16.msra.mxu0 %v846
    %1776 = vmatprep.subr.bf16.mxu0 %v851
    %1777 = vmatpush1.bf16.msra.mxu0 %v850
    %1778 = vmatprep.subr.bf16.mxu0 %v855
    %1779 = vmatpush1.bf16.msra.mxu0 %v854
    %1780 = vmatprep.subr.bf16.mxu0 0
    %1781 = vmatpush1.bf16.msra.mxu0 0
    %1782 = vmatprep.subr.bf16.mxu0 0
    %1783 = vmatpush1.bf16.msra.mxu0 0
    %1784 = vmatprep.subr.bf16.mxu0 0
    %1785 = vmatpush1.bf16.msra.mxu0 0
    %1786 = vmatprep.subr.bf16.mxu0 0
    %1787 = vmatpush1.bf16.msra.mxu0 0
    %1788 = vmatprep.subr.bf16.mxu0 0
    %1789 = vmatpush1.bf16.msra.mxu0 0
    %1790 = vmatprep.subr.bf16.mxu0 0
    %1791 = vmatpush1.bf16.msra.mxu0 0
    %1792 = vmatprep.subr.bf16.mxu0 0
    %1793 = vmatpush1.bf16.msra.mxu0 0
    %1794 = vmatprep.subr.bf16.mxu0 0
    %1795 = vmatpush1.bf16.msra.mxu0 0
    %1796 = vmatprep.mubr.bf16.mxu0 0
    %1797 = vmatmul.mubr.bf16.gmra.mrb[0].mxu0 %v1754
    %v1798 = vpop.f32.mrb[0].mxu0
    %v1799 = vadd.f32 %v1760, %v1798
    %v1800 = vpop.f32.mrb[0].mxu0
    %v1801 = vadd.f32 %v1761, %v1800
    %v1802 = vpop.f32.mrb[0].mxu0
    %v1803 = vpop.f32.mrb[0].mxu0
    %1804 = vdwg.mxu0
    %1805 = vmatprep.subr.bf16.mxu0 %v829
    %1806 = vmatpush1.bf16.msra.mxu0 %v828
    %1807 = vmatprep.subr.bf16.mxu0 %v833
    %1808 = vmatpush1.bf16.msra.mxu0 %v832
    %1809 = vmatprep.subr.bf16.mxu0 %v837
    %1810 = vmatpush1.bf16.msra.mxu0 %v836
    %1811 = vmatprep.subr.bf16.mxu0 %v841
    %1812 = vmatpush1.bf16.msra.mxu0 %v840
    %1813 = vmatprep.subr.bf16.mxu0 %v845
    %1814 = vmatpush1.bf16.msra.mxu0 %v844
    %1815 = vmatprep.subr.bf16.mxu0 %v849
    %1816 = vmatpush1.bf16.msra.mxu0 %v848
    %1817 = vmatprep.subr.bf16.mxu0 %v853
    %1818 = vmatpush1.bf16.msra.mxu0 %v852
    %1819 = vmatprep.subr.bf16.mxu0 %v857
    %1820 = vmatpush1.bf16.msra.mxu0 %v856
    %1821 = vmatprep.subr.bf16.mxu0 0
    %1822 = vmatpush1.bf16.msra.mxu0 0
    %1823 = vmatprep.subr.bf16.mxu0 0
    %1824 = vmatpush1.bf16.msra.mxu0 0
    %1825 = vmatprep.subr.bf16.mxu0 0
    %1826 = vmatpush1.bf16.msra.mxu0 0
    %1827 = vmatprep.subr.bf16.mxu0 0
    %1828 = vmatpush1.bf16.msra.mxu0 0
    %1829 = vmatprep.subr.bf16.mxu0 0
    %1830 = vmatpush1.bf16.msra.mxu0 0
    %1831 = vmatprep.subr.bf16.mxu0 0
    %1832 = vmatpush1.bf16.msra.mxu0 0
    %1833 = vmatprep.subr.bf16.mxu0 0
    %1834 = vmatpush1.bf16.msra.mxu0 0
    %1835 = vmatprep.subr.bf16.mxu0 0
    %1836 = vmatpush1.bf16.msra.mxu0 0
    %1837 = vmatprep.mubr.bf16.mxu0 0
    %1838 = vmatmul.mubr.bf16.gmra.mrb[0].mxu0 %v1754
    %v1839 = vpop.f32.mrb[0].mxu0
    %v1840 = vadd.f32 %v1762, %v1839
    %v1841 = vpop.f32.mrb[0].mxu0
    %v1842 = vadd.f32 %v1763, %v1841
    %v1843 = vpop.f32.mrb[0].mxu0
    %v1844 = vpop.f32.mrb[0].mxu0
    %1845 = vdwg.mxu0
    %v1846 = vpack.c.bf16 %v1799, %v1799
    %v1847 = vpack.c.bf16 %v1801, %v1801
    %v1848 = vpack.c.bf16 %v1840, %v1840
    %v1849 = vpack.c.bf16 %v1842, %v1842
    %v1850 = vxor.u32 %v1846, 2147516416
    %v1852 = vmul.bf16 %v1850, 1069105081
    %v1853 = vpow.bf16.pop %v1852
    %v1854 = vadd.bf16 %v1853, 1065369472
    %v1855 = vrcp.bf16.pop %v1854
    %v1856 = vmul.bf16 1065369472, %v1855
    %v1857 = vxor.u32 %v1847, 2147516416
    %v1859 = vmul.bf16 %v1857, 1069105081
    %v1860 = vpow.bf16.pop %v1859
    %v1861 = vadd.bf16 %v1860, 1065369472
    %v1862 = vrcp.bf16.pop %v1861
    %v1863 = vmul.bf16 1065369472, %v1862
    %v1864 = vtanh.bf16.pop %v1848
    %v1865 = vxor.u32 %v1849, 2147516416
    %v1867 = vmul.bf16 %v1865, 1069105081
    %v1868 = vpow.bf16.pop %v1867
    %v1869 = vadd.bf16 %v1868, 1065369472
    %v1870 = vrcp.bf16.pop %v1869
    %v1871 = vmul.bf16 1065369472, %v1870
    %v1872 = vunpack.c.l.bf16 %v1863
    %v1873 = vmul.f32 %v1872, %v1751
    %v1874 = vmul.bf16 %v1856, %v1864
    %v1875 = vunpack.c.l.bf16 %v1874
    %v1876 = vadd.f32 %v1873, %v1875
    %v1877 = vpack.c.bf16 %v1876, %v1876
    %v1878 = vtanh.bf16.pop %v1877
    %v1879 = vmul.bf16 %v1871, %v1878
    %s1880 = scalar_lea.vmem [#allocation3], 28
    %1881 = vst [vmem:[%s1880] sm:$0xf] %v1879
    %v1882 = vld [vmem:[#allocation3] sm:$0xf]
    %v1883 = vld [vmem:[#allocation3 + $0x4] sm:$0xf]
    %v1884 = vld [vmem:[#allocation3 + $0x8] sm:$0xf]
    %v1885 = vld [vmem:[#allocation3 + $0xc] sm:$0xf]
    %v1886 = vld [vmem:[#allocation3 + $0x10] sm:$0xf]
    %v1887 = vld [vmem:[#allocation3 + $0x14] sm:$0xf]
    %v1888 = vld [vmem:[#allocation3 + $0x18] sm:$0xf]
    %v1889 = vld [vmem:[#allocation3 + $0x1c] sm:$0xf]
    %v1890 = vld [vmem:[#allocation10] sm:$0xff]
    %v1891 = vld [vmem:[#allocation10 + $0x8] sm:$0xff]
    %v1892 = vld [vmem:[#allocation10 + $0x10] sm:$0xff]
    %v1893 = vld [vmem:[#allocation10 + $0x18] sm:$0xff]
    %v1894 = vld [vmem:[#allocation10 + $0x20] sm:$0xff]
    %v1895 = vld [vmem:[#allocation10 + $0x28] sm:$0xff]
    %v1896 = vld [vmem:[#allocation10 + $0x30] sm:$0xff]
    %v1897 = vld [vmem:[#allocation10 + $0x38] sm:$0xff]
    %v1898 = vld [vmem:[#allocation10 + $0x40] sm:$0xff]
    %v1899 = vld [vmem:[#allocation10 + $0x48] sm:$0xff]
    %v1900 = vld [vmem:[#allocation10 + $0x50] sm:$0xff]
    %v1901 = vld [vmem:[#allocation10 + $0x58] sm:$0xff]
    %v1902 = vld [vmem:[#allocation10 + $0x60] sm:$0xff]
    %v1903 = vld [vmem:[#allocation10 + $0x68] sm:$0xff]
    %v1904 = vld [vmem:[#allocation10 + $0x70] sm:$0xff]
    %v1905 = vld [vmem:[#allocation10 + $0x78] sm:$0xff]
    %v1906 = vld [vmem:[#allocation10 + $0x80] sm:$0xff]
    %v1907 = vld [vmem:[#allocation10 + $0x88] sm:$0xff]
    %v1908 = vld [vmem:[#allocation10 + $0x90] sm:$0xff]
    %v1909 = vld [vmem:[#allocation10 + $0x98] sm:$0xff]
    %v1910 = vld [vmem:[#allocation10 + $0xa0] sm:$0xff]
    %v1911 = vld [vmem:[#allocation10 + $0xa8] sm:$0xff]
    %v1912 = vld [vmem:[#allocation10 + $0xb0] sm:$0xff]
    %v1913 = vld [vmem:[#allocation10 + $0xb8] sm:$0xff]
    %v1914 = vld [vmem:[#allocation10 + $0xc0] sm:$0xff]
    %v1915 = vld [vmem:[#allocation10 + $0xc8] sm:$0xff]
    %v1916 = vld [vmem:[#allocation10 + $0xd0] sm:$0xff]
    %v1917 = vld [vmem:[#allocation10 + $0xd8] sm:$0xff]
    %v1918 = vld [vmem:[#allocation10 + $0xe0] sm:$0xff]
    %v1919 = vld [vmem:[#allocation10 + $0xe8] sm:$0xff]
    %v1920 = vld [vmem:[#allocation10 + $0xf0] sm:$0xff]
    %v1921 = vld [vmem:[#allocation10 + $0xf8] sm:$0xff]
    %v1922 = vld [vmem:[%s6] sm:$0xf]
    %v1924 = vlaneseq
    %v1925 = vshrl.u32 %v1924, 7
    %v1926 = vsub.s32 0, %v1925
    %v1927 = vrot.slane %v1922, %v1926
    %v1928 = vlaneseq
    %v1929 = vshrl.u32 %v1928, 7
    %v1930 = vsub.s32 1, %v1929
    %v1931 = vrot.slane %v1922, %v1930
    %v1932 = vlaneseq
    %v1933 = vshrl.u32 %v1932, 7
    %v1934 = vsub.s32 2, %v1933
    %v1935 = vrot.slane %v1922, %v1934
    %v1936 = vlaneseq
    %v1937 = vshrl.u32 %v1936, 7
    %v1938 = vsub.s32 3, %v1937
    %v1939 = vrot.slane %v1922, %v1938
    %v1952 = vunpack.c.l.b16 %v1882
    %v1953 = vunpack.c.l.b16 %v1883
    %v1954 = vunpack.c.l.b16 %v1884
    %v1955 = vunpack.c.l.b16 %v1885
    %v1956 = vunpack.c.l.b16 %v1886
    %v1957 = vunpack.c.l.b16 %v1887
    %v1958 = vunpack.c.l.b16 %v1888
    %v1959 = vunpack.c.l.b16 %v1889
    %v1960 = vpack.c.b16 %v1953, %v1952
    %v1961 = vpack.c.b16 %v1955, %v1954
    %v1962 = vpack.c.b16 %v1957, %v1956
    %v1963 = vpack.c.b16 %v1959, %v1958
    %v2000 = vunpack.c.l.b16 %v1890
    %v2001 = vunpack.c.h.b16 %v1890
    %v2002 = vunpack.c.l.b16 %v1891
    %v2003 = vunpack.c.h.b16 %v1891
    %v2004 = vunpack.c.l.b16 %v1892
    %v2005 = vunpack.c.h.b16 %v1892
    %v2006 = vunpack.c.l.b16 %v1893
    %v2007 = vunpack.c.h.b16 %v1893
    %v2008 = vunpack.c.l.b16 %v1894
    %v2009 = vunpack.c.h.b16 %v1894
    %v2010 = vunpack.c.l.b16 %v1895
    %v2011 = vunpack.c.h.b16 %v1895
    %v2012 = vunpack.c.l.b16 %v1896
    %v2013 = vunpack.c.h.b16 %v1896
    %v2014 = vunpack.c.l.b16 %v1897
    %v2015 = vunpack.c.h.b16 %v1897
    %v2016 = vunpack.c.l.b16 %v1898
    %v2017 = vunpack.c.h.b16 %v1898
    %v2018 = vunpack.c.l.b16 %v1899
    %v2019 = vunpack.c.h.b16 %v1899
    %v2020 = vunpack.c.l.b16 %v1900
    %v2021 = vunpack.c.h.b16 %v1900
    %v2022 = vunpack.c.l.b16 %v1901
    %v2023 = vunpack.c.h.b16 %v1901
    %v2024 = vunpack.c.l.b16 %v1902
    %v2025 = vunpack.c.h.b16 %v1902
    %v2026 = vunpack.c.l.b16 %v1903
    %v2027 = vunpack.c.h.b16 %v1903
    %v2028 = vunpack.c.l.b16 %v1904
    %v2029 = vunpack.c.h.b16 %v1904
    %v2030 = vunpack.c.l.b16 %v1905
    %v2031 = vunpack.c.h.b16 %v1905
    %v2032 = vunpack.c.l.b16 %v1906
    %v2033 = vunpack.c.h.b16 %v1906
    %v2034 = vunpack.c.l.b16 %v1907
    %v2035 = vunpack.c.h.b16 %v1907
    %v2036 = vunpack.c.l.b16 %v1908
    %v2037 = vunpack.c.h.b16 %v1908
    %v2038 = vunpack.c.l.b16 %v1909
    %v2039 = vunpack.c.h.b16 %v1909
    %v2040 = vunpack.c.l.b16 %v1910
    %v2041 = vunpack.c.h.b16 %v1910
    %v2042 = vunpack.c.l.b16 %v1911
    %v2043 = vunpack.c.h.b16 %v1911
    %v2044 = vunpack.c.l.b16 %v1912
    %v2045 = vunpack.c.h.b16 %v1912
    %v2046 = vunpack.c.l.b16 %v1913
    %v2047 = vunpack.c.h.b16 %v1913
    %v2048 = vunpack.c.l.b16 %v1914
    %v2049 = vunpack.c.h.b16 %v1914
    %v2050 = vunpack.c.l.b16 %v1915
    %v2051 = vunpack.c.h.b16 %v1915
    %v2052 = vunpack.c.l.b16 %v1916
    %v2053 = vunpack.c.h.b16 %v1916
    %v2054 = vunpack.c.l.b16 %v1917
    %v2055 = vunpack.c.h.b16 %v1917
    %v2056 = vunpack.c.l.b16 %v1918
    %v2057 = vunpack.c.h.b16 %v1918
    %v2058 = vunpack.c.l.b16 %v1919
    %v2059 = vunpack.c.h.b16 %v1919
    %v2060 = vunpack.c.l.b16 %v1920
    %v2061 = vunpack.c.h.b16 %v1920
    %v2062 = vunpack.c.l.b16 %v1921
    %v2063 = vunpack.c.h.b16 %v1921
    %v2064 = vpack.c.b16 %v2004, %v2000
    %v2065 = vpack.c.b16 %v2005, %v2001
    %v2066 = vpack.c.b16 %v2006, %v2002
    %v2067 = vpack.c.b16 %v2007, %v2003
    %v2068 = vpack.c.b16 %v2012, %v2008
    %v2069 = vpack.c.b16 %v2013, %v2009
    %v2070 = vpack.c.b16 %v2014, %v2010
    %v2071 = vpack.c.b16 %v2015, %v2011
    %v2072 = vpack.c.b16 %v2020, %v2016
    %v2073 = vpack.c.b16 %v2021, %v2017
    %v2074 = vpack.c.b16 %v2022, %v2018
    %v2075 = vpack.c.b16 %v2023, %v2019
    %v2076 = vpack.c.b16 %v2028, %v2024
    %v2077 = vpack.c.b16 %v2029, %v2025
    %v2078 = vpack.c.b16 %v2030, %v2026
    %v2079 = vpack.c.b16 %v2031, %v2027
    %v2080 = vpack.c.b16 %v2036, %v2032
    %v2081 = vpack.c.b16 %v2037, %v2033
    %v2082 = vpack.c.b16 %v2038, %v2034
    %v2083 = vpack.c.b16 %v2039, %v2035
    %v2084 = vpack.c.b16 %v2044, %v2040
    %v2085 = vpack.c.b16 %v2045, %v2041
    %v2086 = vpack.c.b16 %v2046, %v2042
    %v2087 = vpack.c.b16 %v2047, %v2043
    %v2088 = vpack.c.b16 %v2052, %v2048
    %v2089 = vpack.c.b16 %v2053, %v2049
    %v2090 = vpack.c.b16 %v2054, %v2050
    %v2091 = vpack.c.b16 %v2055, %v2051
    %v2092 = vpack.c.b16 %v2060, %v2056
    %v2093 = vpack.c.b16 %v2061, %v2057
    %v2094 = vpack.c.b16 %v2062, %v2058
    %v2095 = vpack.c.b16 %v2063, %v2059
    %2128 = vmatprep.subr.bf16.mxu0 %v2065
    %2129 = vmatpush1.bf16.msra.mxu0 %v2064
    %2130 = vmatprep.subr.bf16.mxu0 %v2069
    %2131 = vmatpush1.bf16.msra.mxu0 %v2068
    %2132 = vmatprep.subr.bf16.mxu0 %v2073
    %2133 = vmatpush1.bf16.msra.mxu0 %v2072
    %2134 = vmatprep.subr.bf16.mxu0 %v2077
    %2135 = vmatpush1.bf16.msra.mxu0 %v2076
    %2136 = vmatprep.subr.bf16.mxu0 %v2081
    %2137 = vmatpush1.bf16.msra.mxu0 %v2080
    %2138 = vmatprep.subr.bf16.mxu0 %v2085
    %2139 = vmatpush1.bf16.msra.mxu0 %v2084
    %2140 = vmatprep.subr.bf16.mxu0 %v2089
    %2141 = vmatpush1.bf16.msra.mxu0 %v2088
    %2142 = vmatprep.subr.bf16.mxu0 %v2093
    %2143 = vmatpush1.bf16.msra.mxu0 %v2092
    %2144 = vmatprep.subr.bf16.mxu0 0
    %2145 = vmatpush1.bf16.msra.mxu0 0
    %2146 = vmatprep.subr.bf16.mxu0 0
    %2147 = vmatpush1.bf16.msra.mxu0 0
    %2148 = vmatprep.subr.bf16.mxu0 0
    %2149 = vmatpush1.bf16.msra.mxu0 0
    %2150 = vmatprep.subr.bf16.mxu0 0
    %2151 = vmatpush1.bf16.msra.mxu0 0
    %2152 = vmatprep.subr.bf16.mxu0 0
    %2153 = vmatpush1.bf16.msra.mxu0 0
    %2154 = vmatprep.subr.bf16.mxu0 0
    %2155 = vmatpush1.bf16.msra.mxu0 0
    %2156 = vmatprep.subr.bf16.mxu0 0
    %2157 = vmatpush1.bf16.msra.mxu0 0
    %2158 = vmatprep.subr.bf16.mxu0 0
    %2159 = vmatpush1.bf16.msra.mxu0 0
    %2160 = vmatprep.mubr.bf16.mxu0 0
    %2161 = vmatmul.mubr.bf16.gmra.mrb[0].mxu0 %v1960
    %v2162 = vpop.f32.mrb[0].mxu0
    %v2163 = vadd.f32 %v1927, %v2162
    %v2164 = vpop.f32.mrb[0].mxu0
    %v2165 = vadd.f32 %v1931, %v2164
    %v2166 = vpop.f32.mrb[0].mxu0
    %v2167 = vadd.f32 %v1927, %v2166
    %v2168 = vpop.f32.mrb[0].mxu0
    %v2169 = vadd.f32 %v1931, %v2168
    %2170 = vmatprep.mubr.bf16.mxu0 0
    %2171 = vmatmul.mubr.bf16.gmra.mrb[0].mxu0 %v1961
    %v2172 = vpop.f32.mrb[0].mxu0
    %v2173 = vadd.f32 %v1927, %v2172
    %v2174 = vpop.f32.mrb[0].mxu0
    %v2175 = vadd.f32 %v1931, %v2174
    %v2176 = vpop.f32.mrb[0].mxu0
    %v2177 = vadd.f32 %v1927, %v2176
    %v2178 = vpop.f32.mrb[0].mxu0
    %v2179 = vadd.f32 %v1931, %v2178
    %2180 = vmatprep.mubr.bf16.mxu0 0
    %2181 = vmatmul.mubr.bf16.gmra.mrb[0].mxu0 %v1962
    %v2182 = vpop.f32.mrb[0].mxu0
    %v2183 = vadd.f32 %v1927, %v2182
    %v2184 = vpop.f32.mrb[0].mxu0
    %v2185 = vadd.f32 %v1931, %v2184
    %v2186 = vpop.f32.mrb[0].mxu0
    %v2187 = vadd.f32 %v1927, %v2186
    %v2188 = vpop.f32.mrb[0].mxu0
    %v2189 = vadd.f32 %v1931, %v2188
    %2190 = vmatprep.mubr.bf16.mxu0 0
    %2191 = vmatmul.mubr.bf16.gmra.mrb[0].mxu0 %v1963
    %v2192 = vpop.f32.mrb[0].mxu0
    %v2193 = vadd.f32 %v1927, %v2192
    %v2194 = vpop.f32.mrb[0].mxu0
    %v2195 = vadd.f32 %v1931, %v2194
    %v2196 = vpop.f32.mrb[0].mxu0
    %v2197 = vadd.f32 %v1927, %v2196
    %v2198 = vpop.f32.mrb[0].mxu0
    %v2199 = vadd.f32 %v1931, %v2198
    %2200 = vdwg.mxu0
    %2201 = vmatprep.subr.bf16.mxu0 %v2067
    %2202 = vmatpush1.bf16.msra.mxu0 %v2066
    %2203 = vmatprep.subr.bf16.mxu0 %v2071
    %2204 = vmatpush1.bf16.msra.mxu0 %v2070
    %2205 = vmatprep.subr.bf16.mxu0 %v2075
    %2206 = vmatpush1.bf16.msra.mxu0 %v2074
    %2207 = vmatprep.subr.bf16.mxu0 %v2079
    %2208 = vmatpush1.bf16.msra.mxu0 %v2078
    %2209 = vmatprep.subr.bf16.mxu0 %v2083
    %2210 = vmatpush1.bf16.msra.mxu0 %v2082
    %2211 = vmatprep.subr.bf16.mxu0 %v2087
    %2212 = vmatpush1.bf16.msra.mxu0 %v2086
    %2213 = vmatprep.subr.bf16.mxu0 %v2091
    %2214 = vmatpush1.bf16.msra.mxu0 %v2090
    %2215 = vmatprep.subr.bf16.mxu0 %v2095
    %2216 = vmatpush1.bf16.msra.mxu0 %v2094
    %2217 = vmatprep.subr.bf16.mxu0 0
    %2218 = vmatpush1.bf16.msra.mxu0 0
    %2219 = vmatprep.subr.bf16.mxu0 0
    %2220 = vmatpush1.bf16.msra.mxu0 0
    %2221 = vmatprep.subr.bf16.mxu0 0
    %2222 = vmatpush1.bf16.msra.mxu0 0
    %2223 = vmatprep.subr.bf16.mxu0 0
    %2224 = vmatpush1.bf16.msra.mxu0 0
    %2225 = vmatprep.subr.bf16.mxu0 0
    %2226 = vmatpush1.bf16.msra.mxu0 0
    %2227 = vmatprep.subr.bf16.mxu0 0
    %2228 = vmatpush1.bf16.msra.mxu0 0
    %2229 = vmatprep.subr.bf16.mxu0 0
    %2230 = vmatpush1.bf16.msra.mxu0 0
    %2231 = vmatprep.subr.bf16.mxu0 0
    %2232 = vmatpush1.bf16.msra.mxu0 0
    %2233 = vmatprep.mubr.bf16.mxu0 0
    %2234 = vmatmul.mubr.bf16.gmra.mrb[0].mxu0 %v1960
    %v2235 = vpop.f32.mrb[0].mxu0
    %v2236 = vadd.f32 %v1935, %v2235
    %v2237 = vpop.f32.mrb[0].mxu0
    %v2238 = vadd.f32 %v1939, %v2237
    %v2239 = vpop.f32.mrb[0].mxu0
    %v2240 = vadd.f32 %v1935, %v2239
    %v2241 = vpop.f32.mrb[0].mxu0
    %v2242 = vadd.f32 %v1939, %v2241
    %2243 = vmatprep.mubr.bf16.mxu0 0
    %2244 = vmatmul.mubr.bf16.gmra.mrb[0].mxu0 %v1961
    %v2245 = vpop.f32.mrb[0].mxu0
    %v2246 = vadd.f32 %v1935, %v2245
    %v2247 = vpop.f32.mrb[0].mxu0
    %v2248 = vadd.f32 %v1939, %v2247
    %v2249 = vpop.f32.mrb[0].mxu0
    %v2250 = vadd.f32 %v1935, %v2249
    %v2251 = vpop.f32.mrb[0].mxu0
    %v2252 = vadd.f32 %v1939, %v2251
    %2253 = vmatprep.mubr.bf16.mxu0 0
    %2254 = vmatmul.mubr.bf16.gmra.mrb[0].mxu0 %v1962
    %v2255 = vpop.f32.mrb[0].mxu0
    %v2256 = vadd.f32 %v1935, %v2255
    %v2257 = vpop.f32.mrb[0].mxu0
    %v2258 = vadd.f32 %v1939, %v2257
    %v2259 = vpop.f32.mrb[0].mxu0
    %v2260 = vadd.f32 %v1935, %v2259
    %v2261 = vpop.f32.mrb[0].mxu0
    %v2262 = vadd.f32 %v1939, %v2261
    %2263 = vmatprep.mubr.bf16.mxu0 0
    %2264 = vmatmul.mubr.bf16.gmra.mrb[0].mxu0 %v1963
    %v2265 = vpop.f32.mrb[0].mxu0
    %v2266 = vadd.f32 %v1935, %v2265
    %v2267 = vpop.f32.mrb[0].mxu0
    %v2268 = vadd.f32 %v1939, %v2267
    %v2269 = vpop.f32.mrb[0].mxu0
    %v2270 = vadd.f32 %v1935, %v2269
    %v2271 = vpop.f32.mrb[0].mxu0
    %v2272 = vadd.f32 %v1939, %v2271
    %2273 = vdwg.mxu0
    %v2274 = vpack.c.bf16 %v2163, %v2163
    %v2275 = vpack.c.bf16 %v2165, %v2165
    %v2276 = vpack.c.bf16 %v2236, %v2236
    %v2277 = vpack.c.bf16 %v2238, %v2238
    %v2278 = vpack.c.bf16 %v2167, %v2167
    %v2279 = vpack.c.bf16 %v2169, %v2169
    %v2280 = vpack.c.bf16 %v2240, %v2240
    %v2281 = vpack.c.bf16 %v2242, %v2242
    %v2282 = vpack.c.bf16 %v2173, %v2173
    %v2283 = vpack.c.bf16 %v2175, %v2175
    %v2284 = vpack.c.bf16 %v2246, %v2246
    %v2285 = vpack.c.bf16 %v2248, %v2248
    %v2286 = vpack.c.bf16 %v2177, %v2177
    %v2287 = vpack.c.bf16 %v2179, %v2179
    %v2288 = vpack.c.bf16 %v2250, %v2250
    %v2289 = vpack.c.bf16 %v2252, %v2252
    %v2290 = vpack.c.bf16 %v2183, %v2183
    %v2291 = vpack.c.bf16 %v2185, %v2185
    %v2292 = vpack.c.bf16 %v2256, %v2256
    %v2293 = vpack.c.bf16 %v2258, %v2258
    %v2294 = vpack.c.bf16 %v2187, %v2187
    %v2295 = vpack.c.bf16 %v2189, %v2189
    %v2296 = vpack.c.bf16 %v2260, %v2260
    %v2297 = vpack.c.bf16 %v2262, %v2262
    %v2298 = vpack.c.bf16 %v2193, %v2193
    %v2299 = vpack.c.bf16 %v2195, %v2195
    %v2300 = vpack.c.bf16 %v2266, %v2266
    %v2301 = vpack.c.bf16 %v2268, %v2268
    %v2302 = vpack.c.bf16 %v2197, %v2197
    %v2303 = vpack.c.bf16 %v2199, %v2199
    %v2304 = vpack.c.bf16 %v2270, %v2270
    %v2305 = vpack.c.bf16 %v2272, %v2272
    %v2338 = vunpack.c.l.b16 %v2274
    %v2339 = vunpack.c.l.b16 %v2275
    %v2340 = vunpack.c.l.b16 %v2276
    %v2341 = vunpack.c.l.b16 %v2277
    %v2342 = vunpack.c.l.b16 %v2278
    %v2343 = vunpack.c.l.b16 %v2279
    %v2344 = vunpack.c.l.b16 %v2280
    %v2345 = vunpack.c.l.b16 %v2281
    %v2346 = vunpack.c.l.b16 %v2282
    %v2347 = vunpack.c.l.b16 %v2283
    %v2348 = vunpack.c.l.b16 %v2284
    %v2349 = vunpack.c.l.b16 %v2285
    %v2350 = vunpack.c.l.b16 %v2286
    %v2351 = vunpack.c.l.b16 %v2287
    %v2352 = vunpack.c.l.b16 %v2288
    %v2353 = vunpack.c.l.b16 %v2289
    %v2354 = vunpack.c.l.b16 %v2290
    %v2355 = vunpack.c.l.b16 %v2291
    %v2356 = vunpack.c.l.b16 %v2292
    %v2357 = vunpack.c.l.b16 %v2293
    %v2358 = vunpack.c.l.b16 %v2294
    %v2359 = vunpack.c.l.b16 %v2295
    %v2360 = vunpack.c.l.b16 %v2296
    %v2361 = vunpack.c.l.b16 %v2297
    %v2362 = vunpack.c.l.b16 %v2298
    %v2363 = vunpack.c.l.b16 %v2299
    %v2364 = vunpack.c.l.b16 %v2300
    %v2365 = vunpack.c.l.b16 %v2301
    %v2366 = vunpack.c.l.b16 %v2302
    %v2367 = vunpack.c.l.b16 %v2303
    %v2368 = vunpack.c.l.b16 %v2304
    %v2369 = vunpack.c.l.b16 %v2305
    %v2370 = vpack.c.b16 %v2339, %v2338
    %v2371 = vpack.c.b16 %v2341, %v2340
    %v2372 = vpack.c.b16 %v2343, %v2342
    %v2373 = vpack.c.b16 %v2345, %v2344
    %v2374 = vpack.c.b16 %v2347, %v2346
    %v2375 = vpack.c.b16 %v2349, %v2348
    %v2376 = vpack.c.b16 %v2351, %v2350
    %v2377 = vpack.c.b16 %v2353, %v2352
    %v2378 = vpack.c.b16 %v2355, %v2354
    %v2379 = vpack.c.b16 %v2357, %v2356
    %v2380 = vpack.c.b16 %v2359, %v2358
    %v2381 = vpack.c.b16 %v2361, %v2360
    %v2382 = vpack.c.b16 %v2363, %v2362
    %v2383 = vpack.c.b16 %v2365, %v2364
    %v2384 = vpack.c.b16 %v2367, %v2366
    %v2385 = vpack.c.b16 %v2369, %v2368
    %2402 = vst [vmem:[#allocation2] sm:$0xff] %v2370
    %2403 = vst [vmem:[#allocation2 + $0x8] sm:$0xff] %v2371
    %2404 = vst [vmem:[#allocation2 + $0x10] sm:$0xff] %v2372
    %2405 = vst [vmem:[#allocation2 + $0x18] sm:$0xff] %v2373
    %2406 = vst [vmem:[#allocation2 + $0x20] sm:$0xff] %v2374
    %2407 = vst [vmem:[#allocation2 + $0x28] sm:$0xff] %v2375
    %2408 = vst [vmem:[#allocation2 + $0x30] sm:$0xff] %v2376
    %2409 = vst [vmem:[#allocation2 + $0x38] sm:$0xff] %v2377
    %2410 = vst [vmem:[#allocation2 + $0x40] sm:$0xff] %v2378
    %2411 = vst [vmem:[#allocation2 + $0x48] sm:$0xff] %v2379
    %2412 = vst [vmem:[#allocation2 + $0x50] sm:$0xff] %v2380
    %2413 = vst [vmem:[#allocation2 + $0x58] sm:$0xff] %v2381
    %2414 = vst [vmem:[#allocation2 + $0x60] sm:$0xff] %v2382
    %2415 = vst [vmem:[#allocation2 + $0x68] sm:$0xff] %v2383
    %2416 = vst [vmem:[#allocation2 + $0x70] sm:$0xff] %v2384
    %2417 = vst [vmem:[#allocation2 + $0x78] sm:$0xff] %v2385
    %v2418 = vld [vmem:[#allocation12] sm:$0xff]
    %v2419 = vld [vmem:[#allocation12 + $0x8] sm:$0xff]
    %v2420 = vld [vmem:[#allocation12 + $0x10] sm:$0xff]
    %v2421 = vld [vmem:[#allocation12 + $0x18] sm:$0xff]
    %v2422 = vld [vmem:[#allocation12 + $0x20] sm:$0xff]
    %v2423 = vld [vmem:[#allocation12 + $0x28] sm:$0xff]
    %v2424 = vld [vmem:[#allocation12 + $0x30] sm:$0xff]
    %v2425 = vld [vmem:[#allocation12 + $0x38] sm:$0xff]
    %v2426 = vld [vmem:[#allocation12 + $0x40] sm:$0xff]
    %v2427 = vld [vmem:[#allocation12 + $0x48] sm:$0xff]
    %v2428 = vld [vmem:[#allocation12 + $0x50] sm:$0xff]
    %v2429 = vld [vmem:[#allocation12 + $0x58] sm:$0xff]
    %v2430 = vld [vmem:[#allocation12 + $0x60] sm:$0xff]
    %v2431 = vld [vmem:[#allocation12 + $0x68] sm:$0xff]
    %v2432 = vld [vmem:[#allocation12 + $0x70] sm:$0xff]
    %v2433 = vld [vmem:[#allocation12 + $0x78] sm:$0xff]
    %v2434 = vld [vmem:[#allocation12 + $0x80] sm:$0xff]
    %v2435 = vld [vmem:[#allocation12 + $0x88] sm:$0xff]
    %v2436 = vld [vmem:[#allocation12 + $0x90] sm:$0xff]
    %v2437 = vld [vmem:[#allocation12 + $0x98] sm:$0xff]
    %v2438 = vld [vmem:[#allocation12 + $0xa0] sm:$0xff]
    %v2439 = vld [vmem:[#allocation12 + $0xa8] sm:$0xff]
    %v2440 = vld [vmem:[#allocation12 + $0xb0] sm:$0xff]
    %v2441 = vld [vmem:[#allocation12 + $0xb8] sm:$0xff]
    %v2442 = vld [vmem:[#allocation12 + $0xc0] sm:$0xff]
    %v2443 = vld [vmem:[#allocation12 + $0xc8] sm:$0xff]
    %v2444 = vld [vmem:[#allocation12 + $0xd0] sm:$0xff]
    %v2445 = vld [vmem:[#allocation12 + $0xd8] sm:$0xff]
    %v2446 = vld [vmem:[#allocation12 + $0xe0] sm:$0xff]
    %v2447 = vld [vmem:[#allocation12 + $0xe8] sm:$0xff]
    %v2448 = vld [vmem:[#allocation12 + $0xf0] sm:$0xff]
    %v2449 = vld [vmem:[#allocation12 + $0xf8] sm:$0xff]
    %v2450 = vld [vmem:[#allocation2] sm:$0xff]
    %v2451 = vld [vmem:[#allocation2 + $0x8] sm:$0xff]
    %v2452 = vunpack.c.l.bf16 %v2450
    %v2453 = vunpack.c.h.bf16 %v2450
    %v2454 = vunpack.c.l.bf16 %v2451
    %v2455 = vunpack.c.h.bf16 %v2451
    %v2488 = vunpack.c.l.b16 %v2418
    %v2489 = vunpack.c.h.b16 %v2418
    %v2490 = vunpack.c.l.b16 %v2419
    %v2491 = vunpack.c.h.b16 %v2419
    %v2492 = vunpack.c.l.b16 %v2420
    %v2493 = vunpack.c.h.b16 %v2420
    %v2494 = vunpack.c.l.b16 %v2421
    %v2495 = vunpack.c.h.b16 %v2421
    %v2496 = vunpack.c.l.b16 %v2422
    %v2497 = vunpack.c.h.b16 %v2422
    %v2498 = vunpack.c.l.b16 %v2423
    %v2499 = vunpack.c.h.b16 %v2423
    %v2500 = vunpack.c.l.b16 %v2424
    %v2501 = vunpack.c.h.b16 %v2424
    %v2502 = vunpack.c.l.b16 %v2425
    %v2503 = vunpack.c.h.b16 %v2425
    %v2504 = vunpack.c.l.b16 %v2426
    %v2505 = vunpack.c.h.b16 %v2426
    %v2506 = vunpack.c.l.b16 %v2427
    %v2507 = vunpack.c.h.b16 %v2427
    %v2508 = vunpack.c.l.b16 %v2428
    %v2509 = vunpack.c.h.b16 %v2428
    %v2510 = vunpack.c.l.b16 %v2429
    %v2511 = vunpack.c.h.b16 %v2429
    %v2512 = vunpack.c.l.b16 %v2430
    %v2513 = vunpack.c.h.b16 %v2430
    %v2514 = vunpack.c.l.b16 %v2431
    %v2515 = vunpack.c.h.b16 %v2431
    %v2516 = vunpack.c.l.b16 %v2432
    %v2517 = vunpack.c.h.b16 %v2432
    %v2518 = vunpack.c.l.b16 %v2433
    %v2519 = vunpack.c.h.b16 %v2433
    %v2520 = vunpack.c.l.b16 %v2434
    %v2521 = vunpack.c.h.b16 %v2434
    %v2522 = vunpack.c.l.b16 %v2435
    %v2523 = vunpack.c.h.b16 %v2435
    %v2524 = vunpack.c.l.b16 %v2436
    %v2525 = vunpack.c.h.b16 %v2436
    %v2526 = vunpack.c.l.b16 %v2437
    %v2527 = vunpack.c.h.b16 %v2437
    %v2528 = vunpack.c.l.b16 %v2438
    %v2529 = vunpack.c.h.b16 %v2438
    %v2530 = vunpack.c.l.b16 %v2439
    %v2531 = vunpack.c.h.b16 %v2439
    %v2532 = vunpack.c.l.b16 %v2440
    %v2533 = vunpack.c.h.b16 %v2440
    %v2534 = vunpack.c.l.b16 %v2441
    %v2535 = vunpack.c.h.b16 %v2441
    %v2536 = vunpack.c.l.b16 %v2442
    %v2537 = vunpack.c.h.b16 %v2442
    %v2538 = vunpack.c.l.b16 %v2443
    %v2539 = vunpack.c.h.b16 %v2443
    %v2540 = vunpack.c.l.b16 %v2444
    %v2541 = vunpack.c.h.b16 %v2444
    %v2542 = vunpack.c.l.b16 %v2445
    %v2543 = vunpack.c.h.b16 %v2445
    %v2544 = vunpack.c.l.b16 %v2446
    %v2545 = vunpack.c.h.b16 %v2446
    %v2546 = vunpack.c.l.b16 %v2447
    %v2547 = vunpack.c.h.b16 %v2447
    %v2548 = vunpack.c.l.b16 %v2448
    %v2549 = vunpack.c.h.b16 %v2448
    %v2550 = vunpack.c.l.b16 %v2449
    %v2551 = vunpack.c.h.b16 %v2449
    %v2552 = vpack.c.b16 %v2492, %v2488
    %v2553 = vpack.c.b16 %v2493, %v2489
    %v2554 = vpack.c.b16 %v2494, %v2490
    %v2555 = vpack.c.b16 %v2495, %v2491
    %v2556 = vpack.c.b16 %v2500, %v2496
    %v2557 = vpack.c.b16 %v2501, %v2497
    %v2558 = vpack.c.b16 %v2502, %v2498
    %v2559 = vpack.c.b16 %v2503, %v2499
    %v2560 = vpack.c.b16 %v2508, %v2504
    %v2561 = vpack.c.b16 %v2509, %v2505
    %v2562 = vpack.c.b16 %v2510, %v2506
    %v2563 = vpack.c.b16 %v2511, %v2507
    %v2564 = vpack.c.b16 %v2516, %v2512
    %v2565 = vpack.c.b16 %v2517, %v2513
    %v2566 = vpack.c.b16 %v2518, %v2514
    %v2567 = vpack.c.b16 %v2519, %v2515
    %v2568 = vpack.c.b16 %v2524, %v2520
    %v2569 = vpack.c.b16 %v2525, %v2521
    %v2570 = vpack.c.b16 %v2526, %v2522
    %v2571 = vpack.c.b16 %v2527, %v2523
    %v2572 = vpack.c.b16 %v2532, %v2528
    %v2573 = vpack.c.b16 %v2533, %v2529
    %v2574 = vpack.c.b16 %v2534, %v2530
    %v2575 = vpack.c.b16 %v2535, %v2531
    %v2576 = vpack.c.b16 %v2540, %v2536
    %v2577 = vpack.c.b16 %v2541, %v2537
    %v2578 = vpack.c.b16 %v2542, %v2538
    %v2579 = vpack.c.b16 %v2543, %v2539
    %v2580 = vpack.c.b16 %v2548, %v2544
    %v2581 = vpack.c.b16 %v2549, %v2545
    %v2582 = vpack.c.b16 %v2550, %v2546
    %v2583 = vpack.c.b16 %v2551, %v2547
    %2616 = vmatprep.subr.bf16.mxu0 %v2553
    %2617 = vmatpush1.bf16.msra.mxu0 %v2552
    %2618 = vmatprep.subr.bf16.mxu0 %v2557
    %2619 = vmatpush1.bf16.msra.mxu0 %v2556
    %2620 = vmatprep.subr.bf16.mxu0 %v2561
    %2621 = vmatpush1.bf16.msra.mxu0 %v2560
    %2622 = vmatprep.subr.bf16.mxu0 %v2565
    %2623 = vmatpush1.bf16.msra.mxu0 %v2564
    %2624 = vmatprep.subr.bf16.mxu0 %v2569
    %2625 = vmatpush1.bf16.msra.mxu0 %v2568
    %2626 = vmatprep.subr.bf16.mxu0 %v2573
    %2627 = vmatpush1.bf16.msra.mxu0 %v2572
    %2628 = vmatprep.subr.bf16.mxu0 %v2577
    %2629 = vmatpush1.bf16.msra.mxu0 %v2576
    %2630 = vmatprep.subr.bf16.mxu0 %v2581
    %2631 = vmatpush1.bf16.msra.mxu0 %v2580
    %2632 = vmatprep.subr.bf16.mxu0 0
    %2633 = vmatpush1.bf16.msra.mxu0 0
    %2634 = vmatprep.subr.bf16.mxu0 0
    %2635 = vmatpush1.bf16.msra.mxu0 0
    %2636 = vmatprep.subr.bf16.mxu0 0
    %2637 = vmatpush1.bf16.msra.mxu0 0
    %2638 = vmatprep.subr.bf16.mxu0 0
    %2639 = vmatpush1.bf16.msra.mxu0 0
    %2640 = vmatprep.subr.bf16.mxu0 0
    %2641 = vmatpush1.bf16.msra.mxu0 0
    %2642 = vmatprep.subr.bf16.mxu0 0
    %2643 = vmatpush1.bf16.msra.mxu0 0
    %2644 = vmatprep.subr.bf16.mxu0 0
    %2645 = vmatpush1.bf16.msra.mxu0 0
    %2646 = vmatprep.subr.bf16.mxu0 0
    %2647 = vmatpush1.bf16.msra.mxu0 0
    %2648 = vmatprep.mubr.bf16.mxu0 0
    %2649 = vmatmul.mubr.bf16.gmra.mrb[0].mxu0 0
    %v2650 = vpop.f32.mrb[0].mxu0
    %v2651 = vadd.f32 %v2452, %v2650
    %v2652 = vpop.f32.mrb[0].mxu0
    %v2653 = vadd.f32 %v2453, %v2652
    %v2654 = vpop.f32.mrb[0].mxu0
    %v2655 = vpop.f32.mrb[0].mxu0
    %2656 = vdwg.mxu0
    %2657 = vmatprep.subr.bf16.mxu0 %v2555
    %2658 = vmatpush1.bf16.msra.mxu0 %v2554
    %2659 = vmatprep.subr.bf16.mxu0 %v2559
    %2660 = vmatpush1.bf16.msra.mxu0 %v2558
    %2661 = vmatprep.subr.bf16.mxu0 %v2563
    %2662 = vmatpush1.bf16.msra.mxu0 %v2562
    %2663 = vmatprep.subr.bf16.mxu0 %v2567
    %2664 = vmatpush1.bf16.msra.mxu0 %v2566
    %2665 = vmatprep.subr.bf16.mxu0 %v2571
    %2666 = vmatpush1.bf16.msra.mxu0 %v2570
    %2667 = vmatprep.subr.bf16.mxu0 %v2575
    %2668 = vmatpush1.bf16.msra.mxu0 %v2574
    %2669 = vmatprep.subr.bf16.mxu0 %v2579
    %2670 = vmatpush1.bf16.msra.mxu0 %v2578
    %2671 = vmatprep.subr.bf16.mxu0 %v2583
    %2672 = vmatpush1.bf16.msra.mxu0 %v2582
    %2673 = vmatprep.subr.bf16.mxu0 0
    %2674 = vmatpush1.bf16.msra.mxu0 0
    %2675 = vmatprep.subr.bf16.mxu0 0
    %2676 = vmatpush1.bf16.msra.mxu0 0
    %2677 = vmatprep.subr.bf16.mxu0 0
    %2678 = vmatpush1.bf16.msra.mxu0 0
    %2679 = vmatprep.subr.bf16.mxu0 0
    %2680 = vmatpush1.bf16.msra.mxu0 0
    %2681 = vmatprep.subr.bf16.mxu0 0
    %2682 = vmatpush1.bf16.msra.mxu0 0
    %2683 = vmatprep.subr.bf16.mxu0 0
    %2684 = vmatpush1.bf16.msra.mxu0 0
    %2685 = vmatprep.subr.bf16.mxu0 0
    %2686 = vmatpush1.bf16.msra.mxu0 0
    %2687 = vmatprep.subr.bf16.mxu0 0
    %2688 = vmatpush1.bf16.msra.mxu0 0
    %2689 = vmatprep.mubr.bf16.mxu0 0
    %2690 = vmatmul.mubr.bf16.gmra.mrb[0].mxu0 0
    %v2691 = vpop.f32.mrb[0].mxu0
    %v2692 = vadd.f32 %v2454, %v2691
    %v2693 = vpop.f32.mrb[0].mxu0
    %v2694 = vadd.f32 %v2455, %v2693
    %v2695 = vpop.f32.mrb[0].mxu0
    %v2696 = vpop.f32.mrb[0].mxu0
    %2697 = vdwg.mxu0
    %v2698 = vpack.c.bf16 %v2651, %v2651
    %v2699 = vpack.c.bf16 %v2653, %v2653
    %v2700 = vpack.c.bf16 %v2692, %v2692
    %v2701 = vpack.c.bf16 %v2694, %v2694
    %v2702 = vxor.u32 %v2698, 2147516416
    %v2704 = vmul.bf16 %v2702, 1069105081
    %v2705 = vpow.bf16.pop %v2704
    %v2706 = vadd.bf16 %v2705, 1065369472
    %v2707 = vrcp.bf16.pop %v2706
    %v2708 = vmul.bf16 1065369472, %v2707
    %v2709 = vxor.u32 %v2699, 2147516416
    %v2711 = vmul.bf16 %v2709, 1069105081
    %v2712 = vpow.bf16.pop %v2711
    %v2713 = vadd.bf16 %v2712, 1065369472
    %v2714 = vrcp.bf16.pop %v2713
    %v2715 = vmul.bf16 1065369472, %v2714
    %v2716 = vtanh.bf16.pop %v2700
    %v2717 = vxor.u32 %v2701, 2147516416
    %v2719 = vmul.bf16 %v2717, 1069105081
    %v2720 = vpow.bf16.pop %v2719
    %v2721 = vadd.bf16 %v2720, 1065369472
    %v2722 = vrcp.bf16.pop %v2721
    %v2723 = vmul.bf16 1065369472, %v2722
    %v2724 = vunpack.c.l.bf16 %v2715
    %v2725 = vmul.f32 %v2724, 0.0
    %v2726 = vmul.bf16 %v2708, %v2716
    %v2727 = vunpack.c.l.bf16 %v2726
    %v2728 = vadd.f32 %v2725, %v2727
    %v2729 = vpack.c.bf16 %v2728, %v2728
    %v2730 = vtanh.bf16.pop %v2729
    %v2731 = vmul.bf16 %v2723, %v2730
    %v2732 = vmax.bf16 %v2731, 0
    %v2733 = vld [vmem:[#allocation13] sm:$0xf]
    %v2734 = vld [vmem:[#allocation13 + $0x4] sm:$0xf]
    %v2735 = vld [vmem:[#allocation13 + $0x8] sm:$0xf]
    %v2736 = vld [vmem:[#allocation13 + $0xc] sm:$0xf]
    %v2737 = vld [vmem:[#allocation13 + $0x10] sm:$0xf]
    %v2738 = vld [vmem:[#allocation13 + $0x14] sm:$0xf]
    %v2739 = vld [vmem:[#allocation13 + $0x18] sm:$0xf]
    %v2740 = vld [vmem:[#allocation13 + $0x1c] sm:$0xf]
    %v2741 = vld [vmem:[#allocation13 + $0x20] sm:$0xf]
    %v2742 = vld [vmem:[#allocation13 + $0x24] sm:$0xf]
    %v2743 = vld [vmem:[#allocation13 + $0x28] sm:$0xf]
    %v2744 = vld [vmem:[#allocation13 + $0x2c] sm:$0xf]
    %v2745 = vld [vmem:[#allocation13 + $0x30] sm:$0xf]
    %v2746 = vld [vmem:[#allocation13 + $0x34] sm:$0xf]
    %v2747 = vld [vmem:[#allocation13 + $0x38] sm:$0xf]
    %v2748 = vld [vmem:[#allocation13 + $0x3c] sm:$0xf]
    %v2749 = vld [vmem:[%s1007] sm:$0xff]
    %v2750 = vld [vmem:[%s1007 + $0x8] sm:$0xff]
    %v2751 = vunpack.c.l.bf16 %v2749
    %v2752 = vunpack.c.h.bf16 %v2749
    %v2753 = vunpack.c.l.bf16 %v2750
    %v2754 = vunpack.c.h.bf16 %v2750
    %2755 = vmatprep.subr.bf16.mxu0 %v2553
    %2756 = vmatpush1.bf16.msra.mxu0 %v2552
    %2757 = vmatprep.subr.bf16.mxu0 %v2557
    %2758 = vmatpush1.bf16.msra.mxu0 %v2556
    %2759 = vmatprep.subr.bf16.mxu0 %v2561
    %2760 = vmatpush1.bf16.msra.mxu0 %v2560
    %2761 = vmatprep.subr.bf16.mxu0 %v2565
    %2762 = vmatpush1.bf16.msra.mxu0 %v2564
    %2763 = vmatprep.subr.bf16.mxu0 %v2569
    %2764 = vmatpush1.bf16.msra.mxu0 %v2568
    %2765 = vmatprep.subr.bf16.mxu0 %v2573
    %2766 = vmatpush1.bf16.msra.mxu0 %v2572
    %2767 = vmatprep.subr.bf16.mxu0 %v2577
    %2768 = vmatpush1.bf16.msra.mxu0 %v2576
    %2769 = vmatprep.subr.bf16.mxu0 %v2581
    %2770 = vmatpush1.bf16.msra.mxu0 %v2580
    %2771 = vmatprep.subr.bf16.mxu0 0
    %2772 = vmatpush1.bf16.msra.mxu0 0
    %2773 = vmatprep.subr.bf16.mxu0 0
    %2774 = vmatpush1.bf16.msra.mxu0 0
    %2775 = vmatprep.subr.bf16.mxu0 0
    %2776 = vmatpush1.bf16.msra.mxu0 0
    %2777 = vmatprep.subr.bf16.mxu0 0
    %2778 = vmatpush1.bf16.msra.mxu0 0
    %2779 = vmatprep.subr.bf16.mxu0 0
    %2780 = vmatpush1.bf16.msra.mxu0 0
    %2781 = vmatprep.subr.bf16.mxu0 0
    %2782 = vmatpush1.bf16.msra.mxu0 0
    %2783 = vmatprep.subr.bf16.mxu0 0
    %2784 = vmatpush1.bf16.msra.mxu0 0
    %2785 = vmatprep.subr.bf16.mxu0 0
    %2786 = vmatpush1.bf16.msra.mxu0 0
    %2787 = vmatprep.mubr.bf16.mxu0 0
    %2788 = vmatmul.mubr.bf16.gmra.mrb[0].mxu0 %v2731
    %v2789 = vpop.f32.mrb[0].mxu0
    %v2790 = vadd.f32 %v2751, %v2789
    %v2791 = vpop.f32.mrb[0].mxu0
    %v2792 = vadd.f32 %v2752, %v2791
    %v2793 = vpop.f32.mrb[0].mxu0
    %v2794 = vpop.f32.mrb[0].mxu0
    %2795 = vdwg.mxu0
    %2796 = vmatprep.subr.bf16.mxu0 %v2555
    %2797 = vmatpush1.bf16.msra.mxu0 %v2554
    %2798 = vmatprep.subr.bf16.mxu0 %v2559
    %2799 = vmatpush1.bf16.msra.mxu0 %v2558
    %2800 = vmatprep.subr.bf16.mxu0 %v2563
    %2801 = vmatpush1.bf16.msra.mxu0 %v2562
    %2802 = vmatprep.subr.bf16.mxu0 %v2567
    %2803 = vmatpush1.bf16.msra.mxu0 %v2566
    %2804 = vmatprep.subr.bf16.mxu0 %v2571
    %2805 = vmatpush1.bf16.msra.mxu0 %v2570
    %2806 = vmatprep.subr.bf16.mxu0 %v2575
    %2807 = vmatpush1.bf16.msra.mxu0 %v2574
    %2808 = vmatprep.subr.bf16.mxu0 %v2579
    %2809 = vmatpush1.bf16.msra.mxu0 %v2578
    %2810 = vmatprep.subr.bf16.mxu0 %v2583
    %2811 = vmatpush1.bf16.msra.mxu0 %v2582
    %2812 = vmatprep.subr.bf16.mxu0 0
    %2813 = vmatpush1.bf16.msra.mxu0 0
    %2814 = vmatprep.subr.bf16.mxu0 0
    %2815 = vmatpush1.bf16.msra.mxu0 0
    %2816 = vmatprep.subr.bf16.mxu0 0
    %2817 = vmatpush1.bf16.msra.mxu0 0
    %2818 = vmatprep.subr.bf16.mxu0 0
    %2819 = vmatpush1.bf16.msra.mxu0 0
    %2820 = vmatprep.subr.bf16.mxu0 0
    %2821 = vmatpush1.bf16.msra.mxu0 0
    %2822 = vmatprep.subr.bf16.mxu0 0
    %2823 = vmatpush1.bf16.msra.mxu0 0
    %2824 = vmatprep.subr.bf16.mxu0 0
    %2825 = vmatpush1.bf16.msra.mxu0 0
    %2826 = vmatprep.subr.bf16.mxu0 0
    %2827 = vmatpush1.bf16.msra.mxu0 0
    %2828 = vmatprep.mubr.bf16.mxu0 0
    %2829 = vmatmul.mubr.bf16.gmra.mrb[0].mxu0 %v2731
    %v2830 = vpop.f32.mrb[0].mxu0
    %v2831 = vadd.f32 %v2753, %v2830
    %v2832 = vpop.f32.mrb[0].mxu0
    %v2833 = vadd.f32 %v2754, %v2832
    %v2834 = vpop.f32.mrb[0].mxu0
    %v2835 = vpop.f32.mrb[0].mxu0
    %2836 = vdwg.mxu0
    %v2837 = vpack.c.bf16 %v2790, %v2790
    %v2838 = vpack.c.bf16 %v2792, %v2792
    %v2839 = vpack.c.bf16 %v2831, %v2831
    %v2840 = vpack.c.bf16 %v2833, %v2833
    %v2841 = vxor.u32 %v2837, 2147516416
    %v2843 = vmul.bf16 %v2841, 1069105081
    %v2844 = vpow.bf16.pop %v2843
    %v2845 = vadd.bf16 %v2844, 1065369472
    %v2846 = vrcp.bf16.pop %v2845
    %v2847 = vmul.bf16 1065369472, %v2846
    %v2848 = vxor.u32 %v2838, 2147516416
    %v2850 = vmul.bf16 %v2848, 1069105081
    %v2851 = vpow.bf16.pop %v2850
    %v2852 = vadd.bf16 %v2851, 1065369472
    %v2853 = vrcp.bf16.pop %v2852
    %v2854 = vmul.bf16 1065369472, %v2853
    %v2855 = vtanh.bf16.pop %v2839
    %v2856 = vxor.u32 %v2840, 2147516416
    %v2858 = vmul.bf16 %v2856, 1069105081
    %v2859 = vpow.bf16.pop %v2858
    %v2860 = vadd.bf16 %v2859, 1065369472
    %v2861 = vrcp.bf16.pop %v2860
    %v2862 = vmul.bf16 1065369472, %v2861
    %v2863 = vunpack.c.l.bf16 %v2854
    %v2864 = vmul.f32 %v2863, %v2728
    %v2865 = vmul.bf16 %v2847, %v2855
    %v2866 = vunpack.c.l.bf16 %v2865
    %v2867 = vadd.f32 %v2864, %v2866
    %v2868 = vpack.c.bf16 %v2867, %v2867
    %v2869 = vtanh.bf16.pop %v2868
    %v2870 = vmul.bf16 %v2862, %v2869
    %v2871 = vmax.bf16 %v2870, 0
    %s2872 = scalar_lea.vmem [#allocation13], 64
    %v2873 = vld [vmem:[%s2872] sm:$0xf]
    %v2874 = vld [vmem:[%s2872 + $0x4] sm:$0xf]
    %v2875 = vld [vmem:[%s2872 + $0x8] sm:$0xf]
    %v2876 = vld [vmem:[%s2872 + $0xc] sm:$0xf]
    %v2877 = vld [vmem:[%s2872 + $0x10] sm:$0xf]
    %v2878 = vld [vmem:[%s2872 + $0x14] sm:$0xf]
    %v2879 = vld [vmem:[%s2872 + $0x18] sm:$0xf]
    %v2880 = vld [vmem:[%s2872 + $0x1c] sm:$0xf]
    %v2881 = vld [vmem:[%s2872 + $0x20] sm:$0xf]
    %v2882 = vld [vmem:[%s2872 + $0x24] sm:$0xf]
    %v2883 = vld [vmem:[%s2872 + $0x28] sm:$0xf]
    %v2884 = vld [vmem:[%s2872 + $0x2c] sm:$0xf]
    %v2885 = vld [vmem:[%s2872 + $0x30] sm:$0xf]
    %v2886 = vld [vmem:[%s2872 + $0x34] sm:$0xf]
    %v2887 = vld [vmem:[%s2872 + $0x38] sm:$0xf]
    %v2888 = vld [vmem:[%s2872 + $0x3c] sm:$0xf]
    %v2905 = vunpack.c.l.b16 %v2873
    %v2906 = vunpack.c.l.b16 %v2874
    %v2907 = vunpack.c.l.b16 %v2875
    %v2908 = vunpack.c.l.b16 %v2876
    %v2909 = vunpack.c.l.b16 %v2877
    %v2910 = vunpack.c.l.b16 %v2878
    %v2911 = vunpack.c.l.b16 %v2879
    %v2912 = vunpack.c.l.b16 %v2880
    %v2913 = vunpack.c.l.b16 %v2881
    %v2914 = vunpack.c.l.b16 %v2882
    %v2915 = vunpack.c.l.b16 %v2883
    %v2916 = vunpack.c.l.b16 %v2884
    %v2917 = vunpack.c.l.b16 %v2885
    %v2918 = vunpack.c.l.b16 %v2886
    %v2919 = vunpack.c.l.b16 %v2887
    %v2920 = vunpack.c.l.b16 %v2888
    %v2921 = vpack.c.b16 %v2906, %v2905
    %v2922 = vpack.c.b16 %v2908, %v2907
    %v2923 = vpack.c.b16 %v2910, %v2909
    %v2924 = vpack.c.b16 %v2912, %v2911
    %v2925 = vpack.c.b16 %v2914, %v2913
    %v2926 = vpack.c.b16 %v2916, %v2915
    %v2927 = vpack.c.b16 %v2918, %v2917
    %v2928 = vpack.c.b16 %v2920, %v2919
    %2937 = vmatprep.subr.bf16.mxu0 0
    %2938 = vmatpush1.bf16.msra.mxu0 %v2921
    %2939 = vmatprep.subr.bf16.mxu0 0
    %2940 = vmatpush1.bf16.msra.mxu0 %v2922
    %2941 = vmatprep.subr.bf16.mxu0 0
    %2942 = vmatpush1.bf16.msra.mxu0 %v2923
    %2943 = vmatprep.subr.bf16.mxu0 0
    %2944 = vmatpush1.bf16.msra.mxu0 %v2924
    %2945 = vmatprep.subr.bf16.mxu0 0
    %2946 = vmatpush1.bf16.msra.mxu0 %v2925
    %2947 = vmatprep.subr.bf16.mxu0 0
    %2948 = vmatpush1.bf16.msra.mxu0 %v2926
    %2949 = vmatprep.subr.bf16.mxu0 0
    %2950 = vmatpush1.bf16.msra.mxu0 %v2927
    %2951 = vmatprep.subr.bf16.mxu0 0
    %2952 = vmatpush1.bf16.msra.mxu0 %v2928
    %2953 = vmatprep.subr.bf16.mxu0 0
    %2954 = vmatpush1.bf16.msra.mxu0 0
    %2955 = vmatprep.subr.bf16.mxu0 0
    %2956 = vmatpush1.bf16.msra.mxu0 0
    %2957 = vmatprep.subr.bf16.mxu0 0
    %2958 = vmatpush1.bf16.msra.mxu0 0
    %2959 = vmatprep.subr.bf16.mxu0 0
    %2960 = vmatpush1.bf16.msra.mxu0 0
    %2961 = vmatprep.subr.bf16.mxu0 0
    %2962 = vmatpush1.bf16.msra.mxu0 0
    %2963 = vmatprep.subr.bf16.mxu0 0
    %2964 = vmatpush1.bf16.msra.mxu0 0
    %2965 = vmatprep.subr.bf16.mxu0 0
    %2966 = vmatpush1.bf16.msra.mxu0 0
    %2967 = vmatprep.subr.bf16.mxu0 0
    %2968 = vmatpush1.bf16.msra.mxu0 0
    %2969 = vmatprep.mubr.bf16.mxu0 0
    %2970 = vmatmul.mubr.bf16.gmra.mrb[0].mxu0 %v2871
    %v2971 = vpop.f32.mrb[0].mxu0
    %v2972 = vadd.f32 0.0, %v2971
    %v2973 = vpop.f32.mrb[0].mxu0
    %v2974 = vpop.f32.mrb[0].mxu0
    %v2975 = vpop.f32.mrb[0].mxu0
    %2976 = vdwg.mxu0
    %v2993 = vunpack.c.l.b16 %v2733
    %v2994 = vunpack.c.l.b16 %v2734
    %v2995 = vunpack.c.l.b16 %v2735
    %v2996 = vunpack.c.l.b16 %v2736
    %v2997 = vunpack.c.l.b16 %v2737
    %v2998 = vunpack.c.l.b16 %v2738
    %v2999 = vunpack.c.l.b16 %v2739
    %v3000 = vunpack.c.l.b16 %v2740
    %v3001 = vunpack.c.l.b16 %v2741
    %v3002 = vunpack.c.l.b16 %v2742
    %v3003 = vunpack.c.l.b16 %v2743
    %v3004 = vunpack.c.l.b16 %v2744
    %v3005 = vunpack.c.l.b16 %v2745
    %v3006 = vunpack.c.l.b16 %v2746
    %v3007 = vunpack.c.l.b16 %v2747
    %v3008 = vunpack.c.l.b16 %v2748
    %v3009 = vpack.c.b16 %v2994, %v2993
    %v3010 = vpack.c.b16 %v2996, %v2995
    %v3011 = vpack.c.b16 %v2998, %v2997
    %v3012 = vpack.c.b16 %v3000, %v2999
    %v3013 = vpack.c.b16 %v3002, %v3001
    %v3014 = vpack.c.b16 %v3004, %v3003
    %v3015 = vpack.c.b16 %v3006, %v3005
    %v3016 = vpack.c.b16 %v3008, %v3007
    %3025 = vmatprep.subr.bf16.mxu0 0
    %3026 = vmatpush1.bf16.msra.mxu0 %v3009
    %3027 = vmatprep.subr.bf16.mxu0 0
    %3028 = vmatpush1.bf16.msra.mxu0 %v3010
    %3029 = vmatprep.subr.bf16.mxu0 0
    %3030 = vmatpush1.bf16.msra.mxu0 %v3011
    %3031 = vmatprep.subr.bf16.mxu0 0
    %3032 = vmatpush1.bf16.msra.mxu0 %v3012
    %3033 = vmatprep.subr.bf16.mxu0 0
    %3034 = vmatpush1.bf16.msra.mxu0 %v3013
    %3035 = vmatprep.subr.bf16.mxu0 0
    %3036 = vmatpush1.bf16.msra.mxu0 %v3014
    %3037 = vmatprep.subr.bf16.mxu0 0
    %3038 = vmatpush1.bf16.msra.mxu0 %v3015
    %3039 = vmatprep.subr.bf16.mxu0 0
    %3040 = vmatpush1.bf16.msra.mxu0 %v3016
    %3041 = vmatprep.subr.bf16.mxu0 0
    %3042 = vmatpush1.bf16.msra.mxu0 0
    %3043 = vmatprep.subr.bf16.mxu0 0
    %3044 = vmatpush1.bf16.msra.mxu0 0
    %3045 = vmatprep.subr.bf16.mxu0 0
    %3046 = vmatpush1.bf16.msra.mxu0 0
    %3047 = vmatprep.subr.bf16.mxu0 0
    %3048 = vmatpush1.bf16.msra.mxu0 0
    %3049 = vmatprep.subr.bf16.mxu0 0
    %3050 = vmatpush1.bf16.msra.mxu0 0
    %3051 = vmatprep.subr.bf16.mxu0 0
    %3052 = vmatpush1.bf16.msra.mxu0 0
    %3053 = vmatprep.subr.bf16.mxu0 0
    %3054 = vmatpush1.bf16.msra.mxu0 0
    %3055 = vmatprep.subr.bf16.mxu0 0
    %3056 = vmatpush1.bf16.msra.mxu0 0
    %3057 = vmatprep.mubr.bf16.mxu0 0
    %3058 = vmatmul.mubr.bf16.gmra.mrb[0].mxu0 %v2732
    %v3059 = vpop.f32.mrb[0].mxu0
    %v3060 = vadd.f32 %v2972, %v3059
    %v3061 = vpop.f32.mrb[0].mxu0
    %v3062 = vpop.f32.mrb[0].mxu0
    %v3063 = vpop.f32.mrb[0].mxu0
    %3064 = vdwg.mxu0
    %v3065 = vld [vmem:[%s1132] sm:$0xff]
    %v3066 = vld [vmem:[%s1132 + $0x8] sm:$0xff]
    %v3067 = vunpack.c.l.bf16 %v3065
    %v3068 = vunpack.c.h.bf16 %v3065
    %v3069 = vunpack.c.l.bf16 %v3066
    %v3070 = vunpack.c.h.bf16 %v3066
    %3071 = vmatprep.subr.bf16.mxu0 %v2553
    %3072 = vmatpush1.bf16.msra.mxu0 %v2552
    %3073 = vmatprep.subr.bf16.mxu0 %v2557
    %3074 = vmatpush1.bf16.msra.mxu0 %v2556
    %3075 = vmatprep.subr.bf16.mxu0 %v2561
    %3076 = vmatpush1.bf16.msra.mxu0 %v2560
    %3077 = vmatprep.subr.bf16.mxu0 %v2565
    %3078 = vmatpush1.bf16.msra.mxu0 %v2564
    %3079 = vmatprep.subr.bf16.mxu0 %v2569
    %3080 = vmatpush1.bf16.msra.mxu0 %v2568
    %3081 = vmatprep.subr.bf16.mxu0 %v2573
    %3082 = vmatpush1.bf16.msra.mxu0 %v2572
    %3083 = vmatprep.subr.bf16.mxu0 %v2577
    %3084 = vmatpush1.bf16.msra.mxu0 %v2576
    %3085 = vmatprep.subr.bf16.mxu0 %v2581
    %3086 = vmatpush1.bf16.msra.mxu0 %v2580
    %3087 = vmatprep.subr.bf16.mxu0 0
    %3088 = vmatpush1.bf16.msra.mxu0 0
    %3089 = vmatprep.subr.bf16.mxu0 0
    %3090 = vmatpush1.bf16.msra.mxu0 0
    %3091 = vmatprep.subr.bf16.mxu0 0
    %3092 = vmatpush1.bf16.msra.mxu0 0
    %3093 = vmatprep.subr.bf16.mxu0 0
    %3094 = vmatpush1.bf16.msra.mxu0 0
    %3095 = vmatprep.subr.bf16.mxu0 0
    %3096 = vmatpush1.bf16.msra.mxu0 0
    %3097 = vmatprep.subr.bf16.mxu0 0
    %3098 = vmatpush1.bf16.msra.mxu0 0
    %3099 = vmatprep.subr.bf16.mxu0 0
    %3100 = vmatpush1.bf16.msra.mxu0 0
    %3101 = vmatprep.subr.bf16.mxu0 0
    %3102 = vmatpush1.bf16.msra.mxu0 0
    %3103 = vmatprep.mubr.bf16.mxu0 0
    %3104 = vmatmul.mubr.bf16.gmra.mrb[0].mxu0 %v2870
    %v3105 = vpop.f32.mrb[0].mxu0
    %v3106 = vadd.f32 %v3067, %v3105
    %v3107 = vpop.f32.mrb[0].mxu0
    %v3108 = vadd.f32 %v3068, %v3107
    %v3109 = vpop.f32.mrb[0].mxu0
    %v3110 = vpop.f32.mrb[0].mxu0
    %3111 = vdwg.mxu0
    %3112 = vmatprep.subr.bf16.mxu0 %v2555
    %3113 = vmatpush1.bf16.msra.mxu0 %v2554
    %3114 = vmatprep.subr.bf16.mxu0 %v2559
    %3115 = vmatpush1.bf16.msra.mxu0 %v2558
    %3116 = vmatprep.subr.bf16.mxu0 %v2563
    %3117 = vmatpush1.bf16.msra.mxu0 %v2562
    %3118 = vmatprep.subr.bf16.mxu0 %v2567
    %3119 = vmatpush1.bf16.msra.mxu0 %v2566
    %3120 = vmatprep.subr.bf16.mxu0 %v2571
    %3121 = vmatpush1.bf16.msra.mxu0 %v2570
    %3122 = vmatprep.subr.bf16.mxu0 %v2575
    %3123 = vmatpush1.bf16.msra.mxu0 %v2574
    %3124 = vmatprep.subr.bf16.mxu0 %v2579
    %3125 = vmatpush1.bf16.msra.mxu0 %v2578
    %3126 = vmatprep.subr.bf16.mxu0 %v2583
    %3127 = vmatpush1.bf16.msra.mxu0 %v2582
    %3128 = vmatprep.subr.bf16.mxu0 0
    %3129 = vmatpush1.bf16.msra.mxu0 0
    %3130 = vmatprep.subr.bf16.mxu0 0
    %3131 = vmatpush1.bf16.msra.mxu0 0
    %3132 = vmatprep.subr.bf16.mxu0 0
    %3133 = vmatpush1.bf16.msra.mxu0 0
    %3134 = vmatprep.subr.bf16.mxu0 0
    %3135 = vmatpush1.bf16.msra.mxu0 0
    %3136 = vmatprep.subr.bf16.mxu0 0
    %3137 = vmatpush1.bf16.msra.mxu0 0
    %3138 = vmatprep.subr.bf16.mxu0 0
    %3139 = vmatpush1.bf16.msra.mxu0 0
    %3140 = vmatprep.subr.bf16.mxu0 0
    %3141 = vmatpush1.bf16.msra.mxu0 0
    %3142 = vmatprep.subr.bf16.mxu0 0
    %3143 = vmatpush1.bf16.msra.mxu0 0
    %3144 = vmatprep.mubr.bf16.mxu0 0
    %3145 = vmatmul.mubr.bf16.gmra.mrb[0].mxu0 %v2870
    %v3146 = vpop.f32.mrb[0].mxu0
    %v3147 = vadd.f32 %v3069, %v3146
    %v3148 = vpop.f32.mrb[0].mxu0
    %v3149 = vadd.f32 %v3070, %v3148
    %v3150 = vpop.f32.mrb[0].mxu0
    %v3151 = vpop.f32.mrb[0].mxu0
    %3152 = vdwg.mxu0
    %v3153 = vpack.c.bf16 %v3106, %v3106
    %v3154 = vpack.c.bf16 %v3108, %v3108
    %v3155 = vpack.c.bf16 %v3147, %v3147
    %v3156 = vpack.c.bf16 %v3149, %v3149
    %v3157 = vxor.u32 %v3153, 2147516416
    %v3159 = vmul.bf16 %v3157, 1069105081
    %v3160 = vpow.bf16.pop %v3159
    %v3161 = vadd.bf16 %v3160, 1065369472
    %v3162 = vrcp.bf16.pop %v3161
    %v3163 = vmul.bf16 1065369472, %v3162
    %v3164 = vxor.u32 %v3154, 2147516416
    %v3166 = vmul.bf16 %v3164, 1069105081
    %v3167 = vpow.bf16.pop %v3166
    %v3168 = vadd.bf16 %v3167, 1065369472
    %v3169 = vrcp.bf16.pop %v3168
    %v3170 = vmul.bf16 1065369472, %v3169
    %v3171 = vtanh.bf16.pop %v3155
    %v3172 = vxor.u32 %v3156, 2147516416
    %v3174 = vmul.bf16 %v3172, 1069105081
    %v3175 = vpow.bf16.pop %v3174
    %v3176 = vadd.bf16 %v3175, 1065369472
    %v3177 = vrcp.bf16.pop %v3176
    %v3178 = vmul.bf16 1065369472, %v3177
    %v3179 = vunpack.c.l.bf16 %v3170
    %v3180 = vmul.f32 %v3179, %v2867
    %v3181 = vmul.bf16 %v3163, %v3171
    %v3182 = vunpack.c.l.bf16 %v3181
    %v3183 = vadd.f32 %v3180, %v3182
    %v3184 = vpack.c.bf16 %v3183, %v3183
    %v3185 = vtanh.bf16.pop %v3184
    %v3186 = vmul.bf16 %v3178, %v3185
    %v3187 = vmax.bf16 %v3186, 0
    %s3188 = scalar_lea.vmem [#allocation13], 128
    %v3189 = vld [vmem:[%s3188] sm:$0xf]
    %v3190 = vld [vmem:[%s3188 + $0x4] sm:$0xf]
    %v3191 = vld [vmem:[%s3188 + $0x8] sm:$0xf]
    %v3192 = vld [vmem:[%s3188 + $0xc] sm:$0xf]
    %v3193 = vld [vmem:[%s3188 + $0x10] sm:$0xf]
    %v3194 = vld [vmem:[%s3188 + $0x14] sm:$0xf]
    %v3195 = vld [vmem:[%s3188 + $0x18] sm:$0xf]
    %v3196 = vld [vmem:[%s3188 + $0x1c] sm:$0xf]
    %v3197 = vld [vmem:[%s3188 + $0x20] sm:$0xf]
    %v3198 = vld [vmem:[%s3188 + $0x24] sm:$0xf]
    %v3199 = vld [vmem:[%s3188 + $0x28] sm:$0xf]
    %v3200 = vld [vmem:[%s3188 + $0x2c] sm:$0xf]
    %v3201 = vld [vmem:[%s3188 + $0x30] sm:$0xf]
    %v3202 = vld [vmem:[%s3188 + $0x34] sm:$0xf]
    %v3203 = vld [vmem:[%s3188 + $0x38] sm:$0xf]
    %v3204 = vld [vmem:[%s3188 + $0x3c] sm:$0xf]
    %v3221 = vunpack.c.l.b16 %v3189
    %v3222 = vunpack.c.l.b16 %v3190
    %v3223 = vunpack.c.l.b16 %v3191
    %v3224 = vunpack.c.l.b16 %v3192
    %v3225 = vunpack.c.l.b16 %v3193
    %v3226 = vunpack.c.l.b16 %v3194
    %v3227 = vunpack.c.l.b16 %v3195
    %v3228 = vunpack.c.l.b16 %v3196
    %v3229 = vunpack.c.l.b16 %v3197
    %v3230 = vunpack.c.l.b16 %v3198
    %v3231 = vunpack.c.l.b16 %v3199
    %v3232 = vunpack.c.l.b16 %v3200
    %v3233 = vunpack.c.l.b16 %v3201
    %v3234 = vunpack.c.l.b16 %v3202
    %v3235 = vunpack.c.l.b16 %v3203
    %v3236 = vunpack.c.l.b16 %v3204
    %v3237 = vpack.c.b16 %v3222, %v3221
    %v3238 = vpack.c.b16 %v3224, %v3223
    %v3239 = vpack.c.b16 %v3226, %v3225
    %v3240 = vpack.c.b16 %v3228, %v3227
    %v3241 = vpack.c.b16 %v3230, %v3229
    %v3242 = vpack.c.b16 %v3232, %v3231
    %v3243 = vpack.c.b16 %v3234, %v3233
    %v3244 = vpack.c.b16 %v3236, %v3235
    %3253 = vmatprep.subr.bf16.mxu0 0
    %3254 = vmatpush1.bf16.msra.mxu0 %v3237
    %3255 = vmatprep.subr.bf16.mxu0 0
    %3256 = vmatpush1.bf16.msra.mxu0 %v3238
    %3257 = vmatprep.subr.bf16.mxu0 0
    %3258 = vmatpush1.bf16.msra.mxu0 %v3239
    %3259 = vmatprep.subr.bf16.mxu0 0
    %3260 = vmatpush1.bf16.msra.mxu0 %v3240
    %3261 = vmatprep.subr.bf16.mxu0 0
    %3262 = vmatpush1.bf16.msra.mxu0 %v3241
    %3263 = vmatprep.subr.bf16.mxu0 0
    %3264 = vmatpush1.bf16.msra.mxu0 %v3242
    %3265 = vmatprep.subr.bf16.mxu0 0
    %3266 = vmatpush1.bf16.msra.mxu0 %v3243
    %3267 = vmatprep.subr.bf16.mxu0 0
    %3268 = vmatpush1.bf16.msra.mxu0 %v3244
    %3269 = vmatprep.subr.bf16.mxu0 0
    %3270 = vmatpush1.bf16.msra.mxu0 0
    %3271 = vmatprep.subr.bf16.mxu0 0
    %3272 = vmatpush1.bf16.msra.mxu0 0
    %3273 = vmatprep.subr.bf16.mxu0 0
    %3274 = vmatpush1.bf16.msra.mxu0 0
    %3275 = vmatprep.subr.bf16.mxu0 0
    %3276 = vmatpush1.bf16.msra.mxu0 0
    %3277 = vmatprep.subr.bf16.mxu0 0
    %3278 = vmatpush1.bf16.msra.mxu0 0
    %3279 = vmatprep.subr.bf16.mxu0 0
    %3280 = vmatpush1.bf16.msra.mxu0 0
    %3281 = vmatprep.subr.bf16.mxu0 0
    %3282 = vmatpush1.bf16.msra.mxu0 0
    %3283 = vmatprep.subr.bf16.mxu0 0
    %3284 = vmatpush1.bf16.msra.mxu0 0
    %3285 = vmatprep.mubr.bf16.mxu0 0
    %3286 = vmatmul.mubr.bf16.gmra.mrb[0].mxu0 %v3187
    %v3287 = vpop.f32.mrb[0].mxu0
    %v3288 = vadd.f32 0.0, %v3287
    %v3289 = vpop.f32.mrb[0].mxu0
    %v3290 = vpop.f32.mrb[0].mxu0
    %v3291 = vpop.f32.mrb[0].mxu0
    %3292 = vdwg.mxu0
    %v3293 = vadd.f32 %v3060, %v3288
    %v3294 = vld [vmem:[%s1257] sm:$0xff]
    %v3295 = vld [vmem:[%s1257 + $0x8] sm:$0xff]
    %v3296 = vunpack.c.l.bf16 %v3294
    %v3297 = vunpack.c.h.bf16 %v3294
    %v3298 = vunpack.c.l.bf16 %v3295
    %v3299 = vunpack.c.h.bf16 %v3295
    %3300 = vmatprep.subr.bf16.mxu0 %v2553
    %3301 = vmatpush1.bf16.msra.mxu0 %v2552
    %3302 = vmatprep.subr.bf16.mxu0 %v2557
    %3303 = vmatpush1.bf16.msra.mxu0 %v2556
    %3304 = vmatprep.subr.bf16.mxu0 %v2561
    %3305 = vmatpush1.bf16.msra.mxu0 %v2560
    %3306 = vmatprep.subr.bf16.mxu0 %v2565
    %3307 = vmatpush1.bf16.msra.mxu0 %v2564
    %3308 = vmatprep.subr.bf16.mxu0 %v2569
    %3309 = vmatpush1.bf16.msra.mxu0 %v2568
    %3310 = vmatprep.subr.bf16.mxu0 %v2573
    %3311 = vmatpush1.bf16.msra.mxu0 %v2572
    %3312 = vmatprep.subr.bf16.mxu0 %v2577
    %3313 = vmatpush1.bf16.msra.mxu0 %v2576
    %3314 = vmatprep.subr.bf16.mxu0 %v2581
    %3315 = vmatpush1.bf16.msra.mxu0 %v2580
    %3316 = vmatprep.subr.bf16.mxu0 0
    %3317 = vmatpush1.bf16.msra.mxu0 0
    %3318 = vmatprep.subr.bf16.mxu0 0
    %3319 = vmatpush1.bf16.msra.mxu0 0
    %3320 = vmatprep.subr.bf16.mxu0 0
    %3321 = vmatpush1.bf16.msra.mxu0 0
    %3322 = vmatprep.subr.bf16.mxu0 0
    %3323 = vmatpush1.bf16.msra.mxu0 0
    %3324 = vmatprep.subr.bf16.mxu0 0
    %3325 = vmatpush1.bf16.msra.mxu0 0
    %3326 = vmatprep.subr.bf16.mxu0 0
    %3327 = vmatpush1.bf16.msra.mxu0 0
    %3328 = vmatprep.subr.bf16.mxu0 0
    %3329 = vmatpush1.bf16.msra.mxu0 0
    %3330 = vmatprep.subr.bf16.mxu0 0
    %3331 = vmatpush1.bf16.msra.mxu0 0
    %3332 = vmatprep.mubr.bf16.mxu0 0
    %3333 = vmatmul.mubr.bf16.gmra.mrb[0].mxu0 %v3186
    %v3334 = vpop.f32.mrb[0].mxu0
    %v3335 = vadd.f32 %v3296, %v3334
    %v3336 = vpop.f32.mrb[0].mxu0
    %v3337 = vadd.f32 %v3297, %v3336
    %v3338 = vpop.f32.mrb[0].mxu0
    %v3339 = vpop.f32.mrb[0].mxu0
    %3340 = vdwg.mxu0
    %3341 = vmatprep.subr.bf16.mxu0 %v2555
    %3342 = vmatpush1.bf16.msra.mxu0 %v2554
    %3343 = vmatprep.subr.bf16.mxu0 %v2559
    %3344 = vmatpush1.bf16.msra.mxu0 %v2558
    %3345 = vmatprep.subr.bf16.mxu0 %v2563
    %3346 = vmatpush1.bf16.msra.mxu0 %v2562
    %3347 = vmatprep.subr.bf16.mxu0 %v2567
    %3348 = vmatpush1.bf16.msra.mxu0 %v2566
    %3349 = vmatprep.subr.bf16.mxu0 %v2571
    %3350 = vmatpush1.bf16.msra.mxu0 %v2570
    %3351 = vmatprep.subr.bf16.mxu0 %v2575
    %3352 = vmatpush1.bf16.msra.mxu0 %v2574
    %3353 = vmatprep.subr.bf16.mxu0 %v2579
    %3354 = vmatpush1.bf16.msra.mxu0 %v2578
    %3355 = vmatprep.subr.bf16.mxu0 %v2583
    %3356 = vmatpush1.bf16.msra.mxu0 %v2582
    %3357 = vmatprep.subr.bf16.mxu0 0
    %3358 = vmatpush1.bf16.msra.mxu0 0
    %3359 = vmatprep.subr.bf16.mxu0 0
    %3360 = vmatpush1.bf16.msra.mxu0 0
    %3361 = vmatprep.subr.bf16.mxu0 0
    %3362 = vmatpush1.bf16.msra.mxu0 0
    %3363 = vmatprep.subr.bf16.mxu0 0
    %3364 = vmatpush1.bf16.msra.mxu0 0
    %3365 = vmatprep.subr.bf16.mxu0 0
    %3366 = vmatpush1.bf16.msra.mxu0 0
    %3367 = vmatprep.subr.bf16.mxu0 0
    %3368 = vmatpush1.bf16.msra.mxu0 0
    %3369 = vmatprep.subr.bf16.mxu0 0
    %3370 = vmatpush1.bf16.msra.mxu0 0
    %3371 = vmatprep.subr.bf16.mxu0 0
    %3372 = vmatpush1.bf16.msra.mxu0 0
    %3373 = vmatprep.mubr.bf16.mxu0 0
    %3374 = vmatmul.mubr.bf16.gmra.mrb[0].mxu0 %v3186
    %v3375 = vpop.f32.mrb[0].mxu0
    %v3376 = vadd.f32 %v3298, %v3375
    %v3377 = vpop.f32.mrb[0].mxu0
    %v3378 = vadd.f32 %v3299, %v3377
    %v3379 = vpop.f32.mrb[0].mxu0
    %v3380 = vpop.f32.mrb[0].mxu0
    %3381 = vdwg.mxu0
    %v3382 = vpack.c.bf16 %v3335, %v3335
    %v3383 = vpack.c.bf16 %v3337, %v3337
    %v3384 = vpack.c.bf16 %v3376, %v3376
    %v3385 = vpack.c.bf16 %v3378, %v3378
    %v3386 = vxor.u32 %v3382, 2147516416
    %v3388 = vmul.bf16 %v3386, 1069105081
    %v3389 = vpow.bf16.pop %v3388
    %v3390 = vadd.bf16 %v3389, 1065369472
    %v3391 = vrcp.bf16.pop %v3390
    %v3392 = vmul.bf16 1065369472, %v3391
    %v3393 = vxor.u32 %v3383, 2147516416
    %v3395 = vmul.bf16 %v3393, 1069105081
    %v3396 = vpow.bf16.pop %v3395
    %v3397 = vadd.bf16 %v3396, 1065369472
    %v3398 = vrcp.bf16.pop %v3397
    %v3399 = vmul.bf16 1065369472, %v3398
    %v3400 = vtanh.bf16.pop %v3384
    %v3401 = vxor.u32 %v3385, 2147516416
    %v3403 = vmul.bf16 %v3401, 1069105081
    %v3404 = vpow.bf16.pop %v3403
    %v3405 = vadd.bf16 %v3404, 1065369472
    %v3406 = vrcp.bf16.pop %v3405
    %v3407 = vmul.bf16 1065369472, %v3406
    %v3408 = vunpack.c.l.bf16 %v3399
    %v3409 = vmul.f32 %v3408, %v3183
    %v3410 = vmul.bf16 %v3392, %v3400
    %v3411 = vunpack.c.l.bf16 %v3410
    %v3412 = vadd.f32 %v3409, %v3411
    %v3413 = vpack.c.bf16 %v3412, %v3412
    %v3414 = vtanh.bf16.pop %v3413
    %v3415 = vmul.bf16 %v3407, %v3414
    %v3416 = vmax.bf16 %v3415, 0
    %s3417 = scalar_lea.vmem [#allocation13], 192
    %v3418 = vld [vmem:[%s3417] sm:$0xf]
    %v3419 = vld [vmem:[%s3417 + $0x4] sm:$0xf]
    %v3420 = vld [vmem:[%s3417 + $0x8] sm:$0xf]
    %v3421 = vld [vmem:[%s3417 + $0xc] sm:$0xf]
    %v3422 = vld [vmem:[%s3417 + $0x10] sm:$0xf]
    %v3423 = vld [vmem:[%s3417 + $0x14] sm:$0xf]
    %v3424 = vld [vmem:[%s3417 + $0x18] sm:$0xf]
    %v3425 = vld [vmem:[%s3417 + $0x1c] sm:$0xf]
    %v3426 = vld [vmem:[%s3417 + $0x20] sm:$0xf]
    %v3427 = vld [vmem:[%s3417 + $0x24] sm:$0xf]
    %v3428 = vld [vmem:[%s3417 + $0x28] sm:$0xf]
    %v3429 = vld [vmem:[%s3417 + $0x2c] sm:$0xf]
    %v3430 = vld [vmem:[%s3417 + $0x30] sm:$0xf]
    %v3431 = vld [vmem:[%s3417 + $0x34] sm:$0xf]
    %v3432 = vld [vmem:[%s3417 + $0x38] sm:$0xf]
    %v3433 = vld [vmem:[%s3417 + $0x3c] sm:$0xf]
    %v3450 = vunpack.c.l.b16 %v3418
    %v3451 = vunpack.c.l.b16 %v3419
    %v3452 = vunpack.c.l.b16 %v3420
    %v3453 = vunpack.c.l.b16 %v3421
    %v3454 = vunpack.c.l.b16 %v3422
    %v3455 = vunpack.c.l.b16 %v3423
    %v3456 = vunpack.c.l.b16 %v3424
    %v3457 = vunpack.c.l.b16 %v3425
    %v3458 = vunpack.c.l.b16 %v3426
    %v3459 = vunpack.c.l.b16 %v3427
    %v3460 = vunpack.c.l.b16 %v3428
    %v3461 = vunpack.c.l.b16 %v3429
    %v3462 = vunpack.c.l.b16 %v3430
    %v3463 = vunpack.c.l.b16 %v3431
    %v3464 = vunpack.c.l.b16 %v3432
    %v3465 = vunpack.c.l.b16 %v3433
    %v3466 = vpack.c.b16 %v3451, %v3450
    %v3467 = vpack.c.b16 %v3453, %v3452
    %v3468 = vpack.c.b16 %v3455, %v3454
    %v3469 = vpack.c.b16 %v3457, %v3456
    %v3470 = vpack.c.b16 %v3459, %v3458
    %v3471 = vpack.c.b16 %v3461, %v3460
    %v3472 = vpack.c.b16 %v3463, %v3462
    %v3473 = vpack.c.b16 %v3465, %v3464
    %3482 = vmatprep.subr.bf16.mxu0 0
    %3483 = vmatpush1.bf16.msra.mxu0 %v3466
    %3484 = vmatprep.subr.bf16.mxu0 0
    %3485 = vmatpush1.bf16.msra.mxu0 %v3467
    %3486 = vmatprep.subr.bf16.mxu0 0
    %3487 = vmatpush1.bf16.msra.mxu0 %v3468
    %3488 = vmatprep.subr.bf16.mxu0 0
    %3489 = vmatpush1.bf16.msra.mxu0 %v3469
    %3490 = vmatprep.subr.bf16.mxu0 0
    %3491 = vmatpush1.bf16.msra.mxu0 %v3470
    %3492 = vmatprep.subr.bf16.mxu0 0
    %3493 = vmatpush1.bf16.msra.mxu0 %v3471
    %3494 = vmatprep.subr.bf16.mxu0 0
    %3495 = vmatpush1.bf16.msra.mxu0 %v3472
    %3496 = vmatprep.subr.bf16.mxu0 0
    %3497 = vmatpush1.bf16.msra.mxu0 %v3473
    %3498 = vmatprep.subr.bf16.mxu0 0
    %3499 = vmatpush1.bf16.msra.mxu0 0
    %3500 = vmatprep.subr.bf16.mxu0 0
    %3501 = vmatpush1.bf16.msra.mxu0 0
    %3502 = vmatprep.subr.bf16.mxu0 0
    %3503 = vmatpush1.bf16.msra.mxu0 0
    %3504 = vmatprep.subr.bf16.mxu0 0
    %3505 = vmatpush1.bf16.msra.mxu0 0
    %3506 = vmatprep.subr.bf16.mxu0 0
    %3507 = vmatpush1.bf16.msra.mxu0 0
    %3508 = vmatprep.subr.bf16.mxu0 0
    %3509 = vmatpush1.bf16.msra.mxu0 0
    %3510 = vmatprep.subr.bf16.mxu0 0
    %3511 = vmatpush1.bf16.msra.mxu0 0
    %3512 = vmatprep.subr.bf16.mxu0 0
    %3513 = vmatpush1.bf16.msra.mxu0 0
    %3514 = vmatprep.mubr.bf16.mxu0 0
    %3515 = vmatmul.mubr.bf16.gmra.mrb[0].mxu0 %v3416
    %v3516 = vpop.f32.mrb[0].mxu0
    %v3517 = vadd.f32 0.0, %v3516
    %v3518 = vpop.f32.mrb[0].mxu0
    %v3519 = vpop.f32.mrb[0].mxu0
    %v3520 = vpop.f32.mrb[0].mxu0
    %3521 = vdwg.mxu0
    %v3522 = vadd.f32 %v3293, %v3517
    %v3523 = vld [vmem:[%s1382] sm:$0xff]
    %v3524 = vld [vmem:[%s1382 + $0x8] sm:$0xff]
    %v3525 = vunpack.c.l.bf16 %v3523
    %v3526 = vunpack.c.h.bf16 %v3523
    %v3527 = vunpack.c.l.bf16 %v3524
    %v3528 = vunpack.c.h.bf16 %v3524
    %3529 = vmatprep.subr.bf16.mxu0 %v2553
    %3530 = vmatpush1.bf16.msra.mxu0 %v2552
    %3531 = vmatprep.subr.bf16.mxu0 %v2557
    %3532 = vmatpush1.bf16.msra.mxu0 %v2556
    %3533 = vmatprep.subr.bf16.mxu0 %v2561
    %3534 = vmatpush1.bf16.msra.mxu0 %v2560
    %3535 = vmatprep.subr.bf16.mxu0 %v2565
    %3536 = vmatpush1.bf16.msra.mxu0 %v2564
    %3537 = vmatprep.subr.bf16.mxu0 %v2569
    %3538 = vmatpush1.bf16.msra.mxu0 %v2568
    %3539 = vmatprep.subr.bf16.mxu0 %v2573
    %3540 = vmatpush1.bf16.msra.mxu0 %v2572
    %3541 = vmatprep.subr.bf16.mxu0 %v2577
    %3542 = vmatpush1.bf16.msra.mxu0 %v2576
    %3543 = vmatprep.subr.bf16.mxu0 %v2581
    %3544 = vmatpush1.bf16.msra.mxu0 %v2580
    %3545 = vmatprep.subr.bf16.mxu0 0
    %3546 = vmatpush1.bf16.msra.mxu0 0
    %3547 = vmatprep.subr.bf16.mxu0 0
    %3548 = vmatpush1.bf16.msra.mxu0 0
    %3549 = vmatprep.subr.bf16.mxu0 0
    %3550 = vmatpush1.bf16.msra.mxu0 0
    %3551 = vmatprep.subr.bf16.mxu0 0
    %3552 = vmatpush1.bf16.msra.mxu0 0
    %3553 = vmatprep.subr.bf16.mxu0 0
    %3554 = vmatpush1.bf16.msra.mxu0 0
    %3555 = vmatprep.subr.bf16.mxu0 0
    %3556 = vmatpush1.bf16.msra.mxu0 0
    %3557 = vmatprep.subr.bf16.mxu0 0
    %3558 = vmatpush1.bf16.msra.mxu0 0
    %3559 = vmatprep.subr.bf16.mxu0 0
    %3560 = vmatpush1.bf16.msra.mxu0 0
    %3561 = vmatprep.mubr.bf16.mxu0 0
    %3562 = vmatmul.mubr.bf16.gmra.mrb[0].mxu0 %v3415
    %v3563 = vpop.f32.mrb[0].mxu0
    %v3564 = vadd.f32 %v3525, %v3563
    %v3565 = vpop.f32.mrb[0].mxu0
    %v3566 = vadd.f32 %v3526, %v3565
    %v3567 = vpop.f32.mrb[0].mxu0
    %v3568 = vpop.f32.mrb[0].mxu0
    %3569 = vdwg.mxu0
    %3570 = vmatprep.subr.bf16.mxu0 %v2555
    %3571 = vmatpush1.bf16.msra.mxu0 %v2554
    %3572 = vmatprep.subr.bf16.mxu0 %v2559
    %3573 = vmatpush1.bf16.msra.mxu0 %v2558
    %3574 = vmatprep.subr.bf16.mxu0 %v2563
    %3575 = vmatpush1.bf16.msra.mxu0 %v2562
    %3576 = vmatprep.subr.bf16.mxu0 %v2567
    %3577 = vmatpush1.bf16.msra.mxu0 %v2566
    %3578 = vmatprep.subr.bf16.mxu0 %v2571
    %3579 = vmatpush1.bf16.msra.mxu0 %v2570
    %3580 = vmatprep.subr.bf16.mxu0 %v2575
    %3581 = vmatpush1.bf16.msra.mxu0 %v2574
    %3582 = vmatprep.subr.bf16.mxu0 %v2579
    %3583 = vmatpush1.bf16.msra.mxu0 %v2578
    %3584 = vmatprep.subr.bf16.mxu0 %v2583
    %3585 = vmatpush1.bf16.msra.mxu0 %v2582
    %3586 = vmatprep.subr.bf16.mxu0 0
    %3587 = vmatpush1.bf16.msra.mxu0 0
    %3588 = vmatprep.subr.bf16.mxu0 0
    %3589 = vmatpush1.bf16.msra.mxu0 0
    %3590 = vmatprep.subr.bf16.mxu0 0
    %3591 = vmatpush1.bf16.msra.mxu0 0
    %3592 = vmatprep.subr.bf16.mxu0 0
    %3593 = vmatpush1.bf16.msra.mxu0 0
    %3594 = vmatprep.subr.bf16.mxu0 0
    %3595 = vmatpush1.bf16.msra.mxu0 0
    %3596 = vmatprep.subr.bf16.mxu0 0
    %3597 = vmatpush1.bf16.msra.mxu0 0
    %3598 = vmatprep.subr.bf16.mxu0 0
    %3599 = vmatpush1.bf16.msra.mxu0 0
    %3600 = vmatprep.subr.bf16.mxu0 0
    %3601 = vmatpush1.bf16.msra.mxu0 0
    %3602 = vmatprep.mubr.bf16.mxu0 0
    %3603 = vmatmul.mubr.bf16.gmra.mrb[0].mxu0 %v3415
    %v3604 = vpop.f32.mrb[0].mxu0
    %v3605 = vadd.f32 %v3527, %v3604
    %v3606 = vpop.f32.mrb[0].mxu0
    %v3607 = vadd.f32 %v3528, %v3606
    %v3608 = vpop.f32.mrb[0].mxu0
    %v3609 = vpop.f32.mrb[0].mxu0
    %3610 = vdwg.mxu0
    %v3611 = vpack.c.bf16 %v3564, %v3564
    %v3612 = vpack.c.bf16 %v3566, %v3566
    %v3613 = vpack.c.bf16 %v3605, %v3605
    %v3614 = vpack.c.bf16 %v3607, %v3607
    %v3615 = vxor.u32 %v3611, 2147516416
    %v3617 = vmul.bf16 %v3615, 1069105081
    %v3618 = vpow.bf16.pop %v3617
    %v3619 = vadd.bf16 %v3618, 1065369472
    %v3620 = vrcp.bf16.pop %v3619
    %v3621 = vmul.bf16 1065369472, %v3620
    %v3622 = vxor.u32 %v3612, 2147516416
    %v3624 = vmul.bf16 %v3622, 1069105081
    %v3625 = vpow.bf16.pop %v3624
    %v3626 = vadd.bf16 %v3625, 1065369472
    %v3627 = vrcp.bf16.pop %v3626
    %v3628 = vmul.bf16 1065369472, %v3627
    %v3629 = vtanh.bf16.pop %v3613
    %v3630 = vxor.u32 %v3614, 2147516416
    %v3632 = vmul.bf16 %v3630, 1069105081
    %v3633 = vpow.bf16.pop %v3632
    %v3634 = vadd.bf16 %v3633, 1065369472
    %v3635 = vrcp.bf16.pop %v3634
    %v3636 = vmul.bf16 1065369472, %v3635
    %v3637 = vunpack.c.l.bf16 %v3628
    %v3638 = vmul.f32 %v3637, %v3412
    %v3639 = vmul.bf16 %v3621, %v3629
    %v3640 = vunpack.c.l.bf16 %v3639
    %v3641 = vadd.f32 %v3638, %v3640
    %v3642 = vpack.c.bf16 %v3641, %v3641
    %v3643 = vtanh.bf16.pop %v3642
    %v3644 = vmul.bf16 %v3636, %v3643
    %v3645 = vmax.bf16 %v3644, 0
    %s3646 = scalar_lea.vmem [#allocation13], 256
    %v3647 = vld [vmem:[%s3646] sm:$0xf]
    %v3648 = vld [vmem:[%s3646 + $0x4] sm:$0xf]
    %v3649 = vld [vmem:[%s3646 + $0x8] sm:$0xf]
    %v3650 = vld [vmem:[%s3646 + $0xc] sm:$0xf]
    %v3651 = vld [vmem:[%s3646 + $0x10] sm:$0xf]
    %v3652 = vld [vmem:[%s3646 + $0x14] sm:$0xf]
    %v3653 = vld [vmem:[%s3646 + $0x18] sm:$0xf]
    %v3654 = vld [vmem:[%s3646 + $0x1c] sm:$0xf]
    %v3655 = vld [vmem:[%s3646 + $0x20] sm:$0xf]
    %v3656 = vld [vmem:[%s3646 + $0x24] sm:$0xf]
    %v3657 = vld [vmem:[%s3646 + $0x28] sm:$0xf]
    %v3658 = vld [vmem:[%s3646 + $0x2c] sm:$0xf]
    %v3659 = vld [vmem:[%s3646 + $0x30] sm:$0xf]
    %v3660 = vld [vmem:[%s3646 + $0x34] sm:$0xf]
    %v3661 = vld [vmem:[%s3646 + $0x38] sm:$0xf]
    %v3662 = vld [vmem:[%s3646 + $0x3c] sm:$0xf]
    %v3679 = vunpack.c.l.b16 %v3647
    %v3680 = vunpack.c.l.b16 %v3648
    %v3681 = vunpack.c.l.b16 %v3649
    %v3682 = vunpack.c.l.b16 %v3650
    %v3683 = vunpack.c.l.b16 %v3651
    %v3684 = vunpack.c.l.b16 %v3652
    %v3685 = vunpack.c.l.b16 %v3653
    %v3686 = vunpack.c.l.b16 %v3654
    %v3687 = vunpack.c.l.b16 %v3655
    %v3688 = vunpack.c.l.b16 %v3656
    %v3689 = vunpack.c.l.b16 %v3657
    %v3690 = vunpack.c.l.b16 %v3658
    %v3691 = vunpack.c.l.b16 %v3659
    %v3692 = vunpack.c.l.b16 %v3660
    %v3693 = vunpack.c.l.b16 %v3661
    %v3694 = vunpack.c.l.b16 %v3662
    %v3695 = vpack.c.b16 %v3680, %v3679
    %v3696 = vpack.c.b16 %v3682, %v3681
    %v3697 = vpack.c.b16 %v3684, %v3683
    %v3698 = vpack.c.b16 %v3686, %v3685
    %v3699 = vpack.c.b16 %v3688, %v3687
    %v3700 = vpack.c.b16 %v3690, %v3689
    %v3701 = vpack.c.b16 %v3692, %v3691
    %v3702 = vpack.c.b16 %v3694, %v3693
    %3711 = vmatprep.subr.bf16.mxu0 0
    %3712 = vmatpush1.bf16.msra.mxu0 %v3695
    %3713 = vmatprep.subr.bf16.mxu0 0
    %3714 = vmatpush1.bf16.msra.mxu0 %v3696
    %3715 = vmatprep.subr.bf16.mxu0 0
    %3716 = vmatpush1.bf16.msra.mxu0 %v3697
    %3717 = vmatprep.subr.bf16.mxu0 0
    %3718 = vmatpush1.bf16.msra.mxu0 %v3698
    %3719 = vmatprep.subr.bf16.mxu0 0
    %3720 = vmatpush1.bf16.msra.mxu0 %v3699
    %3721 = vmatprep.subr.bf16.mxu0 0
    %3722 = vmatpush1.bf16.msra.mxu0 %v3700
    %3723 = vmatprep.subr.bf16.mxu0 0
    %3724 = vmatpush1.bf16.msra.mxu0 %v3701
    %3725 = vmatprep.subr.bf16.mxu0 0
    %3726 = vmatpush1.bf16.msra.mxu0 %v3702
    %3727 = vmatprep.subr.bf16.mxu0 0
    %3728 = vmatpush1.bf16.msra.mxu0 0
    %3729 = vmatprep.subr.bf16.mxu0 0
    %3730 = vmatpush1.bf16.msra.mxu0 0
    %3731 = vmatprep.subr.bf16.mxu0 0
    %3732 = vmatpush1.bf16.msra.mxu0 0
    %3733 = vmatprep.subr.bf16.mxu0 0
    %3734 = vmatpush1.bf16.msra.mxu0 0
    %3735 = vmatprep.subr.bf16.mxu0 0
    %3736 = vmatpush1.bf16.msra.mxu0 0
    %3737 = vmatprep.subr.bf16.mxu0 0
    %3738 = vmatpush1.bf16.msra.mxu0 0
    %3739 = vmatprep.subr.bf16.mxu0 0
    %3740 = vmatpush1.bf16.msra.mxu0 0
    %3741 = vmatprep.subr.bf16.mxu0 0
    %3742 = vmatpush1.bf16.msra.mxu0 0
    %3743 = vmatprep.mubr.bf16.mxu0 0
    %3744 = vmatmul.mubr.bf16.gmra.mrb[0].mxu0 %v3645
    %v3745 = vpop.f32.mrb[0].mxu0
    %v3746 = vadd.f32 0.0, %v3745
    %v3747 = vpop.f32.mrb[0].mxu0
    %v3748 = vpop.f32.mrb[0].mxu0
    %v3749 = vpop.f32.mrb[0].mxu0
    %3750 = vdwg.mxu0
    %v3751 = vadd.f32 %v3522, %v3746
    %v3752 = vld [vmem:[%s1507] sm:$0xff]
    %v3753 = vld [vmem:[%s1507 + $0x8] sm:$0xff]
    %v3754 = vunpack.c.l.bf16 %v3752
    %v3755 = vunpack.c.h.bf16 %v3752
    %v3756 = vunpack.c.l.bf16 %v3753
    %v3757 = vunpack.c.h.bf16 %v3753
    %3758 = vmatprep.subr.bf16.mxu0 %v2553
    %3759 = vmatpush1.bf16.msra.mxu0 %v2552
    %3760 = vmatprep.subr.bf16.mxu0 %v2557
    %3761 = vmatpush1.bf16.msra.mxu0 %v2556
    %3762 = vmatprep.subr.bf16.mxu0 %v2561
    %3763 = vmatpush1.bf16.msra.mxu0 %v2560
    %3764 = vmatprep.subr.bf16.mxu0 %v2565
    %3765 = vmatpush1.bf16.msra.mxu0 %v2564
    %3766 = vmatprep.subr.bf16.mxu0 %v2569
    %3767 = vmatpush1.bf16.msra.mxu0 %v2568
    %3768 = vmatprep.subr.bf16.mxu0 %v2573
    %3769 = vmatpush1.bf16.msra.mxu0 %v2572
    %3770 = vmatprep.subr.bf16.mxu0 %v2577
    %3771 = vmatpush1.bf16.msra.mxu0 %v2576
    %3772 = vmatprep.subr.bf16.mxu0 %v2581
    %3773 = vmatpush1.bf16.msra.mxu0 %v2580
    %3774 = vmatprep.subr.bf16.mxu0 0
    %3775 = vmatpush1.bf16.msra.mxu0 0
    %3776 = vmatprep.subr.bf16.mxu0 0
    %3777 = vmatpush1.bf16.msra.mxu0 0
    %3778 = vmatprep.subr.bf16.mxu0 0
    %3779 = vmatpush1.bf16.msra.mxu0 0
    %3780 = vmatprep.subr.bf16.mxu0 0
    %3781 = vmatpush1.bf16.msra.mxu0 0
    %3782 = vmatprep.subr.bf16.mxu0 0
    %3783 = vmatpush1.bf16.msra.mxu0 0
    %3784 = vmatprep.subr.bf16.mxu0 0
    %3785 = vmatpush1.bf16.msra.mxu0 0
    %3786 = vmatprep.subr.bf16.mxu0 0
    %3787 = vmatpush1.bf16.msra.mxu0 0
    %3788 = vmatprep.subr.bf16.mxu0 0
    %3789 = vmatpush1.bf16.msra.mxu0 0
    %3790 = vmatprep.mubr.bf16.mxu0 0
    %3791 = vmatmul.mubr.bf16.gmra.mrb[0].mxu0 %v3644
    %v3792 = vpop.f32.mrb[0].mxu0
    %v3793 = vadd.f32 %v3754, %v3792
    %v3794 = vpop.f32.mrb[0].mxu0
    %v3795 = vadd.f32 %v3755, %v3794
    %v3796 = vpop.f32.mrb[0].mxu0
    %v3797 = vpop.f32.mrb[0].mxu0
    %3798 = vdwg.mxu0
    %3799 = vmatprep.subr.bf16.mxu0 %v2555
    %3800 = vmatpush1.bf16.msra.mxu0 %v2554
    %3801 = vmatprep.subr.bf16.mxu0 %v2559
    %3802 = vmatpush1.bf16.msra.mxu0 %v2558
    %3803 = vmatprep.subr.bf16.mxu0 %v2563
    %3804 = vmatpush1.bf16.msra.mxu0 %v2562
    %3805 = vmatprep.subr.bf16.mxu0 %v2567
    %3806 = vmatpush1.bf16.msra.mxu0 %v2566
    %3807 = vmatprep.subr.bf16.mxu0 %v2571
    %3808 = vmatpush1.bf16.msra.mxu0 %v2570
    %3809 = vmatprep.subr.bf16.mxu0 %v2575
    %3810 = vmatpush1.bf16.msra.mxu0 %v2574
    %3811 = vmatprep.subr.bf16.mxu0 %v2579
    %3812 = vmatpush1.bf16.msra.mxu0 %v2578
    %3813 = vmatprep.subr.bf16.mxu0 %v2583
    %3814 = vmatpush1.bf16.msra.mxu0 %v2582
    %3815 = vmatprep.subr.bf16.mxu0 0
    %3816 = vmatpush1.bf16.msra.mxu0 0
    %3817 = vmatprep.subr.bf16.mxu0 0
    %3818 = vmatpush1.bf16.msra.mxu0 0
    %3819 = vmatprep.subr.bf16.mxu0 0
    %3820 = vmatpush1.bf16.msra.mxu0 0
    %3821 = vmatprep.subr.bf16.mxu0 0
    %3822 = vmatpush1.bf16.msra.mxu0 0
    %3823 = vmatprep.subr.bf16.mxu0 0
    %3824 = vmatpush1.bf16.msra.mxu0 0
    %3825 = vmatprep.subr.bf16.mxu0 0
    %3826 = vmatpush1.bf16.msra.mxu0 0
    %3827 = vmatprep.subr.bf16.mxu0 0
    %3828 = vmatpush1.bf16.msra.mxu0 0
    %3829 = vmatprep.subr.bf16.mxu0 0
    %3830 = vmatpush1.bf16.msra.mxu0 0
    %3831 = vmatprep.mubr.bf16.mxu0 0
    %3832 = vmatmul.mubr.bf16.gmra.mrb[0].mxu0 %v3644
    %v3833 = vpop.f32.mrb[0].mxu0
    %v3834 = vadd.f32 %v3756, %v3833
    %v3835 = vpop.f32.mrb[0].mxu0
    %v3836 = vadd.f32 %v3757, %v3835
    %v3837 = vpop.f32.mrb[0].mxu0
    %v3838 = vpop.f32.mrb[0].mxu0
    %3839 = vdwg.mxu0
    %v3840 = vpack.c.bf16 %v3793, %v3793
    %v3841 = vpack.c.bf16 %v3795, %v3795
    %v3842 = vpack.c.bf16 %v3834, %v3834
    %v3843 = vpack.c.bf16 %v3836, %v3836
    %v3844 = vxor.u32 %v3840, 2147516416
    %v3846 = vmul.bf16 %v3844, 1069105081
    %v3847 = vpow.bf16.pop %v3846
    %v3848 = vadd.bf16 %v3847, 1065369472
    %v3849 = vrcp.bf16.pop %v3848
    %v3850 = vmul.bf16 1065369472, %v3849
    %v3851 = vxor.u32 %v3841, 2147516416
    %v3853 = vmul.bf16 %v3851, 1069105081
    %v3854 = vpow.bf16.pop %v3853
    %v3855 = vadd.bf16 %v3854, 1065369472
    %v3856 = vrcp.bf16.pop %v3855
    %v3857 = vmul.bf16 1065369472, %v3856
    %v3858 = vtanh.bf16.pop %v3842
    %v3859 = vxor.u32 %v3843, 2147516416
    %v3861 = vmul.bf16 %v3859, 1069105081
    %v3862 = vpow.bf16.pop %v3861
    %v3863 = vadd.bf16 %v3862, 1065369472
    %v3864 = vrcp.bf16.pop %v3863
    %v3865 = vmul.bf16 1065369472, %v3864
    %v3866 = vunpack.c.l.bf16 %v3857
    %v3867 = vmul.f32 %v3866, %v3641
    %v3868 = vmul.bf16 %v3850, %v3858
    %v3869 = vunpack.c.l.bf16 %v3868
    %v3870 = vadd.f32 %v3867, %v3869
    %v3871 = vpack.c.bf16 %v3870, %v3870
    %v3872 = vtanh.bf16.pop %v3871
    %v3873 = vmul.bf16 %v3865, %v3872
    %v3874 = vmax.bf16 %v3873, 0
    %s3875 = scalar_lea.vmem [#allocation13], 320
    %v3876 = vld [vmem:[%s3875] sm:$0xf]
    %v3877 = vld [vmem:[%s3875 + $0x4] sm:$0xf]
    %v3878 = vld [vmem:[%s3875 + $0x8] sm:$0xf]
    %v3879 = vld [vmem:[%s3875 + $0xc] sm:$0xf]
    %v3880 = vld [vmem:[%s3875 + $0x10] sm:$0xf]
    %v3881 = vld [vmem:[%s3875 + $0x14] sm:$0xf]
    %v3882 = vld [vmem:[%s3875 + $0x18] sm:$0xf]
    %v3883 = vld [vmem:[%s3875 + $0x1c] sm:$0xf]
    %v3884 = vld [vmem:[%s3875 + $0x20] sm:$0xf]
    %v3885 = vld [vmem:[%s3875 + $0x24] sm:$0xf]
    %v3886 = vld [vmem:[%s3875 + $0x28] sm:$0xf]
    %v3887 = vld [vmem:[%s3875 + $0x2c] sm:$0xf]
    %v3888 = vld [vmem:[%s3875 + $0x30] sm:$0xf]
    %v3889 = vld [vmem:[%s3875 + $0x34] sm:$0xf]
    %v3890 = vld [vmem:[%s3875 + $0x38] sm:$0xf]
    %v3891 = vld [vmem:[%s3875 + $0x3c] sm:$0xf]
    %v3908 = vunpack.c.l.b16 %v3876
    %v3909 = vunpack.c.l.b16 %v3877
    %v3910 = vunpack.c.l.b16 %v3878
    %v3911 = vunpack.c.l.b16 %v3879
    %v3912 = vunpack.c.l.b16 %v3880
    %v3913 = vunpack.c.l.b16 %v3881
    %v3914 = vunpack.c.l.b16 %v3882
    %v3915 = vunpack.c.l.b16 %v3883
    %v3916 = vunpack.c.l.b16 %v3884
    %v3917 = vunpack.c.l.b16 %v3885
    %v3918 = vunpack.c.l.b16 %v3886
    %v3919 = vunpack.c.l.b16 %v3887
    %v3920 = vunpack.c.l.b16 %v3888
    %v3921 = vunpack.c.l.b16 %v3889
    %v3922 = vunpack.c.l.b16 %v3890
    %v3923 = vunpack.c.l.b16 %v3891
    %v3924 = vpack.c.b16 %v3909, %v3908
    %v3925 = vpack.c.b16 %v3911, %v3910
    %v3926 = vpack.c.b16 %v3913, %v3912
    %v3927 = vpack.c.b16 %v3915, %v3914
    %v3928 = vpack.c.b16 %v3917, %v3916
    %v3929 = vpack.c.b16 %v3919, %v3918
    %v3930 = vpack.c.b16 %v3921, %v3920
    %v3931 = vpack.c.b16 %v3923, %v3922
    %3940 = vmatprep.subr.bf16.mxu0 0
    %3941 = vmatpush1.bf16.msra.mxu0 %v3924
    %3942 = vmatprep.subr.bf16.mxu0 0
    %3943 = vmatpush1.bf16.msra.mxu0 %v3925
    %3944 = vmatprep.subr.bf16.mxu0 0
    %3945 = vmatpush1.bf16.msra.mxu0 %v3926
    %3946 = vmatprep.subr.bf16.mxu0 0
    %3947 = vmatpush1.bf16.msra.mxu0 %v3927
    %3948 = vmatprep.subr.bf16.mxu0 0
    %3949 = vmatpush1.bf16.msra.mxu0 %v3928
    %3950 = vmatprep.subr.bf16.mxu0 0
    %3951 = vmatpush1.bf16.msra.mxu0 %v3929
    %3952 = vmatprep.subr.bf16.mxu0 0
    %3953 = vmatpush1.bf16.msra.mxu0 %v3930
    %3954 = vmatprep.subr.bf16.mxu0 0
    %3955 = vmatpush1.bf16.msra.mxu0 %v3931
    %3956 = vmatprep.subr.bf16.mxu0 0
    %3957 = vmatpush1.bf16.msra.mxu0 0
    %3958 = vmatprep.subr.bf16.mxu0 0
    %3959 = vmatpush1.bf16.msra.mxu0 0
    %3960 = vmatprep.subr.bf16.mxu0 0
    %3961 = vmatpush1.bf16.msra.mxu0 0
    %3962 = vmatprep.subr.bf16.mxu0 0
    %3963 = vmatpush1.bf16.msra.mxu0 0
    %3964 = vmatprep.subr.bf16.mxu0 0
    %3965 = vmatpush1.bf16.msra.mxu0 0
    %3966 = vmatprep.subr.bf16.mxu0 0
    %3967 = vmatpush1.bf16.msra.mxu0 0
    %3968 = vmatprep.subr.bf16.mxu0 0
    %3969 = vmatpush1.bf16.msra.mxu0 0
    %3970 = vmatprep.subr.bf16.mxu0 0
    %3971 = vmatpush1.bf16.msra.mxu0 0
    %3972 = vmatprep.mubr.bf16.mxu0 0
    %3973 = vmatmul.mubr.bf16.gmra.mrb[0].mxu0 %v3874
    %v3974 = vpop.f32.mrb[0].mxu0
    %v3975 = vadd.f32 0.0, %v3974
    %v3976 = vpop.f32.mrb[0].mxu0
    %v3977 = vpop.f32.mrb[0].mxu0
    %v3978 = vpop.f32.mrb[0].mxu0
    %3979 = vdwg.mxu0
    %v3980 = vadd.f32 %v3751, %v3975
    %v3981 = vld [vmem:[%s1632] sm:$0xff]
    %v3982 = vld [vmem:[%s1632 + $0x8] sm:$0xff]
    %v3983 = vunpack.c.l.bf16 %v3981
    %v3984 = vunpack.c.h.bf16 %v3981
    %v3985 = vunpack.c.l.bf16 %v3982
    %v3986 = vunpack.c.h.bf16 %v3982
    %3987 = vmatprep.subr.bf16.mxu0 %v2553
    %3988 = vmatpush1.bf16.msra.mxu0 %v2552
    %3989 = vmatprep.subr.bf16.mxu0 %v2557
    %3990 = vmatpush1.bf16.msra.mxu0 %v2556
    %3991 = vmatprep.subr.bf16.mxu0 %v2561
    %3992 = vmatpush1.bf16.msra.mxu0 %v2560
    %3993 = vmatprep.subr.bf16.mxu0 %v2565
    %3994 = vmatpush1.bf16.msra.mxu0 %v2564
    %3995 = vmatprep.subr.bf16.mxu0 %v2569
    %3996 = vmatpush1.bf16.msra.mxu0 %v2568
    %3997 = vmatprep.subr.bf16.mxu0 %v2573
    %3998 = vmatpush1.bf16.msra.mxu0 %v2572
    %3999 = vmatprep.subr.bf16.mxu0 %v2577
    %4000 = vmatpush1.bf16.msra.mxu0 %v2576
    %4001 = vmatprep.subr.bf16.mxu0 %v2581
    %4002 = vmatpush1.bf16.msra.mxu0 %v2580
    %4003 = vmatprep.subr.bf16.mxu0 0
    %4004 = vmatpush1.bf16.msra.mxu0 0
    %4005 = vmatprep.subr.bf16.mxu0 0
    %4006 = vmatpush1.bf16.msra.mxu0 0
    %4007 = vmatprep.subr.bf16.mxu0 0
    %4008 = vmatpush1.bf16.msra.mxu0 0
    %4009 = vmatprep.subr.bf16.mxu0 0
    %4010 = vmatpush1.bf16.msra.mxu0 0
    %4011 = vmatprep.subr.bf16.mxu0 0
    %4012 = vmatpush1.bf16.msra.mxu0 0
    %4013 = vmatprep.subr.bf16.mxu0 0
    %4014 = vmatpush1.bf16.msra.mxu0 0
    %4015 = vmatprep.subr.bf16.mxu0 0
    %4016 = vmatpush1.bf16.msra.mxu0 0
    %4017 = vmatprep.subr.bf16.mxu0 0
    %4018 = vmatpush1.bf16.msra.mxu0 0
    %4019 = vmatprep.mubr.bf16.mxu0 0
    %4020 = vmatmul.mubr.bf16.gmra.mrb[0].mxu0 %v3873
    %v4021 = vpop.f32.mrb[0].mxu0
    %v4022 = vadd.f32 %v3983, %v4021
    %v4023 = vpop.f32.mrb[0].mxu0
    %v4024 = vadd.f32 %v3984, %v4023
    %v4025 = vpop.f32.mrb[0].mxu0
    %v4026 = vpop.f32.mrb[0].mxu0
    %4027 = vdwg.mxu0
    %4028 = vmatprep.subr.bf16.mxu0 %v2555
    %4029 = vmatpush1.bf16.msra.mxu0 %v2554
    %4030 = vmatprep.subr.bf16.mxu0 %v2559
    %4031 = vmatpush1.bf16.msra.mxu0 %v2558
    %4032 = vmatprep.subr.bf16.mxu0 %v2563
    %4033 = vmatpush1.bf16.msra.mxu0 %v2562
    %4034 = vmatprep.subr.bf16.mxu0 %v2567
    %4035 = vmatpush1.bf16.msra.mxu0 %v2566
    %4036 = vmatprep.subr.bf16.mxu0 %v2571
    %4037 = vmatpush1.bf16.msra.mxu0 %v2570
    %4038 = vmatprep.subr.bf16.mxu0 %v2575
    %4039 = vmatpush1.bf16.msra.mxu0 %v2574
    %4040 = vmatprep.subr.bf16.mxu0 %v2579
    %4041 = vmatpush1.bf16.msra.mxu0 %v2578
    %4042 = vmatprep.subr.bf16.mxu0 %v2583
    %4043 = vmatpush1.bf16.msra.mxu0 %v2582
    %4044 = vmatprep.subr.bf16.mxu0 0
    %4045 = vmatpush1.bf16.msra.mxu0 0
    %4046 = vmatprep.subr.bf16.mxu0 0
    %4047 = vmatpush1.bf16.msra.mxu0 0
    %4048 = vmatprep.subr.bf16.mxu0 0
    %4049 = vmatpush1.bf16.msra.mxu0 0
    %4050 = vmatprep.subr.bf16.mxu0 0
    %4051 = vmatpush1.bf16.msra.mxu0 0
    %4052 = vmatprep.subr.bf16.mxu0 0
    %4053 = vmatpush1.bf16.msra.mxu0 0
    %4054 = vmatprep.subr.bf16.mxu0 0
    %4055 = vmatpush1.bf16.msra.mxu0 0
    %4056 = vmatprep.subr.bf16.mxu0 0
    %4057 = vmatpush1.bf16.msra.mxu0 0
    %4058 = vmatprep.subr.bf16.mxu0 0
    %4059 = vmatpush1.bf16.msra.mxu0 0
    %4060 = vmatprep.mubr.bf16.mxu0 0
    %4061 = vmatmul.mubr.bf16.gmra.mrb[0].mxu0 %v3873
    %v4062 = vpop.f32.mrb[0].mxu0
    %v4063 = vadd.f32 %v3985, %v4062
    %v4064 = vpop.f32.mrb[0].mxu0
    %v4065 = vadd.f32 %v3986, %v4064
    %v4066 = vpop.f32.mrb[0].mxu0
    %v4067 = vpop.f32.mrb[0].mxu0
    %4068 = vdwg.mxu0
    %v4069 = vpack.c.bf16 %v4022, %v4022
    %v4070 = vpack.c.bf16 %v4024, %v4024
    %v4071 = vpack.c.bf16 %v4063, %v4063
    %v4072 = vpack.c.bf16 %v4065, %v4065
    %v4073 = vxor.u32 %v4069, 2147516416
    %v4075 = vmul.bf16 %v4073, 1069105081
    %v4076 = vpow.bf16.pop %v4075
    %v4077 = vadd.bf16 %v4076, 1065369472
    %v4078 = vrcp.bf16.pop %v4077
    %v4079 = vmul.bf16 1065369472, %v4078
    %v4080 = vxor.u32 %v4070, 2147516416
    %v4082 = vmul.bf16 %v4080, 1069105081
    %v4083 = vpow.bf16.pop %v4082
    %v4084 = vadd.bf16 %v4083, 1065369472
    %v4085 = vrcp.bf16.pop %v4084
    %v4086 = vmul.bf16 1065369472, %v4085
    %v4087 = vtanh.bf16.pop %v4071
    %v4088 = vxor.u32 %v4072, 2147516416
    %v4090 = vmul.bf16 %v4088, 1069105081
    %v4091 = vpow.bf16.pop %v4090
    %v4092 = vadd.bf16 %v4091, 1065369472
    %v4093 = vrcp.bf16.pop %v4092
    %v4094 = vmul.bf16 1065369472, %v4093
    %v4095 = vunpack.c.l.bf16 %v4086
    %v4096 = vmul.f32 %v4095, %v3870
    %v4097 = vmul.bf16 %v4079, %v4087
    %v4098 = vunpack.c.l.bf16 %v4097
    %v4099 = vadd.f32 %v4096, %v4098
    %v4100 = vpack.c.bf16 %v4099, %v4099
    %v4101 = vtanh.bf16.pop %v4100
    %v4102 = vmul.bf16 %v4094, %v4101
    %v4103 = vmax.bf16 %v4102, 0
    %s4104 = scalar_lea.vmem [#allocation13], 384
    %v4105 = vld [vmem:[%s4104] sm:$0xf]
    %v4106 = vld [vmem:[%s4104 + $0x4] sm:$0xf]
    %v4107 = vld [vmem:[%s4104 + $0x8] sm:$0xf]
    %v4108 = vld [vmem:[%s4104 + $0xc] sm:$0xf]
    %v4109 = vld [vmem:[%s4104 + $0x10] sm:$0xf]
    %v4110 = vld [vmem:[%s4104 + $0x14] sm:$0xf]
    %v4111 = vld [vmem:[%s4104 + $0x18] sm:$0xf]
    %v4112 = vld [vmem:[%s4104 + $0x1c] sm:$0xf]
    %v4113 = vld [vmem:[%s4104 + $0x20] sm:$0xf]
    %v4114 = vld [vmem:[%s4104 + $0x24] sm:$0xf]
    %v4115 = vld [vmem:[%s4104 + $0x28] sm:$0xf]
    %v4116 = vld [vmem:[%s4104 + $0x2c] sm:$0xf]
    %v4117 = vld [vmem:[%s4104 + $0x30] sm:$0xf]
    %v4118 = vld [vmem:[%s4104 + $0x34] sm:$0xf]
    %v4119 = vld [vmem:[%s4104 + $0x38] sm:$0xf]
    %v4120 = vld [vmem:[%s4104 + $0x3c] sm:$0xf]
    %v4137 = vunpack.c.l.b16 %v4105
    %v4138 = vunpack.c.l.b16 %v4106
    %v4139 = vunpack.c.l.b16 %v4107
    %v4140 = vunpack.c.l.b16 %v4108
    %v4141 = vunpack.c.l.b16 %v4109
    %v4142 = vunpack.c.l.b16 %v4110
    %v4143 = vunpack.c.l.b16 %v4111
    %v4144 = vunpack.c.l.b16 %v4112
    %v4145 = vunpack.c.l.b16 %v4113
    %v4146 = vunpack.c.l.b16 %v4114
    %v4147 = vunpack.c.l.b16 %v4115
    %v4148 = vunpack.c.l.b16 %v4116
    %v4149 = vunpack.c.l.b16 %v4117
    %v4150 = vunpack.c.l.b16 %v4118
    %v4151 = vunpack.c.l.b16 %v4119
    %v4152 = vunpack.c.l.b16 %v4120
    %v4153 = vpack.c.b16 %v4138, %v4137
    %v4154 = vpack.c.b16 %v4140, %v4139
    %v4155 = vpack.c.b16 %v4142, %v4141
    %v4156 = vpack.c.b16 %v4144, %v4143
    %v4157 = vpack.c.b16 %v4146, %v4145
    %v4158 = vpack.c.b16 %v4148, %v4147
    %v4159 = vpack.c.b16 %v4150, %v4149
    %v4160 = vpack.c.b16 %v4152, %v4151
    %4169 = vmatprep.subr.bf16.mxu0 0
    %4170 = vmatpush1.bf16.msra.mxu0 %v4153
    %4171 = vmatprep.subr.bf16.mxu0 0
    %4172 = vmatpush1.bf16.msra.mxu0 %v4154
    %4173 = vmatprep.subr.bf16.mxu0 0
    %4174 = vmatpush1.bf16.msra.mxu0 %v4155
    %4175 = vmatprep.subr.bf16.mxu0 0
    %4176 = vmatpush1.bf16.msra.mxu0 %v4156
    %4177 = vmatprep.subr.bf16.mxu0 0
    %4178 = vmatpush1.bf16.msra.mxu0 %v4157
    %4179 = vmatprep.subr.bf16.mxu0 0
    %4180 = vmatpush1.bf16.msra.mxu0 %v4158
    %4181 = vmatprep.subr.bf16.mxu0 0
    %4182 = vmatpush1.bf16.msra.mxu0 %v4159
    %4183 = vmatprep.subr.bf16.mxu0 0
    %4184 = vmatpush1.bf16.msra.mxu0 %v4160
    %4185 = vmatprep.subr.bf16.mxu0 0
    %4186 = vmatpush1.bf16.msra.mxu0 0
    %4187 = vmatprep.subr.bf16.mxu0 0
    %4188 = vmatpush1.bf16.msra.mxu0 0
    %4189 = vmatprep.subr.bf16.mxu0 0
    %4190 = vmatpush1.bf16.msra.mxu0 0
    %4191 = vmatprep.subr.bf16.mxu0 0
    %4192 = vmatpush1.bf16.msra.mxu0 0
    %4193 = vmatprep.subr.bf16.mxu0 0
    %4194 = vmatpush1.bf16.msra.mxu0 0
    %4195 = vmatprep.subr.bf16.mxu0 0
    %4196 = vmatpush1.bf16.msra.mxu0 0
    %4197 = vmatprep.subr.bf16.mxu0 0
    %4198 = vmatpush1.bf16.msra.mxu0 0
    %4199 = vmatprep.subr.bf16.mxu0 0
    %4200 = vmatpush1.bf16.msra.mxu0 0
    %4201 = vmatprep.mubr.bf16.mxu0 0
    %4202 = vmatmul.mubr.bf16.gmra.mrb[0].mxu0 %v4103
    %v4203 = vpop.f32.mrb[0].mxu0
    %v4204 = vadd.f32 0.0, %v4203
    %v4205 = vpop.f32.mrb[0].mxu0
    %v4206 = vpop.f32.mrb[0].mxu0
    %v4207 = vpop.f32.mrb[0].mxu0
    %4208 = vdwg.mxu0
    %v4209 = vadd.f32 %v3980, %v4204
    %v4210 = vld [vmem:[%s1757] sm:$0xff]
    %v4211 = vld [vmem:[%s1757 + $0x8] sm:$0xff]
    %v4212 = vunpack.c.l.bf16 %v4210
    %v4213 = vunpack.c.h.bf16 %v4210
    %v4214 = vunpack.c.l.bf16 %v4211
    %v4215 = vunpack.c.h.bf16 %v4211
    %4216 = vmatprep.subr.bf16.mxu0 %v2553
    %4217 = vmatpush1.bf16.msra.mxu0 %v2552
    %4218 = vmatprep.subr.bf16.mxu0 %v2557
    %4219 = vmatpush1.bf16.msra.mxu0 %v2556
    %4220 = vmatprep.subr.bf16.mxu0 %v2561
    %4221 = vmatpush1.bf16.msra.mxu0 %v2560
    %4222 = vmatprep.subr.bf16.mxu0 %v2565
    %4223 = vmatpush1.bf16.msra.mxu0 %v2564
    %4224 = vmatprep.subr.bf16.mxu0 %v2569
    %4225 = vmatpush1.bf16.msra.mxu0 %v2568
    %4226 = vmatprep.subr.bf16.mxu0 %v2573
    %4227 = vmatpush1.bf16.msra.mxu0 %v2572
    %4228 = vmatprep.subr.bf16.mxu0 %v2577
    %4229 = vmatpush1.bf16.msra.mxu0 %v2576
    %4230 = vmatprep.subr.bf16.mxu0 %v2581
    %4231 = vmatpush1.bf16.msra.mxu0 %v2580
    %4232 = vmatprep.subr.bf16.mxu0 0
    %4233 = vmatpush1.bf16.msra.mxu0 0
    %4234 = vmatprep.subr.bf16.mxu0 0
    %4235 = vmatpush1.bf16.msra.mxu0 0
    %4236 = vmatprep.subr.bf16.mxu0 0
    %4237 = vmatpush1.bf16.msra.mxu0 0
    %4238 = vmatprep.subr.bf16.mxu0 0
    %4239 = vmatpush1.bf16.msra.mxu0 0
    %4240 = vmatprep.subr.bf16.mxu0 0
    %4241 = vmatpush1.bf16.msra.mxu0 0
    %4242 = vmatprep.subr.bf16.mxu0 0
    %4243 = vmatpush1.bf16.msra.mxu0 0
    %4244 = vmatprep.subr.bf16.mxu0 0
    %4245 = vmatpush1.bf16.msra.mxu0 0
    %4246 = vmatprep.subr.bf16.mxu0 0
    %4247 = vmatpush1.bf16.msra.mxu0 0
    %4248 = vmatprep.mubr.bf16.mxu0 0
    %4249 = vmatmul.mubr.bf16.gmra.mrb[0].mxu0 %v4102
    %v4250 = vpop.f32.mrb[0].mxu0
    %v4251 = vadd.f32 %v4212, %v4250
    %v4252 = vpop.f32.mrb[0].mxu0
    %v4253 = vadd.f32 %v4213, %v4252
    %v4254 = vpop.f32.mrb[0].mxu0
    %v4255 = vpop.f32.mrb[0].mxu0
    %4256 = vdwg.mxu0
    %4257 = vmatprep.subr.bf16.mxu0 %v2555
    %4258 = vmatpush1.bf16.msra.mxu0 %v2554
    %4259 = vmatprep.subr.bf16.mxu0 %v2559
    %4260 = vmatpush1.bf16.msra.mxu0 %v2558
    %4261 = vmatprep.subr.bf16.mxu0 %v2563
    %4262 = vmatpush1.bf16.msra.mxu0 %v2562
    %4263 = vmatprep.subr.bf16.mxu0 %v2567
    %4264 = vmatpush1.bf16.msra.mxu0 %v2566
    %4265 = vmatprep.subr.bf16.mxu0 %v2571
    %4266 = vmatpush1.bf16.msra.mxu0 %v2570
    %4267 = vmatprep.subr.bf16.mxu0 %v2575
    %4268 = vmatpush1.bf16.msra.mxu0 %v2574
    %4269 = vmatprep.subr.bf16.mxu0 %v2579
    %4270 = vmatpush1.bf16.msra.mxu0 %v2578
    %4271 = vmatprep.subr.bf16.mxu0 %v2583
    %4272 = vmatpush1.bf16.msra.mxu0 %v2582
    %4273 = vmatprep.subr.bf16.mxu0 0
    %4274 = vmatpush1.bf16.msra.mxu0 0
    %4275 = vmatprep.subr.bf16.mxu0 0
    %4276 = vmatpush1.bf16.msra.mxu0 0
    %4277 = vmatprep.subr.bf16.mxu0 0
    %4278 = vmatpush1.bf16.msra.mxu0 0
    %4279 = vmatprep.subr.bf16.mxu0 0
    %4280 = vmatpush1.bf16.msra.mxu0 0
    %4281 = vmatprep.subr.bf16.mxu0 0
    %4282 = vmatpush1.bf16.msra.mxu0 0
    %4283 = vmatprep.subr.bf16.mxu0 0
    %4284 = vmatpush1.bf16.msra.mxu0 0
    %4285 = vmatprep.subr.bf16.mxu0 0
    %4286 = vmatpush1.bf16.msra.mxu0 0
    %4287 = vmatprep.subr.bf16.mxu0 0
    %4288 = vmatpush1.bf16.msra.mxu0 0
    %4289 = vmatprep.mubr.bf16.mxu0 0
    %4290 = vmatmul.mubr.bf16.gmra.mrb[0].mxu0 %v4102
    %v4291 = vpop.f32.mrb[0].mxu0
    %v4292 = vadd.f32 %v4214, %v4291
    %v4293 = vpop.f32.mrb[0].mxu0
    %v4294 = vadd.f32 %v4215, %v4293
    %v4295 = vpop.f32.mrb[0].mxu0
    %v4296 = vpop.f32.mrb[0].mxu0
    %4297 = vdwg.mxu0
    %v4298 = vpack.c.bf16 %v4251, %v4251
    %v4299 = vpack.c.bf16 %v4253, %v4253
    %v4300 = vpack.c.bf16 %v4292, %v4292
    %v4301 = vpack.c.bf16 %v4294, %v4294
    %v4302 = vxor.u32 %v4298, 2147516416
    %v4304 = vmul.bf16 %v4302, 1069105081
    %v4305 = vpow.bf16.pop %v4304
    %v4306 = vadd.bf16 %v4305, 1065369472
    %v4307 = vrcp.bf16.pop %v4306
    %v4308 = vmul.bf16 1065369472, %v4307
    %v4309 = vxor.u32 %v4299, 2147516416
    %v4311 = vmul.bf16 %v4309, 1069105081
    %v4312 = vpow.bf16.pop %v4311
    %v4313 = vadd.bf16 %v4312, 1065369472
    %v4314 = vrcp.bf16.pop %v4313
    %v4315 = vmul.bf16 1065369472, %v4314
    %v4316 = vtanh.bf16.pop %v4300
    %v4317 = vxor.u32 %v4301, 2147516416
    %v4319 = vmul.bf16 %v4317, 1069105081
    %v4320 = vpow.bf16.pop %v4319
    %v4321 = vadd.bf16 %v4320, 1065369472
    %v4322 = vrcp.bf16.pop %v4321
    %v4323 = vmul.bf16 1065369472, %v4322
    %v4324 = vunpack.c.l.bf16 %v4315
    %v4325 = vmul.f32 %v4324, %v4099
    %v4326 = vmul.bf16 %v4308, %v4316
    %v4327 = vunpack.c.l.bf16 %v4326
    %v4328 = vadd.f32 %v4325, %v4327
    %v4329 = vpack.c.bf16 %v4328, %v4328
    %v4330 = vtanh.bf16.pop %v4329
    %v4331 = vmul.bf16 %v4323, %v4330
    %v4332 = vmax.bf16 %v4331, 0
    %s4333 = scalar_lea.vmem [#allocation13], 448
    %v4334 = vld [vmem:[%s4333] sm:$0xf]
    %v4335 = vld [vmem:[%s4333 + $0x4] sm:$0xf]
    %v4336 = vld [vmem:[%s4333 + $0x8] sm:$0xf]
    %v4337 = vld [vmem:[%s4333 + $0xc] sm:$0xf]
    %v4338 = vld [vmem:[%s4333 + $0x10] sm:$0xf]
    %v4339 = vld [vmem:[%s4333 + $0x14] sm:$0xf]
    %v4340 = vld [vmem:[%s4333 + $0x18] sm:$0xf]
    %v4341 = vld [vmem:[%s4333 + $0x1c] sm:$0xf]
    %v4342 = vld [vmem:[%s4333 + $0x20] sm:$0xf]
    %v4343 = vld [vmem:[%s4333 + $0x24] sm:$0xf]
    %v4344 = vld [vmem:[%s4333 + $0x28] sm:$0xf]
    %v4345 = vld [vmem:[%s4333 + $0x2c] sm:$0xf]
    %v4346 = vld [vmem:[%s4333 + $0x30] sm:$0xf]
    %v4347 = vld [vmem:[%s4333 + $0x34] sm:$0xf]
    %v4348 = vld [vmem:[%s4333 + $0x38] sm:$0xf]
    %v4349 = vld [vmem:[%s4333 + $0x3c] sm:$0xf]
    %v4366 = vunpack.c.l.b16 %v4334
    %v4367 = vunpack.c.l.b16 %v4335
    %v4368 = vunpack.c.l.b16 %v4336
    %v4369 = vunpack.c.l.b16 %v4337
    %v4370 = vunpack.c.l.b16 %v4338
    %v4371 = vunpack.c.l.b16 %v4339
    %v4372 = vunpack.c.l.b16 %v4340
    %v4373 = vunpack.c.l.b16 %v4341
    %v4374 = vunpack.c.l.b16 %v4342
    %v4375 = vunpack.c.l.b16 %v4343
    %v4376 = vunpack.c.l.b16 %v4344
    %v4377 = vunpack.c.l.b16 %v4345
    %v4378 = vunpack.c.l.b16 %v4346
    %v4379 = vunpack.c.l.b16 %v4347
    %v4380 = vunpack.c.l.b16 %v4348
    %v4381 = vunpack.c.l.b16 %v4349
    %v4382 = vpack.c.b16 %v4367, %v4366
    %v4383 = vpack.c.b16 %v4369, %v4368
    %v4384 = vpack.c.b16 %v4371, %v4370
    %v4385 = vpack.c.b16 %v4373, %v4372
    %v4386 = vpack.c.b16 %v4375, %v4374
    %v4387 = vpack.c.b16 %v4377, %v4376
    %v4388 = vpack.c.b16 %v4379, %v4378
    %v4389 = vpack.c.b16 %v4381, %v4380
    %4398 = vmatprep.subr.bf16.mxu0 0
    %4399 = vmatpush1.bf16.msra.mxu0 %v4382
    %4400 = vmatprep.subr.bf16.mxu0 0
    %4401 = vmatpush1.bf16.msra.mxu0 %v4383
    %4402 = vmatprep.subr.bf16.mxu0 0
    %4403 = vmatpush1.bf16.msra.mxu0 %v4384
    %4404 = vmatprep.subr.bf16.mxu0 0
    %4405 = vmatpush1.bf16.msra.mxu0 %v4385
    %4406 = vmatprep.subr.bf16.mxu0 0
    %4407 = vmatpush1.bf16.msra.mxu0 %v4386
    %4408 = vmatprep.subr.bf16.mxu0 0
    %4409 = vmatpush1.bf16.msra.mxu0 %v4387
    %4410 = vmatprep.subr.bf16.mxu0 0
    %4411 = vmatpush1.bf16.msra.mxu0 %v4388
    %4412 = vmatprep.subr.bf16.mxu0 0
    %4413 = vmatpush1.bf16.msra.mxu0 %v4389
    %4414 = vmatprep.subr.bf16.mxu0 0
    %4415 = vmatpush1.bf16.msra.mxu0 0
    %4416 = vmatprep.subr.bf16.mxu0 0
    %4417 = vmatpush1.bf16.msra.mxu0 0
    %4418 = vmatprep.subr.bf16.mxu0 0
    %4419 = vmatpush1.bf16.msra.mxu0 0
    %4420 = vmatprep.subr.bf16.mxu0 0
    %4421 = vmatpush1.bf16.msra.mxu0 0
    %4422 = vmatprep.subr.bf16.mxu0 0
    %4423 = vmatpush1.bf16.msra.mxu0 0
    %4424 = vmatprep.subr.bf16.mxu0 0
    %4425 = vmatpush1.bf16.msra.mxu0 0
    %4426 = vmatprep.subr.bf16.mxu0 0
    %4427 = vmatpush1.bf16.msra.mxu0 0
    %4428 = vmatprep.subr.bf16.mxu0 0
    %4429 = vmatpush1.bf16.msra.mxu0 0
    %4430 = vmatprep.mubr.bf16.mxu0 0
    %4431 = vmatmul.mubr.bf16.gmra.mrb[0].mxu0 %v4332
    %v4432 = vpop.f32.mrb[0].mxu0
    %v4433 = vadd.f32 0.0, %v4432
    %v4434 = vpop.f32.mrb[0].mxu0
    %v4435 = vpop.f32.mrb[0].mxu0
    %v4436 = vpop.f32.mrb[0].mxu0
    %4437 = vdwg.mxu0
    %v4438 = vadd.f32 %v4209, %v4433
    %v4439 = vld [vmem:[%s8] sm:$0x1]
    %v4441 = vlaneseq
    %v4442 = vshrl.u32 %v4441, 7
    %v4443 = vsub.s32 0, %v4442
    %v4444 = vrot.slane %v4439, %v4443
    %v4446 = vadd.f32 %v4438, %v4444
    %v4447 = vmax.f32 %v4446, 0.0
    %v4448 = vpack.c.bf16 %v4447, %v4447
    %v4449 = vld [vmem:[#allocation15] sm:$0xf]
    %v4450 = vld [vmem:[#allocation15 + $0x4] sm:$0xf]
    %v4451 = vld [vmem:[#allocation15 + $0x8] sm:$0xf]
    %v4452 = vld [vmem:[#allocation15 + $0xc] sm:$0xf]
    %v4453 = vld [vmem:[#allocation15 + $0x10] sm:$0xf]
    %v4454 = vld [vmem:[#allocation15 + $0x14] sm:$0xf]
    %v4455 = vld [vmem:[#allocation15 + $0x18] sm:$0xf]
    %v4456 = vld [vmem:[#allocation15 + $0x1c] sm:$0xf]
    %v4457 = vld [vmem:[#allocation15 + $0x20] sm:$0xf]
    %v4458 = vld [vmem:[#allocation15 + $0x24] sm:$0xf]
    %v4459 = vld [vmem:[#allocation15 + $0x28] sm:$0xf]
    %v4460 = vld [vmem:[#allocation15 + $0x2c] sm:$0xf]
    %v4461 = vld [vmem:[#allocation15 + $0x30] sm:$0xf]
    %v4462 = vld [vmem:[#allocation15 + $0x34] sm:$0xf]
    %v4463 = vld [vmem:[#allocation15 + $0x38] sm:$0xf]
    %v4464 = vld [vmem:[#allocation15 + $0x3c] sm:$0xf]
    %v4465 = vld [vmem:[%s10] sm:$0x1]
    %v4467 = vlaneseq
    %v4468 = vshrl.u32 %v4467, 7
    %v4469 = vsub.s32 0, %v4468
    %v4470 = vrot.slane %v4465, %v4469
    %v4488 = vunpack.c.l.b16 %v4449
    %v4489 = vunpack.c.l.b16 %v4450
    %v4490 = vunpack.c.l.b16 %v4451
    %v4491 = vunpack.c.l.b16 %v4452
    %v4492 = vunpack.c.l.b16 %v4453
    %v4493 = vunpack.c.l.b16 %v4454
    %v4494 = vunpack.c.l.b16 %v4455
    %v4495 = vunpack.c.l.b16 %v4456
    %v4496 = vunpack.c.l.b16 %v4457
    %v4497 = vunpack.c.l.b16 %v4458
    %v4498 = vunpack.c.l.b16 %v4459
    %v4499 = vunpack.c.l.b16 %v4460
    %v4500 = vunpack.c.l.b16 %v4461
    %v4501 = vunpack.c.l.b16 %v4462
    %v4502 = vunpack.c.l.b16 %v4463
    %v4503 = vunpack.c.l.b16 %v4464
    %v4504 = vpack.c.b16 %v4489, %v4488
    %v4505 = vpack.c.b16 %v4491, %v4490
    %v4506 = vpack.c.b16 %v4493, %v4492
    %v4507 = vpack.c.b16 %v4495, %v4494
    %v4508 = vpack.c.b16 %v4497, %v4496
    %v4509 = vpack.c.b16 %v4499, %v4498
    %v4510 = vpack.c.b16 %v4501, %v4500
    %v4511 = vpack.c.b16 %v4503, %v4502
    %4520 = vmatprep.subr.bf16.mxu0 0
    %4521 = vmatpush1.bf16.msra.mxu0 %v4504
    %4522 = vmatprep.subr.bf16.mxu0 0
    %4523 = vmatpush1.bf16.msra.mxu0 %v4505
    %4524 = vmatprep.subr.bf16.mxu0 0
    %4525 = vmatpush1.bf16.msra.mxu0 %v4506
    %4526 = vmatprep.subr.bf16.mxu0 0
    %4527 = vmatpush1.bf16.msra.mxu0 %v4507
    %4528 = vmatprep.subr.bf16.mxu0 0
    %4529 = vmatpush1.bf16.msra.mxu0 %v4508
    %4530 = vmatprep.subr.bf16.mxu0 0
    %4531 = vmatpush1.bf16.msra.mxu0 %v4509
    %4532 = vmatprep.subr.bf16.mxu0 0
    %4533 = vmatpush1.bf16.msra.mxu0 %v4510
    %4534 = vmatprep.subr.bf16.mxu0 0
    %4535 = vmatpush1.bf16.msra.mxu0 %v4511
    %4536 = vmatprep.subr.bf16.mxu0 0
    %4537 = vmatpush1.bf16.msra.mxu0 0
    %4538 = vmatprep.subr.bf16.mxu0 0
    %4539 = vmatpush1.bf16.msra.mxu0 0
    %4540 = vmatprep.subr.bf16.mxu0 0
    %4541 = vmatpush1.bf16.msra.mxu0 0
    %4542 = vmatprep.subr.bf16.mxu0 0
    %4543 = vmatpush1.bf16.msra.mxu0 0
    %4544 = vmatprep.subr.bf16.mxu0 0
    %4545 = vmatpush1.bf16.msra.mxu0 0
    %4546 = vmatprep.subr.bf16.mxu0 0
    %4547 = vmatpush1.bf16.msra.mxu0 0
    %4548 = vmatprep.subr.bf16.mxu0 0
    %4549 = vmatpush1.bf16.msra.mxu0 0
    %4550 = vmatprep.subr.bf16.mxu0 0
    %4551 = vmatpush1.bf16.msra.mxu0 0
    %4552 = vmatprep.mubr.bf16.mxu0 0
    %4553 = vmatmul.mubr.bf16.gmra.mrb[0].mxu0 %v4448
    %v4554 = vpop.f32.mrb[0].mxu0
    %v4555 = vadd.f32 %v4470, %v4554
    %v4556 = vpop.f32.mrb[0].mxu0
    %v4557 = vpop.f32.mrb[0].mxu0
    %v4558 = vpop.f32.mrb[0].mxu0
    %4559 = vdwg.mxu0
    %v4560 = vmax.f32 %v4555, 0.0
    %v4561 = vpack.c.bf16 %v4560, %v4560
    %v4562 = vld [vmem:[#allocation16] sm:$0xf]
    %v4563 = vld [vmem:[#allocation16 + $0x4] sm:$0xf]
    %v4564 = vld [vmem:[#allocation16 + $0x8] sm:$0xf]
    %v4565 = vld [vmem:[#allocation16 + $0xc] sm:$0xf]
    %v4566 = vld [vmem:[#allocation16 + $0x10] sm:$0xf]
    %v4567 = vld [vmem:[#allocation16 + $0x14] sm:$0xf]
    %v4568 = vld [vmem:[#allocation16 + $0x18] sm:$0xf]
    %v4569 = vld [vmem:[#allocation16 + $0x1c] sm:$0xf]
    %v4570 = vld [vmem:[#allocation16 + $0x20] sm:$0xf]
    %v4571 = vld [vmem:[#allocation16 + $0x24] sm:$0xf]
    %v4572 = vld [vmem:[#allocation16 + $0x28] sm:$0xf]
    %v4573 = vld [vmem:[#allocation16 + $0x2c] sm:$0xf]
    %v4574 = vld [vmem:[#allocation16 + $0x30] sm:$0xf]
    %v4575 = vld [vmem:[#allocation16 + $0x34] sm:$0xf]
    %v4576 = vld [vmem:[#allocation16 + $0x38] sm:$0xf]
    %v4577 = vld [vmem:[#allocation16 + $0x3c] sm:$0xf]
    %v4578 = vld [vmem:[%s12] sm:$0x1]
    %v4580 = vlaneseq
    %v4581 = vshrl.u32 %v4580, 7
    %v4582 = vsub.s32 0, %v4581
    %v4583 = vrot.slane %v4578, %v4582
    %v4601 = vunpack.c.l.b16 %v4562
    %v4602 = vunpack.c.l.b16 %v4563
    %v4603 = vunpack.c.l.b16 %v4564
    %v4604 = vunpack.c.l.b16 %v4565
    %v4605 = vunpack.c.l.b16 %v4566
    %v4606 = vunpack.c.l.b16 %v4567
    %v4607 = vunpack.c.l.b16 %v4568
    %v4608 = vunpack.c.l.b16 %v4569
    %v4609 = vunpack.c.l.b16 %v4570
    %v4610 = vunpack.c.l.b16 %v4571
    %v4611 = vunpack.c.l.b16 %v4572
    %v4612 = vunpack.c.l.b16 %v4573
    %v4613 = vunpack.c.l.b16 %v4574
    %v4614 = vunpack.c.l.b16 %v4575
    %v4615 = vunpack.c.l.b16 %v4576
    %v4616 = vunpack.c.l.b16 %v4577
    %v4617 = vpack.c.b16 %v4602, %v4601
    %v4618 = vpack.c.b16 %v4604, %v4603
    %v4619 = vpack.c.b16 %v4606, %v4605
    %v4620 = vpack.c.b16 %v4608, %v4607
    %v4621 = vpack.c.b16 %v4610, %v4609
    %v4622 = vpack.c.b16 %v4612, %v4611
    %v4623 = vpack.c.b16 %v4614, %v4613
    %v4624 = vpack.c.b16 %v4616, %v4615
    %4633 = vmatprep.subr.bf16.mxu0 0
    %4634 = vmatpush1.bf16.msra.mxu0 %v4617
    %4635 = vmatprep.subr.bf16.mxu0 0
    %4636 = vmatpush1.bf16.msra.mxu0 %v4618
    %4637 = vmatprep.subr.bf16.mxu0 0
    %4638 = vmatpush1.bf16.msra.mxu0 %v4619
    %4639 = vmatprep.subr.bf16.mxu0 0
    %4640 = vmatpush1.bf16.msra.mxu0 %v4620
    %4641 = vmatprep.subr.bf16.mxu0 0
    %4642 = vmatpush1.bf16.msra.mxu0 %v4621
    %4643 = vmatprep.subr.bf16.mxu0 0
    %4644 = vmatpush1.bf16.msra.mxu0 %v4622
    %4645 = vmatprep.subr.bf16.mxu0 0
    %4646 = vmatpush1.bf16.msra.mxu0 %v4623
    %4647 = vmatprep.subr.bf16.mxu0 0
    %4648 = vmatpush1.bf16.msra.mxu0 %v4624
    %4649 = vmatprep.subr.bf16.mxu0 0
    %4650 = vmatpush1.bf16.msra.mxu0 0
    %4651 = vmatprep.subr.bf16.mxu0 0
    %4652 = vmatpush1.bf16.msra.mxu0 0
    %4653 = vmatprep.subr.bf16.mxu0 0
    %4654 = vmatpush1.bf16.msra.mxu0 0
    %4655 = vmatprep.subr.bf16.mxu0 0
    %4656 = vmatpush1.bf16.msra.mxu0 0
    %4657 = vmatprep.subr.bf16.mxu0 0
    %4658 = vmatpush1.bf16.msra.mxu0 0
    %4659 = vmatprep.subr.bf16.mxu0 0
    %4660 = vmatpush1.bf16.msra.mxu0 0
    %4661 = vmatprep.subr.bf16.mxu0 0
    %4662 = vmatpush1.bf16.msra.mxu0 0
    %4663 = vmatprep.subr.bf16.mxu0 0
    %4664 = vmatpush1.bf16.msra.mxu0 0
    %4665 = vmatprep.mubr.bf16.mxu0 0
    %4666 = vmatmul.mubr.bf16.gmra.mrb[0].mxu0 %v4561
    %v4667 = vpop.f32.mrb[0].mxu0
    %v4668 = vadd.f32 %v4583, %v4667
    %v4669 = vpop.f32.mrb[0].mxu0
    %v4670 = vpop.f32.mrb[0].mxu0
    %v4671 = vpop.f32.mrb[0].mxu0
    %4672 = vdwg.mxu0
    %4673 = vst [vmem:[#allocation18] sm:$0xff] %v4668
    // Predicated region
    $region86: #{tpu_custom_call.1} parent=1 // pred_check
      _
    $region87: #{tpu_custom_call.1} parent=1 // pred_check_branch
      %4675 = sbr.rel (0) target = $region89
    $region88: #{tpu_custom_call.1} parent=1 // pred_region
      %s4677 = ssub.s32 128, 128
      %4678 = vsyncadd [#allocation6], %s4677
      %s4680 = sshll.u32 [#allocation18], 4
      %s4681 = int_to_ptr.vmem [resolvable:$true] %s4680
      %4683 = dma.vmem_to_hbm [thread:$0]  %s4681, 128, %s13, [#allocation6]
    $region89: #{tpu_custom_call.1} parent=1 // pred_fallthru
      _
    // Predicated region
    $region90: #{tpu_custom_call.1} parent=1 // pred_check
      _
    $region91: #{tpu_custom_call.1} parent=1 // pred_check_branch
      %4685 = sbr.rel (0) target = $region93
    $region92: #{tpu_custom_call.1} parent=1 // pred_region
      %4686 = dma.done [#allocation6], 128
    $region93: #{tpu_custom_call.1} parent=1 // pred_fallthru
      _
    %4687 = vsyncpa [#allocation5], 1
    %4688 = vsyncpa [#allocation8], 1
    %4689 = vsyncpa [#allocation11], 1
    %4690 = vsyncpa [#allocation14], 1
    %4691 = vsyncpa [#allocation17], 1
    %4692 = vsyncpa [#allocation6], 1

</llo_original>
